<compile_context>
chip_gen: v5e
topology: v5e:2x2
jax: 0.10.0
libtpu: 0.0.40
codegen_flags: <defaults>
</compile_context>

<pallas_src>
import functools

import numpy as np
import jax
import jax.numpy as jnp
from jax.experimental import pallas as pl
from jax.experimental.pallas import tpu as pltpu

BF16 = jnp.bfloat16


# ----------------------------------------------------------------------------
# Pallas kernel: one grid step == one batch element, whole block fused.
# ----------------------------------------------------------------------------
def flux_single_block_kernel(
    hs_ref, temb_ref, cos_ref, sin_ref,
    w_ada_ref, b_ada_ref, w_mlp_ref, b_mlp_ref,
    wq_ref, bq_ref, wk_ref, bk_ref, wv_ref, bv_ref,
    rmsq_ref, rmsk_ref, w_out_a_ref, w_out_m_ref, b_out_ref,
    out_ref,
    *, num_heads, head_dim):
  D = num_heads * head_dim
  hd2 = head_dim // 2

  x = hs_ref[0]                     # (S, D)  f32 residual
  t = temb_ref[0]                   # (1, D)  f32

  # --- AdaLayerNormZeroSingle: emb = Linear(SiLU(temb)) -> shift/scale/gate --
  t_silu = t * jax.nn.sigmoid(t)
  emb = jnp.dot(t_silu.astype(BF16), w_ada_ref[...],
                preferred_element_type=jnp.float32) + b_ada_ref[...]  # (1, 3D)
  shift = emb[:, 0:D]
  scale = emb[:, D:2 * D]
  gate = emb[:, 2 * D:3 * D]

  mean = jnp.mean(x, axis=-1, keepdims=True)
  var = jnp.mean(jnp.square(x - mean), axis=-1, keepdims=True)
  xn = (x - mean) * jax.lax.rsqrt(var + 1e-6)
  norm_hs = xn * (1.0 + scale) + shift                                # (S, D)
  norm_bf = norm_hs.astype(BF16)

  # --- MLP branch: GELU(tanh)(Linear) ---
  mlp = jnp.dot(norm_bf, w_mlp_ref[...],
                preferred_element_type=jnp.float32) + b_mlp_ref[...]  # (S, M)
  mlp = jax.nn.gelu(mlp, approximate=True)

  # --- attention projections (flat, single big GEMMs) ---
  q = jnp.dot(norm_bf, wq_ref[...], preferred_element_type=jnp.float32) + bq_ref[...]
  k = jnp.dot(norm_bf, wk_ref[...], preferred_element_type=jnp.float32) + bk_ref[...]
  v = jnp.dot(norm_bf, wv_ref[...], preferred_element_type=jnp.float32) + bv_ref[...]

  # split heads -> (H, S, head_dim)
  def split_heads(z):
    return jnp.stack(
        [z[:, h * head_dim:(h + 1) * head_dim] for h in range(num_heads)],
        axis=0)
  q3 = split_heads(q)
  k3 = split_heads(k)
  v3 = split_heads(v)

  # per-head RMSNorm (eps=1e-6): plain lane reduction, no mask matmul.
  def rms_norm(z, w_ref):
    ms = jnp.mean(jnp.square(z), axis=-1, keepdims=True)
    return z * jax.lax.rsqrt(ms + 1e-6) * w_ref[...][None]   # (1,1,hd) bcast
  q3 = rms_norm(q3, rmsq_ref)
  k3 = rms_norm(k3, rmsk_ref)

  # RoPE in de-interleaved ("half") channel layout: rotate-half + sign.
  # (q/k weights, biases, rms weights, cos/sin were permuted host-side so the
  #  interleaved pair rotation becomes this cheap lane move -- no MXU.)
  cos = cos_ref[...][None]          # (1, S, hd)
  sin = sin_ref[...][None]
  def rope(z):
    zrot = jnp.concatenate([-z[..., hd2:], z[..., :hd2]], axis=-1)
    return z * cos + zrot * sin
  q3 = rope(q3)
  k3 = rope(k3)

  # --- batched multi-head scaled dot-product attention ---
  inv_sqrt_hd = 1.0 / float(np.sqrt(head_dim))
  qb = q3.astype(BF16)
  kb = k3.astype(BF16)
  vb = v3.astype(BF16)
  s = jnp.einsum('hqd,hkd->hqk', qb, kb,
                 preferred_element_type=jnp.float32) * inv_sqrt_hd    # (H,S,S)
  m = jnp.max(s, axis=-1, keepdims=True)
  p = jnp.exp(s - m)
  denom = jnp.sum(p, axis=-1, keepdims=True)
  p = p * pl.reciprocal(denom, approx=True)
  o3 = jnp.einsum('hqk,hkd->hqd', p.astype(BF16), vb,
                  preferred_element_type=jnp.float32)                 # (H,S,hd)

  # merge heads back to (S, D) and do ONE big proj_out (split attn/mlp halves)
  attn = jnp.concatenate([o3[h] for h in range(num_heads)], axis=-1)  # (S, D)
  out = (jnp.dot(attn.astype(BF16), w_out_a_ref[...],
                 preferred_element_type=jnp.float32)
         + jnp.dot(mlp.astype(BF16), w_out_m_ref[...],
                   preferred_element_type=jnp.float32)
         + b_out_ref[...])                                            # (S, D)

  # gate * proj_out + residual
  out_ref[0] = x + gate * out


# ----------------------------------------------------------------------------
# One-time parameter prep (hoisted out of the per-call path):
#   * de-interleave q/k channels within each head so RoPE == rotate-half,
#   * permute cos/sin and the per-head rms weights accordingly,
#   * split proj_out weight into its attn / mlp halves,
#   * cast all big weight matrices to bf16 (half the HBM/VMEM bytes).
# ----------------------------------------------------------------------------
def prepare_flux_single_block_params(params, cos, sin, *, num_heads, head_dim):
  D = num_heads * head_dim
  perm_head = np.concatenate([np.arange(0, head_dim, 2),
                              np.arange(1, head_dim, 2)])
  perm_full = (np.arange(num_heads)[:, None] * head_dim
               + perm_head[None, :]).reshape(-1)

  return {
      'w_ada': params['w_ada'].astype(BF16),
      'b_ada': params['b_ada'],
      'w_mlp': params['w_mlp'].astype(BF16),
      'b_mlp': params['b_mlp'],
      'wq': params['wq'][:, perm_full].astype(BF16),
      'bq': params['bq'][:, perm_full],
      'wk': params['wk'][:, perm_full].astype(BF16),
      'bk': params['bk'][:, perm_full],
      'wv': params['wv'].astype(BF16),
      'bv': params['bv'],
      'rmsq': params['rmsq_head'][perm_head].reshape(1, head_dim),
      'rmsk': params['rmsk_head'][perm_head].reshape(1, head_dim),
      'w_out_a': params['w_out'][:D].astype(BF16),
      'w_out_m': params['w_out'][D:].astype(BF16),
      'b_out': params['b_out'],
      'cos': cos[:, perm_head],
      'sin': sin[:, perm_head],
  }


# ----------------------------------------------------------------------------
# Wrapper: BlockSpecs / grid / cost estimate.
# ----------------------------------------------------------------------------
def flux_single_block(hs, temb, prm, *, num_heads, head_dim):
  B, S, D = hs.shape
  M = prm['w_mlp'].shape[1]
  temb3 = temb.reshape(B, 1, D)

  def full(arr):
    shape = arr.shape
    return pl.BlockSpec(shape, lambda b: (0,) * len(shape))

  in_specs = [
      pl.BlockSpec((1, S, D), lambda b: (b, 0, 0)),   # hidden_states
      pl.BlockSpec((1, 1, D), lambda b: (b, 0, 0)),   # temb
      full(prm['cos']), full(prm['sin']),             # rope tables (S, hd)
      full(prm['w_ada']), full(prm['b_ada']),         # adaLN linear
      full(prm['w_mlp']), full(prm['b_mlp']),         # proj_mlp
      full(prm['wq']), full(prm['bq']),               # to_q
      full(prm['wk']), full(prm['bk']),               # to_k
      full(prm['wv']), full(prm['bv']),               # to_v
      full(prm['rmsq']), full(prm['rmsk']),           # per-head rms weights
      full(prm['w_out_a']), full(prm['w_out_m']), full(prm['b_out']),
  ]

  # advisory cost estimate for the XLA scheduler
  flops = int(2 * B * (D * 3 * D
                       + S * D * M
                       + 3 * S * D * D
                       + num_heads * 2 * S * S * head_dim
                       + S * D * D
                       + S * M * D))
  transcendentals = int(B * (S * M + num_heads * S * S + S + D))
  weight_bytes = sum(int(v.size) * v.dtype.itemsize for v in prm.values())
  bytes_accessed = int(hs.size * hs.dtype.itemsize * 2
                       + temb.size * temb.dtype.itemsize
                       + weight_bytes)

  kernel = functools.partial(flux_single_block_kernel,
                             num_heads=num_heads, head_dim=head_dim)
  return pl.pallas_call(
      kernel,
      out_shape=jax.ShapeDtypeStruct((B, S, D), jnp.float32),
      grid_spec=pltpu.PrefetchScalarGridSpec(
          num_scalar_prefetch=0,
          grid=(B,),
          in_specs=in_specs,
          out_specs=pl.BlockSpec((1, S, D), lambda b: (b, 0, 0)),
      ),
      compiler_params=pltpu.CompilerParams(
          dimension_semantics=("parallel",),
          vmem_limit_bytes=32 * 1024 * 1024),
      cost_estimate=pl.CostEstimate(flops=flops,
                                    transcendentals=transcendentals,
                                    bytes_accessed=bytes_accessed),
  )(hs, temb3, prm['cos'], prm['sin'],
    prm['w_ada'], prm['b_ada'],
    prm['w_mlp'], prm['b_mlp'],
    prm['wq'], prm['bq'],
    prm['wk'], prm['bk'],
    prm['wv'], prm['bv'],
    prm['rmsq'], prm['rmsk'],
    prm['w_out_a'], prm['w_out_m'], prm['b_out'])


# ----------------------------------------------------------------------------
# Pure-JAX reference (mirrors the PyTorch module semantics; matmul operands
# are cast to bf16 like the kernel so the comparison is precision-matched).
# ----------------------------------------------------------------------------
def reference_forward(hs, temb, cos, sin, params, *, num_heads, head_dim):
  B, S, D = hs.shape

  def mm(a, w):
    return jnp.dot(a.astype(BF16), w.astype(BF16),
                   preferred_element_type=jnp.float32)

  emb = mm(jax.nn.silu(temb), params['w_ada']) + params['b_ada'][0]
  shift, scale, gate = emb[:, :D], emb[:, D:2 * D], emb[:, 2 * D:]

  mean = hs.mean(-1, keepdims=True)
  var = jnp.square(hs - mean).mean(-1, keepdims=True)
  xn = (hs - mean) * jax.lax.rsqrt(var + 1e-6)
  norm_hs = xn * (1.0 + scale[:, None, :]) + shift[:, None, :]

  mlp = jax.nn.gelu(mm(norm_hs, params['w_mlp']) + params['b_mlp'][0],
                    approximate=True)

  q = mm(norm_hs, params['wq']) + params['bq'][0]
  k = mm(norm_hs, params['wk']) + params['bk'][0]
  v = mm(norm_hs, params['wv']) + params['bv'][0]

  def split_heads(z):
    return z.reshape(B, S, num_heads, head_dim).transpose(0, 2, 1, 3)
  q, k, v = map(split_heads, (q, k, v))

  def rmsn(z, w):
    ms = jnp.mean(z * z, axis=-1, keepdims=True)
    return z * jax.lax.rsqrt(ms + 1e-6) * w
  q = rmsn(q, params['rmsq_head'])
  k = rmsn(k, params['rmsk_head'])

  def rope(z):
    zr = z[..., 0::2]
    zi = z[..., 1::2]
    rot = jnp.stack([-zi, zr], axis=-1).reshape(z.shape)
    return z * cos[None, None] + rot * sin[None, None]
  q = rope(q)
  k = rope(k)

  s = jnp.einsum('bhqd,bhkd->bhqk', q.astype(BF16), k.astype(BF16),
                 preferred_element_type=jnp.float32) / float(np.sqrt(head_dim))
  p = jax.nn.softmax(s, axis=-1)
  attn = jnp.einsum('bhqk,bhkd->bhqd', p.astype(BF16), v.astype(BF16),
                    preferred_element_type=jnp.float32)
  attn = attn.transpose(0, 2, 1, 3).reshape(B, S, D)

  cat = jnp.concatenate([attn, mlp], axis=-1)
  out = mm(cat, params['w_out']) + params['b_out'][0]
  return hs + gate[:, None, :] * out


# ----------------------------------------------------------------------------
if __name__ == "__main__":
  B, S = 2, 128
  num_heads, head_dim = 4, 32
  D = num_heads * head_dim          # dim = 128
  M = int(D * 4.0)                  # mlp_hidden_dim = 512

  key = jax.random.PRNGKey(0)
  ks = jax.random.split(key, 20)

  def rnd(k, shape, scale=0.02):
    return jax.random.normal(k, shape, dtype=jnp.float32) * scale

  params = {
      'w_ada': rnd(ks[0], (D, 3 * D)), 'b_ada': rnd(ks[1], (1, 3 * D)),
      'w_mlp': rnd(ks[2], (D, M)),     'b_mlp': rnd(ks[3], (1, M)),
      'wq': rnd(ks[4], (D, D)),        'bq': rnd(ks[5], (1, D)),
      'wk': rnd(ks[6], (D, D)),        'bk': rnd(ks[7], (1, D)),
      'wv': rnd(ks[8], (D, D)),        'bv': rnd(ks[9], (1, D)),
      'rmsq_head': 1.0 + rnd(ks[10], (head_dim,)),
      'rmsk_head': 1.0 + rnd(ks[11], (head_dim,)),
      'w_out': rnd(ks[12], (D + M, D)), 'b_out': rnd(ks[13], (1, D)),
  }

  hidden_states = jax.random.normal(ks[14], (B, S, D), dtype=jnp.float32)
  temb = jax.random.normal(ks[15], (B, D), dtype=jnp.float32)

  # deterministic interleaved rotary embedding (cos, sin) of shape (S, head_dim)
  pos = jnp.arange(S, dtype=jnp.float32)
  inv_freq = 1.0 / (10000.0 ** (jnp.arange(0, head_dim, 2, dtype=jnp.float32)
                                / head_dim))
  freqs = pos[:, None] * inv_freq[None, :]              # (S, head_dim//2)
  cos = jnp.repeat(jnp.cos(freqs), 2, axis=-1)          # (S, head_dim)
  sin = jnp.repeat(jnp.sin(freqs), 2, axis=-1)

  # one-time prep (permutations + bf16 weight casts), then the fused kernel
  prepped = prepare_flux_single_block_params(
      params, cos, sin, num_heads=num_heads, head_dim=head_dim)
  out = flux_single_block(hidden_states, temb, prepped,
                          num_heads=num_heads, head_dim=head_dim)
  out = jax.block_until_ready(out)

  ref = reference_forward(hidden_states, temb, cos, sin, params,
                          num_heads=num_heads, head_dim=head_dim)
  ref = jax.block_until_ready(ref)

  assert out.shape == (B, S, D)
  assert bool(jnp.all(jnp.isfinite(out)))
  max_err = float(jnp.max(jnp.abs(out - ref)))
  assert bool(jnp.allclose(out, ref, atol=2e-3, rtol=2e-3)), max_err

  print("KERNEL_OK")
</pallas_src>

<mosaic_0001>
module attributes {stable_mosaic.version = 11 : i64} {
  func.func @flux_single_block_kernel(%arg0: i32, %arg1: memref<1x128x128xf32, #tpu.memory_space<vmem>>, %arg2: memref<1x1x128xf32, #tpu.memory_space<vmem>>, %arg3: memref<128x32xf32, #tpu.memory_space<vmem>>, %arg4: memref<128x32xf32, #tpu.memory_space<vmem>>, %arg5: memref<128x384xbf16, #tpu.memory_space<vmem>>, %arg6: memref<1x384xf32, #tpu.memory_space<vmem>>, %arg7: memref<128x512xbf16, #tpu.memory_space<vmem>>, %arg8: memref<1x512xf32, #tpu.memory_space<vmem>>, %arg9: memref<128x128xbf16, #tpu.memory_space<vmem>>, %arg10: memref<1x128xf32, #tpu.memory_space<vmem>>, %arg11: memref<128x128xbf16, #tpu.memory_space<vmem>>, %arg12: memref<1x128xf32, #tpu.memory_space<vmem>>, %arg13: memref<128x128xbf16, #tpu.memory_space<vmem>>, %arg14: memref<1x128xf32, #tpu.memory_space<vmem>>, %arg15: memref<1x32xf32, #tpu.memory_space<vmem>>, %arg16: memref<1x32xf32, #tpu.memory_space<vmem>>, %arg17: memref<128x128xbf16, #tpu.memory_space<vmem>>, %arg18: memref<512x128xbf16, #tpu.memory_space<vmem>>, %arg19: memref<1x128xf32, #tpu.memory_space<vmem>>, %arg20: memref<1x128x128xf32, #tpu.memory_space<vmem>>) attributes {dimension_semantics = [#tpu.dimension_semantics<parallel>], iteration_bounds = array<i64: 2>, scalar_prefetch = 0 : i64, scratch_operands = 0 : i64, tpu.core_type = #tpu.core_type<tc>, window_params = [{transform_indices = @transform_0, window_bounds = array<i64: 1, 128, 128>}, {transform_indices = @transform_1, window_bounds = array<i64: 1, 1, 128>}, {pipeline_mode = #tpu.pipeline_mode<synchronous>, transform_indices = @transform_2, window_bounds = array<i64: 128, 32>}, {pipeline_mode = #tpu.pipeline_mode<synchronous>, transform_indices = @transform_3, window_bounds = array<i64: 128, 32>}, {pipeline_mode = #tpu.pipeline_mode<synchronous>, transform_indices = @transform_4, window_bounds = array<i64: 128, 384>}, {pipeline_mode = #tpu.pipeline_mode<synchronous>, transform_indices = @transform_5, window_bounds = array<i64: 1, 384>}, {pipeline_mode = #tpu.pipeline_mode<synchronous>, transform_indices = @transform_6, window_bounds = array<i64: 128, 512>}, {pipeline_mode = #tpu.pipeline_mode<synchronous>, transform_indices = @transform_7, window_bounds = array<i64: 1, 512>}, {pipeline_mode = #tpu.pipeline_mode<synchronous>, transform_indices = @transform_8, window_bounds = array<i64: 128, 128>}, {pipeline_mode = #tpu.pipeline_mode<synchronous>, transform_indices = @transform_9, window_bounds = array<i64: 1, 128>}, {pipeline_mode = #tpu.pipeline_mode<synchronous>, transform_indices = @transform_10, window_bounds = array<i64: 128, 128>}, {pipeline_mode = #tpu.pipeline_mode<synchronous>, transform_indices = @transform_11, window_bounds = array<i64: 1, 128>}, {pipeline_mode = #tpu.pipeline_mode<synchronous>, transform_indices = @transform_12, window_bounds = array<i64: 128, 128>}, {pipeline_mode = #tpu.pipeline_mode<synchronous>, transform_indices = @transform_13, window_bounds = array<i64: 1, 128>}, {pipeline_mode = #tpu.pipeline_mode<synchronous>, transform_indices = @transform_14, window_bounds = array<i64: 1, 32>}, {pipeline_mode = #tpu.pipeline_mode<synchronous>, transform_indices = @transform_15, window_bounds = array<i64: 1, 32>}, {pipeline_mode = #tpu.pipeline_mode<synchronous>, transform_indices = @transform_16, window_bounds = array<i64: 128, 128>}, {pipeline_mode = #tpu.pipeline_mode<synchronous>, transform_indices = @transform_17, window_bounds = array<i64: 512, 128>}, {pipeline_mode = #tpu.pipeline_mode<synchronous>, transform_indices = @transform_18, window_bounds = array<i64: 1, 128>}, {transform_indices = @transform_19, window_bounds = array<i64: 1, 128, 128>}]} {
    %c0 = arith.constant 0 : index
    %c0_0 = arith.constant 0 : index
    %c0_1 = arith.constant 0 : index
    %0 = vector.load %arg1[%c0, %c0_0, %c0_1] : memref<1x128x128xf32, #tpu.memory_space<vmem>>, vector<1x128x128xf32>
    %1 = vector.shape_cast %0 : vector<1x128x128xf32> to vector<128x128xf32>
    %c0_2 = arith.constant 0 : index
    %c0_3 = arith.constant 0 : index
    %c0_4 = arith.constant 0 : index
    %2 = vector.load %arg2[%c0_2, %c0_3, %c0_4] : memref<1x1x128xf32, #tpu.memory_space<vmem>>, vector<1x1x128xf32>
    %3 = vector.shape_cast %2 : vector<1x1x128xf32> to vector<1x128xf32>
    %4 = arith.negf %3 : vector<1x128xf32>
    %5 = math.exp %4 : vector<1x128xf32>
    %cst = arith.constant 1.000000e+00 : f32
    %6 = vector.broadcast %cst : f32 to vector<1x128xf32>
    %7 = arith.addf %6, %5 : vector<1x128xf32>
    %8 = arith.divf %6, %7 : vector<1x128xf32>
    %9 = arith.mulf %3, %8 : vector<1x128xf32>
    %10 = arith.truncf %9 : vector<1x128xf32> to vector<1x128xbf16>
    %c0_5 = arith.constant 0 : index
    %c0_6 = arith.constant 0 : index
    %11 = vector.load %arg5[%c0_5, %c0_6] : memref<128x384xbf16, #tpu.memory_space<vmem>>, vector<128x384xbf16>
    %cst_7 = arith.constant dense<0.000000e+00> : vector<1x384xf32>
    %12 = tpu.matmul %10, %11, %cst_7 {dimension_numbers = #tpu.dot_dimension_numbers<[1], [0], [0], [1], [0, 0, 1, 1], [], []>} : vector<1x128xbf16>, vector<128x384xbf16>, vector<1x384xf32> -> vector<1x384xf32>
    %c0_8 = arith.constant 0 : index
    %c0_9 = arith.constant 0 : index
    %13 = vector.load %arg6[%c0_8, %c0_9] : memref<1x384xf32, #tpu.memory_space<vmem>>, vector<1x384xf32>
    %14 = arith.addf %12, %13 : vector<1x384xf32>
    %15 = vector.extract_strided_slice %14 {offsets = [0, 0], sizes = [1, 128], strides = [1, 1]} : vector<1x384xf32> to vector<1x128xf32>
    %16 = vector.extract_strided_slice %14 {offsets = [0, 128], sizes = [1, 128], strides = [1, 1]} : vector<1x384xf32> to vector<1x128xf32>
    %17 = vector.extract_strided_slice %14 {offsets = [0, 256], sizes = [1, 128], strides = [1, 1]} : vector<1x384xf32> to vector<1x128xf32>
    %cst_10 = arith.constant dense<0.000000e+00> : vector<128xf32>
    %18 = vector.multi_reduction <add>, %1, %cst_10 [1] : vector<128x128xf32> to vector<128xf32>
    %19 = vector.shape_cast %18 : vector<128xf32> to vector<128x1xf32>
    %cst_11 = arith.constant 1.280000e+02 : f32
    %20 = vector.broadcast %cst_11 : f32 to vector<128x1xf32>
    %21 = arith.divf %19, %20 : vector<128x1xf32>
    %22 = vector.broadcast %21 : vector<128x1xf32> to vector<128x128xf32>
    %23 = arith.subf %1, %22 : vector<128x128xf32>
    %24 = arith.mulf %23, %23 : vector<128x128xf32>
    %cst_12 = arith.constant dense<0.000000e+00> : vector<128xf32>
    %25 = vector.multi_reduction <add>, %24, %cst_12 [1] : vector<128x128xf32> to vector<128xf32>
    %26 = vector.shape_cast %25 : vector<128xf32> to vector<128x1xf32>
    %cst_13 = arith.constant 1.280000e+02 : f32
    %27 = vector.broadcast %cst_13 : f32 to vector<128x1xf32>
    %28 = arith.divf %26, %27 : vector<128x1xf32>
    %29 = vector.broadcast %21 : vector<128x1xf32> to vector<128x128xf32>
    %30 = arith.subf %1, %29 : vector<128x128xf32>
    %cst_14 = arith.constant 9.99999997E-7 : f32
    %31 = vector.broadcast %cst_14 : f32 to vector<128x1xf32>
    %32 = arith.addf %28, %31 : vector<128x1xf32>
    %33 = math.rsqrt %32 : vector<128x1xf32>
    %34 = vector.broadcast %33 : vector<128x1xf32> to vector<128x128xf32>
    %35 = arith.mulf %30, %34 : vector<128x128xf32>
    %cst_15 = arith.constant 1.000000e+00 : f32
    %36 = vector.broadcast %cst_15 : f32 to vector<1x128xf32>
    %37 = arith.addf %36, %16 : vector<1x128xf32>
    %38 = vector.broadcast %37 : vector<1x128xf32> to vector<128x128xf32>
    %39 = arith.mulf %35, %38 : vector<128x128xf32>
    %40 = vector.broadcast %15 : vector<1x128xf32> to vector<128x128xf32>
    %41 = arith.addf %39, %40 : vector<128x128xf32>
    %42 = arith.truncf %41 : vector<128x128xf32> to vector<128x128xbf16>
    %c0_16 = arith.constant 0 : index
    %c0_17 = arith.constant 0 : index
    %43 = vector.load %arg7[%c0_16, %c0_17] : memref<128x512xbf16, #tpu.memory_space<vmem>>, vector<128x512xbf16>
    %cst_18 = arith.constant dense<0.000000e+00> : vector<128x512xf32>
    %44 = tpu.matmul %42, %43, %cst_18 {dimension_numbers = #tpu.dot_dimension_numbers<[1], [0], [0], [1], [0, 0, 1, 1], [], []>} : vector<128x128xbf16>, vector<128x512xbf16>, vector<128x512xf32> -> vector<128x512xf32>
    %c0_19 = arith.constant 0 : index
    %c0_20 = arith.constant 0 : index
    %45 = vector.load %arg8[%c0_19, %c0_20] : memref<1x512xf32, #tpu.memory_space<vmem>>, vector<1x512xf32>
    %46 = vector.broadcast %45 : vector<1x512xf32> to vector<128x512xf32>
    %47 = arith.addf %44, %46 : vector<128x512xf32>
    %48 = arith.mulf %47, %47 : vector<128x512xf32>
    %49 = arith.mulf %47, %48 : vector<128x512xf32>
    %cst_21 = arith.constant 4.471500e-02 : f32
    %50 = vector.broadcast %cst_21 : f32 to vector<128x512xf32>
    %51 = arith.mulf %50, %49 : vector<128x512xf32>
    %52 = arith.addf %47, %51 : vector<128x512xf32>
    %cst_22 = arith.constant 0.797884583 : f32
    %53 = vector.broadcast %cst_22 : f32 to vector<128x512xf32>
    %54 = arith.mulf %53, %52 : vector<128x512xf32>
    %55 = math.tanh %54 : vector<128x512xf32>
    %cst_23 = arith.constant 1.000000e+00 : f32
    %56 = vector.broadcast %cst_23 : f32 to vector<128x512xf32>
    %57 = arith.addf %56, %55 : vector<128x512xf32>
    %cst_24 = arith.constant 5.000000e-01 : f32
    %58 = vector.broadcast %cst_24 : f32 to vector<128x512xf32>
    %59 = arith.mulf %58, %57 : vector<128x512xf32>
    %60 = arith.mulf %47, %59 : vector<128x512xf32>
    %c0_25 = arith.constant 0 : index
    %c0_26 = arith.constant 0 : index
    %61 = vector.load %arg9[%c0_25, %c0_26] : memref<128x128xbf16, #tpu.memory_space<vmem>>, vector<128x128xbf16>
    %cst_27 = arith.constant dense<0.000000e+00> : vector<128x128xf32>
    %62 = tpu.matmul %42, %61, %cst_27 {dimension_numbers = #tpu.dot_dimension_numbers<[1], [0], [0], [1], [0, 0, 1, 1], [], []>} : vector<128x128xbf16>, vector<128x128xbf16>, vector<128x128xf32> -> vector<128x128xf32>
    %c0_28 = arith.constant 0 : index
    %c0_29 = arith.constant 0 : index
    %63 = vector.load %arg10[%c0_28, %c0_29] : memref<1x128xf32, #tpu.memory_space<vmem>>, vector<1x128xf32>
    %64 = vector.broadcast %63 : vector<1x128xf32> to vector<128x128xf32>
    %65 = arith.addf %62, %64 : vector<128x128xf32>
    %c0_30 = arith.constant 0 : index
    %c0_31 = arith.constant 0 : index
    %66 = vector.load %arg11[%c0_30, %c0_31] : memref<128x128xbf16, #tpu.memory_space<vmem>>, vector<128x128xbf16>
    %cst_32 = arith.constant dense<0.000000e+00> : vector<128x128xf32>
    %67 = tpu.matmul %42, %66, %cst_32 {dimension_numbers = #tpu.dot_dimension_numbers<[1], [0], [0], [1], [0, 0, 1, 1], [], []>} : vector<128x128xbf16>, vector<128x128xbf16>, vector<128x128xf32> -> vector<128x128xf32>
    %c0_33 = arith.constant 0 : index
    %c0_34 = arith.constant 0 : index
    %68 = vector.load %arg12[%c0_33, %c0_34] : memref<1x128xf32, #tpu.memory_space<vmem>>, vector<1x128xf32>
    %69 = vector.broadcast %68 : vector<1x128xf32> to vector<128x128xf32>
    %70 = arith.addf %67, %69 : vector<128x128xf32>
    %c0_35 = arith.constant 0 : index
    %c0_36 = arith.constant 0 : index
    %71 = vector.load %arg13[%c0_35, %c0_36] : memref<128x128xbf16, #tpu.memory_space<vmem>>, vector<128x128xbf16>
    %cst_37 = arith.constant dense<0.000000e+00> : vector<128x128xf32>
    %72 = tpu.matmul %42, %71, %cst_37 {dimension_numbers = #tpu.dot_dimension_numbers<[1], [0], [0], [1], [0, 0, 1, 1], [], []>} : vector<128x128xbf16>, vector<128x128xbf16>, vector<128x128xf32> -> vector<128x128xf32>
    %c0_38 = arith.constant 0 : index
    %c0_39 = arith.constant 0 : index
    %73 = vector.load %arg14[%c0_38, %c0_39] : memref<1x128xf32, #tpu.memory_space<vmem>>, vector<1x128xf32>
    %74 = vector.broadcast %73 : vector<1x128xf32> to vector<128x128xf32>
    %75 = arith.addf %72, %74 : vector<128x128xf32>
    %76 = vector.extract_strided_slice %65 {offsets = [0, 0], sizes = [128, 32], strides = [1, 1]} : vector<128x128xf32> to vector<128x32xf32>
    %77 = vector.extract_strided_slice %65 {offsets = [0, 32], sizes = [128, 32], strides = [1, 1]} : vector<128x128xf32> to vector<128x32xf32>
    %78 = vector.extract_strided_slice %65 {offsets = [0, 64], sizes = [128, 32], strides = [1, 1]} : vector<128x128xf32> to vector<128x32xf32>
    %79 = vector.extract_strided_slice %65 {offsets = [0, 96], sizes = [128, 32], strides = [1, 1]} : vector<128x128xf32> to vector<128x32xf32>
    %80 = vector.shape_cast %76 : vector<128x32xf32> to vector<1x128x32xf32>
    %81 = vector.shape_cast %77 : vector<128x32xf32> to vector<1x128x32xf32>
    %82 = vector.shape_cast %78 : vector<128x32xf32> to vector<1x128x32xf32>
    %83 = vector.shape_cast %79 : vector<128x32xf32> to vector<1x128x32xf32>
    %84 = tpu.concatenate %80, %81, %82, %83 in 0 : vector<1x128x32xf32>, vector<1x128x32xf32>, vector<1x128x32xf32>, vector<1x128x32xf32> -> vector<4x128x32xf32>
    %85 = vector.extract_strided_slice %70 {offsets = [0, 0], sizes = [128, 32], strides = [1, 1]} : vector<128x128xf32> to vector<128x32xf32>
    %86 = vector.extract_strided_slice %70 {offsets = [0, 32], sizes = [128, 32], strides = [1, 1]} : vector<128x128xf32> to vector<128x32xf32>
    %87 = vector.extract_strided_slice %70 {offsets = [0, 64], sizes = [128, 32], strides = [1, 1]} : vector<128x128xf32> to vector<128x32xf32>
    %88 = vector.extract_strided_slice %70 {offsets = [0, 96], sizes = [128, 32], strides = [1, 1]} : vector<128x128xf32> to vector<128x32xf32>
    %89 = vector.shape_cast %85 : vector<128x32xf32> to vector<1x128x32xf32>
    %90 = vector.shape_cast %86 : vector<128x32xf32> to vector<1x128x32xf32>
    %91 = vector.shape_cast %87 : vector<128x32xf32> to vector<1x128x32xf32>
    %92 = vector.shape_cast %88 : vector<128x32xf32> to vector<1x128x32xf32>
    %93 = tpu.concatenate %89, %90, %91, %92 in 0 : vector<1x128x32xf32>, vector<1x128x32xf32>, vector<1x128x32xf32>, vector<1x128x32xf32> -> vector<4x128x32xf32>
    %94 = vector.extract_strided_slice %75 {offsets = [0, 0], sizes = [128, 32], strides = [1, 1]} : vector<128x128xf32> to vector<128x32xf32>
    %95 = vector.extract_strided_slice %75 {offsets = [0, 32], sizes = [128, 32], strides = [1, 1]} : vector<128x128xf32> to vector<128x32xf32>
    %96 = vector.extract_strided_slice %75 {offsets = [0, 64], sizes = [128, 32], strides = [1, 1]} : vector<128x128xf32> to vector<128x32xf32>
    %97 = vector.extract_strided_slice %75 {offsets = [0, 96], sizes = [128, 32], strides = [1, 1]} : vector<128x128xf32> to vector<128x32xf32>
    %98 = vector.shape_cast %94 : vector<128x32xf32> to vector<1x128x32xf32>
    %99 = vector.shape_cast %95 : vector<128x32xf32> to vector<1x128x32xf32>
    %100 = vector.shape_cast %96 : vector<128x32xf32> to vector<1x128x32xf32>
    %101 = vector.shape_cast %97 : vector<128x32xf32> to vector<1x128x32xf32>
    %102 = tpu.concatenate %98, %99, %100, %101 in 0 : vector<1x128x32xf32>, vector<1x128x32xf32>, vector<1x128x32xf32>, vector<1x128x32xf32> -> vector<4x128x32xf32>
    %103 = arith.mulf %84, %84 : vector<4x128x32xf32>
    %cst_40 = arith.constant dense<0.000000e+00> : vector<4x128xf32>
    %104 = vector.multi_reduction <add>, %103, %cst_40 [2] : vector<4x128x32xf32> to vector<4x128xf32>
    %105 = vector.shape_cast %104 : vector<4x128xf32> to vector<4x128x1xf32>
    %cst_41 = arith.constant 3.200000e+01 : f32
    %106 = vector.broadcast %cst_41 : f32 to vector<4x128x1xf32>
    %107 = arith.divf %105, %106 : vector<4x128x1xf32>
    %cst_42 = arith.constant 9.99999997E-7 : f32
    %108 = vector.broadcast %cst_42 : f32 to vector<4x128x1xf32>
    %109 = arith.addf %107, %108 : vector<4x128x1xf32>
    %110 = math.rsqrt %109 : vector<4x128x1xf32>
    %111 = vector.broadcast %110 : vector<4x128x1xf32> to vector<4x128x32xf32>
    %112 = arith.mulf %84, %111 : vector<4x128x32xf32>
    %c0_43 = arith.constant 0 : index
    %c0_44 = arith.constant 0 : index
    %113 = vector.load %arg15[%c0_43, %c0_44] : memref<1x32xf32, #tpu.memory_space<vmem>>, vector<1x32xf32>
    %114 = vector.shape_cast %113 : vector<1x32xf32> to vector<1x1x32xf32>
    %115 = vector.broadcast %114 : vector<1x1x32xf32> to vector<4x128x32xf32>
    %116 = arith.mulf %112, %115 : vector<4x128x32xf32>
    %117 = arith.mulf %93, %93 : vector<4x128x32xf32>
    %cst_45 = arith.constant dense<0.000000e+00> : vector<4x128xf32>
    %118 = vector.multi_reduction <add>, %117, %cst_45 [2] : vector<4x128x32xf32> to vector<4x128xf32>
    %119 = vector.shape_cast %118 : vector<4x128xf32> to vector<4x128x1xf32>
    %cst_46 = arith.constant 3.200000e+01 : f32
    %120 = vector.broadcast %cst_46 : f32 to vector<4x128x1xf32>
    %121 = arith.divf %119, %120 : vector<4x128x1xf32>
    %cst_47 = arith.constant 9.99999997E-7 : f32
    %122 = vector.broadcast %cst_47 : f32 to vector<4x128x1xf32>
    %123 = arith.addf %121, %122 : vector<4x128x1xf32>
    %124 = math.rsqrt %123 : vector<4x128x1xf32>
    %125 = vector.broadcast %124 : vector<4x128x1xf32> to vector<4x128x32xf32>
    %126 = arith.mulf %93, %125 : vector<4x128x32xf32>
    %c0_48 = arith.constant 0 : index
    %c0_49 = arith.constant 0 : index
    %127 = vector.load %arg16[%c0_48, %c0_49] : memref<1x32xf32, #tpu.memory_space<vmem>>, vector<1x32xf32>
    %128 = vector.shape_cast %127 : vector<1x32xf32> to vector<1x1x32xf32>
    %129 = vector.broadcast %128 : vector<1x1x32xf32> to vector<4x128x32xf32>
    %130 = arith.mulf %126, %129 : vector<4x128x32xf32>
    %c0_50 = arith.constant 0 : index
    %c0_51 = arith.constant 0 : index
    %131 = vector.load %arg3[%c0_50, %c0_51] : memref<128x32xf32, #tpu.memory_space<vmem>>, vector<128x32xf32>
    %132 = vector.shape_cast %131 : vector<128x32xf32> to vector<1x128x32xf32>
    %c0_52 = arith.constant 0 : index
    %c0_53 = arith.constant 0 : index
    %133 = vector.load %arg4[%c0_52, %c0_53] : memref<128x32xf32, #tpu.memory_space<vmem>>, vector<128x32xf32>
    %134 = vector.shape_cast %133 : vector<128x32xf32> to vector<1x128x32xf32>
    %135 = vector.extract_strided_slice %116 {offsets = [0, 0, 16], sizes = [4, 128, 16], strides = [1, 1, 1]} : vector<4x128x32xf32> to vector<4x128x16xf32>
    %cst_54 = arith.constant 0.000000e+00 : f32
    %136 = vector.broadcast %cst_54 : f32 to vector<4x128x16xf32>
    %137 = arith.subf %136, %135 : vector<4x128x16xf32>
    %138 = vector.extract_strided_slice %116 {offsets = [0, 0, 0], sizes = [4, 128, 16], strides = [1, 1, 1]} : vector<4x128x32xf32> to vector<4x128x16xf32>
    %139 = tpu.concatenate %137, %138 in 2 : vector<4x128x16xf32>, vector<4x128x16xf32> -> vector<4x128x32xf32>
    %140 = vector.broadcast %132 : vector<1x128x32xf32> to vector<4x128x32xf32>
    %141 = arith.mulf %116, %140 : vector<4x128x32xf32>
    %142 = vector.broadcast %134 : vector<1x128x32xf32> to vector<4x128x32xf32>
    %143 = arith.mulf %139, %142 : vector<4x128x32xf32>
    %144 = arith.addf %141, %143 : vector<4x128x32xf32>
    %145 = vector.extract_strided_slice %130 {offsets = [0, 0, 16], sizes = [4, 128, 16], strides = [1, 1, 1]} : vector<4x128x32xf32> to vector<4x128x16xf32>
    %cst_55 = arith.constant 0.000000e+00 : f32
    %146 = vector.broadcast %cst_55 : f32 to vector<4x128x16xf32>
    %147 = arith.subf %146, %145 : vector<4x128x16xf32>
    %148 = vector.extract_strided_slice %130 {offsets = [0, 0, 0], sizes = [4, 128, 16], strides = [1, 1, 1]} : vector<4x128x32xf32> to vector<4x128x16xf32>
    %149 = tpu.concatenate %147, %148 in 2 : vector<4x128x16xf32>, vector<4x128x16xf32> -> vector<4x128x32xf32>
    %150 = vector.broadcast %132 : vector<1x128x32xf32> to vector<4x128x32xf32>
    %151 = arith.mulf %130, %150 : vector<4x128x32xf32>
    %152 = vector.broadcast %134 : vector<1x128x32xf32> to vector<4x128x32xf32>
    %153 = arith.mulf %149, %152 : vector<4x128x32xf32>
    %154 = arith.addf %151, %153 : vector<4x128x32xf32>
    %155 = arith.truncf %144 : vector<4x128x32xf32> to vector<4x128x32xbf16>
    %156 = arith.truncf %154 : vector<4x128x32xf32> to vector<4x128x32xbf16>
    %157 = arith.truncf %102 : vector<4x128x32xf32> to vector<4x128x32xbf16>
    "tpu.trace_start"() <{level = 10 : i32, message = "hqd,hkd->hqk"}> : () -> ()
    %cst_56 = arith.constant dense<0.000000e+00> : vector<4x128x128xf32>
    %158 = tpu.matmul %155, %156, %cst_56 {dimension_numbers = #tpu.dot_dimension_numbers<[2], [2], [1], [1], [0, 0, 0, 1, 1, 1], [0], [0]>} : vector<4x128x32xbf16>, vector<4x128x32xbf16>, vector<4x128x128xf32> -> vector<4x128x128xf32>
    "tpu.trace_stop"() : () -> ()
    %cst_57 = arith.constant 0.176776692 : f32
    %159 = vector.broadcast %cst_57 : f32 to vector<4x128x128xf32>
    %160 = arith.mulf %158, %159 : vector<4x128x128xf32>
    %cst_58 = arith.constant dense<0xFF800000> : vector<4x128xf32>
    %161 = vector.multi_reduction <maximumf>, %160, %cst_58 [2] : vector<4x128x128xf32> to vector<4x128xf32>
    %162 = vector.shape_cast %161 : vector<4x128xf32> to vector<4x128x1xf32>
    %163 = vector.broadcast %162 : vector<4x128x1xf32> to vector<4x128x128xf32>
    %164 = arith.subf %160, %163 : vector<4x128x128xf32>
    %165 = math.exp %164 : vector<4x128x128xf32>
    %cst_59 = arith.constant dense<0.000000e+00> : vector<4x128xf32>
    %166 = vector.multi_reduction <add>, %165, %cst_59 [2] : vector<4x128x128xf32> to vector<4x128xf32>
    %167 = vector.shape_cast %166 : vector<4x128xf32> to vector<4x128x1xf32>
    %168 = tpu.reciprocal %167 {approx = true} : vector<4x128x1xf32> -> vector<4x128x1xf32>
    %169 = vector.broadcast %168 : vector<4x128x1xf32> to vector<4x128x128xf32>
    %170 = arith.mulf %165, %169 : vector<4x128x128xf32>
    %171 = arith.truncf %170 : vector<4x128x128xf32> to vector<4x128x128xbf16>
    "tpu.trace_start"() <{level = 10 : i32, message = "hqk,hkd->hqd"}> : () -> ()
    %cst_60 = arith.constant dense<0.000000e+00> : vector<4x128x32xf32>
    %172 = tpu.matmul %171, %157, %cst_60 {dimension_numbers = #tpu.dot_dimension_numbers<[2], [1], [1], [2], [0, 0, 0, 1, 1, 2], [0], [0]>} : vector<4x128x128xbf16>, vector<4x128x32xbf16>, vector<4x128x32xf32> -> vector<4x128x32xf32>
    "tpu.trace_stop"() : () -> ()
    %173 = vector.extract_strided_slice %172 {offsets = [0, 0, 0], sizes = [1, 128, 32], strides = [1, 1, 1]} : vector<4x128x32xf32> to vector<1x128x32xf32>
    %174 = vector.shape_cast %173 : vector<1x128x32xf32> to vector<128x32xf32>
    %175 = vector.extract_strided_slice %172 {offsets = [1, 0, 0], sizes = [1, 128, 32], strides = [1, 1, 1]} : vector<4x128x32xf32> to vector<1x128x32xf32>
    %176 = vector.shape_cast %175 : vector<1x128x32xf32> to vector<128x32xf32>
    %177 = vector.extract_strided_slice %172 {offsets = [2, 0, 0], sizes = [1, 128, 32], strides = [1, 1, 1]} : vector<4x128x32xf32> to vector<1x128x32xf32>
    %178 = vector.shape_cast %177 : vector<1x128x32xf32> to vector<128x32xf32>
    %179 = vector.extract_strided_slice %172 {offsets = [3, 0, 0], sizes = [1, 128, 32], strides = [1, 1, 1]} : vector<4x128x32xf32> to vector<1x128x32xf32>
    %180 = vector.shape_cast %179 : vector<1x128x32xf32> to vector<128x32xf32>
    %181 = tpu.concatenate %174, %176, %178, %180 in 1 : vector<128x32xf32>, vector<128x32xf32>, vector<128x32xf32>, vector<128x32xf32> -> vector<128x128xf32>
    %182 = arith.truncf %181 : vector<128x128xf32> to vector<128x128xbf16>
    %c0_61 = arith.constant 0 : index
    %c0_62 = arith.constant 0 : index
    %183 = vector.load %arg17[%c0_61, %c0_62] : memref<128x128xbf16, #tpu.memory_space<vmem>>, vector<128x128xbf16>
    %cst_63 = arith.constant dense<0.000000e+00> : vector<128x128xf32>
    %184 = tpu.matmul %182, %183, %cst_63 {dimension_numbers = #tpu.dot_dimension_numbers<[1], [0], [0], [1], [0, 0, 1, 1], [], []>} : vector<128x128xbf16>, vector<128x128xbf16>, vector<128x128xf32> -> vector<128x128xf32>
    %185 = arith.truncf %60 : vector<128x512xf32> to vector<128x512xbf16>
    %c0_64 = arith.constant 0 : index
    %c0_65 = arith.constant 0 : index
    %186 = vector.load %arg18[%c0_64, %c0_65] : memref<512x128xbf16, #tpu.memory_space<vmem>>, vector<512x128xbf16>
    %cst_66 = arith.constant dense<0.000000e+00> : vector<128x128xf32>
    %187 = tpu.matmul %185, %186, %cst_66 {dimension_numbers = #tpu.dot_dimension_numbers<[1], [0], [0], [1], [0, 0, 1, 1], [], []>} : vector<128x512xbf16>, vector<512x128xbf16>, vector<128x128xf32> -> vector<128x128xf32>
    %188 = arith.addf %184, %187 : vector<128x128xf32>
    %c0_67 = arith.constant 0 : index
    %c0_68 = arith.constant 0 : index
    %189 = vector.load %arg19[%c0_67, %c0_68] : memref<1x128xf32, #tpu.memory_space<vmem>>, vector<1x128xf32>
    %190 = vector.broadcast %189 : vector<1x128xf32> to vector<128x128xf32>
    %191 = arith.addf %188, %190 : vector<128x128xf32>
    %192 = vector.broadcast %17 : vector<1x128xf32> to vector<128x128xf32>
    %193 = arith.mulf %192, %191 : vector<128x128xf32>
    %194 = arith.addf %1, %193 : vector<128x128xf32>
    %c0_69 = arith.constant 0 : index
    %c0_70 = arith.constant 0 : index
    %c0_71 = arith.constant 0 : index
    %195 = vector.load %arg20[%c0_69, %c0_70, %c0_71] : memref<1x128x128xf32, #tpu.memory_space<vmem>>, vector<1x128x128xf32>
    %196 = vector.shape_cast %195 : vector<1x128x128xf32> to vector<128x128xf32>
    %197 = vector.shape_cast %194 : vector<128x128xf32> to vector<1x128x128xf32>
    tpu.vector_store %arg20[%c0_69, %c0_70, %c0_71], %197 {strides = array<i32>} : memref<1x128x128xf32, #tpu.memory_space<vmem>>, vector<1x128x128xf32>,
    return
  }
  func.func @transform_0(%arg0: i32) -> (i32, i32, i32) {
    %c0_i32 = arith.constant 0 : i32
    %c0_i32_0 = arith.constant 0 : i32
    %c0_i32_1 = arith.constant 0 : i32
    return %arg0, %c0_i32, %c0_i32_0 : i32, i32, i32
  }
  func.func @transform_1(%arg0: i32) -> (i32, i32, i32) {
    %c0_i32 = arith.constant 0 : i32
    %c0_i32_0 = arith.constant 0 : i32
    %c0_i32_1 = arith.constant 0 : i32
    return %arg0, %c0_i32, %c0_i32_0 : i32, i32, i32
  }
  func.func @transform_2(%arg0: i32) -> (i32, i32) {
    %c0_i32 = arith.constant 0 : i32
    %c0_i32_0 = arith.constant 0 : i32
    %c0_i32_1 = arith.constant 0 : i32
    return %c0_i32, %c0_i32_0 : i32, i32
  }
  func.func @transform_3(%arg0: i32) -> (i32, i32) {
    %c0_i32 = arith.constant 0 : i32
    %c0_i32_0 = arith.constant 0 : i32
    %c0_i32_1 = arith.constant 0 : i32
    return %c0_i32, %c0_i32_0 : i32, i32
  }
  func.func @transform_4(%arg0: i32) -> (i32, i32) {
    %c0_i32 = arith.constant 0 : i32
    %c0_i32_0 = arith.constant 0 : i32
    %c0_i32_1 = arith.constant 0 : i32
    return %c0_i32, %c0_i32_0 : i32, i32
  }
  func.func @transform_5(%arg0: i32) -> (i32, i32) {
    %c0_i32 = arith.constant 0 : i32
    %c0_i32_0 = arith.constant 0 : i32
    %c0_i32_1 = arith.constant 0 : i32
    return %c0_i32, %c0_i32_0 : i32, i32
  }
  func.func @transform_6(%arg0: i32) -> (i32, i32) {
    %c0_i32 = arith.constant 0 : i32
    %c0_i32_0 = arith.constant 0 : i32
    %c0_i32_1 = arith.constant 0 : i32
    return %c0_i32, %c0_i32_0 : i32, i32
  }
  func.func @transform_7(%arg0: i32) -> (i32, i32) {
    %c0_i32 = arith.constant 0 : i32
    %c0_i32_0 = arith.constant 0 : i32
    %c0_i32_1 = arith.constant 0 : i32
    return %c0_i32, %c0_i32_0 : i32, i32
  }
  func.func @transform_8(%arg0: i32) -> (i32, i32) {
    %c0_i32 = arith.constant 0 : i32
    %c0_i32_0 = arith.constant 0 : i32
    %c0_i32_1 = arith.constant 0 : i32
    return %c0_i32, %c0_i32_0 : i32, i32
  }
  func.func @transform_9(%arg0: i32) -> (i32, i32) {
    %c0_i32 = arith.constant 0 : i32
    %c0_i32_0 = arith.constant 0 : i32
    %c0_i32_1 = arith.constant 0 : i32
    return %c0_i32, %c0_i32_0 : i32, i32
  }
  func.func @transform_10(%arg0: i32) -> (i32, i32) {
    %c0_i32 = arith.constant 0 : i32
    %c0_i32_0 = arith.constant 0 : i32
    %c0_i32_1 = arith.constant 0 : i32
    return %c0_i32, %c0_i32_0 : i32, i32
  }
  func.func @transform_11(%arg0: i32) -> (i32, i32) {
    %c0_i32 = arith.constant 0 : i32
    %c0_i32_0 = arith.constant 0 : i32
    %c0_i32_1 = arith.constant 0 : i32
    return %c0_i32, %c0_i32_0 : i32, i32
  }
  func.func @transform_12(%arg0: i32) -> (i32, i32) {
    %c0_i32 = arith.constant 0 : i32
    %c0_i32_0 = arith.constant 0 : i32
    %c0_i32_1 = arith.constant 0 : i32
    return %c0_i32, %c0_i32_0 : i32, i32
  }
  func.func @transform_13(%arg0: i32) -> (i32, i32) {
    %c0_i32 = arith.constant 0 : i32
    %c0_i32_0 = arith.constant 0 : i32
    %c0_i32_1 = arith.constant 0 : i32
    return %c0_i32, %c0_i32_0 : i32, i32
  }
  func.func @transform_14(%arg0: i32) -> (i32, i32) {
    %c0_i32 = arith.constant 0 : i32
    %c0_i32_0 = arith.constant 0 : i32
    %c0_i32_1 = arith.constant 0 : i32
    return %c0_i32, %c0_i32_0 : i32, i32
  }
  func.func @transform_15(%arg0: i32) -> (i32, i32) {
    %c0_i32 = arith.constant 0 : i32
    %c0_i32_0 = arith.constant 0 : i32
    %c0_i32_1 = arith.constant 0 : i32
    return %c0_i32, %c0_i32_0 : i32, i32
  }
  func.func @transform_16(%arg0: i32) -> (i32, i32) {
    %c0_i32 = arith.constant 0 : i32
    %c0_i32_0 = arith.constant 0 : i32
    %c0_i32_1 = arith.constant 0 : i32
    return %c0_i32, %c0_i32_0 : i32, i32
  }
  func.func @transform_17(%arg0: i32) -> (i32, i32) {
    %c0_i32 = arith.constant 0 : i32
    %c0_i32_0 = arith.constant 0 : i32
    %c0_i32_1 = arith.constant 0 : i32
    return %c0_i32, %c0_i32_0 : i32, i32
  }
  func.func @transform_18(%arg0: i32) -> (i32, i32) {
    %c0_i32 = arith.constant 0 : i32
    %c0_i32_0 = arith.constant 0 : i32
    %c0_i32_1 = arith.constant 0 : i32
    return %c0_i32, %c0_i32_0 : i32, i32
  }
  func.func @transform_19(%arg0: i32) -> (i32, i32, i32) {
    %c0_i32 = arith.constant 0 : i32
    %c0_i32_0 = arith.constant 0 : i32
    %c0_i32_1 = arith.constant 0 : i32
    return %arg0, %c0_i32, %c0_i32_0 : i32, i32, i32
  }
}

</mosaic_0001>

<llo_original>
// kernel: tpu_custom_call.1
$region0: #{tpu_custom_call.1}
  #allocation0 [shape = 'u32[]', space=smem, size = 0x4, offset = 0x4, fixed_abs, tag = 'smem constant byte address 0x4 - core index']
  #allocation1 [shape = 'u32[72,128]{1,0:T(1,128)}', space=vmem, size = 0x9000, scoped, tag = 'internal scratch']
  %s0 = inlined_call_operand.vmem [shape: f32[2,128,128], index: 0, kind: input, shape index: {}]
  %s1 = inlined_call_operand.hbm [shape: f32[2,1,128], index: 1, kind: input, shape index: {}]
  %s2 = inlined_call_operand.vmem [shape: f32[128,32], index: 2, kind: input, shape index: {}]
  %s3 = inlined_call_operand.vmem [shape: f32[128,32], index: 3, kind: input, shape index: {}]
  %s4 = inlined_call_operand.hbm [shape: bf16[128,384], index: 4, kind: input, shape index: {}]
  %s5 = inlined_call_operand.vmem [shape: f32[1,384], index: 5, kind: input, shape index: {}]
  %s6 = inlined_call_operand.hbm [shape: bf16[128,512], index: 6, kind: input, shape index: {}]
  %s7 = inlined_call_operand.hbm [shape: f32[1,512], index: 7, kind: input, shape index: {}]
  %s8 = inlined_call_operand.vmem [shape: bf16[128,128], index: 8, kind: input, shape index: {}]
  %s9 = inlined_call_operand.vmem [shape: f32[1,128], index: 9, kind: input, shape index: {}]
  %s10 = inlined_call_operand.hbm [shape: bf16[128,128], index: 10, kind: input, shape index: {}]
  %s11 = inlined_call_operand.vmem [shape: f32[1,128], index: 11, kind: input, shape index: {}]
  %s12 = inlined_call_operand.hbm [shape: bf16[128,128], index: 12, kind: input, shape index: {}]
  %s13 = inlined_call_operand.vmem [shape: f32[1,128], index: 13, kind: input, shape index: {}]
  %s14 = inlined_call_operand.vmem [shape: f32[1,32], index: 14, kind: input, shape index: {}]
  %s15 = inlined_call_operand.vmem [shape: f32[1,32], index: 15, kind: input, shape index: {}]
  %s16 = inlined_call_operand.hbm [shape: bf16[128,128], index: 16, kind: input, shape index: {}]
  %s17 = inlined_call_operand.hbm [shape: bf16[512,128], index: 17, kind: input, shape index: {}]
  %s18 = inlined_call_operand.vmem [shape: f32[1,128], index: 18, kind: input, shape index: {}]
  %s19 = inlined_call_operand.hbm [shape: f32[2,128,128], index: 19, kind: output, shape index: {}]
  %s20 = sld [smem:[#allocation0]]
  $region141: #{tpu_custom_call.1} parent=0
    _
  %s22 = ssub.s32 1, %s20
  %s23 = scalar_select 0, %s22, %s20
  $region1: #{tpu_custom_call.1} parent=0
    #allocation2 [shape = 'u8[1024]{0}', space=vmem, size = 0x400, scoped, tag = 'input window, operand 1']
    #allocation3 [shape = 's32[2]{0}', space=sflag, size = 0x8, scoped, tag = 'scoped memory for tpu_custom_call.1']
    #allocation4 [shape = 's32[2]{0}', space=sflag, size = 0x8, scoped, tag = 'scoped memory for tpu_custom_call.1']
    #allocation5 [shape = 'u8[98304]{0}', space=vmem, size = 0x18000, scoped, tag = 'input window, operand 4, single buffered']
    #allocation6 [shape = 's32[1]{0}', space=sflag, size = 0x4, scoped, tag = 'scoped memory for tpu_custom_call.1']
    #allocation7 [shape = 'u8[131072]{0}', space=vmem, size = 0x20000, scoped, tag = 'input window, operand 6, single buffered']
    #allocation8 [shape = 'u8[2048]{0}', space=vmem, size = 0x800, scoped, tag = 'input window, operand 7, single buffered']
    #allocation9 [shape = 's32[1]{0}', space=sflag, size = 0x4, scoped, tag = 'scoped memory for tpu_custom_call.1']
    #allocation10 [shape = 'u8[32768]{0}', space=vmem, size = 0x8000, scoped, tag = 'input window, operand 10, single buffered']
    #allocation11 [shape = 'u8[32768]{0}', space=vmem, size = 0x8000, scoped, tag = 'input window, operand 12, single buffered']
    #allocation12 [shape = 's32[1]{0}', space=sflag, size = 0x4, scoped, tag = 'scoped memory for tpu_custom_call.1']
    #allocation13 [shape = 'u8[32768]{0}', space=vmem, size = 0x8000, scoped, tag = 'input window, operand 16, single buffered']
    #allocation14 [shape = 'u8[131072]{0}', space=vmem, size = 0x20000, scoped, tag = 'input window, operand 17, single buffered']
    #allocation15 [shape = 's32[1]{0}', space=sflag, size = 0x4, scoped, tag = 'scoped memory for tpu_custom_call.1']
    #allocation16 [shape = 'u8[131072]{0}', space=vmem, size = 0x20000, scoped, tag = 'output window, operand 0']
    %24 = vsyncpa [#allocation3], 0
    %s25 = scalar_lea.sflag [#allocation3], 1
    %26 = vsyncpa %s25, 0
    %27 = vsyncpa [#allocation6], 0
    %28 = vsyncpa [#allocation9], 0
    %29 = vsyncpa [#allocation12], 0
    %30 = vsyncpa [#allocation15], 0
    %31 = vsyncpa [#allocation4], 0
    %s32 = scalar_lea.sflag [#allocation4], 1
    %33 = vsyncpa %s32, 0
    loop: start=0, step=1, limit=4
    $region2: #{tpu_custom_call.1} parent=1 // loop_pre_header
      _
    $region3: #{tpu_custom_call.1} parent=1 // loop_header
      %s35 = sphi 0, %s39
      %p36 = scmp.ge.s32.totalorder %s35, 4
      %s45 = sphi 0, %s47
      %s48 = sphi 0, %s45
      %s49 = sphi 0, %s48
      %s65 = sphi 0, %s49
      %s71 = sphi 0, %s73
      %s74 = sphi 0, %s71
      %s75 = sphi 0, %s74
      %s91 = sphi 0, %s75
      %s95 = sphi 0, %s95
      %s97 = sphi 0, %s95
      %s98 = sphi 0, %s97
      %s112 = sphi 0, %s98
      %s116 = sphi 0, %s116
      %s118 = sphi 0, %s116
      %s119 = sphi 0, %s118
      %s133 = sphi 0, %s119
      %s137 = sphi 0, %s137
      %s139 = sphi 0, %s137
      %s140 = sphi 0, %s139
      %s154 = sphi 0, %s140
      %s158 = sphi 0, %s158
      %s160 = sphi 0, %s158
      %s161 = sphi 0, %s160
      %s175 = sphi 0, %s161
      %s179 = sphi 0, %s179
      %s181 = sphi 0, %s179
      %s182 = sphi 0, %s181
      %s196 = sphi 0, %s182
      %s200 = sphi 0, %s200
      %s202 = sphi 0, %s200
      %s203 = sphi 0, %s202
      %s217 = sphi 0, %s203
      %s221 = sphi 0, %s221
      %s223 = sphi 0, %s221
      %s224 = sphi 0, %s223
      %s238 = sphi 0, %s224
      %s242 = sphi 0, %s242
      %s244 = sphi 0, %s242
      %s245 = sphi 0, %s244
      %s259 = sphi 0, %s245
      %s263 = sphi 0, %s263
      %s265 = sphi 0, %s263
      %s266 = sphi 0, %s265
      %s280 = sphi 0, %s266
      %s284 = sphi 0, %s284
      %s286 = sphi 0, %s284
      %s287 = sphi 0, %s286
      %s301 = sphi 0, %s287
      %s305 = sphi 0, %s305
      %s307 = sphi 0, %s305
      %s308 = sphi 0, %s307
      %s322 = sphi 0, %s308
      %s326 = sphi 0, %s326
      %s328 = sphi 0, %s326
      %s329 = sphi 0, %s328
      %s343 = sphi 0, %s329
      %s347 = sphi 0, %s347
      %s349 = sphi 0, %s347
      %s350 = sphi 0, %s349
      %s364 = sphi 0, %s350
      %s368 = sphi 0, %s368
      %s370 = sphi 0, %s368
      %s371 = sphi 0, %s370
      %s385 = sphi 0, %s371
      %s389 = sphi 0, %s389
      %s391 = sphi 0, %s389
      %s392 = sphi 0, %s391
      %s406 = sphi 0, %s392
      %s410 = sphi 0, %s410
      %s412 = sphi 0, %s410
      %s413 = sphi 0, %s412
      %s427 = sphi 0, %s413
      %s431 = sphi 0, %s431
      %s433 = sphi 0, %s431
      %s434 = sphi 0, %s433
      %s448 = sphi 0, %s434
      %s454 = sphi 0, %s456
      %s457 = sphi 0, %s454
      %s458 = sphi 0, %s457
      %s474 = sphi 0, %s458
    $region4: #{tpu_custom_call.1} parent=1 // loop_header_branch
      %38 = sbr.rel (%p36) target = $region8
    $region5: #{tpu_custom_call.1} parent=1 // loop_body
      %s40 = ssub.s32 %s35, 1
      %s41 = ssub.s32 %s35, 2
      %s42 = sadd.s32 %s35, 1
      %s43 = ssub.s32 %s35, %s42
      %p44 = scmp.eq.s32.totalorder %s43, 0
      %s46 = sadd.s32 %s45, 1
      %s47 = scalar_select %p44, %s45, %s46
      %p50 = pneg %p44
      %p51 = scmp.eq.s32.totalorder %s35, 1
      %p52 = por %p50, %p51
      %p53 = scmp.ne.s32.totalorder %s45, %s48
      %p54 = scmp.eq.s32.totalorder %s35, 0
      %p55 = por %p53, %p54
      %p56 = scmp.ne.s32.totalorder %s45, %s48
      %p57 = scmp.eq.s32.totalorder %s40, 1
      %p58 = por %p56, %p57
      %p59 = scmp.ne.s32.totalorder %s48, %s49
      %p60 = scmp.eq.s32.totalorder %s40, 0
      %p61 = por %p59, %p60
      %p62 = scmp.ne.s32.totalorder %s48, %s49
      %p63 = scmp.eq.s32.totalorder %s41, 1
      %p64 = por %p62, %p63
      %p66 = scmp.ne.s32.totalorder %s49, %s65
      %p67 = scmp.eq.s32.totalorder %s41, 0
      %p68 = por %p66, %p67
      %s69 = ssub.s32 %s35, %s42
      %p70 = scmp.eq.s32.totalorder %s69, 0
      %s72 = sadd.s32 %s71, 1
      %s73 = scalar_select %p70, %s71, %s72
      %p76 = pneg %p70
      %p77 = scmp.eq.s32.totalorder %s35, 1
      %p78 = por %p76, %p77
      %p79 = scmp.ne.s32.totalorder %s71, %s74
      %p80 = scmp.eq.s32.totalorder %s35, 0
      %p81 = por %p79, %p80
      %p82 = scmp.ne.s32.totalorder %s71, %s74
      %p83 = scmp.eq.s32.totalorder %s40, 1
      %p84 = por %p82, %p83
      %p85 = scmp.ne.s32.totalorder %s74, %s75
      %p86 = scmp.eq.s32.totalorder %s40, 0
      %p87 = por %p85, %p86
      %p88 = scmp.ne.s32.totalorder %s74, %s75
      %p89 = scmp.eq.s32.totalorder %s41, 1
      %p90 = por %p88, %p89
      %p92 = scmp.ne.s32.totalorder %s75, %s91
      %p93 = scmp.eq.s32.totalorder %s41, 0
      %p94 = por %p92, %p93
      %s96 = sadd.s32 %s95, 1
      %p99 = scmp.eq.s32.totalorder %s35, 1
      %p100 = scmp.ne.s32.totalorder %s95, %s97
      %p101 = scmp.eq.s32.totalorder %s35, 0
      %p102 = por %p100, %p101
      %p103 = scmp.ne.s32.totalorder %s95, %s97
      %p104 = scmp.eq.s32.totalorder %s40, 1
      %p105 = por %p103, %p104
      %p106 = scmp.ne.s32.totalorder %s97, %s98
      %p107 = scmp.eq.s32.totalorder %s40, 0
      %p108 = por %p106, %p107
      %p109 = scmp.ne.s32.totalorder %s97, %s98
      %p110 = scmp.eq.s32.totalorder %s41, 1
      %p111 = por %p109, %p110
      %p113 = scmp.ne.s32.totalorder %s98, %s112
      %p114 = scmp.eq.s32.totalorder %s41, 0
      %p115 = por %p113, %p114
      %s117 = sadd.s32 %s116, 1
      %p120 = scmp.eq.s32.totalorder %s35, 1
      %p121 = scmp.ne.s32.totalorder %s116, %s118
      %p122 = scmp.eq.s32.totalorder %s35, 0
      %p123 = por %p121, %p122
      %p124 = scmp.ne.s32.totalorder %s116, %s118
      %p125 = scmp.eq.s32.totalorder %s40, 1
      %p126 = por %p124, %p125
      %p127 = scmp.ne.s32.totalorder %s118, %s119
      %p128 = scmp.eq.s32.totalorder %s40, 0
      %p129 = por %p127, %p128
      %p130 = scmp.ne.s32.totalorder %s118, %s119
      %p131 = scmp.eq.s32.totalorder %s41, 1
      %p132 = por %p130, %p131
      %p134 = scmp.ne.s32.totalorder %s119, %s133
      %p135 = scmp.eq.s32.totalorder %s41, 0
      %p136 = por %p134, %p135
      %s138 = sadd.s32 %s137, 1
      %p141 = scmp.eq.s32.totalorder %s35, 1
      %p142 = scmp.ne.s32.totalorder %s137, %s139
      %p143 = scmp.eq.s32.totalorder %s35, 0
      %p144 = por %p142, %p143
      %p145 = scmp.ne.s32.totalorder %s137, %s139
      %p146 = scmp.eq.s32.totalorder %s40, 1
      %p147 = por %p145, %p146
      %p148 = scmp.ne.s32.totalorder %s139, %s140
      %p149 = scmp.eq.s32.totalorder %s40, 0
      %p150 = por %p148, %p149
      %p151 = scmp.ne.s32.totalorder %s139, %s140
      %p152 = scmp.eq.s32.totalorder %s41, 1
      %p153 = por %p151, %p152
      %p155 = scmp.ne.s32.totalorder %s140, %s154
      %p156 = scmp.eq.s32.totalorder %s41, 0
      %p157 = por %p155, %p156
      %s159 = sadd.s32 %s158, 1
      %p162 = scmp.eq.s32.totalorder %s35, 1
      %p163 = scmp.ne.s32.totalorder %s158, %s160
      %p164 = scmp.eq.s32.totalorder %s35, 0
      %p165 = por %p163, %p164
      %p166 = scmp.ne.s32.totalorder %s158, %s160
      %p167 = scmp.eq.s32.totalorder %s40, 1
      %p168 = por %p166, %p167
      %p169 = scmp.ne.s32.totalorder %s160, %s161
      %p170 = scmp.eq.s32.totalorder %s40, 0
      %p171 = por %p169, %p170
      %p172 = scmp.ne.s32.totalorder %s160, %s161
      %p173 = scmp.eq.s32.totalorder %s41, 1
      %p174 = por %p172, %p173
      %p176 = scmp.ne.s32.totalorder %s161, %s175
      %p177 = scmp.eq.s32.totalorder %s41, 0
      %p178 = por %p176, %p177
      %s180 = sadd.s32 %s179, 1
      %p183 = scmp.eq.s32.totalorder %s35, 1
      %p184 = scmp.ne.s32.totalorder %s179, %s181
      %p185 = scmp.eq.s32.totalorder %s35, 0
      %p186 = por %p184, %p185
      %p187 = scmp.ne.s32.totalorder %s179, %s181
      %p188 = scmp.eq.s32.totalorder %s40, 1
      %p189 = por %p187, %p188
      %p190 = scmp.ne.s32.totalorder %s181, %s182
      %p191 = scmp.eq.s32.totalorder %s40, 0
      %p192 = por %p190, %p191
      %p193 = scmp.ne.s32.totalorder %s181, %s182
      %p194 = scmp.eq.s32.totalorder %s41, 1
      %p195 = por %p193, %p194
      %p197 = scmp.ne.s32.totalorder %s182, %s196
      %p198 = scmp.eq.s32.totalorder %s41, 0
      %p199 = por %p197, %p198
      %s201 = sadd.s32 %s200, 1
      %p204 = scmp.eq.s32.totalorder %s35, 1
      %p205 = scmp.ne.s32.totalorder %s200, %s202
      %p206 = scmp.eq.s32.totalorder %s35, 0
      %p207 = por %p205, %p206
      %p208 = scmp.ne.s32.totalorder %s200, %s202
      %p209 = scmp.eq.s32.totalorder %s40, 1
      %p210 = por %p208, %p209
      %p211 = scmp.ne.s32.totalorder %s202, %s203
      %p212 = scmp.eq.s32.totalorder %s40, 0
      %p213 = por %p211, %p212
      %p214 = scmp.ne.s32.totalorder %s202, %s203
      %p215 = scmp.eq.s32.totalorder %s41, 1
      %p216 = por %p214, %p215
      %p218 = scmp.ne.s32.totalorder %s203, %s217
      %p219 = scmp.eq.s32.totalorder %s41, 0
      %p220 = por %p218, %p219
      %s222 = sadd.s32 %s221, 1
      %p225 = scmp.eq.s32.totalorder %s35, 1
      %p226 = scmp.ne.s32.totalorder %s221, %s223
      %p227 = scmp.eq.s32.totalorder %s35, 0
      %p228 = por %p226, %p227
      %p229 = scmp.ne.s32.totalorder %s221, %s223
      %p230 = scmp.eq.s32.totalorder %s40, 1
      %p231 = por %p229, %p230
      %p232 = scmp.ne.s32.totalorder %s223, %s224
      %p233 = scmp.eq.s32.totalorder %s40, 0
      %p234 = por %p232, %p233
      %p235 = scmp.ne.s32.totalorder %s223, %s224
      %p236 = scmp.eq.s32.totalorder %s41, 1
      %p237 = por %p235, %p236
      %p239 = scmp.ne.s32.totalorder %s224, %s238
      %p240 = scmp.eq.s32.totalorder %s41, 0
      %p241 = por %p239, %p240
      %s243 = sadd.s32 %s242, 1
      %p246 = scmp.eq.s32.totalorder %s35, 1
      %p247 = scmp.ne.s32.totalorder %s242, %s244
      %p248 = scmp.eq.s32.totalorder %s35, 0
      %p249 = por %p247, %p248
      %p250 = scmp.ne.s32.totalorder %s242, %s244
      %p251 = scmp.eq.s32.totalorder %s40, 1
      %p252 = por %p250, %p251
      %p253 = scmp.ne.s32.totalorder %s244, %s245
      %p254 = scmp.eq.s32.totalorder %s40, 0
      %p255 = por %p253, %p254
      %p256 = scmp.ne.s32.totalorder %s244, %s245
      %p257 = scmp.eq.s32.totalorder %s41, 1
      %p258 = por %p256, %p257
      %p260 = scmp.ne.s32.totalorder %s245, %s259
      %p261 = scmp.eq.s32.totalorder %s41, 0
      %p262 = por %p260, %p261
      %s264 = sadd.s32 %s263, 1
      %p267 = scmp.eq.s32.totalorder %s35, 1
      %p268 = scmp.ne.s32.totalorder %s263, %s265
      %p269 = scmp.eq.s32.totalorder %s35, 0
      %p270 = por %p268, %p269
      %p271 = scmp.ne.s32.totalorder %s263, %s265
      %p272 = scmp.eq.s32.totalorder %s40, 1
      %p273 = por %p271, %p272
      %p274 = scmp.ne.s32.totalorder %s265, %s266
      %p275 = scmp.eq.s32.totalorder %s40, 0
      %p276 = por %p274, %p275
      %p277 = scmp.ne.s32.totalorder %s265, %s266
      %p278 = scmp.eq.s32.totalorder %s41, 1
      %p279 = por %p277, %p278
      %p281 = scmp.ne.s32.totalorder %s266, %s280
      %p282 = scmp.eq.s32.totalorder %s41, 0
      %p283 = por %p281, %p282
      %s285 = sadd.s32 %s284, 1
      %p288 = scmp.eq.s32.totalorder %s35, 1
      %p289 = scmp.ne.s32.totalorder %s284, %s286
      %p290 = scmp.eq.s32.totalorder %s35, 0
      %p291 = por %p289, %p290
      %p292 = scmp.ne.s32.totalorder %s284, %s286
      %p293 = scmp.eq.s32.totalorder %s40, 1
      %p294 = por %p292, %p293
      %p295 = scmp.ne.s32.totalorder %s286, %s287
      %p296 = scmp.eq.s32.totalorder %s40, 0
      %p297 = por %p295, %p296
      %p298 = scmp.ne.s32.totalorder %s286, %s287
      %p299 = scmp.eq.s32.totalorder %s41, 1
      %p300 = por %p298, %p299
      %p302 = scmp.ne.s32.totalorder %s287, %s301
      %p303 = scmp.eq.s32.totalorder %s41, 0
      %p304 = por %p302, %p303
      %s306 = sadd.s32 %s305, 1
      %p309 = scmp.eq.s32.totalorder %s35, 1
      %p310 = scmp.ne.s32.totalorder %s305, %s307
      %p311 = scmp.eq.s32.totalorder %s35, 0
      %p312 = por %p310, %p311
      %p313 = scmp.ne.s32.totalorder %s305, %s307
      %p314 = scmp.eq.s32.totalorder %s40, 1
      %p315 = por %p313, %p314
      %p316 = scmp.ne.s32.totalorder %s307, %s308
      %p317 = scmp.eq.s32.totalorder %s40, 0
      %p318 = por %p316, %p317
      %p319 = scmp.ne.s32.totalorder %s307, %s308
      %p320 = scmp.eq.s32.totalorder %s41, 1
      %p321 = por %p319, %p320
      %p323 = scmp.ne.s32.totalorder %s308, %s322
      %p324 = scmp.eq.s32.totalorder %s41, 0
      %p325 = por %p323, %p324
      %s327 = sadd.s32 %s326, 1
      %p330 = scmp.eq.s32.totalorder %s35, 1
      %p331 = scmp.ne.s32.totalorder %s326, %s328
      %p332 = scmp.eq.s32.totalorder %s35, 0
      %p333 = por %p331, %p332
      %p334 = scmp.ne.s32.totalorder %s326, %s328
      %p335 = scmp.eq.s32.totalorder %s40, 1
      %p336 = por %p334, %p335
      %p337 = scmp.ne.s32.totalorder %s328, %s329
      %p338 = scmp.eq.s32.totalorder %s40, 0
      %p339 = por %p337, %p338
      %p340 = scmp.ne.s32.totalorder %s328, %s329
      %p341 = scmp.eq.s32.totalorder %s41, 1
      %p342 = por %p340, %p341
      %p344 = scmp.ne.s32.totalorder %s329, %s343
      %p345 = scmp.eq.s32.totalorder %s41, 0
      %p346 = por %p344, %p345
      %s348 = sadd.s32 %s347, 1
      %p351 = scmp.eq.s32.totalorder %s35, 1
      %p352 = scmp.ne.s32.totalorder %s347, %s349
      %p353 = scmp.eq.s32.totalorder %s35, 0
      %p354 = por %p352, %p353
      %p355 = scmp.ne.s32.totalorder %s347, %s349
      %p356 = scmp.eq.s32.totalorder %s40, 1
      %p357 = por %p355, %p356
      %p358 = scmp.ne.s32.totalorder %s349, %s350
      %p359 = scmp.eq.s32.totalorder %s40, 0
      %p360 = por %p358, %p359
      %p361 = scmp.ne.s32.totalorder %s349, %s350
      %p362 = scmp.eq.s32.totalorder %s41, 1
      %p363 = por %p361, %p362
      %p365 = scmp.ne.s32.totalorder %s350, %s364
      %p366 = scmp.eq.s32.totalorder %s41, 0
      %p367 = por %p365, %p366
      %s369 = sadd.s32 %s368, 1
      %p372 = scmp.eq.s32.totalorder %s35, 1
      %p373 = scmp.ne.s32.totalorder %s368, %s370
      %p374 = scmp.eq.s32.totalorder %s35, 0
      %p375 = por %p373, %p374
      %p376 = scmp.ne.s32.totalorder %s368, %s370
      %p377 = scmp.eq.s32.totalorder %s40, 1
      %p378 = por %p376, %p377
      %p379 = scmp.ne.s32.totalorder %s370, %s371
      %p380 = scmp.eq.s32.totalorder %s40, 0
      %p381 = por %p379, %p380
      %p382 = scmp.ne.s32.totalorder %s370, %s371
      %p383 = scmp.eq.s32.totalorder %s41, 1
      %p384 = por %p382, %p383
      %p386 = scmp.ne.s32.totalorder %s371, %s385
      %p387 = scmp.eq.s32.totalorder %s41, 0
      %p388 = por %p386, %p387
      %s390 = sadd.s32 %s389, 1
      %p393 = scmp.eq.s32.totalorder %s35, 1
      %p394 = scmp.ne.s32.totalorder %s389, %s391
      %p395 = scmp.eq.s32.totalorder %s35, 0
      %p396 = por %p394, %p395
      %p397 = scmp.ne.s32.totalorder %s389, %s391
      %p398 = scmp.eq.s32.totalorder %s40, 1
      %p399 = por %p397, %p398
      %p400 = scmp.ne.s32.totalorder %s391, %s392
      %p401 = scmp.eq.s32.totalorder %s40, 0
      %p402 = por %p400, %p401
      %p403 = scmp.ne.s32.totalorder %s391, %s392
      %p404 = scmp.eq.s32.totalorder %s41, 1
      %p405 = por %p403, %p404
      %p407 = scmp.ne.s32.totalorder %s392, %s406
      %p408 = scmp.eq.s32.totalorder %s41, 0
      %p409 = por %p407, %p408
      %s411 = sadd.s32 %s410, 1
      %p414 = scmp.eq.s32.totalorder %s35, 1
      %p415 = scmp.ne.s32.totalorder %s410, %s412
      %p416 = scmp.eq.s32.totalorder %s35, 0
      %p417 = por %p415, %p416
      %p418 = scmp.ne.s32.totalorder %s410, %s412
      %p419 = scmp.eq.s32.totalorder %s40, 1
      %p420 = por %p418, %p419
      %p421 = scmp.ne.s32.totalorder %s412, %s413
      %p422 = scmp.eq.s32.totalorder %s40, 0
      %p423 = por %p421, %p422
      %p424 = scmp.ne.s32.totalorder %s412, %s413
      %p425 = scmp.eq.s32.totalorder %s41, 1
      %p426 = por %p424, %p425
      %p428 = scmp.ne.s32.totalorder %s413, %s427
      %p429 = scmp.eq.s32.totalorder %s41, 0
      %p430 = por %p428, %p429
      %s432 = sadd.s32 %s431, 1
      %p435 = scmp.eq.s32.totalorder %s35, 1
      %p436 = scmp.ne.s32.totalorder %s431, %s433
      %p437 = scmp.eq.s32.totalorder %s35, 0
      %p438 = por %p436, %p437
      %p439 = scmp.ne.s32.totalorder %s431, %s433
      %p440 = scmp.eq.s32.totalorder %s40, 1
      %p441 = por %p439, %p440
      %p442 = scmp.ne.s32.totalorder %s433, %s434
      %p443 = scmp.eq.s32.totalorder %s40, 0
      %p444 = por %p442, %p443
      %p445 = scmp.ne.s32.totalorder %s433, %s434
      %p446 = scmp.eq.s32.totalorder %s41, 1
      %p447 = por %p445, %p446
      %p449 = scmp.ne.s32.totalorder %s434, %s448
      %p450 = scmp.eq.s32.totalorder %s41, 0
      %p451 = por %p449, %p450
      %s452 = ssub.s32 %s35, %s42
      %p453 = scmp.eq.s32.totalorder %s452, 0
      %s455 = sadd.s32 %s454, 1
      %s456 = scalar_select %p453, %s454, %s455
      %p459 = pneg %p453
      %p460 = scmp.eq.s32.totalorder %s35, 1
      %p461 = por %p459, %p460
      %p462 = scmp.ne.s32.totalorder %s454, %s457
      %p463 = scmp.eq.s32.totalorder %s35, 0
      %p464 = por %p462, %p463
      %p465 = scmp.ne.s32.totalorder %s454, %s457
      %p466 = scmp.eq.s32.totalorder %s40, 1
      %p467 = por %p465, %p466
      %p468 = scmp.ne.s32.totalorder %s457, %s458
      %p469 = scmp.eq.s32.totalorder %s40, 0
      %p470 = por %p468, %p469
      %p471 = scmp.ne.s32.totalorder %s457, %s458
      %p472 = scmp.eq.s32.totalorder %s41, 1
      %p473 = por %p471, %p472
      %p475 = scmp.ne.s32.totalorder %s458, %s474
      %p476 = scmp.eq.s32.totalorder %s41, 0
      %p477 = por %p475, %p476
      %p478 = scmp.le.s32.totalorder 1, %s35
      %p479 = scmp.lt.s32.totalorder %s35, 3
      %p480 = pnand %p478, %p479
      %p481 = pneg %p480
      // Predicated region
      $region9: #{tpu_custom_call.1} parent=5 // pred_check
        _
      $region10: #{tpu_custom_call.1} parent=5 // pred_check_branch
        %483 = sbr.rel (%p480) target = $region12
      $region11: #{tpu_custom_call.1} parent=5 // pred_region
        %s484 = ssub.s32 %s35, 1
        // Predicated region
        $region13: #{tpu_custom_call.1} parent=11 // pred_check
          %p485 = pneg %p108
        $region14: #{tpu_custom_call.1} parent=11 // pred_check_branch
          %487 = sbr.rel (%p485) target = $region16
        $region15: #{tpu_custom_call.1} parent=11 // pred_region
          _
        $region16: #{tpu_custom_call.1} parent=11 // pred_fallthru
          _
        // Predicated region
        $region17: #{tpu_custom_call.1} parent=11 // pred_check
          %p488 = pneg %p129
        $region18: #{tpu_custom_call.1} parent=11 // pred_check_branch
          %490 = sbr.rel (%p488) target = $region20
        $region19: #{tpu_custom_call.1} parent=11 // pred_region
          _
        $region20: #{tpu_custom_call.1} parent=11 // pred_fallthru
          _
        // Predicated region
        $region21: #{tpu_custom_call.1} parent=11 // pred_check
          %p491 = pneg %p150
        $region22: #{tpu_custom_call.1} parent=11 // pred_check_branch
          %493 = sbr.rel (%p491) target = $region24
        $region23: #{tpu_custom_call.1} parent=11 // pred_region
          %495 = vsyncadd [#allocation6], 0
          %s496 = sshll.u32 %s4, 4
          %s497 = int_to_ptr.hbm [resolvable:$true] %s496
          %s498 = sshll.u32 [#allocation5], 4
          %s499 = int_to_ptr.vmem [resolvable:$true] %s498
          %504 = dma.hbm_to_vmem [thread:$0]  %s497, 3072, %s499, [#allocation6], 192, 192, 12
        $region24: #{tpu_custom_call.1} parent=11 // pred_fallthru
          _
        // Predicated region
        $region25: #{tpu_custom_call.1} parent=11 // pred_check
          %p505 = pneg %p171
        $region26: #{tpu_custom_call.1} parent=11 // pred_check_branch
          %507 = sbr.rel (%p505) target = $region28
        $region27: #{tpu_custom_call.1} parent=11 // pred_region
          _
        $region28: #{tpu_custom_call.1} parent=11 // pred_fallthru
          _
        // Predicated region
        $region29: #{tpu_custom_call.1} parent=11 // pred_check
          %p508 = pneg %p192
        $region30: #{tpu_custom_call.1} parent=11 // pred_check_branch
          %510 = sbr.rel (%p508) target = $region32
        $region31: #{tpu_custom_call.1} parent=11 // pred_region
          %512 = vsyncadd [#allocation6], 0
          %s513 = sshll.u32 %s6, 4
          %s514 = int_to_ptr.hbm [resolvable:$true] %s513
          %s515 = sshll.u32 [#allocation7], 4
          %s516 = int_to_ptr.vmem [resolvable:$true] %s515
          %521 = dma.hbm_to_vmem [thread:$0]  %s514, 4096, %s516, [#allocation6], 256, 256, 16
        $region32: #{tpu_custom_call.1} parent=11 // pred_fallthru
          _
        // Predicated region
        $region33: #{tpu_custom_call.1} parent=11 // pred_check
          %p522 = pneg %p213
        $region34: #{tpu_custom_call.1} parent=11 // pred_check_branch
          %524 = sbr.rel (%p522) target = $region36
        $region35: #{tpu_custom_call.1} parent=11 // pred_region
          %526 = vsyncadd [#allocation9], 0
          %s528 = sshll.u32 %s7, 4
          %s529 = int_to_ptr.hbm [resolvable:$true] %s528
          %s530 = sshll.u32 [#allocation8], 4
          %s531 = int_to_ptr.vmem [resolvable:$true] %s530
          %533 = dma.hbm_to_vmem [thread:$0]  %s529, 64, %s531, [#allocation9]
        $region36: #{tpu_custom_call.1} parent=11 // pred_fallthru
          _
        // Predicated region
        $region37: #{tpu_custom_call.1} parent=11 // pred_check
          %p534 = pneg %p234
        $region38: #{tpu_custom_call.1} parent=11 // pred_check_branch
          %536 = sbr.rel (%p534) target = $region40
        $region39: #{tpu_custom_call.1} parent=11 // pred_region
          _
        $region40: #{tpu_custom_call.1} parent=11 // pred_fallthru
          _
        // Predicated region
        $region41: #{tpu_custom_call.1} parent=11 // pred_check
          %p537 = pneg %p255
        $region42: #{tpu_custom_call.1} parent=11 // pred_check_branch
          %539 = sbr.rel (%p537) target = $region44
        $region43: #{tpu_custom_call.1} parent=11 // pred_region
          _
        $region44: #{tpu_custom_call.1} parent=11 // pred_fallthru
          _
        // Predicated region
        $region45: #{tpu_custom_call.1} parent=11 // pred_check
          %p540 = pneg %p276
        $region46: #{tpu_custom_call.1} parent=11 // pred_check_branch
          %542 = sbr.rel (%p540) target = $region48
        $region47: #{tpu_custom_call.1} parent=11 // pred_region
          %544 = vsyncadd [#allocation9], 0
          %s545 = sshll.u32 %s10, 4
          %s546 = int_to_ptr.hbm [resolvable:$true] %s545
          %s547 = sshll.u32 [#allocation10], 4
          %s548 = int_to_ptr.vmem [resolvable:$true] %s547
          %553 = dma.hbm_to_vmem [thread:$0]  %s546, 1024, %s548, [#allocation9], 64, 64, 4
        $region48: #{tpu_custom_call.1} parent=11 // pred_fallthru
          _
        // Predicated region
        $region49: #{tpu_custom_call.1} parent=11 // pred_check
          %p554 = pneg %p297
        $region50: #{tpu_custom_call.1} parent=11 // pred_check_branch
          %556 = sbr.rel (%p554) target = $region52
        $region51: #{tpu_custom_call.1} parent=11 // pred_region
          _
        $region52: #{tpu_custom_call.1} parent=11 // pred_fallthru
          _
        // Predicated region
        $region53: #{tpu_custom_call.1} parent=11 // pred_check
          %p557 = pneg %p318
        $region54: #{tpu_custom_call.1} parent=11 // pred_check_branch
          %559 = sbr.rel (%p557) target = $region56
        $region55: #{tpu_custom_call.1} parent=11 // pred_region
          %561 = vsyncadd [#allocation12], 0
          %s562 = sshll.u32 %s12, 4
          %s563 = int_to_ptr.hbm [resolvable:$true] %s562
          %s564 = sshll.u32 [#allocation11], 4
          %s565 = int_to_ptr.vmem [resolvable:$true] %s564
          %570 = dma.hbm_to_vmem [thread:$0]  %s563, 1024, %s565, [#allocation12], 64, 64, 4
        $region56: #{tpu_custom_call.1} parent=11 // pred_fallthru
          _
        // Predicated region
        $region57: #{tpu_custom_call.1} parent=11 // pred_check
          %p571 = pneg %p339
        $region58: #{tpu_custom_call.1} parent=11 // pred_check_branch
          %573 = sbr.rel (%p571) target = $region60
        $region59: #{tpu_custom_call.1} parent=11 // pred_region
          _
        $region60: #{tpu_custom_call.1} parent=11 // pred_fallthru
          _
        // Predicated region
        $region61: #{tpu_custom_call.1} parent=11 // pred_check
          %p574 = pneg %p360
        $region62: #{tpu_custom_call.1} parent=11 // pred_check_branch
          %576 = sbr.rel (%p574) target = $region64
        $region63: #{tpu_custom_call.1} parent=11 // pred_region
          _
        $region64: #{tpu_custom_call.1} parent=11 // pred_fallthru
          _
        // Predicated region
        $region65: #{tpu_custom_call.1} parent=11 // pred_check
          %p577 = pneg %p381
        $region66: #{tpu_custom_call.1} parent=11 // pred_check_branch
          %579 = sbr.rel (%p577) target = $region68
        $region67: #{tpu_custom_call.1} parent=11 // pred_region
          _
        $region68: #{tpu_custom_call.1} parent=11 // pred_fallthru
          _
        // Predicated region
        $region69: #{tpu_custom_call.1} parent=11 // pred_check
          %p580 = pneg %p402
        $region70: #{tpu_custom_call.1} parent=11 // pred_check_branch
          %582 = sbr.rel (%p580) target = $region72
        $region71: #{tpu_custom_call.1} parent=11 // pred_region
          %584 = vsyncadd [#allocation12], 0
          %s585 = sshll.u32 %s16, 4
          %s586 = int_to_ptr.hbm [resolvable:$true] %s585
          %s587 = sshll.u32 [#allocation13], 4
          %s588 = int_to_ptr.vmem [resolvable:$true] %s587
          %593 = dma.hbm_to_vmem [thread:$0]  %s586, 1024, %s588, [#allocation12], 64, 64, 4
        $region72: #{tpu_custom_call.1} parent=11 // pred_fallthru
          _
        // Predicated region
        $region73: #{tpu_custom_call.1} parent=11 // pred_check
          %p594 = pneg %p423
        $region74: #{tpu_custom_call.1} parent=11 // pred_check_branch
          %596 = sbr.rel (%p594) target = $region76
        $region75: #{tpu_custom_call.1} parent=11 // pred_region
          %598 = vsyncadd [#allocation15], 0
          %s599 = sshll.u32 %s17, 4
          %s600 = int_to_ptr.hbm [resolvable:$true] %s599
          %s601 = sshll.u32 [#allocation14], 4
          %s602 = int_to_ptr.vmem [resolvable:$true] %s601
          %607 = dma.hbm_to_vmem [thread:$0]  %s600, 4096, %s602, [#allocation15], 64, 64, 4
        $region76: #{tpu_custom_call.1} parent=11 // pred_fallthru
          _
        // Predicated region
        $region77: #{tpu_custom_call.1} parent=11 // pred_check
          %p608 = pneg %p444
        $region78: #{tpu_custom_call.1} parent=11 // pred_check_branch
          %610 = sbr.rel (%p608) target = $region80
        $region79: #{tpu_custom_call.1} parent=11 // pred_region
          _
        $region80: #{tpu_custom_call.1} parent=11 // pred_fallthru
          _
      $region12: #{tpu_custom_call.1} parent=5 // pred_fallthru
        _
      %p611 = scmp.lt.s32.totalorder %s35, 2
      // Predicated region
      $region81: #{tpu_custom_call.1} parent=5 // pred_check
        %p612 = pneg %p611
      $region82: #{tpu_custom_call.1} parent=5 // pred_check_branch
        %614 = sbr.rel (%p612) target = $region84
      $region83: #{tpu_custom_call.1} parent=5 // pred_region
        // Predicated region
        $region85: #{tpu_custom_call.1} parent=83 // pred_check
          %p615 = pneg %p55
        $region86: #{tpu_custom_call.1} parent=83 // pred_check_branch
          %617 = sbr.rel (%p615) target = $region88
        $region87: #{tpu_custom_call.1} parent=83 // pred_region
          %p618 = scmp.lt.s32.totalorder %s35, 1
          %s619 = scalar_select %p618, %s35, 1
          %s620 = smul.addr %s619, 16
          %s621 = smul.addr %s620, 8
          %s622 = scalar_lea.vmem %s0, %s621
        $region88: #{tpu_custom_call.1} parent=83 // pred_fallthru
          _
        // Predicated region
        $region89: #{tpu_custom_call.1} parent=83 // pred_check
          %p623 = pneg %p81
        $region90: #{tpu_custom_call.1} parent=83 // pred_check_branch
          %625 = sbr.rel (%p623) target = $region92
        $region91: #{tpu_custom_call.1} parent=83 // pred_region
          %s626 = sand.u32 %s71, 1
          %s627 = scalar_lea.sflag [#allocation3], %s626
          %s628 = sand.u32 %s71, 1
          %s629 = scalar_lea.vmem [#allocation2], %s628
          %631 = vsyncadd %s627, 0
          %s632 = scalar_lea.hbm %s1, %s35
          %s634 = sshll.u32 %s632, 4
          %s635 = int_to_ptr.hbm [resolvable:$true] %s634
          %s636 = sshll.u32 %s629, 4
          %s637 = int_to_ptr.vmem [resolvable:$true] %s636
          %639 = dma.hbm_to_vmem [thread:$0]  %s635, 16, %s637, %s627
        $region92: #{tpu_custom_call.1} parent=83 // pred_fallthru
          _
      $region84: #{tpu_custom_call.1} parent=5 // pred_fallthru
        _
      %p640 = scmp.le.s32.totalorder 1, %s35
      %p641 = scmp.lt.s32.totalorder %s35, 3
      %p642 = pnand %p640, %p641
      %p643 = pneg %p642
      // Predicated region
      $region93: #{tpu_custom_call.1} parent=5 // pred_check
        _
      $region94: #{tpu_custom_call.1} parent=5 // pred_check_branch
        %645 = sbr.rel (%p642) target = $region96
      $region95: #{tpu_custom_call.1} parent=5 // pred_region
        %s646 = ssub.s32 %s35, 1
        %s647 = sand.u32 %s74, 1
        %s648 = scalar_lea.sflag [#allocation3], %s647
        %s649 = sand.u32 %s74, 1
        %s650 = scalar_lea.vmem [#allocation2], %s649
        // Predicated region
        $region97: #{tpu_custom_call.1} parent=95 // pred_check
          %p651 = pneg %p87
        $region98: #{tpu_custom_call.1} parent=95 // pred_check_branch
          %653 = sbr.rel (%p651) target = $region100
        $region99: #{tpu_custom_call.1} parent=95 // pred_region
          %655 = dma.done %s648, 16
        $region100: #{tpu_custom_call.1} parent=95 // pred_fallthru
          _
        // Predicated region
        $region101: #{tpu_custom_call.1} parent=95 // pred_check
          %p656 = pneg %p150
        $region102: #{tpu_custom_call.1} parent=95 // pred_check_branch
          %658 = sbr.rel (%p656) target = $region104
        $region103: #{tpu_custom_call.1} parent=95 // pred_region
          %660 = dma.done [#allocation6], 3072
        $region104: #{tpu_custom_call.1} parent=95 // pred_fallthru
          _
        // Predicated region
        $region105: #{tpu_custom_call.1} parent=95 // pred_check
          %p661 = pneg %p192
        $region106: #{tpu_custom_call.1} parent=95 // pred_check_branch
          %663 = sbr.rel (%p661) target = $region108
        $region107: #{tpu_custom_call.1} parent=95 // pred_region
          %665 = dma.done [#allocation6], 4096
        $region108: #{tpu_custom_call.1} parent=95 // pred_fallthru
          _
        // Predicated region
        $region109: #{tpu_custom_call.1} parent=95 // pred_check
          %p666 = pneg %p213
        $region110: #{tpu_custom_call.1} parent=95 // pred_check_branch
          %668 = sbr.rel (%p666) target = $region112
        $region111: #{tpu_custom_call.1} parent=95 // pred_region
          %670 = dma.done [#allocation9], 64
        $region112: #{tpu_custom_call.1} parent=95 // pred_fallthru
          _
        // Predicated region
        $region113: #{tpu_custom_call.1} parent=95 // pred_check
          %p671 = pneg %p276
        $region114: #{tpu_custom_call.1} parent=95 // pred_check_branch
          %673 = sbr.rel (%p671) target = $region116
        $region115: #{tpu_custom_call.1} parent=95 // pred_region
          %675 = dma.done [#allocation9], 1024
        $region116: #{tpu_custom_call.1} parent=95 // pred_fallthru
          _
        // Predicated region
        $region117: #{tpu_custom_call.1} parent=95 // pred_check
          %p676 = pneg %p318
        $region118: #{tpu_custom_call.1} parent=95 // pred_check_branch
          %678 = sbr.rel (%p676) target = $region120
        $region119: #{tpu_custom_call.1} parent=95 // pred_region
          %680 = dma.done [#allocation12], 1024
        $region120: #{tpu_custom_call.1} parent=95 // pred_fallthru
          _
        // Predicated region
        $region121: #{tpu_custom_call.1} parent=95 // pred_check
          %p681 = pneg %p402
        $region122: #{tpu_custom_call.1} parent=95 // pred_check_branch
          %683 = sbr.rel (%p681) target = $region124
        $region123: #{tpu_custom_call.1} parent=95 // pred_region
          %685 = dma.done [#allocation12], 1024
        $region124: #{tpu_custom_call.1} parent=95 // pred_fallthru
          _
        // Predicated region
        $region125: #{tpu_custom_call.1} parent=95 // pred_check
          %p686 = pneg %p423
        $region126: #{tpu_custom_call.1} parent=95 // pred_check_branch
          %688 = sbr.rel (%p686) target = $region128
        $region127: #{tpu_custom_call.1} parent=95 // pred_region
          %690 = dma.done [#allocation15], 4096
        $region128: #{tpu_custom_call.1} parent=95 // pred_fallthru
          _
        %p691 = scmp.lt.s32.totalorder %s40, 1
        %s692 = scalar_select %p691, %s40, 1
        %s693 = smul.addr %s692, 16
        %s694 = smul.addr %s693, 8
        %s695 = scalar_lea.vmem %s0, %s694
        %p696 = pneg %p61
        %p697 = pneg %p58
        %s698 = sand.u32 %s74, 1
        %s699 = scalar_lea.sflag [#allocation3], %s698
        %s700 = sand.u32 %s74, 1
        %s701 = scalar_lea.vmem [#allocation2], %s700
        %p702 = pneg %p87
        %p703 = pneg %p84
        %p704 = pneg %p108
        %p705 = pneg %p105
        %p706 = pneg %p129
        %p707 = pneg %p126
        %p708 = pneg %p150
        %p709 = pneg %p147
        %p710 = pneg %p171
        %p711 = pneg %p168
        %p712 = pneg %p192
        %p713 = pneg %p189
        %p714 = pneg %p213
        %p715 = pneg %p210
        %p716 = pneg %p234
        %p717 = pneg %p231
        %p718 = pneg %p255
        %p719 = pneg %p252
        %p720 = pneg %p276
        %p721 = pneg %p273
        %p722 = pneg %p297
        %p723 = pneg %p294
        %p724 = pneg %p318
        %p725 = pneg %p315
        %p726 = pneg %p339
        %p727 = pneg %p336
        %p728 = pneg %p360
        %p729 = pneg %p357
        %p730 = pneg %p381
        %p731 = pneg %p378
        %p732 = pneg %p402
        %p733 = pneg %p399
        %p734 = pneg %p423
        %p735 = pneg %p420
        %p736 = pneg %p444
        %p737 = pneg %p441
        %p738 = pneg %p470
        %p739 = pneg %p467
        %s740 = sand.u32 %s457, 1
        %s741 = scalar_lea.sflag [#allocation4], %s740
        %s742 = sand.u32 %s457, 1
        %s743 = smul.addr %s742, 128
        %s744 = scalar_lea.vmem [#allocation16], %s743
        %p745 = scmp.lt.s32.totalorder %s40, 1
        %s746 = scalar_select %p745, %s40, 1
        %s747 = smul.addr %s746, 16
        %s748 = smul.addr %s747, 8
        %s749 = scalar_lea.vmem %s0, %s748
        %v750 = vld [vmem:[%s749] sm:$0xff]
        %v751 = vld [vmem:[%s749 + $0x8] sm:$0xff]
        %v752 = vld [vmem:[%s749 + $0x10] sm:$0xff]
        %v753 = vld [vmem:[%s749 + $0x18] sm:$0xff]
        %v754 = vld [vmem:[%s749 + $0x20] sm:$0xff]
        %v755 = vld [vmem:[%s749 + $0x28] sm:$0xff]
        %v756 = vld [vmem:[%s749 + $0x30] sm:$0xff]
        %v757 = vld [vmem:[%s749 + $0x38] sm:$0xff]
        %v758 = vld [vmem:[%s749 + $0x40] sm:$0xff]
        %v759 = vld [vmem:[%s749 + $0x48] sm:$0xff]
        %v760 = vld [vmem:[%s749 + $0x50] sm:$0xff]
        %v761 = vld [vmem:[%s749 + $0x58] sm:$0xff]
        %v762 = vld [vmem:[%s749 + $0x60] sm:$0xff]
        %v763 = vld [vmem:[%s749 + $0x68] sm:$0xff]
        %v764 = vld [vmem:[%s749 + $0x70] sm:$0xff]
        %v765 = vld [vmem:[%s749 + $0x78] sm:$0xff]
        %v766 = vld [vmem:[%s650] sm:$0x1]
        %v767 = vxor.u32 %v766, 2147483648
        %v768 = vmul.f32 %v767, 1.442695
        %v769 = vpow.pop %v768
        %v770 = vadd.f32 %v769, 1.0
        %v771 = vrcp.pop %v770
        %v772 = vmul.f32 %v770, %v771
        %v773 = vsub.f32 1.0, %v772
        %v774 = vmul.f32 %v771, %v773
        %v775 = vadd.f32 %v771, %v774
        %vm776 = vweird.f32 %v770
        %vm777 = vweird.f32 %v771
        %vm778 = vmor %vm776, %vm777
        %v779 = vsel %vm778, %v771, %v775
        %v780 = vand.u32 2147483647, %v770
        %vm781 = vcmp.eq.f32.partialorder %v780, 8.507059e+37
        %v782 = vand.u32 %v770, 2147483648
        %v783 = vor.u32 1.1754944e-38, %v782
        %v784 = vsel %vm781, %v783, %v779
        %v785 = vmul.f32 1.0, %v784
        %v786 = vmul.f32 %v766, %v785
        %v787 = vpack.c.bf16 %v786, %v786
        %v788 = vld [vmem:[#allocation5] sm:$0xff]
        %v789 = vld [vmem:[#allocation5 + $0x8] sm:$0xf]
        %v790 = vld [vmem:[#allocation5 + $0xc] sm:$0xff]
        %v791 = vld [vmem:[#allocation5 + $0x14] sm:$0xf]
        %v792 = vld [vmem:[#allocation5 + $0x18] sm:$0xff]
        %v793 = vld [vmem:[#allocation5 + $0x20] sm:$0xf]
        %v794 = vld [vmem:[#allocation5 + $0x24] sm:$0xff]
        %v795 = vld [vmem:[#allocation5 + $0x2c] sm:$0xf]
        %v796 = vld [vmem:[#allocation5 + $0x30] sm:$0xff]
        %v797 = vld [vmem:[#allocation5 + $0x38] sm:$0xf]
        %v798 = vld [vmem:[#allocation5 + $0x3c] sm:$0xff]
        %v799 = vld [vmem:[#allocation5 + $0x44] sm:$0xf]
        %v800 = vld [vmem:[#allocation5 + $0x48] sm:$0xff]
        %v801 = vld [vmem:[#allocation5 + $0x50] sm:$0xf]
        %v802 = vld [vmem:[#allocation5 + $0x54] sm:$0xff]
        %v803 = vld [vmem:[#allocation5 + $0x5c] sm:$0xf]
        %v804 = vld [vmem:[#allocation5 + $0x60] sm:$0xff]
        %v805 = vld [vmem:[#allocation5 + $0x68] sm:$0xf]
        %v806 = vld [vmem:[#allocation5 + $0x6c] sm:$0xff]
        %v807 = vld [vmem:[#allocation5 + $0x74] sm:$0xf]
        %v808 = vld [vmem:[#allocation5 + $0x78] sm:$0xff]
        %v809 = vld [vmem:[#allocation5 + $0x80] sm:$0xf]
        %v810 = vld [vmem:[#allocation5 + $0x84] sm:$0xff]
        %v811 = vld [vmem:[#allocation5 + $0x8c] sm:$0xf]
        %v812 = vld [vmem:[#allocation5 + $0x90] sm:$0xff]
        %v813 = vld [vmem:[#allocation5 + $0x98] sm:$0xf]
        %v814 = vld [vmem:[#allocation5 + $0x9c] sm:$0xff]
        %v815 = vld [vmem:[#allocation5 + $0xa4] sm:$0xf]
        %v816 = vld [vmem:[#allocation5 + $0xa8] sm:$0xff]
        %v817 = vld [vmem:[#allocation5 + $0xb0] sm:$0xf]
        %v818 = vld [vmem:[#allocation5 + $0xb4] sm:$0xff]
        %v819 = vld [vmem:[#allocation5 + $0xbc] sm:$0xf]
        %v820 = vld [vmem:[%s5] sm:$0x7]
        %v853 = vunpack.c.l.b16 %v788
        %v854 = vunpack.c.h.b16 %v788
        %v855 = vunpack.c.l.b16 %v789
        %v856 = vunpack.c.l.b16 %v790
        %v857 = vunpack.c.h.b16 %v790
        %v858 = vunpack.c.l.b16 %v791
        %v859 = vunpack.c.l.b16 %v792
        %v860 = vunpack.c.h.b16 %v792
        %v861 = vunpack.c.l.b16 %v793
        %v862 = vunpack.c.l.b16 %v794
        %v863 = vunpack.c.h.b16 %v794
        %v864 = vunpack.c.l.b16 %v795
        %v865 = vunpack.c.l.b16 %v796
        %v866 = vunpack.c.h.b16 %v796
        %v867 = vunpack.c.l.b16 %v797
        %v868 = vunpack.c.l.b16 %v798
        %v869 = vunpack.c.h.b16 %v798
        %v870 = vunpack.c.l.b16 %v799
        %v871 = vunpack.c.l.b16 %v800
        %v872 = vunpack.c.h.b16 %v800
        %v873 = vunpack.c.l.b16 %v801
        %v874 = vunpack.c.l.b16 %v802
        %v875 = vunpack.c.h.b16 %v802
        %v876 = vunpack.c.l.b16 %v803
        %v877 = vunpack.c.l.b16 %v804
        %v878 = vunpack.c.h.b16 %v804
        %v879 = vunpack.c.l.b16 %v805
        %v880 = vunpack.c.l.b16 %v806
        %v881 = vunpack.c.h.b16 %v806
        %v882 = vunpack.c.l.b16 %v807
        %v883 = vunpack.c.l.b16 %v808
        %v884 = vunpack.c.h.b16 %v808
        %v885 = vunpack.c.l.b16 %v809
        %v886 = vunpack.c.l.b16 %v810
        %v887 = vunpack.c.h.b16 %v810
        %v888 = vunpack.c.l.b16 %v811
        %v889 = vunpack.c.l.b16 %v812
        %v890 = vunpack.c.h.b16 %v812
        %v891 = vunpack.c.l.b16 %v813
        %v892 = vunpack.c.l.b16 %v814
        %v893 = vunpack.c.h.b16 %v814
        %v894 = vunpack.c.l.b16 %v815
        %v895 = vunpack.c.l.b16 %v816
        %v896 = vunpack.c.h.b16 %v816
        %v897 = vunpack.c.l.b16 %v817
        %v898 = vunpack.c.l.b16 %v818
        %v899 = vunpack.c.h.b16 %v818
        %v900 = vunpack.c.l.b16 %v819
        %v901 = vpack.c.b16 %v856, %v853
        %v902 = vpack.c.b16 %v857, %v854
        %v903 = vpack.c.b16 %v858, %v855
        %v904 = vpack.c.b16 %v862, %v859
        %v905 = vpack.c.b16 %v863, %v860
        %v906 = vpack.c.b16 %v864, %v861
        %v907 = vpack.c.b16 %v868, %v865
        %v908 = vpack.c.b16 %v869, %v866
        %v909 = vpack.c.b16 %v870, %v867
        %v910 = vpack.c.b16 %v874, %v871
        %v911 = vpack.c.b16 %v875, %v872
        %v912 = vpack.c.b16 %v876, %v873
        %v913 = vpack.c.b16 %v880, %v877
        %v914 = vpack.c.b16 %v881, %v878
        %v915 = vpack.c.b16 %v882, %v879
        %v916 = vpack.c.b16 %v886, %v883
        %v917 = vpack.c.b16 %v887, %v884
        %v918 = vpack.c.b16 %v888, %v885
        %v919 = vpack.c.b16 %v892, %v889
        %v920 = vpack.c.b16 %v893, %v890
        %v921 = vpack.c.b16 %v894, %v891
        %v922 = vpack.c.b16 %v898, %v895
        %v923 = vpack.c.b16 %v899, %v896
        %v924 = vpack.c.b16 %v900, %v897
        %v950 = vperm.slane %v820, 0
        %v951 = vperm.slane %v820, 1
        %v952 = vperm.slane %v820, 2
        %956 = vmatpush.bf16.msra.mxu0 %v922
        %957 = vmatpush.bf16.msra.mxu0 %v919
        %958 = vmatpush.bf16.msra.mxu0 %v916
        %959 = vmatpush.bf16.msra.mxu0 %v913
        %960 = vmatpush.bf16.msra.mxu0 %v910
        %961 = vmatpush.bf16.msra.mxu0 %v907
        %962 = vmatpush.bf16.msra.mxu0 %v904
        %963 = vmatpush.bf16.msra.mxu0 %v901
        %964 = vmatmul.bf16.gmra.mxu0 %v787
        %v965 = vpop.f32.mrf.mxu0
        %v966 = vadd.f32 %v950, %v965
        %v967 = vpop.f32.mrf.mxu0
        %968 = vdwg.mxu0
        %969 = vmatpush.bf16.msra.mxu0 %v923
        %970 = vmatpush.bf16.msra.mxu0 %v920
        %971 = vmatpush.bf16.msra.mxu0 %v917
        %972 = vmatpush.bf16.msra.mxu0 %v914
        %973 = vmatpush.bf16.msra.mxu0 %v911
        %974 = vmatpush.bf16.msra.mxu0 %v908
        %975 = vmatpush.bf16.msra.mxu0 %v905
        %976 = vmatpush.bf16.msra.mxu0 %v902
        %977 = vmatmul.bf16.gmra.mxu0 %v787
        %v978 = vpop.f32.mrf.mxu0
        %v979 = vadd.f32 %v951, %v978
        %v980 = vpop.f32.mrf.mxu0
        %981 = vdwg.mxu0
        %982 = vmatpush.bf16.msra.mxu0 %v924
        %983 = vmatpush.bf16.msra.mxu0 %v921
        %984 = vmatpush.bf16.msra.mxu0 %v918
        %985 = vmatpush.bf16.msra.mxu0 %v915
        %986 = vmatpush.bf16.msra.mxu0 %v912
        %987 = vmatpush.bf16.msra.mxu0 %v909
        %988 = vmatpush.bf16.msra.mxu0 %v906
        %989 = vmatpush.bf16.msra.mxu0 %v903
        %990 = vmatmul.bf16.gmra.mxu0 %v787
        %v991 = vpop.f32.mrf.mxu0
        %v992 = vadd.f32 %v952, %v991
        %v993 = vpop.f32.mrf.mxu0
        %994 = vdwg.mxu0
        %995 = vadd.xlane.f32.xlu0 %v750
        %v996 = vpop.xlane.xlu0 %995
        %997 = vadd.xlane.f32.xlu0 %v751
        %v998 = vpop.xlane.xlu0 %997
        %999 = vadd.xlane.f32.xlu0 %v752
        %v1000 = vpop.xlane.xlu0 %999
        %1001 = vadd.xlane.f32.xlu0 %v753
        %v1002 = vpop.xlane.xlu0 %1001
        %1003 = vadd.xlane.f32.xlu0 %v754
        %v1004 = vpop.xlane.xlu0 %1003
        %1005 = vadd.xlane.f32.xlu0 %v755
        %v1006 = vpop.xlane.xlu0 %1005
        %1007 = vadd.xlane.f32.xlu0 %v756
        %v1008 = vpop.xlane.xlu0 %1007
        %1009 = vadd.xlane.f32.xlu0 %v757
        %v1010 = vpop.xlane.xlu0 %1009
        %1011 = vadd.xlane.f32.xlu0 %v758
        %v1012 = vpop.xlane.xlu0 %1011
        %1013 = vadd.xlane.f32.xlu0 %v759
        %v1014 = vpop.xlane.xlu0 %1013
        %1015 = vadd.xlane.f32.xlu0 %v760
        %v1016 = vpop.xlane.xlu0 %1015
        %1017 = vadd.xlane.f32.xlu0 %v761
        %v1018 = vpop.xlane.xlu0 %1017
        %1019 = vadd.xlane.f32.xlu0 %v762
        %v1020 = vpop.xlane.xlu0 %1019
        %1021 = vadd.xlane.f32.xlu0 %v763
        %v1022 = vpop.xlane.xlu0 %1021
        %1023 = vadd.xlane.f32.xlu0 %v764
        %v1024 = vpop.xlane.xlu0 %1023
        %1025 = vadd.xlane.f32.xlu0 %v765
        %v1026 = vpop.xlane.xlu0 %1025
        %v1027 = vrcp.pop 128.0
        %v1028 = vmul.f32 128.0, %v1027
        %v1029 = vsub.f32 1.0, %v1028
        %v1030 = vmul.f32 %v1027, %v1029
        %v1031 = vadd.f32 %v1027, %v1030
        %vm1032 = vweird.f32 %v1027
        %v1033 = vsel %vm1032, %v1027, %v1031
        %v1034 = vmul.f32 %v996, %v1033
        %v1035 = vmul.f32 %v998, %v1033
        %v1036 = vmul.f32 %v1000, %v1033
        %v1037 = vmul.f32 %v1002, %v1033
        %v1038 = vmul.f32 %v1004, %v1033
        %v1039 = vmul.f32 %v1006, %v1033
        %v1040 = vmul.f32 %v1008, %v1033
        %v1041 = vmul.f32 %v1010, %v1033
        %v1042 = vmul.f32 %v1012, %v1033
        %v1043 = vmul.f32 %v1014, %v1033
        %v1044 = vmul.f32 %v1016, %v1033
        %v1045 = vmul.f32 %v1018, %v1033
        %v1046 = vmul.f32 %v1020, %v1033
        %v1047 = vmul.f32 %v1022, %v1033
        %v1048 = vmul.f32 %v1024, %v1033
        %v1049 = vmul.f32 %v1026, %v1033
        %v1050 = vsub.f32 %v750, %v1034
        %v1051 = vsub.f32 %v751, %v1035
        %v1052 = vsub.f32 %v752, %v1036
        %v1053 = vsub.f32 %v753, %v1037
        %v1054 = vsub.f32 %v754, %v1038
        %v1055 = vsub.f32 %v755, %v1039
        %v1056 = vsub.f32 %v756, %v1040
        %v1057 = vsub.f32 %v757, %v1041
        %v1058 = vsub.f32 %v758, %v1042
        %v1059 = vsub.f32 %v759, %v1043
        %v1060 = vsub.f32 %v760, %v1044
        %v1061 = vsub.f32 %v761, %v1045
        %v1062 = vsub.f32 %v762, %v1046
        %v1063 = vsub.f32 %v763, %v1047
        %v1064 = vsub.f32 %v764, %v1048
        %v1065 = vsub.f32 %v765, %v1049
        %v1066 = vmul.f32 %v1050, %v1050
        %v1067 = vmul.f32 %v1051, %v1051
        %v1068 = vmul.f32 %v1052, %v1052
        %v1069 = vmul.f32 %v1053, %v1053
        %v1070 = vmul.f32 %v1054, %v1054
        %v1071 = vmul.f32 %v1055, %v1055
        %v1072 = vmul.f32 %v1056, %v1056
        %v1073 = vmul.f32 %v1057, %v1057
        %v1074 = vmul.f32 %v1058, %v1058
        %v1075 = vmul.f32 %v1059, %v1059
        %v1076 = vmul.f32 %v1060, %v1060
        %v1077 = vmul.f32 %v1061, %v1061
        %v1078 = vmul.f32 %v1062, %v1062
        %v1079 = vmul.f32 %v1063, %v1063
        %v1080 = vmul.f32 %v1064, %v1064
        %v1081 = vmul.f32 %v1065, %v1065
        %1082 = vadd.xlane.f32.xlu0 %v1066
        %v1083 = vpop.xlane.xlu0 %1082
        %1084 = vadd.xlane.f32.xlu0 %v1067
        %v1085 = vpop.xlane.xlu0 %1084
        %1086 = vadd.xlane.f32.xlu0 %v1068
        %v1087 = vpop.xlane.xlu0 %1086
        %1088 = vadd.xlane.f32.xlu0 %v1069
        %v1089 = vpop.xlane.xlu0 %1088
        %1090 = vadd.xlane.f32.xlu0 %v1070
        %v1091 = vpop.xlane.xlu0 %1090
        %1092 = vadd.xlane.f32.xlu0 %v1071
        %v1093 = vpop.xlane.xlu0 %1092
        %1094 = vadd.xlane.f32.xlu0 %v1072
        %v1095 = vpop.xlane.xlu0 %1094
        %1096 = vadd.xlane.f32.xlu0 %v1073
        %v1097 = vpop.xlane.xlu0 %1096
        %1098 = vadd.xlane.f32.xlu0 %v1074
        %v1099 = vpop.xlane.xlu0 %1098
        %1100 = vadd.xlane.f32.xlu0 %v1075
        %v1101 = vpop.xlane.xlu0 %1100
        %1102 = vadd.xlane.f32.xlu0 %v1076
        %v1103 = vpop.xlane.xlu0 %1102
        %1104 = vadd.xlane.f32.xlu0 %v1077
        %v1105 = vpop.xlane.xlu0 %1104
        %1106 = vadd.xlane.f32.xlu0 %v1078
        %v1107 = vpop.xlane.xlu0 %1106
        %1108 = vadd.xlane.f32.xlu0 %v1079
        %v1109 = vpop.xlane.xlu0 %1108
        %1110 = vadd.xlane.f32.xlu0 %v1080
        %v1111 = vpop.xlane.xlu0 %1110
        %1112 = vadd.xlane.f32.xlu0 %v1081
        %v1113 = vpop.xlane.xlu0 %1112
        %v1114 = vmul.f32 %v1083, %v1033
        %v1115 = vmul.f32 %v1085, %v1033
        %v1116 = vmul.f32 %v1087, %v1033
        %v1117 = vmul.f32 %v1089, %v1033
        %v1118 = vmul.f32 %v1091, %v1033
        %v1119 = vmul.f32 %v1093, %v1033
        %v1120 = vmul.f32 %v1095, %v1033
        %v1121 = vmul.f32 %v1097, %v1033
        %v1122 = vmul.f32 %v1099, %v1033
        %v1123 = vmul.f32 %v1101, %v1033
        %v1124 = vmul.f32 %v1103, %v1033
        %v1125 = vmul.f32 %v1105, %v1033
        %v1126 = vmul.f32 %v1107, %v1033
        %v1127 = vmul.f32 %v1109, %v1033
        %v1128 = vmul.f32 %v1111, %v1033
        %v1129 = vmul.f32 %v1113, %v1033
        %v1130 = vadd.f32 %v1114, 1e-06
        %v1131 = vadd.f32 %v1115, 1e-06
        %v1132 = vadd.f32 %v1116, 1e-06
        %v1133 = vadd.f32 %v1117, 1e-06
        %v1134 = vadd.f32 %v1118, 1e-06
        %v1135 = vadd.f32 %v1119, 1e-06
        %v1136 = vadd.f32 %v1120, 1e-06
        %v1137 = vadd.f32 %v1121, 1e-06
        %v1138 = vadd.f32 %v1122, 1e-06
        %v1139 = vadd.f32 %v1123, 1e-06
        %v1140 = vadd.f32 %v1124, 1e-06
        %v1141 = vadd.f32 %v1125, 1e-06
        %v1142 = vadd.f32 %v1126, 1e-06
        %v1143 = vadd.f32 %v1127, 1e-06
        %v1144 = vadd.f32 %v1128, 1e-06
        %v1145 = vadd.f32 %v1129, 1e-06
        %v1146 = vrsqrt.pop %v1130
        %v1147 = vmul.f32 %v1146, %v1130
        %v1148 = vmul.f32 %v1147, %v1146
        %v1149 = vmul.f32 0.5, %v1148
        %v1150 = vsub.f32 1.5, %v1149
        %v1151 = vmul.f32 %v1146, %v1150
        %vm1152 = vweird.f32 %v1130
        %vm1153 = vweird.f32 %v1146
        %vm1154 = vmor %vm1152, %vm1153
        %v1155 = vsel %vm1154, %v1146, %v1151
        %v1156 = vrsqrt.pop %v1131
        %v1157 = vmul.f32 %v1156, %v1131
        %v1158 = vmul.f32 %v1157, %v1156
        %v1159 = vmul.f32 0.5, %v1158
        %v1160 = vsub.f32 1.5, %v1159
        %v1161 = vmul.f32 %v1156, %v1160
        %vm1162 = vweird.f32 %v1131
        %vm1163 = vweird.f32 %v1156
        %vm1164 = vmor %vm1162, %vm1163
        %v1165 = vsel %vm1164, %v1156, %v1161
        %v1166 = vrsqrt.pop %v1132
        %v1167 = vmul.f32 %v1166, %v1132
        %v1168 = vmul.f32 %v1167, %v1166
        %v1169 = vmul.f32 0.5, %v1168
        %v1170 = vsub.f32 1.5, %v1169
        %v1171 = vmul.f32 %v1166, %v1170
        %vm1172 = vweird.f32 %v1132
        %vm1173 = vweird.f32 %v1166
        %vm1174 = vmor %vm1172, %vm1173
        %v1175 = vsel %vm1174, %v1166, %v1171
        %v1176 = vrsqrt.pop %v1133
        %v1177 = vmul.f32 %v1176, %v1133
        %v1178 = vmul.f32 %v1177, %v1176
        %v1179 = vmul.f32 0.5, %v1178
        %v1180 = vsub.f32 1.5, %v1179
        %v1181 = vmul.f32 %v1176, %v1180
        %vm1182 = vweird.f32 %v1133
        %vm1183 = vweird.f32 %v1176
        %vm1184 = vmor %vm1182, %vm1183
        %v1185 = vsel %vm1184, %v1176, %v1181
        %v1186 = vrsqrt.pop %v1134
        %v1187 = vmul.f32 %v1186, %v1134
        %v1188 = vmul.f32 %v1187, %v1186
        %v1189 = vmul.f32 0.5, %v1188
        %v1190 = vsub.f32 1.5, %v1189
        %v1191 = vmul.f32 %v1186, %v1190
        %vm1192 = vweird.f32 %v1134
        %vm1193 = vweird.f32 %v1186
        %vm1194 = vmor %vm1192, %vm1193
        %v1195 = vsel %vm1194, %v1186, %v1191
        %v1196 = vrsqrt.pop %v1135
        %v1197 = vmul.f32 %v1196, %v1135
        %v1198 = vmul.f32 %v1197, %v1196
        %v1199 = vmul.f32 0.5, %v1198
        %v1200 = vsub.f32 1.5, %v1199
        %v1201 = vmul.f32 %v1196, %v1200
        %vm1202 = vweird.f32 %v1135
        %vm1203 = vweird.f32 %v1196
        %vm1204 = vmor %vm1202, %vm1203
        %v1205 = vsel %vm1204, %v1196, %v1201
        %v1206 = vrsqrt.pop %v1136
        %v1207 = vmul.f32 %v1206, %v1136
        %v1208 = vmul.f32 %v1207, %v1206
        %v1209 = vmul.f32 0.5, %v1208
        %v1210 = vsub.f32 1.5, %v1209
        %v1211 = vmul.f32 %v1206, %v1210
        %vm1212 = vweird.f32 %v1136
        %vm1213 = vweird.f32 %v1206
        %vm1214 = vmor %vm1212, %vm1213
        %v1215 = vsel %vm1214, %v1206, %v1211
        %v1216 = vrsqrt.pop %v1137
        %v1217 = vmul.f32 %v1216, %v1137
        %v1218 = vmul.f32 %v1217, %v1216
        %v1219 = vmul.f32 0.5, %v1218
        %v1220 = vsub.f32 1.5, %v1219
        %v1221 = vmul.f32 %v1216, %v1220
        %vm1222 = vweird.f32 %v1137
        %vm1223 = vweird.f32 %v1216
        %vm1224 = vmor %vm1222, %vm1223
        %v1225 = vsel %vm1224, %v1216, %v1221
        %v1226 = vrsqrt.pop %v1138
        %v1227 = vmul.f32 %v1226, %v1138
        %v1228 = vmul.f32 %v1227, %v1226
        %v1229 = vmul.f32 0.5, %v1228
        %v1230 = vsub.f32 1.5, %v1229
        %v1231 = vmul.f32 %v1226, %v1230
        %vm1232 = vweird.f32 %v1138
        %vm1233 = vweird.f32 %v1226
        %vm1234 = vmor %vm1232, %vm1233
        %v1235 = vsel %vm1234, %v1226, %v1231
        %v1236 = vrsqrt.pop %v1139
        %v1237 = vmul.f32 %v1236, %v1139
        %v1238 = vmul.f32 %v1237, %v1236
        %v1239 = vmul.f32 0.5, %v1238
        %v1240 = vsub.f32 1.5, %v1239
        %v1241 = vmul.f32 %v1236, %v1240
        %vm1242 = vweird.f32 %v1139
        %vm1243 = vweird.f32 %v1236
        %vm1244 = vmor %vm1242, %vm1243
        %v1245 = vsel %vm1244, %v1236, %v1241
        %v1246 = vrsqrt.pop %v1140
        %v1247 = vmul.f32 %v1246, %v1140
        %v1248 = vmul.f32 %v1247, %v1246
        %v1249 = vmul.f32 0.5, %v1248
        %v1250 = vsub.f32 1.5, %v1249
        %v1251 = vmul.f32 %v1246, %v1250
        %vm1252 = vweird.f32 %v1140
        %vm1253 = vweird.f32 %v1246
        %vm1254 = vmor %vm1252, %vm1253
        %v1255 = vsel %vm1254, %v1246, %v1251
        %v1256 = vrsqrt.pop %v1141
        %v1257 = vmul.f32 %v1256, %v1141
        %v1258 = vmul.f32 %v1257, %v1256
        %v1259 = vmul.f32 0.5, %v1258
        %v1260 = vsub.f32 1.5, %v1259
        %v1261 = vmul.f32 %v1256, %v1260
        %vm1262 = vweird.f32 %v1141
        %vm1263 = vweird.f32 %v1256
        %vm1264 = vmor %vm1262, %vm1263
        %v1265 = vsel %vm1264, %v1256, %v1261
        %v1266 = vrsqrt.pop %v1142
        %v1267 = vmul.f32 %v1266, %v1142
        %v1268 = vmul.f32 %v1267, %v1266
        %v1269 = vmul.f32 0.5, %v1268
        %v1270 = vsub.f32 1.5, %v1269
        %v1271 = vmul.f32 %v1266, %v1270
        %vm1272 = vweird.f32 %v1142
        %vm1273 = vweird.f32 %v1266
        %vm1274 = vmor %vm1272, %vm1273
        %v1275 = vsel %vm1274, %v1266, %v1271
        %v1276 = vrsqrt.pop %v1143
        %v1277 = vmul.f32 %v1276, %v1143
        %v1278 = vmul.f32 %v1277, %v1276
        %v1279 = vmul.f32 0.5, %v1278
        %v1280 = vsub.f32 1.5, %v1279
        %v1281 = vmul.f32 %v1276, %v1280
        %vm1282 = vweird.f32 %v1143
        %vm1283 = vweird.f32 %v1276
        %vm1284 = vmor %vm1282, %vm1283
        %v1285 = vsel %vm1284, %v1276, %v1281
        %v1286 = vrsqrt.pop %v1144
        %v1287 = vmul.f32 %v1286, %v1144
        %v1288 = vmul.f32 %v1287, %v1286
        %v1289 = vmul.f32 0.5, %v1288
        %v1290 = vsub.f32 1.5, %v1289
        %v1291 = vmul.f32 %v1286, %v1290
        %vm1292 = vweird.f32 %v1144
        %vm1293 = vweird.f32 %v1286
        %vm1294 = vmor %vm1292, %vm1293
        %v1295 = vsel %vm1294, %v1286, %v1291
        %v1296 = vrsqrt.pop %v1145
        %v1297 = vmul.f32 %v1296, %v1145
        %v1298 = vmul.f32 %v1297, %v1296
        %v1299 = vmul.f32 0.5, %v1298
        %v1300 = vsub.f32 1.5, %v1299
        %v1301 = vmul.f32 %v1296, %v1300
        %vm1302 = vweird.f32 %v1145
        %vm1303 = vweird.f32 %v1296
        %vm1304 = vmor %vm1302, %vm1303
        %v1305 = vsel %vm1304, %v1296, %v1301
        %v1306 = vmul.f32 %v1050, %v1155
        %v1307 = vmul.f32 %v1051, %v1165
        %v1308 = vmul.f32 %v1052, %v1175
        %v1309 = vmul.f32 %v1053, %v1185
        %v1310 = vmul.f32 %v1054, %v1195
        %v1311 = vmul.f32 %v1055, %v1205
        %v1312 = vmul.f32 %v1056, %v1215
        %v1313 = vmul.f32 %v1057, %v1225
        %v1314 = vmul.f32 %v1058, %v1235
        %v1315 = vmul.f32 %v1059, %v1245
        %v1316 = vmul.f32 %v1060, %v1255
        %v1317 = vmul.f32 %v1061, %v1265
        %v1318 = vmul.f32 %v1062, %v1275
        %v1319 = vmul.f32 %v1063, %v1285
        %v1320 = vmul.f32 %v1064, %v1295
        %v1321 = vmul.f32 %v1065, %v1305
        %v1322 = vadd.f32 %v979, 1.0
        %v1323 = vperm.slane %v1322, 0
        %v1324 = vmul.f32 %v1306, %v1323
        %v1325 = vmul.f32 %v1307, %v1323
        %v1326 = vmul.f32 %v1308, %v1323
        %v1327 = vmul.f32 %v1309, %v1323
        %v1328 = vmul.f32 %v1310, %v1323
        %v1329 = vmul.f32 %v1311, %v1323
        %v1330 = vmul.f32 %v1312, %v1323
        %v1331 = vmul.f32 %v1313, %v1323
        %v1332 = vmul.f32 %v1314, %v1323
        %v1333 = vmul.f32 %v1315, %v1323
        %v1334 = vmul.f32 %v1316, %v1323
        %v1335 = vmul.f32 %v1317, %v1323
        %v1336 = vmul.f32 %v1318, %v1323
        %v1337 = vmul.f32 %v1319, %v1323
        %v1338 = vmul.f32 %v1320, %v1323
        %v1339 = vmul.f32 %v1321, %v1323
        %v1340 = vperm.slane %v966, 0
        %v1341 = vadd.f32 %v1324, %v1340
        %v1342 = vadd.f32 %v1325, %v1340
        %v1343 = vadd.f32 %v1326, %v1340
        %v1344 = vadd.f32 %v1327, %v1340
        %v1345 = vadd.f32 %v1328, %v1340
        %v1346 = vadd.f32 %v1329, %v1340
        %v1347 = vadd.f32 %v1330, %v1340
        %v1348 = vadd.f32 %v1331, %v1340
        %v1349 = vadd.f32 %v1332, %v1340
        %v1350 = vadd.f32 %v1333, %v1340
        %v1351 = vadd.f32 %v1334, %v1340
        %v1352 = vadd.f32 %v1335, %v1340
        %v1353 = vadd.f32 %v1336, %v1340
        %v1354 = vadd.f32 %v1337, %v1340
        %v1355 = vadd.f32 %v1338, %v1340
        %v1356 = vadd.f32 %v1339, %v1340
        %v1357 = vpack.c.bf16 %v1342, %v1341
        %v1358 = vpack.c.bf16 %v1344, %v1343
        %v1359 = vpack.c.bf16 %v1346, %v1345
        %v1360 = vpack.c.bf16 %v1348, %v1347
        %v1361 = vpack.c.bf16 %v1350, %v1349
        %v1362 = vpack.c.bf16 %v1352, %v1351
        %v1363 = vpack.c.bf16 %v1354, %v1353
        %v1364 = vpack.c.bf16 %v1356, %v1355
        %v1365 = vld [vmem:[#allocation7] sm:$0xff]
        %v1366 = vld [vmem:[#allocation7 + $0x8] sm:$0xff]
        %v1367 = vld [vmem:[#allocation7 + $0x10] sm:$0xff]
        %v1368 = vld [vmem:[#allocation7 + $0x18] sm:$0xff]
        %v1369 = vld [vmem:[#allocation7 + $0x20] sm:$0xff]
        %v1370 = vld [vmem:[#allocation7 + $0x28] sm:$0xff]
        %v1371 = vld [vmem:[#allocation7 + $0x30] sm:$0xff]
        %v1372 = vld [vmem:[#allocation7 + $0x38] sm:$0xff]
        %v1373 = vld [vmem:[#allocation7 + $0x40] sm:$0xff]
        %v1374 = vld [vmem:[#allocation7 + $0x48] sm:$0xff]
        %v1375 = vld [vmem:[#allocation7 + $0x50] sm:$0xff]
        %v1376 = vld [vmem:[#allocation7 + $0x58] sm:$0xff]
        %v1377 = vld [vmem:[#allocation7 + $0x60] sm:$0xff]
        %v1378 = vld [vmem:[#allocation7 + $0x68] sm:$0xff]
        %v1379 = vld [vmem:[#allocation7 + $0x70] sm:$0xff]
        %v1380 = vld [vmem:[#allocation7 + $0x78] sm:$0xff]
        %v1381 = vld [vmem:[#allocation7 + $0x80] sm:$0xff]
        %v1382 = vld [vmem:[#allocation7 + $0x88] sm:$0xff]
        %v1383 = vld [vmem:[#allocation7 + $0x90] sm:$0xff]
        %v1384 = vld [vmem:[#allocation7 + $0x98] sm:$0xff]
        %v1385 = vld [vmem:[#allocation7 + $0xa0] sm:$0xff]
        %v1386 = vld [vmem:[#allocation7 + $0xa8] sm:$0xff]
        %v1387 = vld [vmem:[#allocation7 + $0xb0] sm:$0xff]
        %v1388 = vld [vmem:[#allocation7 + $0xb8] sm:$0xff]
        %v1389 = vld [vmem:[#allocation7 + $0xc0] sm:$0xff]
        %v1390 = vld [vmem:[#allocation7 + $0xc8] sm:$0xff]
        %v1391 = vld [vmem:[#allocation7 + $0xd0] sm:$0xff]
        %v1392 = vld [vmem:[#allocation7 + $0xd8] sm:$0xff]
        %v1393 = vld [vmem:[#allocation7 + $0xe0] sm:$0xff]
        %v1394 = vld [vmem:[#allocation7 + $0xe8] sm:$0xff]
        %v1395 = vld [vmem:[#allocation7 + $0xf0] sm:$0xff]
        %v1396 = vld [vmem:[#allocation7 + $0xf8] sm:$0xff]
        %v1397 = vld [vmem:[#allocation8] sm:$0xf]
        %v1399 = vperm.slane %v1397, 0
        %v1400 = vperm.slane %v1397, 1
        %v1401 = vperm.slane %v1397, 2
        %v1402 = vperm.slane %v1397, 3
        %v1439 = vunpack.c.l.b16 %v1365
        %v1440 = vunpack.c.h.b16 %v1365
        %v1441 = vunpack.c.l.b16 %v1366
        %v1442 = vunpack.c.h.b16 %v1366
        %v1443 = vunpack.c.l.b16 %v1367
        %v1444 = vunpack.c.h.b16 %v1367
        %v1445 = vunpack.c.l.b16 %v1368
        %v1446 = vunpack.c.h.b16 %v1368
        %v1447 = vunpack.c.l.b16 %v1369
        %v1448 = vunpack.c.h.b16 %v1369
        %v1449 = vunpack.c.l.b16 %v1370
        %v1450 = vunpack.c.h.b16 %v1370
        %v1451 = vunpack.c.l.b16 %v1371
        %v1452 = vunpack.c.h.b16 %v1371
        %v1453 = vunpack.c.l.b16 %v1372
        %v1454 = vunpack.c.h.b16 %v1372
        %v1455 = vunpack.c.l.b16 %v1373
        %v1456 = vunpack.c.h.b16 %v1373
        %v1457 = vunpack.c.l.b16 %v1374
        %v1458 = vunpack.c.h.b16 %v1374
        %v1459 = vunpack.c.l.b16 %v1375
        %v1460 = vunpack.c.h.b16 %v1375
        %v1461 = vunpack.c.l.b16 %v1376
        %v1462 = vunpack.c.h.b16 %v1376
        %v1463 = vunpack.c.l.b16 %v1377
        %v1464 = vunpack.c.h.b16 %v1377
        %v1465 = vunpack.c.l.b16 %v1378
        %v1466 = vunpack.c.h.b16 %v1378
        %v1467 = vunpack.c.l.b16 %v1379
        %v1468 = vunpack.c.h.b16 %v1379
        %v1469 = vunpack.c.l.b16 %v1380
        %v1470 = vunpack.c.h.b16 %v1380
        %v1471 = vunpack.c.l.b16 %v1381
        %v1472 = vunpack.c.h.b16 %v1381
        %v1473 = vunpack.c.l.b16 %v1382
        %v1474 = vunpack.c.h.b16 %v1382
        %v1475 = vunpack.c.l.b16 %v1383
        %v1476 = vunpack.c.h.b16 %v1383
        %v1477 = vunpack.c.l.b16 %v1384
        %v1478 = vunpack.c.h.b16 %v1384
        %v1479 = vunpack.c.l.b16 %v1385
        %v1480 = vunpack.c.h.b16 %v1385
        %v1481 = vunpack.c.l.b16 %v1386
        %v1482 = vunpack.c.h.b16 %v1386
        %v1483 = vunpack.c.l.b16 %v1387
        %v1484 = vunpack.c.h.b16 %v1387
        %v1485 = vunpack.c.l.b16 %v1388
        %v1486 = vunpack.c.h.b16 %v1388
        %v1487 = vunpack.c.l.b16 %v1389
        %v1488 = vunpack.c.h.b16 %v1389
        %v1489 = vunpack.c.l.b16 %v1390
        %v1490 = vunpack.c.h.b16 %v1390
        %v1491 = vunpack.c.l.b16 %v1391
        %v1492 = vunpack.c.h.b16 %v1391
        %v1493 = vunpack.c.l.b16 %v1392
        %v1494 = vunpack.c.h.b16 %v1392
        %v1495 = vunpack.c.l.b16 %v1393
        %v1496 = vunpack.c.h.b16 %v1393
        %v1497 = vunpack.c.l.b16 %v1394
        %v1498 = vunpack.c.h.b16 %v1394
        %v1499 = vunpack.c.l.b16 %v1395
        %v1500 = vunpack.c.h.b16 %v1395
        %v1501 = vunpack.c.l.b16 %v1396
        %v1502 = vunpack.c.h.b16 %v1396
        %v1503 = vpack.c.b16 %v1443, %v1439
        %v1504 = vpack.c.b16 %v1444, %v1440
        %v1505 = vpack.c.b16 %v1445, %v1441
        %v1506 = vpack.c.b16 %v1446, %v1442
        %v1507 = vpack.c.b16 %v1451, %v1447
        %v1508 = vpack.c.b16 %v1452, %v1448
        %v1509 = vpack.c.b16 %v1453, %v1449
        %v1510 = vpack.c.b16 %v1454, %v1450
        %v1511 = vpack.c.b16 %v1459, %v1455
        %v1512 = vpack.c.b16 %v1460, %v1456
        %v1513 = vpack.c.b16 %v1461, %v1457
        %v1514 = vpack.c.b16 %v1462, %v1458
        %v1515 = vpack.c.b16 %v1467, %v1463
        %v1516 = vpack.c.b16 %v1468, %v1464
        %v1517 = vpack.c.b16 %v1469, %v1465
        %v1518 = vpack.c.b16 %v1470, %v1466
        %v1519 = vpack.c.b16 %v1475, %v1471
        %v1520 = vpack.c.b16 %v1476, %v1472
        %v1521 = vpack.c.b16 %v1477, %v1473
        %v1522 = vpack.c.b16 %v1478, %v1474
        %v1523 = vpack.c.b16 %v1483, %v1479
        %v1524 = vpack.c.b16 %v1484, %v1480
        %v1525 = vpack.c.b16 %v1485, %v1481
        %v1526 = vpack.c.b16 %v1486, %v1482
        %v1527 = vpack.c.b16 %v1491, %v1487
        %v1528 = vpack.c.b16 %v1492, %v1488
        %v1529 = vpack.c.b16 %v1493, %v1489
        %v1530 = vpack.c.b16 %v1494, %v1490
        %v1531 = vpack.c.b16 %v1499, %v1495
        %v1532 = vpack.c.b16 %v1500, %v1496
        %v1533 = vpack.c.b16 %v1501, %v1497
        %v1534 = vpack.c.b16 %v1502, %v1498
        %1567 = vmatpush.bf16.msra.mxu0 %v1531
        %1568 = vmatpush.bf16.msra.mxu0 %v1527
        %1569 = vmatpush.bf16.msra.mxu0 %v1523
        %1570 = vmatpush.bf16.msra.mxu0 %v1519
        %1571 = vmatpush.bf16.msra.mxu0 %v1515
        %1572 = vmatpush.bf16.msra.mxu0 %v1511
        %1573 = vmatpush.bf16.msra.mxu0 %v1507
        %1574 = vmatpush.bf16.msra.mxu0 %v1503
        %1575 = vmatmul.bf16.gmra.mxu0 %v1357
        %v1576 = vpop.f32.mrf.mxu0
        %v1577 = vadd.f32 %v1399, %v1576
        %v1578 = vpop.f32.mrf.mxu0
        %v1579 = vadd.f32 %v1399, %v1578
        %1580 = vmatmul.bf16.gmra.mxu0 %v1358
        %v1581 = vpop.f32.mrf.mxu0
        %v1582 = vadd.f32 %v1399, %v1581
        %v1583 = vpop.f32.mrf.mxu0
        %v1584 = vadd.f32 %v1399, %v1583
        %1585 = vmatmul.bf16.gmra.mxu0 %v1359
        %v1586 = vpop.f32.mrf.mxu0
        %v1587 = vadd.f32 %v1399, %v1586
        %v1588 = vpop.f32.mrf.mxu0
        %v1589 = vadd.f32 %v1399, %v1588
        %1590 = vmatmul.bf16.gmra.mxu0 %v1360
        %v1591 = vpop.f32.mrf.mxu0
        %v1592 = vadd.f32 %v1399, %v1591
        %v1593 = vpop.f32.mrf.mxu0
        %v1594 = vadd.f32 %v1399, %v1593
        %1595 = vmatmul.bf16.gmra.mxu0 %v1361
        %v1596 = vpop.f32.mrf.mxu0
        %v1597 = vadd.f32 %v1399, %v1596
        %v1598 = vpop.f32.mrf.mxu0
        %v1599 = vadd.f32 %v1399, %v1598
        %1600 = vmatmul.bf16.gmra.mxu0 %v1362
        %v1601 = vpop.f32.mrf.mxu0
        %v1602 = vadd.f32 %v1399, %v1601
        %v1603 = vpop.f32.mrf.mxu0
        %v1604 = vadd.f32 %v1399, %v1603
        %1605 = vmatmul.bf16.gmra.mxu0 %v1363
        %v1606 = vpop.f32.mrf.mxu0
        %v1607 = vadd.f32 %v1399, %v1606
        %v1608 = vpop.f32.mrf.mxu0
        %v1609 = vadd.f32 %v1399, %v1608
        %1610 = vmatmul.bf16.gmra.mxu0 %v1364
        %v1611 = vpop.f32.mrf.mxu0
        %v1612 = vadd.f32 %v1399, %v1611
        %v1613 = vpop.f32.mrf.mxu0
        %v1614 = vadd.f32 %v1399, %v1613
        %1615 = vdwg.mxu0
        %1616 = vmatpush.bf16.msra.mxu0 %v1532
        %1617 = vmatpush.bf16.msra.mxu0 %v1528
        %1618 = vmatpush.bf16.msra.mxu0 %v1524
        %1619 = vmatpush.bf16.msra.mxu0 %v1520
        %1620 = vmatpush.bf16.msra.mxu0 %v1516
        %1621 = vmatpush.bf16.msra.mxu0 %v1512
        %1622 = vmatpush.bf16.msra.mxu0 %v1508
        %1623 = vmatpush.bf16.msra.mxu0 %v1504
        %1624 = vmatmul.bf16.gmra.mxu0 %v1357
        %v1625 = vpop.f32.mrf.mxu0
        %v1626 = vadd.f32 %v1400, %v1625
        %v1627 = vpop.f32.mrf.mxu0
        %v1628 = vadd.f32 %v1400, %v1627
        %1629 = vmatmul.bf16.gmra.mxu0 %v1358
        %v1630 = vpop.f32.mrf.mxu0
        %v1631 = vadd.f32 %v1400, %v1630
        %v1632 = vpop.f32.mrf.mxu0
        %v1633 = vadd.f32 %v1400, %v1632
        %1634 = vmatmul.bf16.gmra.mxu0 %v1359
        %v1635 = vpop.f32.mrf.mxu0
        %v1636 = vadd.f32 %v1400, %v1635
        %v1637 = vpop.f32.mrf.mxu0
        %v1638 = vadd.f32 %v1400, %v1637
        %1639 = vmatmul.bf16.gmra.mxu0 %v1360
        %v1640 = vpop.f32.mrf.mxu0
        %v1641 = vadd.f32 %v1400, %v1640
        %v1642 = vpop.f32.mrf.mxu0
        %v1643 = vadd.f32 %v1400, %v1642
        %1644 = vmatmul.bf16.gmra.mxu0 %v1361
        %v1645 = vpop.f32.mrf.mxu0
        %v1646 = vadd.f32 %v1400, %v1645
        %v1647 = vpop.f32.mrf.mxu0
        %v1648 = vadd.f32 %v1400, %v1647
        %1649 = vmatmul.bf16.gmra.mxu0 %v1362
        %v1650 = vpop.f32.mrf.mxu0
        %v1651 = vadd.f32 %v1400, %v1650
        %v1652 = vpop.f32.mrf.mxu0
        %v1653 = vadd.f32 %v1400, %v1652
        %1654 = vmatmul.bf16.gmra.mxu0 %v1363
        %v1655 = vpop.f32.mrf.mxu0
        %v1656 = vadd.f32 %v1400, %v1655
        %v1657 = vpop.f32.mrf.mxu0
        %v1658 = vadd.f32 %v1400, %v1657
        %1659 = vmatmul.bf16.gmra.mxu0 %v1364
        %v1660 = vpop.f32.mrf.mxu0
        %v1661 = vadd.f32 %v1400, %v1660
        %v1662 = vpop.f32.mrf.mxu0
        %v1663 = vadd.f32 %v1400, %v1662
        %1664 = vdwg.mxu0
        %1665 = vmatpush.bf16.msra.mxu0 %v1533
        %1666 = vmatpush.bf16.msra.mxu0 %v1529
        %1667 = vmatpush.bf16.msra.mxu0 %v1525
        %1668 = vmatpush.bf16.msra.mxu0 %v1521
        %1669 = vmatpush.bf16.msra.mxu0 %v1517
        %1670 = vmatpush.bf16.msra.mxu0 %v1513
        %1671 = vmatpush.bf16.msra.mxu0 %v1509
        %1672 = vmatpush.bf16.msra.mxu0 %v1505
        %1673 = vmatmul.bf16.gmra.mxu0 %v1357
        %v1674 = vpop.f32.mrf.mxu0
        %v1675 = vadd.f32 %v1401, %v1674
        %v1676 = vpop.f32.mrf.mxu0
        %v1677 = vadd.f32 %v1401, %v1676
        %1678 = vmatmul.bf16.gmra.mxu0 %v1358
        %v1679 = vpop.f32.mrf.mxu0
        %v1680 = vadd.f32 %v1401, %v1679
        %v1681 = vpop.f32.mrf.mxu0
        %v1682 = vadd.f32 %v1401, %v1681
        %1683 = vmatmul.bf16.gmra.mxu0 %v1359
        %v1684 = vpop.f32.mrf.mxu0
        %v1685 = vadd.f32 %v1401, %v1684
        %v1686 = vpop.f32.mrf.mxu0
        %v1687 = vadd.f32 %v1401, %v1686
        %1688 = vmatmul.bf16.gmra.mxu0 %v1360
        %v1689 = vpop.f32.mrf.mxu0
        %v1690 = vadd.f32 %v1401, %v1689
        %v1691 = vpop.f32.mrf.mxu0
        %v1692 = vadd.f32 %v1401, %v1691
        %1693 = vmatmul.bf16.gmra.mxu0 %v1361
        %v1694 = vpop.f32.mrf.mxu0
        %v1695 = vadd.f32 %v1401, %v1694
        %v1696 = vpop.f32.mrf.mxu0
        %v1697 = vadd.f32 %v1401, %v1696
        %1698 = vmatmul.bf16.gmra.mxu0 %v1362
        %v1699 = vpop.f32.mrf.mxu0
        %v1700 = vadd.f32 %v1401, %v1699
        %v1701 = vpop.f32.mrf.mxu0
        %v1702 = vadd.f32 %v1401, %v1701
        %1703 = vmatmul.bf16.gmra.mxu0 %v1363
        %v1704 = vpop.f32.mrf.mxu0
        %v1705 = vadd.f32 %v1401, %v1704
        %v1706 = vpop.f32.mrf.mxu0
        %v1707 = vadd.f32 %v1401, %v1706
        %1708 = vmatmul.bf16.gmra.mxu0 %v1364
        %v1709 = vpop.f32.mrf.mxu0
        %v1710 = vadd.f32 %v1401, %v1709
        %v1711 = vpop.f32.mrf.mxu0
        %v1712 = vadd.f32 %v1401, %v1711
        %1713 = vdwg.mxu0
        %1714 = vmatpush.bf16.msra.mxu0 %v1534
        %1715 = vmatpush.bf16.msra.mxu0 %v1530
        %1716 = vmatpush.bf16.msra.mxu0 %v1526
        %1717 = vmatpush.bf16.msra.mxu0 %v1522
        %1718 = vmatpush.bf16.msra.mxu0 %v1518
        %1719 = vmatpush.bf16.msra.mxu0 %v1514
        %1720 = vmatpush.bf16.msra.mxu0 %v1510
        %1721 = vmatpush.bf16.msra.mxu0 %v1506
        %1722 = vmatmul.bf16.gmra.mxu0 %v1357
        %v1723 = vpop.f32.mrf.mxu0
        %v1724 = vadd.f32 %v1402, %v1723
        %v1725 = vpop.f32.mrf.mxu0
        %v1726 = vadd.f32 %v1402, %v1725
        %1727 = vmatmul.bf16.gmra.mxu0 %v1358
        %v1728 = vpop.f32.mrf.mxu0
        %v1729 = vadd.f32 %v1402, %v1728
        %v1730 = vpop.f32.mrf.mxu0
        %v1731 = vadd.f32 %v1402, %v1730
        %1732 = vmatmul.bf16.gmra.mxu0 %v1359
        %v1733 = vpop.f32.mrf.mxu0
        %v1734 = vadd.f32 %v1402, %v1733
        %v1735 = vpop.f32.mrf.mxu0
        %v1736 = vadd.f32 %v1402, %v1735
        %1737 = vmatmul.bf16.gmra.mxu0 %v1360
        %v1738 = vpop.f32.mrf.mxu0
        %v1739 = vadd.f32 %v1402, %v1738
        %v1740 = vpop.f32.mrf.mxu0
        %v1741 = vadd.f32 %v1402, %v1740
        %1742 = vmatmul.bf16.gmra.mxu0 %v1361
        %v1743 = vpop.f32.mrf.mxu0
        %v1744 = vadd.f32 %v1402, %v1743
        %v1745 = vpop.f32.mrf.mxu0
        %v1746 = vadd.f32 %v1402, %v1745
        %1747 = vmatmul.bf16.gmra.mxu0 %v1362
        %v1748 = vpop.f32.mrf.mxu0
        %v1749 = vadd.f32 %v1402, %v1748
        %v1750 = vpop.f32.mrf.mxu0
        %v1751 = vadd.f32 %v1402, %v1750
        %1752 = vmatmul.bf16.gmra.mxu0 %v1363
        %v1753 = vpop.f32.mrf.mxu0
        %v1754 = vadd.f32 %v1402, %v1753
        %v1755 = vpop.f32.mrf.mxu0
        %v1756 = vadd.f32 %v1402, %v1755
        %1757 = vmatmul.bf16.gmra.mxu0 %v1364
        %v1758 = vpop.f32.mrf.mxu0
        %v1759 = vadd.f32 %v1402, %v1758
        %v1760 = vpop.f32.mrf.mxu0
        %v1761 = vadd.f32 %v1402, %v1760
        %1762 = vdwg.mxu0
        %v1763 = vmul.f32 %v1577, %v1577
        %v1764 = vmul.f32 %v1626, %v1626
        %v1765 = vmul.f32 %v1675, %v1675
        %v1766 = vmul.f32 %v1724, %v1724
        %v1767 = vmul.f32 %v1579, %v1579
        %v1768 = vmul.f32 %v1628, %v1628
        %v1769 = vmul.f32 %v1677, %v1677
        %v1770 = vmul.f32 %v1726, %v1726
        %v1771 = vmul.f32 %v1582, %v1582
        %v1772 = vmul.f32 %v1631, %v1631
        %v1773 = vmul.f32 %v1680, %v1680
        %v1774 = vmul.f32 %v1729, %v1729
        %v1775 = vmul.f32 %v1584, %v1584
        %v1776 = vmul.f32 %v1633, %v1633
        %v1777 = vmul.f32 %v1682, %v1682
        %v1778 = vmul.f32 %v1731, %v1731
        %v1779 = vmul.f32 %v1587, %v1587
        %v1780 = vmul.f32 %v1636, %v1636
        %v1781 = vmul.f32 %v1685, %v1685
        %v1782 = vmul.f32 %v1734, %v1734
        %v1783 = vmul.f32 %v1589, %v1589
        %v1784 = vmul.f32 %v1638, %v1638
        %v1785 = vmul.f32 %v1687, %v1687
        %v1786 = vmul.f32 %v1736, %v1736
        %v1787 = vmul.f32 %v1592, %v1592
        %v1788 = vmul.f32 %v1641, %v1641
        %v1789 = vmul.f32 %v1690, %v1690
        %v1790 = vmul.f32 %v1739, %v1739
        %v1791 = vmul.f32 %v1594, %v1594
        %v1792 = vmul.f32 %v1643, %v1643
        %v1793 = vmul.f32 %v1692, %v1692
        %v1794 = vmul.f32 %v1741, %v1741
        %v1795 = vmul.f32 %v1597, %v1597
        %v1796 = vmul.f32 %v1646, %v1646
        %v1797 = vmul.f32 %v1695, %v1695
        %v1798 = vmul.f32 %v1744, %v1744
        %v1799 = vmul.f32 %v1599, %v1599
        %v1800 = vmul.f32 %v1648, %v1648
        %v1801 = vmul.f32 %v1697, %v1697
        %v1802 = vmul.f32 %v1746, %v1746
        %v1803 = vmul.f32 %v1602, %v1602
        %v1804 = vmul.f32 %v1651, %v1651
        %v1805 = vmul.f32 %v1700, %v1700
        %v1806 = vmul.f32 %v1749, %v1749
        %v1807 = vmul.f32 %v1604, %v1604
        %v1808 = vmul.f32 %v1653, %v1653
        %v1809 = vmul.f32 %v1702, %v1702
        %v1810 = vmul.f32 %v1751, %v1751
        %v1811 = vmul.f32 %v1607, %v1607
        %v1812 = vmul.f32 %v1656, %v1656
        %v1813 = vmul.f32 %v1705, %v1705
        %v1814 = vmul.f32 %v1754, %v1754
        %v1815 = vmul.f32 %v1609, %v1609
        %v1816 = vmul.f32 %v1658, %v1658
        %v1817 = vmul.f32 %v1707, %v1707
        %v1818 = vmul.f32 %v1756, %v1756
        %v1819 = vmul.f32 %v1612, %v1612
        %v1820 = vmul.f32 %v1661, %v1661
        %v1821 = vmul.f32 %v1710, %v1710
        %v1822 = vmul.f32 %v1759, %v1759
        %v1823 = vmul.f32 %v1614, %v1614
        %v1824 = vmul.f32 %v1663, %v1663
        %v1825 = vmul.f32 %v1712, %v1712
        %v1826 = vmul.f32 %v1761, %v1761
        %v1827 = vmul.f32 %v1577, %v1763
        %v1828 = vmul.f32 %v1626, %v1764
        %v1829 = vmul.f32 %v1675, %v1765
        %v1830 = vmul.f32 %v1724, %v1766
        %v1831 = vmul.f32 %v1579, %v1767
        %v1832 = vmul.f32 %v1628, %v1768
        %v1833 = vmul.f32 %v1677, %v1769
        %v1834 = vmul.f32 %v1726, %v1770
        %v1835 = vmul.f32 %v1582, %v1771
        %v1836 = vmul.f32 %v1631, %v1772
        %v1837 = vmul.f32 %v1680, %v1773
        %v1838 = vmul.f32 %v1729, %v1774
        %v1839 = vmul.f32 %v1584, %v1775
        %v1840 = vmul.f32 %v1633, %v1776
        %v1841 = vmul.f32 %v1682, %v1777
        %v1842 = vmul.f32 %v1731, %v1778
        %v1843 = vmul.f32 %v1587, %v1779
        %v1844 = vmul.f32 %v1636, %v1780
        %v1845 = vmul.f32 %v1685, %v1781
        %v1846 = vmul.f32 %v1734, %v1782
        %v1847 = vmul.f32 %v1589, %v1783
        %v1848 = vmul.f32 %v1638, %v1784
        %v1849 = vmul.f32 %v1687, %v1785
        %v1850 = vmul.f32 %v1736, %v1786
        %v1851 = vmul.f32 %v1592, %v1787
        %v1852 = vmul.f32 %v1641, %v1788
        %v1853 = vmul.f32 %v1690, %v1789
        %v1854 = vmul.f32 %v1739, %v1790
        %v1855 = vmul.f32 %v1594, %v1791
        %v1856 = vmul.f32 %v1643, %v1792
        %v1857 = vmul.f32 %v1692, %v1793
        %v1858 = vmul.f32 %v1741, %v1794
        %v1859 = vmul.f32 %v1597, %v1795
        %v1860 = vmul.f32 %v1646, %v1796
        %v1861 = vmul.f32 %v1695, %v1797
        %v1862 = vmul.f32 %v1744, %v1798
        %v1863 = vmul.f32 %v1599, %v1799
        %v1864 = vmul.f32 %v1648, %v1800
        %v1865 = vmul.f32 %v1697, %v1801
        %v1866 = vmul.f32 %v1746, %v1802
        %v1867 = vmul.f32 %v1602, %v1803
        %v1868 = vmul.f32 %v1651, %v1804
        %v1869 = vmul.f32 %v1700, %v1805
        %v1870 = vmul.f32 %v1749, %v1806
        %v1871 = vmul.f32 %v1604, %v1807
        %v1872 = vmul.f32 %v1653, %v1808
        %v1873 = vmul.f32 %v1702, %v1809
        %v1874 = vmul.f32 %v1751, %v1810
        %v1875 = vmul.f32 %v1607, %v1811
        %v1876 = vmul.f32 %v1656, %v1812
        %v1877 = vmul.f32 %v1705, %v1813
        %v1878 = vmul.f32 %v1754, %v1814
        %v1879 = vmul.f32 %v1609, %v1815
        %v1880 = vmul.f32 %v1658, %v1816
        %v1881 = vmul.f32 %v1707, %v1817
        %v1882 = vmul.f32 %v1756, %v1818
        %v1883 = vmul.f32 %v1612, %v1819
        %v1884 = vmul.f32 %v1661, %v1820
        %v1885 = vmul.f32 %v1710, %v1821
        %v1886 = vmul.f32 %v1759, %v1822
        %v1887 = vmul.f32 %v1614, %v1823
        %v1888 = vmul.f32 %v1663, %v1824
        %v1889 = vmul.f32 %v1712, %v1825
        %v1890 = vmul.f32 %v1761, %v1826
        %v1891 = vmul.f32 %v1827, 0.044715
        %v1892 = vmul.f32 %v1828, 0.044715
        %v1893 = vmul.f32 %v1829, 0.044715
        %v1894 = vmul.f32 %v1830, 0.044715
        %v1895 = vmul.f32 %v1831, 0.044715
        %v1896 = vmul.f32 %v1832, 0.044715
        %v1897 = vmul.f32 %v1833, 0.044715
        %v1898 = vmul.f32 %v1834, 0.044715
        %v1899 = vmul.f32 %v1835, 0.044715
        %v1900 = vmul.f32 %v1836, 0.044715
        %v1901 = vmul.f32 %v1837, 0.044715
        %v1902 = vmul.f32 %v1838, 0.044715
        %v1903 = vmul.f32 %v1839, 0.044715
        %v1904 = vmul.f32 %v1840, 0.044715
        %v1905 = vmul.f32 %v1841, 0.044715
        %v1906 = vmul.f32 %v1842, 0.044715
        %v1907 = vmul.f32 %v1843, 0.044715
        %v1908 = vmul.f32 %v1844, 0.044715
        %v1909 = vmul.f32 %v1845, 0.044715
        %v1910 = vmul.f32 %v1846, 0.044715
        %v1911 = vmul.f32 %v1847, 0.044715
        %v1912 = vmul.f32 %v1848, 0.044715
        %v1913 = vmul.f32 %v1849, 0.044715
        %v1914 = vmul.f32 %v1850, 0.044715
        %v1915 = vmul.f32 %v1851, 0.044715
        %v1916 = vmul.f32 %v1852, 0.044715
        %v1917 = vmul.f32 %v1853, 0.044715
        %v1918 = vmul.f32 %v1854, 0.044715
        %v1919 = vmul.f32 %v1855, 0.044715
        %v1920 = vmul.f32 %v1856, 0.044715
        %v1921 = vmul.f32 %v1857, 0.044715
        %v1922 = vmul.f32 %v1858, 0.044715
        %v1923 = vmul.f32 %v1859, 0.044715
        %v1924 = vmul.f32 %v1860, 0.044715
        %v1925 = vmul.f32 %v1861, 0.044715
        %v1926 = vmul.f32 %v1862, 0.044715
        %v1927 = vmul.f32 %v1863, 0.044715
        %v1928 = vmul.f32 %v1864, 0.044715
        %v1929 = vmul.f32 %v1865, 0.044715
        %v1930 = vmul.f32 %v1866, 0.044715
        %v1931 = vmul.f32 %v1867, 0.044715
        %v1932 = vmul.f32 %v1868, 0.044715
        %v1933 = vmul.f32 %v1869, 0.044715
        %v1934 = vmul.f32 %v1870, 0.044715
        %v1935 = vmul.f32 %v1871, 0.044715
        %v1936 = vmul.f32 %v1872, 0.044715
        %v1937 = vmul.f32 %v1873, 0.044715
        %v1938 = vmul.f32 %v1874, 0.044715
        %v1939 = vmul.f32 %v1875, 0.044715
        %v1940 = vmul.f32 %v1876, 0.044715
        %v1941 = vmul.f32 %v1877, 0.044715
        %v1942 = vmul.f32 %v1878, 0.044715
        %v1943 = vmul.f32 %v1879, 0.044715
        %v1944 = vmul.f32 %v1880, 0.044715
        %v1945 = vmul.f32 %v1881, 0.044715
        %v1946 = vmul.f32 %v1882, 0.044715
        %v1947 = vmul.f32 %v1883, 0.044715
        %v1948 = vmul.f32 %v1884, 0.044715
        %v1949 = vmul.f32 %v1885, 0.044715
        %v1950 = vmul.f32 %v1886, 0.044715
        %v1951 = vmul.f32 %v1887, 0.044715
        %v1952 = vmul.f32 %v1888, 0.044715
        %v1953 = vmul.f32 %v1889, 0.044715
        %v1954 = vmul.f32 %v1890, 0.044715
        %v1955 = vadd.f32 %v1577, %v1891
        %v1956 = vadd.f32 %v1626, %v1892
        %v1957 = vadd.f32 %v1675, %v1893
        %v1958 = vadd.f32 %v1724, %v1894
        %v1959 = vadd.f32 %v1579, %v1895
        %v1960 = vadd.f32 %v1628, %v1896
        %v1961 = vadd.f32 %v1677, %v1897
        %v1962 = vadd.f32 %v1726, %v1898
        %v1963 = vadd.f32 %v1582, %v1899
        %v1964 = vadd.f32 %v1631, %v1900
        %v1965 = vadd.f32 %v1680, %v1901
        %v1966 = vadd.f32 %v1729, %v1902
        %v1967 = vadd.f32 %v1584, %v1903
        %v1968 = vadd.f32 %v1633, %v1904
        %v1969 = vadd.f32 %v1682, %v1905
        %v1970 = vadd.f32 %v1731, %v1906
        %v1971 = vadd.f32 %v1587, %v1907
        %v1972 = vadd.f32 %v1636, %v1908
        %v1973 = vadd.f32 %v1685, %v1909
        %v1974 = vadd.f32 %v1734, %v1910
        %v1975 = vadd.f32 %v1589, %v1911
        %v1976 = vadd.f32 %v1638, %v1912
        %v1977 = vadd.f32 %v1687, %v1913
        %v1978 = vadd.f32 %v1736, %v1914
        %v1979 = vadd.f32 %v1592, %v1915
        %v1980 = vadd.f32 %v1641, %v1916
        %v1981 = vadd.f32 %v1690, %v1917
        %v1982 = vadd.f32 %v1739, %v1918
        %v1983 = vadd.f32 %v1594, %v1919
        %v1984 = vadd.f32 %v1643, %v1920
        %v1985 = vadd.f32 %v1692, %v1921
        %v1986 = vadd.f32 %v1741, %v1922
        %v1987 = vadd.f32 %v1597, %v1923
        %v1988 = vadd.f32 %v1646, %v1924
        %v1989 = vadd.f32 %v1695, %v1925
        %v1990 = vadd.f32 %v1744, %v1926
        %v1991 = vadd.f32 %v1599, %v1927
        %v1992 = vadd.f32 %v1648, %v1928
        %v1993 = vadd.f32 %v1697, %v1929
        %v1994 = vadd.f32 %v1746, %v1930
        %v1995 = vadd.f32 %v1602, %v1931
        %v1996 = vadd.f32 %v1651, %v1932
        %v1997 = vadd.f32 %v1700, %v1933
        %v1998 = vadd.f32 %v1749, %v1934
        %v1999 = vadd.f32 %v1604, %v1935
        %v2000 = vadd.f32 %v1653, %v1936
        %v2001 = vadd.f32 %v1702, %v1937
        %v2002 = vadd.f32 %v1751, %v1938
        %v2003 = vadd.f32 %v1607, %v1939
        %v2004 = vadd.f32 %v1656, %v1940
        %v2005 = vadd.f32 %v1705, %v1941
        %v2006 = vadd.f32 %v1754, %v1942
        %v2007 = vadd.f32 %v1609, %v1943
        %v2008 = vadd.f32 %v1658, %v1944
        %v2009 = vadd.f32 %v1707, %v1945
        %v2010 = vadd.f32 %v1756, %v1946
        %v2011 = vadd.f32 %v1612, %v1947
        %v2012 = vadd.f32 %v1661, %v1948
        %v2013 = vadd.f32 %v1710, %v1949
        %v2014 = vadd.f32 %v1759, %v1950
        %v2015 = vadd.f32 %v1614, %v1951
        %v2016 = vadd.f32 %v1663, %v1952
        %v2017 = vadd.f32 %v1712, %v1953
        %v2018 = vadd.f32 %v1761, %v1954
        %v2019 = vmul.f32 %v1955, 0.7978846
        %v2020 = vmul.f32 %v1956, 0.7978846
        %v2021 = vmul.f32 %v1957, 0.7978846
        %v2022 = vmul.f32 %v1958, 0.7978846
        %v2023 = vmul.f32 %v1959, 0.7978846
        %v2024 = vmul.f32 %v1960, 0.7978846
        %v2025 = vmul.f32 %v1961, 0.7978846
        %v2026 = vmul.f32 %v1962, 0.7978846
        %v2027 = vmul.f32 %v1963, 0.7978846
        %v2028 = vmul.f32 %v1964, 0.7978846
        %v2029 = vmul.f32 %v1965, 0.7978846
        %v2030 = vmul.f32 %v1966, 0.7978846
        %v2031 = vmul.f32 %v1967, 0.7978846
        %v2032 = vmul.f32 %v1968, 0.7978846
        %v2033 = vmul.f32 %v1969, 0.7978846
        %v2034 = vmul.f32 %v1970, 0.7978846
        %v2035 = vmul.f32 %v1971, 0.7978846
        %v2036 = vmul.f32 %v1972, 0.7978846
        %v2037 = vmul.f32 %v1973, 0.7978846
        %v2038 = vmul.f32 %v1974, 0.7978846
        %v2039 = vmul.f32 %v1975, 0.7978846
        %v2040 = vmul.f32 %v1976, 0.7978846
        %v2041 = vmul.f32 %v1977, 0.7978846
        %v2042 = vmul.f32 %v1978, 0.7978846
        %v2043 = vmul.f32 %v1979, 0.7978846
        %v2044 = vmul.f32 %v1980, 0.7978846
        %v2045 = vmul.f32 %v1981, 0.7978846
        %v2046 = vmul.f32 %v1982, 0.7978846
        %v2047 = vmul.f32 %v1983, 0.7978846
        %v2048 = vmul.f32 %v1984, 0.7978846
        %v2049 = vmul.f32 %v1985, 0.7978846
        %v2050 = vmul.f32 %v1986, 0.7978846
        %v2051 = vmul.f32 %v1987, 0.7978846
        %v2052 = vmul.f32 %v1988, 0.7978846
        %v2053 = vmul.f32 %v1989, 0.7978846
        %v2054 = vmul.f32 %v1990, 0.7978846
        %v2055 = vmul.f32 %v1991, 0.7978846
        %v2056 = vmul.f32 %v1992, 0.7978846
        %v2057 = vmul.f32 %v1993, 0.7978846
        %v2058 = vmul.f32 %v1994, 0.7978846
        %v2059 = vmul.f32 %v1995, 0.7978846
        %v2060 = vmul.f32 %v1996, 0.7978846
        %v2061 = vmul.f32 %v1997, 0.7978846
        %v2062 = vmul.f32 %v1998, 0.7978846
        %v2063 = vmul.f32 %v1999, 0.7978846
        %v2064 = vmul.f32 %v2000, 0.7978846
        %v2065 = vmul.f32 %v2001, 0.7978846
        %v2066 = vmul.f32 %v2002, 0.7978846
        %v2067 = vmul.f32 %v2003, 0.7978846
        %v2068 = vmul.f32 %v2004, 0.7978846
        %v2069 = vmul.f32 %v2005, 0.7978846
        %v2070 = vmul.f32 %v2006, 0.7978846
        %v2071 = vmul.f32 %v2007, 0.7978846
        %v2072 = vmul.f32 %v2008, 0.7978846
        %v2073 = vmul.f32 %v2009, 0.7978846
        %v2074 = vmul.f32 %v2010, 0.7978846
        %v2075 = vmul.f32 %v2011, 0.7978846
        %v2076 = vmul.f32 %v2012, 0.7978846
        %v2077 = vmul.f32 %v2013, 0.7978846
        %v2078 = vmul.f32 %v2014, 0.7978846
        %v2079 = vmul.f32 %v2015, 0.7978846
        %v2080 = vmul.f32 %v2016, 0.7978846
        %v2081 = vmul.f32 %v2017, 0.7978846
        %v2082 = vmul.f32 %v2018, 0.7978846
        %v2083 = vtanh.pop %v2019
        %v2084 = vtanh.pop %v2020
        %v2085 = vtanh.pop %v2021
        %v2086 = vtanh.pop %v2022
        %v2087 = vtanh.pop %v2023
        %v2088 = vtanh.pop %v2024
        %v2089 = vtanh.pop %v2025
        %v2090 = vtanh.pop %v2026
        %v2091 = vtanh.pop %v2027
        %v2092 = vtanh.pop %v2028
        %v2093 = vtanh.pop %v2029
        %v2094 = vtanh.pop %v2030
        %v2095 = vtanh.pop %v2031
        %v2096 = vtanh.pop %v2032
        %v2097 = vtanh.pop %v2033
        %v2098 = vtanh.pop %v2034
        %v2099 = vtanh.pop %v2035
        %v2100 = vtanh.pop %v2036
        %v2101 = vtanh.pop %v2037
        %v2102 = vtanh.pop %v2038
        %v2103 = vtanh.pop %v2039
        %v2104 = vtanh.pop %v2040
        %v2105 = vtanh.pop %v2041
        %v2106 = vtanh.pop %v2042
        %v2107 = vtanh.pop %v2043
        %v2108 = vtanh.pop %v2044
        %v2109 = vtanh.pop %v2045
        %v2110 = vtanh.pop %v2046
        %v2111 = vtanh.pop %v2047
        %v2112 = vtanh.pop %v2048
        %v2113 = vtanh.pop %v2049
        %v2114 = vtanh.pop %v2050
        %v2115 = vtanh.pop %v2051
        %v2116 = vtanh.pop %v2052
        %v2117 = vtanh.pop %v2053
        %v2118 = vtanh.pop %v2054
        %v2119 = vtanh.pop %v2055
        %v2120 = vtanh.pop %v2056
        %v2121 = vtanh.pop %v2057
        %v2122 = vtanh.pop %v2058
        %v2123 = vtanh.pop %v2059
        %v2124 = vtanh.pop %v2060
        %v2125 = vtanh.pop %v2061
        %v2126 = vtanh.pop %v2062
        %v2127 = vtanh.pop %v2063
        %v2128 = vtanh.pop %v2064
        %v2129 = vtanh.pop %v2065
        %v2130 = vtanh.pop %v2066
        %v2131 = vtanh.pop %v2067
        %v2132 = vtanh.pop %v2068
        %v2133 = vtanh.pop %v2069
        %v2134 = vtanh.pop %v2070
        %v2135 = vtanh.pop %v2071
        %v2136 = vtanh.pop %v2072
        %v2137 = vtanh.pop %v2073
        %v2138 = vtanh.pop %v2074
        %v2139 = vtanh.pop %v2075
        %v2140 = vtanh.pop %v2076
        %v2141 = vtanh.pop %v2077
        %v2142 = vtanh.pop %v2078
        %v2143 = vtanh.pop %v2079
        %v2144 = vtanh.pop %v2080
        %v2145 = vtanh.pop %v2081
        %v2146 = vtanh.pop %v2082
        %v2147 = vadd.f32 %v2083, 1.0
        %v2148 = vadd.f32 %v2084, 1.0
        %v2149 = vadd.f32 %v2085, 1.0
        %v2150 = vadd.f32 %v2086, 1.0
        %v2151 = vadd.f32 %v2087, 1.0
        %v2152 = vadd.f32 %v2088, 1.0
        %v2153 = vadd.f32 %v2089, 1.0
        %v2154 = vadd.f32 %v2090, 1.0
        %v2155 = vadd.f32 %v2091, 1.0
        %v2156 = vadd.f32 %v2092, 1.0
        %v2157 = vadd.f32 %v2093, 1.0
        %v2158 = vadd.f32 %v2094, 1.0
        %v2159 = vadd.f32 %v2095, 1.0
        %v2160 = vadd.f32 %v2096, 1.0
        %v2161 = vadd.f32 %v2097, 1.0
        %v2162 = vadd.f32 %v2098, 1.0
        %v2163 = vadd.f32 %v2099, 1.0
        %v2164 = vadd.f32 %v2100, 1.0
        %v2165 = vadd.f32 %v2101, 1.0
        %v2166 = vadd.f32 %v2102, 1.0
        %v2167 = vadd.f32 %v2103, 1.0
        %v2168 = vadd.f32 %v2104, 1.0
        %v2169 = vadd.f32 %v2105, 1.0
        %v2170 = vadd.f32 %v2106, 1.0
        %v2171 = vadd.f32 %v2107, 1.0
        %v2172 = vadd.f32 %v2108, 1.0
        %v2173 = vadd.f32 %v2109, 1.0
        %v2174 = vadd.f32 %v2110, 1.0
        %v2175 = vadd.f32 %v2111, 1.0
        %v2176 = vadd.f32 %v2112, 1.0
        %v2177 = vadd.f32 %v2113, 1.0
        %v2178 = vadd.f32 %v2114, 1.0
        %v2179 = vadd.f32 %v2115, 1.0
        %v2180 = vadd.f32 %v2116, 1.0
        %v2181 = vadd.f32 %v2117, 1.0
        %v2182 = vadd.f32 %v2118, 1.0
        %v2183 = vadd.f32 %v2119, 1.0
        %v2184 = vadd.f32 %v2120, 1.0
        %v2185 = vadd.f32 %v2121, 1.0
        %v2186 = vadd.f32 %v2122, 1.0
        %v2187 = vadd.f32 %v2123, 1.0
        %v2188 = vadd.f32 %v2124, 1.0
        %v2189 = vadd.f32 %v2125, 1.0
        %v2190 = vadd.f32 %v2126, 1.0
        %v2191 = vadd.f32 %v2127, 1.0
        %v2192 = vadd.f32 %v2128, 1.0
        %v2193 = vadd.f32 %v2129, 1.0
        %v2194 = vadd.f32 %v2130, 1.0
        %v2195 = vadd.f32 %v2131, 1.0
        %v2196 = vadd.f32 %v2132, 1.0
        %v2197 = vadd.f32 %v2133, 1.0
        %v2198 = vadd.f32 %v2134, 1.0
        %v2199 = vadd.f32 %v2135, 1.0
        %v2200 = vadd.f32 %v2136, 1.0
        %v2201 = vadd.f32 %v2137, 1.0
        %v2202 = vadd.f32 %v2138, 1.0
        %v2203 = vadd.f32 %v2139, 1.0
        %v2204 = vadd.f32 %v2140, 1.0
        %v2205 = vadd.f32 %v2141, 1.0
        %v2206 = vadd.f32 %v2142, 1.0
        %v2207 = vadd.f32 %v2143, 1.0
        %v2208 = vadd.f32 %v2144, 1.0
        %v2209 = vadd.f32 %v2145, 1.0
        %v2210 = vadd.f32 %v2146, 1.0
        %v2211 = vmul.f32 %v2147, 0.5
        %v2212 = vmul.f32 %v2148, 0.5
        %v2213 = vmul.f32 %v2149, 0.5
        %v2214 = vmul.f32 %v2150, 0.5
        %v2215 = vmul.f32 %v2151, 0.5
        %v2216 = vmul.f32 %v2152, 0.5
        %v2217 = vmul.f32 %v2153, 0.5
        %v2218 = vmul.f32 %v2154, 0.5
        %v2219 = vmul.f32 %v2155, 0.5
        %v2220 = vmul.f32 %v2156, 0.5
        %v2221 = vmul.f32 %v2157, 0.5
        %v2222 = vmul.f32 %v2158, 0.5
        %v2223 = vmul.f32 %v2159, 0.5
        %v2224 = vmul.f32 %v2160, 0.5
        %v2225 = vmul.f32 %v2161, 0.5
        %v2226 = vmul.f32 %v2162, 0.5
        %v2227 = vmul.f32 %v2163, 0.5
        %v2228 = vmul.f32 %v2164, 0.5
        %v2229 = vmul.f32 %v2165, 0.5
        %v2230 = vmul.f32 %v2166, 0.5
        %v2231 = vmul.f32 %v2167, 0.5
        %v2232 = vmul.f32 %v2168, 0.5
        %v2233 = vmul.f32 %v2169, 0.5
        %v2234 = vmul.f32 %v2170, 0.5
        %v2235 = vmul.f32 %v2171, 0.5
        %v2236 = vmul.f32 %v2172, 0.5
        %v2237 = vmul.f32 %v2173, 0.5
        %v2238 = vmul.f32 %v2174, 0.5
        %v2239 = vmul.f32 %v2175, 0.5
        %v2240 = vmul.f32 %v2176, 0.5
        %v2241 = vmul.f32 %v2177, 0.5
        %v2242 = vmul.f32 %v2178, 0.5
        %v2243 = vmul.f32 %v2179, 0.5
        %v2244 = vmul.f32 %v2180, 0.5
        %v2245 = vmul.f32 %v2181, 0.5
        %v2246 = vmul.f32 %v2182, 0.5
        %v2247 = vmul.f32 %v2183, 0.5
        %v2248 = vmul.f32 %v2184, 0.5
        %v2249 = vmul.f32 %v2185, 0.5
        %v2250 = vmul.f32 %v2186, 0.5
        %v2251 = vmul.f32 %v2187, 0.5
        %v2252 = vmul.f32 %v2188, 0.5
        %v2253 = vmul.f32 %v2189, 0.5
        %v2254 = vmul.f32 %v2190, 0.5
        %v2255 = vmul.f32 %v2191, 0.5
        %v2256 = vmul.f32 %v2192, 0.5
        %v2257 = vmul.f32 %v2193, 0.5
        %v2258 = vmul.f32 %v2194, 0.5
        %v2259 = vmul.f32 %v2195, 0.5
        %v2260 = vmul.f32 %v2196, 0.5
        %v2261 = vmul.f32 %v2197, 0.5
        %v2262 = vmul.f32 %v2198, 0.5
        %v2263 = vmul.f32 %v2199, 0.5
        %v2264 = vmul.f32 %v2200, 0.5
        %v2265 = vmul.f32 %v2201, 0.5
        %v2266 = vmul.f32 %v2202, 0.5
        %v2267 = vmul.f32 %v2203, 0.5
        %v2268 = vmul.f32 %v2204, 0.5
        %v2269 = vmul.f32 %v2205, 0.5
        %v2270 = vmul.f32 %v2206, 0.5
        %v2271 = vmul.f32 %v2207, 0.5
        %v2272 = vmul.f32 %v2208, 0.5
        %v2273 = vmul.f32 %v2209, 0.5
        %v2274 = vmul.f32 %v2210, 0.5
        %v2275 = vmul.f32 %v1577, %v2211
        %v2276 = vmul.f32 %v1626, %v2212
        %v2277 = vmul.f32 %v1675, %v2213
        %v2278 = vmul.f32 %v1724, %v2214
        %v2279 = vmul.f32 %v1579, %v2215
        %v2280 = vmul.f32 %v1628, %v2216
        %v2281 = vmul.f32 %v1677, %v2217
        %v2282 = vmul.f32 %v1726, %v2218
        %v2283 = vmul.f32 %v1582, %v2219
        %v2284 = vmul.f32 %v1631, %v2220
        %v2285 = vmul.f32 %v1680, %v2221
        %v2286 = vmul.f32 %v1729, %v2222
        %v2287 = vmul.f32 %v1584, %v2223
        %v2288 = vmul.f32 %v1633, %v2224
        %v2289 = vmul.f32 %v1682, %v2225
        %v2290 = vmul.f32 %v1731, %v2226
        %v2291 = vmul.f32 %v1587, %v2227
        %v2292 = vmul.f32 %v1636, %v2228
        %v2293 = vmul.f32 %v1685, %v2229
        %v2294 = vmul.f32 %v1734, %v2230
        %v2295 = vmul.f32 %v1589, %v2231
        %v2296 = vmul.f32 %v1638, %v2232
        %v2297 = vmul.f32 %v1687, %v2233
        %v2298 = vmul.f32 %v1736, %v2234
        %v2299 = vmul.f32 %v1592, %v2235
        %v2300 = vmul.f32 %v1641, %v2236
        %v2301 = vmul.f32 %v1690, %v2237
        %v2302 = vmul.f32 %v1739, %v2238
        %v2303 = vmul.f32 %v1594, %v2239
        %v2304 = vmul.f32 %v1643, %v2240
        %v2305 = vmul.f32 %v1692, %v2241
        %v2306 = vmul.f32 %v1741, %v2242
        %v2307 = vmul.f32 %v1597, %v2243
        %v2308 = vmul.f32 %v1646, %v2244
        %v2309 = vmul.f32 %v1695, %v2245
        %v2310 = vmul.f32 %v1744, %v2246
        %v2311 = vmul.f32 %v1599, %v2247
        %v2312 = vmul.f32 %v1648, %v2248
        %v2313 = vmul.f32 %v1697, %v2249
        %v2314 = vmul.f32 %v1746, %v2250
        %v2315 = vmul.f32 %v1602, %v2251
        %v2316 = vmul.f32 %v1651, %v2252
        %v2317 = vmul.f32 %v1700, %v2253
        %v2318 = vmul.f32 %v1749, %v2254
        %v2319 = vmul.f32 %v1604, %v2255
        %v2320 = vmul.f32 %v1653, %v2256
        %v2321 = vmul.f32 %v1702, %v2257
        %v2322 = vmul.f32 %v1751, %v2258
        %v2323 = vmul.f32 %v1607, %v2259
        %v2324 = vmul.f32 %v1656, %v2260
        %v2325 = vmul.f32 %v1705, %v2261
        %v2326 = vmul.f32 %v1754, %v2262
        %v2327 = vmul.f32 %v1609, %v2263
        %v2328 = vmul.f32 %v1658, %v2264
        %v2329 = vmul.f32 %v1707, %v2265
        %v2330 = vmul.f32 %v1756, %v2266
        %v2331 = vmul.f32 %v1612, %v2267
        %v2332 = vmul.f32 %v1661, %v2268
        %v2333 = vmul.f32 %v1710, %v2269
        %v2334 = vmul.f32 %v1759, %v2270
        %v2335 = vmul.f32 %v1614, %v2271
        %v2336 = vmul.f32 %v1663, %v2272
        %v2337 = vmul.f32 %v1712, %v2273
        %v2338 = vmul.f32 %v1761, %v2274
        %v2339 = vld [vmem:[%s8] sm:$0xf]
        %v2340 = vld [vmem:[%s8 + $0x4] sm:$0xf]
        %v2341 = vld [vmem:[%s8 + $0x8] sm:$0xf]
        %v2342 = vld [vmem:[%s8 + $0xc] sm:$0xf]
        %v2343 = vld [vmem:[%s8 + $0x10] sm:$0xf]
        %v2344 = vld [vmem:[%s8 + $0x14] sm:$0xf]
        %v2345 = vld [vmem:[%s8 + $0x18] sm:$0xf]
        %v2346 = vld [vmem:[%s8 + $0x1c] sm:$0xf]
        %v2347 = vld [vmem:[%s8 + $0x20] sm:$0xf]
        %v2348 = vld [vmem:[%s8 + $0x24] sm:$0xf]
        %v2349 = vld [vmem:[%s8 + $0x28] sm:$0xf]
        %v2350 = vld [vmem:[%s8 + $0x2c] sm:$0xf]
        %v2351 = vld [vmem:[%s8 + $0x30] sm:$0xf]
        %v2352 = vld [vmem:[%s8 + $0x34] sm:$0xf]
        %v2353 = vld [vmem:[%s8 + $0x38] sm:$0xf]
        %v2354 = vld [vmem:[%s8 + $0x3c] sm:$0xf]
        %v2355 = vld [vmem:[%s9] sm:$0x1]
        %v2357 = vperm.slane %v2355, 0
        %v2375 = vunpack.c.l.b16 %v2339
        %v2376 = vunpack.c.l.b16 %v2340
        %v2377 = vunpack.c.l.b16 %v2341
        %v2378 = vunpack.c.l.b16 %v2342
        %v2379 = vunpack.c.l.b16 %v2343
        %v2380 = vunpack.c.l.b16 %v2344
        %v2381 = vunpack.c.l.b16 %v2345
        %v2382 = vunpack.c.l.b16 %v2346
        %v2383 = vunpack.c.l.b16 %v2347
        %v2384 = vunpack.c.l.b16 %v2348
        %v2385 = vunpack.c.l.b16 %v2349
        %v2386 = vunpack.c.l.b16 %v2350
        %v2387 = vunpack.c.l.b16 %v2351
        %v2388 = vunpack.c.l.b16 %v2352
        %v2389 = vunpack.c.l.b16 %v2353
        %v2390 = vunpack.c.l.b16 %v2354
        %v2391 = vpack.c.b16 %v2376, %v2375
        %v2392 = vpack.c.b16 %v2378, %v2377
        %v2393 = vpack.c.b16 %v2380, %v2379
        %v2394 = vpack.c.b16 %v2382, %v2381
        %v2395 = vpack.c.b16 %v2384, %v2383
        %v2396 = vpack.c.b16 %v2386, %v2385
        %v2397 = vpack.c.b16 %v2388, %v2387
        %v2398 = vpack.c.b16 %v2390, %v2389
        %2407 = vmatpush.bf16.msra.mxu0 %v2398
        %2408 = vmatpush.bf16.msra.mxu0 %v2397
        %2409 = vmatpush.bf16.msra.mxu0 %v2396
        %2410 = vmatpush.bf16.msra.mxu0 %v2395
        %2411 = vmatpush.bf16.msra.mxu0 %v2394
        %2412 = vmatpush.bf16.msra.mxu0 %v2393
        %2413 = vmatpush.bf16.msra.mxu0 %v2392
        %2414 = vmatpush.bf16.msra.mxu0 %v2391
        %2415 = vmatmul.bf16.gmra.mxu0 %v1357
        %v2416 = vpop.f32.mrf.mxu0
        %v2417 = vadd.f32 %v2357, %v2416
        %v2418 = vpop.f32.mrf.mxu0
        %v2419 = vadd.f32 %v2357, %v2418
        %2420 = vmatmul.bf16.gmra.mxu0 %v1358
        %v2421 = vpop.f32.mrf.mxu0
        %v2422 = vadd.f32 %v2357, %v2421
        %v2423 = vpop.f32.mrf.mxu0
        %v2424 = vadd.f32 %v2357, %v2423
        %2425 = vmatmul.bf16.gmra.mxu0 %v1359
        %v2426 = vpop.f32.mrf.mxu0
        %v2427 = vadd.f32 %v2357, %v2426
        %v2428 = vpop.f32.mrf.mxu0
        %v2429 = vadd.f32 %v2357, %v2428
        %2430 = vmatmul.bf16.gmra.mxu0 %v1360
        %v2431 = vpop.f32.mrf.mxu0
        %v2432 = vadd.f32 %v2357, %v2431
        %v2433 = vpop.f32.mrf.mxu0
        %v2434 = vadd.f32 %v2357, %v2433
        %2435 = vmatmul.bf16.gmra.mxu0 %v1361
        %v2436 = vpop.f32.mrf.mxu0
        %v2437 = vadd.f32 %v2357, %v2436
        %v2438 = vpop.f32.mrf.mxu0
        %v2439 = vadd.f32 %v2357, %v2438
        %2440 = vmatmul.bf16.gmra.mxu0 %v1362
        %v2441 = vpop.f32.mrf.mxu0
        %v2442 = vadd.f32 %v2357, %v2441
        %v2443 = vpop.f32.mrf.mxu0
        %v2444 = vadd.f32 %v2357, %v2443
        %2445 = vmatmul.bf16.gmra.mxu0 %v1363
        %v2446 = vpop.f32.mrf.mxu0
        %v2447 = vadd.f32 %v2357, %v2446
        %v2448 = vpop.f32.mrf.mxu0
        %v2449 = vadd.f32 %v2357, %v2448
        %2450 = vmatmul.bf16.gmra.mxu0 %v1364
        %v2451 = vpop.f32.mrf.mxu0
        %v2452 = vadd.f32 %v2357, %v2451
        %v2453 = vpop.f32.mrf.mxu0
        %v2454 = vadd.f32 %v2357, %v2453
        %2455 = vdwg.mxu0
        %v2456 = vld [vmem:[#allocation10] sm:$0xf]
        %v2457 = vld [vmem:[#allocation10 + $0x4] sm:$0xf]
        %v2458 = vld [vmem:[#allocation10 + $0x8] sm:$0xf]
        %v2459 = vld [vmem:[#allocation10 + $0xc] sm:$0xf]
        %v2460 = vld [vmem:[#allocation10 + $0x10] sm:$0xf]
        %v2461 = vld [vmem:[#allocation10 + $0x14] sm:$0xf]
        %v2462 = vld [vmem:[#allocation10 + $0x18] sm:$0xf]
        %v2463 = vld [vmem:[#allocation10 + $0x1c] sm:$0xf]
        %v2464 = vld [vmem:[#allocation10 + $0x20] sm:$0xf]
        %v2465 = vld [vmem:[#allocation10 + $0x24] sm:$0xf]
        %v2466 = vld [vmem:[#allocation10 + $0x28] sm:$0xf]
        %v2467 = vld [vmem:[#allocation10 + $0x2c] sm:$0xf]
        %v2468 = vld [vmem:[#allocation10 + $0x30] sm:$0xf]
        %v2469 = vld [vmem:[#allocation10 + $0x34] sm:$0xf]
        %v2470 = vld [vmem:[#allocation10 + $0x38] sm:$0xf]
        %v2471 = vld [vmem:[#allocation10 + $0x3c] sm:$0xf]
        %v2472 = vld [vmem:[%s11] sm:$0x1]
        %v2474 = vperm.slane %v2472, 0
        %v2492 = vunpack.c.l.b16 %v2456
        %v2493 = vunpack.c.l.b16 %v2457
        %v2494 = vunpack.c.l.b16 %v2458
        %v2495 = vunpack.c.l.b16 %v2459
        %v2496 = vunpack.c.l.b16 %v2460
        %v2497 = vunpack.c.l.b16 %v2461
        %v2498 = vunpack.c.l.b16 %v2462
        %v2499 = vunpack.c.l.b16 %v2463
        %v2500 = vunpack.c.l.b16 %v2464
        %v2501 = vunpack.c.l.b16 %v2465
        %v2502 = vunpack.c.l.b16 %v2466
        %v2503 = vunpack.c.l.b16 %v2467
        %v2504 = vunpack.c.l.b16 %v2468
        %v2505 = vunpack.c.l.b16 %v2469
        %v2506 = vunpack.c.l.b16 %v2470
        %v2507 = vunpack.c.l.b16 %v2471
        %v2508 = vpack.c.b16 %v2493, %v2492
        %v2509 = vpack.c.b16 %v2495, %v2494
        %v2510 = vpack.c.b16 %v2497, %v2496
        %v2511 = vpack.c.b16 %v2499, %v2498
        %v2512 = vpack.c.b16 %v2501, %v2500
        %v2513 = vpack.c.b16 %v2503, %v2502
        %v2514 = vpack.c.b16 %v2505, %v2504
        %v2515 = vpack.c.b16 %v2507, %v2506
        %2524 = vmatpush.bf16.msra.mxu0 %v2515
        %2525 = vmatpush.bf16.msra.mxu0 %v2514
        %2526 = vmatpush.bf16.msra.mxu0 %v2513
        %2527 = vmatpush.bf16.msra.mxu0 %v2512
        %2528 = vmatpush.bf16.msra.mxu0 %v2511
        %2529 = vmatpush.bf16.msra.mxu0 %v2510
        %2530 = vmatpush.bf16.msra.mxu0 %v2509
        %2531 = vmatpush.bf16.msra.mxu0 %v2508
        %2532 = vmatmul.bf16.gmra.mxu0 %v1357
        %v2533 = vpop.f32.mrf.mxu0
        %v2534 = vadd.f32 %v2474, %v2533
        %v2535 = vpop.f32.mrf.mxu0
        %v2536 = vadd.f32 %v2474, %v2535
        %2537 = vmatmul.bf16.gmra.mxu0 %v1358
        %v2538 = vpop.f32.mrf.mxu0
        %v2539 = vadd.f32 %v2474, %v2538
        %v2540 = vpop.f32.mrf.mxu0
        %v2541 = vadd.f32 %v2474, %v2540
        %2542 = vmatmul.bf16.gmra.mxu0 %v1359
        %v2543 = vpop.f32.mrf.mxu0
        %v2544 = vadd.f32 %v2474, %v2543
        %v2545 = vpop.f32.mrf.mxu0
        %v2546 = vadd.f32 %v2474, %v2545
        %2547 = vmatmul.bf16.gmra.mxu0 %v1360
        %v2548 = vpop.f32.mrf.mxu0
        %v2549 = vadd.f32 %v2474, %v2548
        %v2550 = vpop.f32.mrf.mxu0
        %v2551 = vadd.f32 %v2474, %v2550
        %2552 = vmatmul.bf16.gmra.mxu0 %v1361
        %v2553 = vpop.f32.mrf.mxu0
        %v2554 = vadd.f32 %v2474, %v2553
        %v2555 = vpop.f32.mrf.mxu0
        %v2556 = vadd.f32 %v2474, %v2555
        %2557 = vmatmul.bf16.gmra.mxu0 %v1362
        %v2558 = vpop.f32.mrf.mxu0
        %v2559 = vadd.f32 %v2474, %v2558
        %v2560 = vpop.f32.mrf.mxu0
        %v2561 = vadd.f32 %v2474, %v2560
        %2562 = vmatmul.bf16.gmra.mxu0 %v1363
        %v2563 = vpop.f32.mrf.mxu0
        %v2564 = vadd.f32 %v2474, %v2563
        %v2565 = vpop.f32.mrf.mxu0
        %v2566 = vadd.f32 %v2474, %v2565
        %2567 = vmatmul.bf16.gmra.mxu0 %v1364
        %v2568 = vpop.f32.mrf.mxu0
        %v2569 = vadd.f32 %v2474, %v2568
        %v2570 = vpop.f32.mrf.mxu0
        %v2571 = vadd.f32 %v2474, %v2570
        %2572 = vdwg.mxu0
        %v2573 = vld [vmem:[#allocation11] sm:$0xf]
        %v2574 = vld [vmem:[#allocation11 + $0x4] sm:$0xf]
        %v2575 = vld [vmem:[#allocation11 + $0x8] sm:$0xf]
        %v2576 = vld [vmem:[#allocation11 + $0xc] sm:$0xf]
        %v2577 = vld [vmem:[#allocation11 + $0x10] sm:$0xf]
        %v2578 = vld [vmem:[#allocation11 + $0x14] sm:$0xf]
        %v2579 = vld [vmem:[#allocation11 + $0x18] sm:$0xf]
        %v2580 = vld [vmem:[#allocation11 + $0x1c] sm:$0xf]
        %v2581 = vld [vmem:[#allocation11 + $0x20] sm:$0xf]
        %v2582 = vld [vmem:[#allocation11 + $0x24] sm:$0xf]
        %v2583 = vld [vmem:[#allocation11 + $0x28] sm:$0xf]
        %v2584 = vld [vmem:[#allocation11 + $0x2c] sm:$0xf]
        %v2585 = vld [vmem:[#allocation11 + $0x30] sm:$0xf]
        %v2586 = vld [vmem:[#allocation11 + $0x34] sm:$0xf]
        %v2587 = vld [vmem:[#allocation11 + $0x38] sm:$0xf]
        %v2588 = vld [vmem:[#allocation11 + $0x3c] sm:$0xf]
        %v2589 = vld [vmem:[%s13] sm:$0x1]
        %v2591 = vperm.slane %v2589, 0
        %v2609 = vunpack.c.l.b16 %v2573
        %v2610 = vunpack.c.l.b16 %v2574
        %v2611 = vunpack.c.l.b16 %v2575
        %v2612 = vunpack.c.l.b16 %v2576
        %v2613 = vunpack.c.l.b16 %v2577
        %v2614 = vunpack.c.l.b16 %v2578
        %v2615 = vunpack.c.l.b16 %v2579
        %v2616 = vunpack.c.l.b16 %v2580
        %v2617 = vunpack.c.l.b16 %v2581
        %v2618 = vunpack.c.l.b16 %v2582
        %v2619 = vunpack.c.l.b16 %v2583
        %v2620 = vunpack.c.l.b16 %v2584
        %v2621 = vunpack.c.l.b16 %v2585
        %v2622 = vunpack.c.l.b16 %v2586
        %v2623 = vunpack.c.l.b16 %v2587
        %v2624 = vunpack.c.l.b16 %v2588
        %v2625 = vpack.c.b16 %v2610, %v2609
        %v2626 = vpack.c.b16 %v2612, %v2611
        %v2627 = vpack.c.b16 %v2614, %v2613
        %v2628 = vpack.c.b16 %v2616, %v2615
        %v2629 = vpack.c.b16 %v2618, %v2617
        %v2630 = vpack.c.b16 %v2620, %v2619
        %v2631 = vpack.c.b16 %v2622, %v2621
        %v2632 = vpack.c.b16 %v2624, %v2623
        %2641 = vmatpush.bf16.msra.mxu0 %v2632
        %2642 = vmatpush.bf16.msra.mxu0 %v2631
        %2643 = vmatpush.bf16.msra.mxu0 %v2630
        %2644 = vmatpush.bf16.msra.mxu0 %v2629
        %2645 = vmatpush.bf16.msra.mxu0 %v2628
        %2646 = vmatpush.bf16.msra.mxu0 %v2627
        %2647 = vmatpush.bf16.msra.mxu0 %v2626
        %2648 = vmatpush.bf16.msra.mxu0 %v2625
        %2649 = vmatmul.bf16.gmra.mxu0 %v1357
        %v2650 = vpop.f32.mrf.mxu0
        %v2651 = vadd.f32 %v2591, %v2650
        %v2652 = vpop.f32.mrf.mxu0
        %v2653 = vadd.f32 %v2591, %v2652
        %2654 = vmatmul.bf16.gmra.mxu0 %v1358
        %v2655 = vpop.f32.mrf.mxu0
        %v2656 = vadd.f32 %v2591, %v2655
        %v2657 = vpop.f32.mrf.mxu0
        %v2658 = vadd.f32 %v2591, %v2657
        %2659 = vmatmul.bf16.gmra.mxu0 %v1359
        %v2660 = vpop.f32.mrf.mxu0
        %v2661 = vadd.f32 %v2591, %v2660
        %v2662 = vpop.f32.mrf.mxu0
        %v2663 = vadd.f32 %v2591, %v2662
        %2664 = vmatmul.bf16.gmra.mxu0 %v1360
        %v2665 = vpop.f32.mrf.mxu0
        %v2666 = vadd.f32 %v2591, %v2665
        %v2667 = vpop.f32.mrf.mxu0
        %v2668 = vadd.f32 %v2591, %v2667
        %2669 = vmatmul.bf16.gmra.mxu0 %v1361
        %v2670 = vpop.f32.mrf.mxu0
        %v2671 = vadd.f32 %v2591, %v2670
        %v2672 = vpop.f32.mrf.mxu0
        %v2673 = vadd.f32 %v2591, %v2672
        %2674 = vmatmul.bf16.gmra.mxu0 %v1362
        %v2675 = vpop.f32.mrf.mxu0
        %v2676 = vadd.f32 %v2591, %v2675
        %v2677 = vpop.f32.mrf.mxu0
        %v2678 = vadd.f32 %v2591, %v2677
        %2679 = vmatmul.bf16.gmra.mxu0 %v1363
        %v2680 = vpop.f32.mrf.mxu0
        %v2681 = vadd.f32 %v2591, %v2680
        %v2682 = vpop.f32.mrf.mxu0
        %v2683 = vadd.f32 %v2591, %v2682
        %2684 = vmatmul.bf16.gmra.mxu0 %v1364
        %v2685 = vpop.f32.mrf.mxu0
        %v2686 = vadd.f32 %v2591, %v2685
        %v2687 = vpop.f32.mrf.mxu0
        %v2688 = vadd.f32 %v2591, %v2687
        %2689 = vdwg.mxu0
        %2706 = vrot.lane.b32.xlu0 %v2417, 96
        %v2707 = vpop.permute.xlu0 %2706
        %2708 = vrot.lane.b32.xlu0 %v2419, 96
        %v2709 = vpop.permute.xlu0 %2708
        %2710 = vrot.lane.b32.xlu0 %v2422, 96
        %v2711 = vpop.permute.xlu0 %2710
        %2712 = vrot.lane.b32.xlu0 %v2424, 96
        %v2713 = vpop.permute.xlu0 %2712
        %2714 = vrot.lane.b32.xlu0 %v2427, 96
        %v2715 = vpop.permute.xlu0 %2714
        %2716 = vrot.lane.b32.xlu0 %v2429, 96
        %v2717 = vpop.permute.xlu0 %2716
        %2718 = vrot.lane.b32.xlu0 %v2432, 96
        %v2719 = vpop.permute.xlu0 %2718
        %2720 = vrot.lane.b32.xlu0 %v2434, 96
        %v2721 = vpop.permute.xlu0 %2720
        %2722 = vrot.lane.b32.xlu0 %v2437, 96
        %v2723 = vpop.permute.xlu0 %2722
        %2724 = vrot.lane.b32.xlu0 %v2439, 96
        %v2725 = vpop.permute.xlu0 %2724
        %2726 = vrot.lane.b32.xlu0 %v2442, 96
        %v2727 = vpop.permute.xlu0 %2726
        %2728 = vrot.lane.b32.xlu0 %v2444, 96
        %v2729 = vpop.permute.xlu0 %2728
        %2730 = vrot.lane.b32.xlu0 %v2447, 96
        %v2731 = vpop.permute.xlu0 %2730
        %2732 = vrot.lane.b32.xlu0 %v2449, 96
        %v2733 = vpop.permute.xlu0 %2732
        %2734 = vrot.lane.b32.xlu0 %v2452, 96
        %v2735 = vpop.permute.xlu0 %2734
        %2736 = vrot.lane.b32.xlu0 %v2454, 96
        %v2737 = vpop.permute.xlu0 %2736
        %2754 = vrot.lane.b32.xlu0 %v2417, 64
        %v2755 = vpop.permute.xlu0 %2754
        %2756 = vrot.lane.b32.xlu0 %v2419, 64
        %v2757 = vpop.permute.xlu0 %2756
        %2758 = vrot.lane.b32.xlu0 %v2422, 64
        %v2759 = vpop.permute.xlu0 %2758
        %2760 = vrot.lane.b32.xlu0 %v2424, 64
        %v2761 = vpop.permute.xlu0 %2760
        %2762 = vrot.lane.b32.xlu0 %v2427, 64
        %v2763 = vpop.permute.xlu0 %2762
        %2764 = vrot.lane.b32.xlu0 %v2429, 64
        %v2765 = vpop.permute.xlu0 %2764
        %2766 = vrot.lane.b32.xlu0 %v2432, 64
        %v2767 = vpop.permute.xlu0 %2766
        %2768 = vrot.lane.b32.xlu0 %v2434, 64
        %v2769 = vpop.permute.xlu0 %2768
        %2770 = vrot.lane.b32.xlu0 %v2437, 64
        %v2771 = vpop.permute.xlu0 %2770
        %2772 = vrot.lane.b32.xlu0 %v2439, 64
        %v2773 = vpop.permute.xlu0 %2772
        %2774 = vrot.lane.b32.xlu0 %v2442, 64
        %v2775 = vpop.permute.xlu0 %2774
        %2776 = vrot.lane.b32.xlu0 %v2444, 64
        %v2777 = vpop.permute.xlu0 %2776
        %2778 = vrot.lane.b32.xlu0 %v2447, 64
        %v2779 = vpop.permute.xlu0 %2778
        %2780 = vrot.lane.b32.xlu0 %v2449, 64
        %v2781 = vpop.permute.xlu0 %2780
        %2782 = vrot.lane.b32.xlu0 %v2452, 64
        %v2783 = vpop.permute.xlu0 %2782
        %2784 = vrot.lane.b32.xlu0 %v2454, 64
        %v2785 = vpop.permute.xlu0 %2784
        %2802 = vrot.lane.b32.xlu0 %v2417, 32
        %v2803 = vpop.permute.xlu0 %2802
        %2804 = vrot.lane.b32.xlu0 %v2419, 32
        %v2805 = vpop.permute.xlu0 %2804
        %2806 = vrot.lane.b32.xlu0 %v2422, 32
        %v2807 = vpop.permute.xlu0 %2806
        %2808 = vrot.lane.b32.xlu0 %v2424, 32
        %v2809 = vpop.permute.xlu0 %2808
        %2810 = vrot.lane.b32.xlu0 %v2427, 32
        %v2811 = vpop.permute.xlu0 %2810
        %2812 = vrot.lane.b32.xlu0 %v2429, 32
        %v2813 = vpop.permute.xlu0 %2812
        %2814 = vrot.lane.b32.xlu0 %v2432, 32
        %v2815 = vpop.permute.xlu0 %2814
        %2816 = vrot.lane.b32.xlu0 %v2434, 32
        %v2817 = vpop.permute.xlu0 %2816
        %2818 = vrot.lane.b32.xlu0 %v2437, 32
        %v2819 = vpop.permute.xlu0 %2818
        %2820 = vrot.lane.b32.xlu0 %v2439, 32
        %v2821 = vpop.permute.xlu0 %2820
        %2822 = vrot.lane.b32.xlu0 %v2442, 32
        %v2823 = vpop.permute.xlu0 %2822
        %2824 = vrot.lane.b32.xlu0 %v2444, 32
        %v2825 = vpop.permute.xlu0 %2824
        %2826 = vrot.lane.b32.xlu0 %v2447, 32
        %v2827 = vpop.permute.xlu0 %2826
        %2828 = vrot.lane.b32.xlu0 %v2449, 32
        %v2829 = vpop.permute.xlu0 %2828
        %2830 = vrot.lane.b32.xlu0 %v2452, 32
        %v2831 = vpop.permute.xlu0 %2830
        %2832 = vrot.lane.b32.xlu0 %v2454, 32
        %v2833 = vpop.permute.xlu0 %2832
        %2866 = vrot.lane.b32.xlu0 %v2534, 96
        %v2867 = vpop.permute.xlu0 %2866
        %2868 = vrot.lane.b32.xlu0 %v2536, 96
        %v2869 = vpop.permute.xlu0 %2868
        %2870 = vrot.lane.b32.xlu0 %v2539, 96
        %v2871 = vpop.permute.xlu0 %2870
        %2872 = vrot.lane.b32.xlu0 %v2541, 96
        %v2873 = vpop.permute.xlu0 %2872
        %2874 = vrot.lane.b32.xlu0 %v2544, 96
        %v2875 = vpop.permute.xlu0 %2874
        %2876 = vrot.lane.b32.xlu0 %v2546, 96
        %v2877 = vpop.permute.xlu0 %2876
        %2878 = vrot.lane.b32.xlu0 %v2549, 96
        %v2879 = vpop.permute.xlu0 %2878
        %2880 = vrot.lane.b32.xlu0 %v2551, 96
        %v2881 = vpop.permute.xlu0 %2880
        %2882 = vrot.lane.b32.xlu0 %v2554, 96
        %v2883 = vpop.permute.xlu0 %2882
        %2884 = vrot.lane.b32.xlu0 %v2556, 96
        %v2885 = vpop.permute.xlu0 %2884
        %2886 = vrot.lane.b32.xlu0 %v2559, 96
        %v2887 = vpop.permute.xlu0 %2886
        %2888 = vrot.lane.b32.xlu0 %v2561, 96
        %v2889 = vpop.permute.xlu0 %2888
        %2890 = vrot.lane.b32.xlu0 %v2564, 96
        %v2891 = vpop.permute.xlu0 %2890
        %2892 = vrot.lane.b32.xlu0 %v2566, 96
        %v2893 = vpop.permute.xlu0 %2892
        %2894 = vrot.lane.b32.xlu0 %v2569, 96
        %v2895 = vpop.permute.xlu0 %2894
        %2896 = vrot.lane.b32.xlu0 %v2571, 96
        %v2897 = vpop.permute.xlu0 %2896
        %2914 = vrot.lane.b32.xlu0 %v2534, 64
        %v2915 = vpop.permute.xlu0 %2914
        %2916 = vrot.lane.b32.xlu0 %v2536, 64
        %v2917 = vpop.permute.xlu0 %2916
        %2918 = vrot.lane.b32.xlu0 %v2539, 64
        %v2919 = vpop.permute.xlu0 %2918
        %2920 = vrot.lane.b32.xlu0 %v2541, 64
        %v2921 = vpop.permute.xlu0 %2920
        %2922 = vrot.lane.b32.xlu0 %v2544, 64
        %v2923 = vpop.permute.xlu0 %2922
        %2924 = vrot.lane.b32.xlu0 %v2546, 64
        %v2925 = vpop.permute.xlu0 %2924
        %2926 = vrot.lane.b32.xlu0 %v2549, 64
        %v2927 = vpop.permute.xlu0 %2926
        %2928 = vrot.lane.b32.xlu0 %v2551, 64
        %v2929 = vpop.permute.xlu0 %2928
        %2930 = vrot.lane.b32.xlu0 %v2554, 64
        %v2931 = vpop.permute.xlu0 %2930
        %2932 = vrot.lane.b32.xlu0 %v2556, 64
        %v2933 = vpop.permute.xlu0 %2932
        %2934 = vrot.lane.b32.xlu0 %v2559, 64
        %v2935 = vpop.permute.xlu0 %2934
        %2936 = vrot.lane.b32.xlu0 %v2561, 64
        %v2937 = vpop.permute.xlu0 %2936
        %2938 = vrot.lane.b32.xlu0 %v2564, 64
        %v2939 = vpop.permute.xlu0 %2938
        %2940 = vrot.lane.b32.xlu0 %v2566, 64
        %v2941 = vpop.permute.xlu0 %2940
        %2942 = vrot.lane.b32.xlu0 %v2569, 64
        %v2943 = vpop.permute.xlu0 %2942
        %2944 = vrot.lane.b32.xlu0 %v2571, 64
        %v2945 = vpop.permute.xlu0 %2944
        %2962 = vrot.lane.b32.xlu0 %v2534, 32
        %v2963 = vpop.permute.xlu0 %2962
        %2964 = vrot.lane.b32.xlu0 %v2536, 32
        %v2965 = vpop.permute.xlu0 %2964
        %2966 = vrot.lane.b32.xlu0 %v2539, 32
        %v2967 = vpop.permute.xlu0 %2966
        %2968 = vrot.lane.b32.xlu0 %v2541, 32
        %v2969 = vpop.permute.xlu0 %2968
        %2970 = vrot.lane.b32.xlu0 %v2544, 32
        %v2971 = vpop.permute.xlu0 %2970
        %2972 = vrot.lane.b32.xlu0 %v2546, 32
        %v2973 = vpop.permute.xlu0 %2972
        %2974 = vrot.lane.b32.xlu0 %v2549, 32
        %v2975 = vpop.permute.xlu0 %2974
        %2976 = vrot.lane.b32.xlu0 %v2551, 32
        %v2977 = vpop.permute.xlu0 %2976
        %2978 = vrot.lane.b32.xlu0 %v2554, 32
        %v2979 = vpop.permute.xlu0 %2978
        %2980 = vrot.lane.b32.xlu0 %v2556, 32
        %v2981 = vpop.permute.xlu0 %2980
        %2982 = vrot.lane.b32.xlu0 %v2559, 32
        %v2983 = vpop.permute.xlu0 %2982
        %2984 = vrot.lane.b32.xlu0 %v2561, 32
        %v2985 = vpop.permute.xlu0 %2984
        %2986 = vrot.lane.b32.xlu0 %v2564, 32
        %v2987 = vpop.permute.xlu0 %2986
        %2988 = vrot.lane.b32.xlu0 %v2566, 32
        %v2989 = vpop.permute.xlu0 %2988
        %2990 = vrot.lane.b32.xlu0 %v2569, 32
        %v2991 = vpop.permute.xlu0 %2990
        %2992 = vrot.lane.b32.xlu0 %v2571, 32
        %v2993 = vpop.permute.xlu0 %2992
        %3026 = vrot.lane.b32.xlu0 %v2651, 96
        %v3027 = vpop.permute.xlu0 %3026
        %3028 = vrot.lane.b32.xlu0 %v2653, 96
        %v3029 = vpop.permute.xlu0 %3028
        %3030 = vrot.lane.b32.xlu0 %v2656, 96
        %v3031 = vpop.permute.xlu0 %3030
        %3032 = vrot.lane.b32.xlu0 %v2658, 96
        %v3033 = vpop.permute.xlu0 %3032
        %3034 = vrot.lane.b32.xlu0 %v2661, 96
        %v3035 = vpop.permute.xlu0 %3034
        %3036 = vrot.lane.b32.xlu0 %v2663, 96
        %v3037 = vpop.permute.xlu0 %3036
        %3038 = vrot.lane.b32.xlu0 %v2666, 96
        %v3039 = vpop.permute.xlu0 %3038
        %3040 = vrot.lane.b32.xlu0 %v2668, 96
        %v3041 = vpop.permute.xlu0 %3040
        %3042 = vrot.lane.b32.xlu0 %v2671, 96
        %v3043 = vpop.permute.xlu0 %3042
        %3044 = vrot.lane.b32.xlu0 %v2673, 96
        %v3045 = vpop.permute.xlu0 %3044
        %3046 = vrot.lane.b32.xlu0 %v2676, 96
        %v3047 = vpop.permute.xlu0 %3046
        %3048 = vrot.lane.b32.xlu0 %v2678, 96
        %v3049 = vpop.permute.xlu0 %3048
        %3050 = vrot.lane.b32.xlu0 %v2681, 96
        %v3051 = vpop.permute.xlu0 %3050
        %3052 = vrot.lane.b32.xlu0 %v2683, 96
        %v3053 = vpop.permute.xlu0 %3052
        %3054 = vrot.lane.b32.xlu0 %v2686, 96
        %v3055 = vpop.permute.xlu0 %3054
        %3056 = vrot.lane.b32.xlu0 %v2688, 96
        %v3057 = vpop.permute.xlu0 %3056
        %3074 = vrot.lane.b32.xlu0 %v2651, 64
        %v3075 = vpop.permute.xlu0 %3074
        %3076 = vrot.lane.b32.xlu0 %v2653, 64
        %v3077 = vpop.permute.xlu0 %3076
        %3078 = vrot.lane.b32.xlu0 %v2656, 64
        %v3079 = vpop.permute.xlu0 %3078
        %3080 = vrot.lane.b32.xlu0 %v2658, 64
        %v3081 = vpop.permute.xlu0 %3080
        %3082 = vrot.lane.b32.xlu0 %v2661, 64
        %v3083 = vpop.permute.xlu0 %3082
        %3084 = vrot.lane.b32.xlu0 %v2663, 64
        %v3085 = vpop.permute.xlu0 %3084
        %3086 = vrot.lane.b32.xlu0 %v2666, 64
        %v3087 = vpop.permute.xlu0 %3086
        %3088 = vrot.lane.b32.xlu0 %v2668, 64
        %v3089 = vpop.permute.xlu0 %3088
        %3090 = vrot.lane.b32.xlu0 %v2671, 64
        %v3091 = vpop.permute.xlu0 %3090
        %3092 = vrot.lane.b32.xlu0 %v2673, 64
        %v3093 = vpop.permute.xlu0 %3092
        %3094 = vrot.lane.b32.xlu0 %v2676, 64
        %v3095 = vpop.permute.xlu0 %3094
        %3096 = vrot.lane.b32.xlu0 %v2678, 64
        %v3097 = vpop.permute.xlu0 %3096
        %3098 = vrot.lane.b32.xlu0 %v2681, 64
        %v3099 = vpop.permute.xlu0 %3098
        %3100 = vrot.lane.b32.xlu0 %v2683, 64
        %v3101 = vpop.permute.xlu0 %3100
        %3102 = vrot.lane.b32.xlu0 %v2686, 64
        %v3103 = vpop.permute.xlu0 %3102
        %3104 = vrot.lane.b32.xlu0 %v2688, 64
        %v3105 = vpop.permute.xlu0 %3104
        %3122 = vrot.lane.b32.xlu0 %v2651, 32
        %v3123 = vpop.permute.xlu0 %3122
        %3124 = vrot.lane.b32.xlu0 %v2653, 32
        %v3125 = vpop.permute.xlu0 %3124
        %3126 = vrot.lane.b32.xlu0 %v2656, 32
        %v3127 = vpop.permute.xlu0 %3126
        %3128 = vrot.lane.b32.xlu0 %v2658, 32
        %v3129 = vpop.permute.xlu0 %3128
        %3130 = vrot.lane.b32.xlu0 %v2661, 32
        %v3131 = vpop.permute.xlu0 %3130
        %3132 = vrot.lane.b32.xlu0 %v2663, 32
        %v3133 = vpop.permute.xlu0 %3132
        %3134 = vrot.lane.b32.xlu0 %v2666, 32
        %v3135 = vpop.permute.xlu0 %3134
        %3136 = vrot.lane.b32.xlu0 %v2668, 32
        %v3137 = vpop.permute.xlu0 %3136
        %3138 = vrot.lane.b32.xlu0 %v2671, 32
        %v3139 = vpop.permute.xlu0 %3138
        %3140 = vrot.lane.b32.xlu0 %v2673, 32
        %v3141 = vpop.permute.xlu0 %3140
        %3142 = vrot.lane.b32.xlu0 %v2676, 32
        %v3143 = vpop.permute.xlu0 %3142
        %3144 = vrot.lane.b32.xlu0 %v2678, 32
        %v3145 = vpop.permute.xlu0 %3144
        %3146 = vrot.lane.b32.xlu0 %v2681, 32
        %v3147 = vpop.permute.xlu0 %3146
        %3148 = vrot.lane.b32.xlu0 %v2683, 32
        %v3149 = vpop.permute.xlu0 %3148
        %3150 = vrot.lane.b32.xlu0 %v2686, 32
        %v3151 = vpop.permute.xlu0 %3150
        %3152 = vrot.lane.b32.xlu0 %v2688, 32
        %v3153 = vpop.permute.xlu0 %3152
        %v3170 = vmul.f32 %v2417, %v2417
        %v3171 = vmul.f32 %v2419, %v2419
        %v3172 = vmul.f32 %v2422, %v2422
        %v3173 = vmul.f32 %v2424, %v2424
        %v3174 = vmul.f32 %v2427, %v2427
        %v3175 = vmul.f32 %v2429, %v2429
        %v3176 = vmul.f32 %v2432, %v2432
        %v3177 = vmul.f32 %v2434, %v2434
        %v3178 = vmul.f32 %v2437, %v2437
        %v3179 = vmul.f32 %v2439, %v2439
        %v3180 = vmul.f32 %v2442, %v2442
        %v3181 = vmul.f32 %v2444, %v2444
        %v3182 = vmul.f32 %v2447, %v2447
        %v3183 = vmul.f32 %v2449, %v2449
        %v3184 = vmul.f32 %v2452, %v2452
        %v3185 = vmul.f32 %v2454, %v2454
        %v3186 = vmul.f32 %v2707, %v2707
        %v3187 = vmul.f32 %v2709, %v2709
        %v3188 = vmul.f32 %v2711, %v2711
        %v3189 = vmul.f32 %v2713, %v2713
        %v3190 = vmul.f32 %v2715, %v2715
        %v3191 = vmul.f32 %v2717, %v2717
        %v3192 = vmul.f32 %v2719, %v2719
        %v3193 = vmul.f32 %v2721, %v2721
        %v3194 = vmul.f32 %v2723, %v2723
        %v3195 = vmul.f32 %v2725, %v2725
        %v3196 = vmul.f32 %v2727, %v2727
        %v3197 = vmul.f32 %v2729, %v2729
        %v3198 = vmul.f32 %v2731, %v2731
        %v3199 = vmul.f32 %v2733, %v2733
        %v3200 = vmul.f32 %v2735, %v2735
        %v3201 = vmul.f32 %v2737, %v2737
        %v3202 = vmul.f32 %v2755, %v2755
        %v3203 = vmul.f32 %v2757, %v2757
        %v3204 = vmul.f32 %v2759, %v2759
        %v3205 = vmul.f32 %v2761, %v2761
        %v3206 = vmul.f32 %v2763, %v2763
        %v3207 = vmul.f32 %v2765, %v2765
        %v3208 = vmul.f32 %v2767, %v2767
        %v3209 = vmul.f32 %v2769, %v2769
        %v3210 = vmul.f32 %v2771, %v2771
        %v3211 = vmul.f32 %v2773, %v2773
        %v3212 = vmul.f32 %v2775, %v2775
        %v3213 = vmul.f32 %v2777, %v2777
        %v3214 = vmul.f32 %v2779, %v2779
        %v3215 = vmul.f32 %v2781, %v2781
        %v3216 = vmul.f32 %v2783, %v2783
        %v3217 = vmul.f32 %v2785, %v2785
        %v3218 = vmul.f32 %v2803, %v2803
        %v3219 = vmul.f32 %v2805, %v2805
        %v3220 = vmul.f32 %v2807, %v2807
        %v3221 = vmul.f32 %v2809, %v2809
        %v3222 = vmul.f32 %v2811, %v2811
        %v3223 = vmul.f32 %v2813, %v2813
        %v3224 = vmul.f32 %v2815, %v2815
        %v3225 = vmul.f32 %v2817, %v2817
        %v3226 = vmul.f32 %v2819, %v2819
        %v3227 = vmul.f32 %v2821, %v2821
        %v3228 = vmul.f32 %v2823, %v2823
        %v3229 = vmul.f32 %v2825, %v2825
        %v3230 = vmul.f32 %v2827, %v2827
        %v3231 = vmul.f32 %v2829, %v2829
        %v3232 = vmul.f32 %v2831, %v2831
        %v3233 = vmul.f32 %v2833, %v2833
        %vm3234 = vcmask 261120
        %v3235 = vsel %vm3234, %v3170, 0.0
        %3236 = vadd.xlane.f32.xlu0 %v3235
        %v3237 = vpop.xlane.xlu0 %3236
        %v3238 = vsel %vm3234, %v3171, 0.0
        %3239 = vadd.xlane.f32.xlu0 %v3238
        %v3240 = vpop.xlane.xlu0 %3239
        %v3241 = vsel %vm3234, %v3172, 0.0
        %3242 = vadd.xlane.f32.xlu0 %v3241
        %v3243 = vpop.xlane.xlu0 %3242
        %v3244 = vsel %vm3234, %v3173, 0.0
        %3245 = vadd.xlane.f32.xlu0 %v3244
        %v3246 = vpop.xlane.xlu0 %3245
        %v3247 = vsel %vm3234, %v3174, 0.0
        %3248 = vadd.xlane.f32.xlu0 %v3247
        %v3249 = vpop.xlane.xlu0 %3248
        %v3250 = vsel %vm3234, %v3175, 0.0
        %3251 = vadd.xlane.f32.xlu0 %v3250
        %v3252 = vpop.xlane.xlu0 %3251
        %v3253 = vsel %vm3234, %v3176, 0.0
        %3254 = vadd.xlane.f32.xlu0 %v3253
        %v3255 = vpop.xlane.xlu0 %3254
        %v3256 = vsel %vm3234, %v3177, 0.0
        %3257 = vadd.xlane.f32.xlu0 %v3256
        %v3258 = vpop.xlane.xlu0 %3257
        %v3259 = vsel %vm3234, %v3178, 0.0
        %3260 = vadd.xlane.f32.xlu0 %v3259
        %v3261 = vpop.xlane.xlu0 %3260
        %v3262 = vsel %vm3234, %v3179, 0.0
        %3263 = vadd.xlane.f32.xlu0 %v3262
        %v3264 = vpop.xlane.xlu0 %3263
        %v3265 = vsel %vm3234, %v3180, 0.0
        %3266 = vadd.xlane.f32.xlu0 %v3265
        %v3267 = vpop.xlane.xlu0 %3266
        %v3268 = vsel %vm3234, %v3181, 0.0
        %3269 = vadd.xlane.f32.xlu0 %v3268
        %v3270 = vpop.xlane.xlu0 %3269
        %v3271 = vsel %vm3234, %v3182, 0.0
        %3272 = vadd.xlane.f32.xlu0 %v3271
        %v3273 = vpop.xlane.xlu0 %3272
        %v3274 = vsel %vm3234, %v3183, 0.0
        %3275 = vadd.xlane.f32.xlu0 %v3274
        %v3276 = vpop.xlane.xlu0 %3275
        %v3277 = vsel %vm3234, %v3184, 0.0
        %3278 = vadd.xlane.f32.xlu0 %v3277
        %v3279 = vpop.xlane.xlu0 %3278
        %v3280 = vsel %vm3234, %v3185, 0.0
        %3281 = vadd.xlane.f32.xlu0 %v3280
        %v3282 = vpop.xlane.xlu0 %3281
        %v3283 = vsel %vm3234, %v3186, 0.0
        %3284 = vadd.xlane.f32.xlu0 %v3283
        %v3285 = vpop.xlane.xlu0 %3284
        %v3286 = vsel %vm3234, %v3187, 0.0
        %3287 = vadd.xlane.f32.xlu0 %v3286
        %v3288 = vpop.xlane.xlu0 %3287
        %v3289 = vsel %vm3234, %v3188, 0.0
        %3290 = vadd.xlane.f32.xlu0 %v3289
        %v3291 = vpop.xlane.xlu0 %3290
        %v3292 = vsel %vm3234, %v3189, 0.0
        %3293 = vadd.xlane.f32.xlu0 %v3292
        %v3294 = vpop.xlane.xlu0 %3293
        %v3295 = vsel %vm3234, %v3190, 0.0
        %3296 = vadd.xlane.f32.xlu0 %v3295
        %v3297 = vpop.xlane.xlu0 %3296
        %v3298 = vsel %vm3234, %v3191, 0.0
        %3299 = vadd.xlane.f32.xlu0 %v3298
        %v3300 = vpop.xlane.xlu0 %3299
        %v3301 = vsel %vm3234, %v3192, 0.0
        %3302 = vadd.xlane.f32.xlu0 %v3301
        %v3303 = vpop.xlane.xlu0 %3302
        %v3304 = vsel %vm3234, %v3193, 0.0
        %3305 = vadd.xlane.f32.xlu0 %v3304
        %v3306 = vpop.xlane.xlu0 %3305
        %v3307 = vsel %vm3234, %v3194, 0.0
        %3308 = vadd.xlane.f32.xlu0 %v3307
        %v3309 = vpop.xlane.xlu0 %3308
        %v3310 = vsel %vm3234, %v3195, 0.0
        %3311 = vadd.xlane.f32.xlu0 %v3310
        %v3312 = vpop.xlane.xlu0 %3311
        %v3313 = vsel %vm3234, %v3196, 0.0
        %3314 = vadd.xlane.f32.xlu0 %v3313
        %v3315 = vpop.xlane.xlu0 %3314
        %v3316 = vsel %vm3234, %v3197, 0.0
        %3317 = vadd.xlane.f32.xlu0 %v3316
        %v3318 = vpop.xlane.xlu0 %3317
        %v3319 = vsel %vm3234, %v3198, 0.0
        %3320 = vadd.xlane.f32.xlu0 %v3319
        %v3321 = vpop.xlane.xlu0 %3320
        %v3322 = vsel %vm3234, %v3199, 0.0
        %3323 = vadd.xlane.f32.xlu0 %v3322
        %v3324 = vpop.xlane.xlu0 %3323
        %v3325 = vsel %vm3234, %v3200, 0.0
        %3326 = vadd.xlane.f32.xlu0 %v3325
        %v3327 = vpop.xlane.xlu0 %3326
        %v3328 = vsel %vm3234, %v3201, 0.0
        %3329 = vadd.xlane.f32.xlu0 %v3328
        %v3330 = vpop.xlane.xlu0 %3329
        %v3331 = vsel %vm3234, %v3202, 0.0
        %3332 = vadd.xlane.f32.xlu0 %v3331
        %v3333 = vpop.xlane.xlu0 %3332
        %v3334 = vsel %vm3234, %v3203, 0.0
        %3335 = vadd.xlane.f32.xlu0 %v3334
        %v3336 = vpop.xlane.xlu0 %3335
        %v3337 = vsel %vm3234, %v3204, 0.0
        %3338 = vadd.xlane.f32.xlu0 %v3337
        %v3339 = vpop.xlane.xlu0 %3338
        %v3340 = vsel %vm3234, %v3205, 0.0
        %3341 = vadd.xlane.f32.xlu0 %v3340
        %v3342 = vpop.xlane.xlu0 %3341
        %v3343 = vsel %vm3234, %v3206, 0.0
        %3344 = vadd.xlane.f32.xlu0 %v3343
        %v3345 = vpop.xlane.xlu0 %3344
        %v3346 = vsel %vm3234, %v3207, 0.0
        %3347 = vadd.xlane.f32.xlu0 %v3346
        %v3348 = vpop.xlane.xlu0 %3347
        %v3349 = vsel %vm3234, %v3208, 0.0
        %3350 = vadd.xlane.f32.xlu0 %v3349
        %v3351 = vpop.xlane.xlu0 %3350
        %v3352 = vsel %vm3234, %v3209, 0.0
        %3353 = vadd.xlane.f32.xlu0 %v3352
        %v3354 = vpop.xlane.xlu0 %3353
        %v3355 = vsel %vm3234, %v3210, 0.0
        %3356 = vadd.xlane.f32.xlu0 %v3355
        %v3357 = vpop.xlane.xlu0 %3356
        %v3358 = vsel %vm3234, %v3211, 0.0
        %3359 = vadd.xlane.f32.xlu0 %v3358
        %v3360 = vpop.xlane.xlu0 %3359
        %v3361 = vsel %vm3234, %v3212, 0.0
        %3362 = vadd.xlane.f32.xlu0 %v3361
        %v3363 = vpop.xlane.xlu0 %3362
        %v3364 = vsel %vm3234, %v3213, 0.0
        %3365 = vadd.xlane.f32.xlu0 %v3364
        %v3366 = vpop.xlane.xlu0 %3365
        %v3367 = vsel %vm3234, %v3214, 0.0
        %3368 = vadd.xlane.f32.xlu0 %v3367
        %v3369 = vpop.xlane.xlu0 %3368
        %v3370 = vsel %vm3234, %v3215, 0.0
        %3371 = vadd.xlane.f32.xlu0 %v3370
        %v3372 = vpop.xlane.xlu0 %3371
        %v3373 = vsel %vm3234, %v3216, 0.0
        %3374 = vadd.xlane.f32.xlu0 %v3373
        %v3375 = vpop.xlane.xlu0 %3374
        %v3376 = vsel %vm3234, %v3217, 0.0
        %3377 = vadd.xlane.f32.xlu0 %v3376
        %v3378 = vpop.xlane.xlu0 %3377
        %v3379 = vsel %vm3234, %v3218, 0.0
        %3380 = vadd.xlane.f32.xlu0 %v3379
        %v3381 = vpop.xlane.xlu0 %3380
        %v3382 = vsel %vm3234, %v3219, 0.0
        %3383 = vadd.xlane.f32.xlu0 %v3382
        %v3384 = vpop.xlane.xlu0 %3383
        %v3385 = vsel %vm3234, %v3220, 0.0
        %3386 = vadd.xlane.f32.xlu0 %v3385
        %v3387 = vpop.xlane.xlu0 %3386
        %v3388 = vsel %vm3234, %v3221, 0.0
        %3389 = vadd.xlane.f32.xlu0 %v3388
        %v3390 = vpop.xlane.xlu0 %3389
        %v3391 = vsel %vm3234, %v3222, 0.0
        %3392 = vadd.xlane.f32.xlu0 %v3391
        %v3393 = vpop.xlane.xlu0 %3392
        %v3394 = vsel %vm3234, %v3223, 0.0
        %3395 = vadd.xlane.f32.xlu0 %v3394
        %v3396 = vpop.xlane.xlu0 %3395
        %v3397 = vsel %vm3234, %v3224, 0.0
        %3398 = vadd.xlane.f32.xlu0 %v3397
        %v3399 = vpop.xlane.xlu0 %3398
        %v3400 = vsel %vm3234, %v3225, 0.0
        %3401 = vadd.xlane.f32.xlu0 %v3400
        %v3402 = vpop.xlane.xlu0 %3401
        %v3403 = vsel %vm3234, %v3226, 0.0
        %3404 = vadd.xlane.f32.xlu0 %v3403
        %v3405 = vpop.xlane.xlu0 %3404
        %v3406 = vsel %vm3234, %v3227, 0.0
        %3407 = vadd.xlane.f32.xlu0 %v3406
        %v3408 = vpop.xlane.xlu0 %3407
        %v3409 = vsel %vm3234, %v3228, 0.0
        %3410 = vadd.xlane.f32.xlu0 %v3409
        %v3411 = vpop.xlane.xlu0 %3410
        %v3412 = vsel %vm3234, %v3229, 0.0
        %3413 = vadd.xlane.f32.xlu0 %v3412
        %v3414 = vpop.xlane.xlu0 %3413
        %v3415 = vsel %vm3234, %v3230, 0.0
        %3416 = vadd.xlane.f32.xlu0 %v3415
        %v3417 = vpop.xlane.xlu0 %3416
        %v3418 = vsel %vm3234, %v3231, 0.0
        %3419 = vadd.xlane.f32.xlu0 %v3418
        %v3420 = vpop.xlane.xlu0 %3419
        %v3421 = vsel %vm3234, %v3232, 0.0
        %3422 = vadd.xlane.f32.xlu0 %v3421
        %v3423 = vpop.xlane.xlu0 %3422
        %v3424 = vsel %vm3234, %v3233, 0.0
        %3425 = vadd.xlane.f32.xlu0 %v3424
        %v3426 = vpop.xlane.xlu0 %3425
        %v3427 = vrcp.pop 32.0
        %v3428 = vmul.f32 32.0, %v3427
        %v3429 = vsub.f32 1.0, %v3428
        %v3430 = vmul.f32 %v3427, %v3429
        %v3431 = vadd.f32 %v3427, %v3430
        %vm3432 = vweird.f32 %v3427
        %v3433 = vsel %vm3432, %v3427, %v3431
        %v3434 = vmul.f32 %v3237, %v3433
        %v3435 = vmul.f32 %v3240, %v3433
        %v3436 = vmul.f32 %v3243, %v3433
        %v3437 = vmul.f32 %v3246, %v3433
        %v3438 = vmul.f32 %v3249, %v3433
        %v3439 = vmul.f32 %v3252, %v3433
        %v3440 = vmul.f32 %v3255, %v3433
        %v3441 = vmul.f32 %v3258, %v3433
        %v3442 = vmul.f32 %v3261, %v3433
        %v3443 = vmul.f32 %v3264, %v3433
        %v3444 = vmul.f32 %v3267, %v3433
        %v3445 = vmul.f32 %v3270, %v3433
        %v3446 = vmul.f32 %v3273, %v3433
        %v3447 = vmul.f32 %v3276, %v3433
        %v3448 = vmul.f32 %v3279, %v3433
        %v3449 = vmul.f32 %v3282, %v3433
        %v3450 = vmul.f32 %v3285, %v3433
        %v3451 = vmul.f32 %v3288, %v3433
        %v3452 = vmul.f32 %v3291, %v3433
        %v3453 = vmul.f32 %v3294, %v3433
        %v3454 = vmul.f32 %v3297, %v3433
        %v3455 = vmul.f32 %v3300, %v3433
        %v3456 = vmul.f32 %v3303, %v3433
        %v3457 = vmul.f32 %v3306, %v3433
        %v3458 = vmul.f32 %v3309, %v3433
        %v3459 = vmul.f32 %v3312, %v3433
        %v3460 = vmul.f32 %v3315, %v3433
        %v3461 = vmul.f32 %v3318, %v3433
        %v3462 = vmul.f32 %v3321, %v3433
        %v3463 = vmul.f32 %v3324, %v3433
        %v3464 = vmul.f32 %v3327, %v3433
        %v3465 = vmul.f32 %v3330, %v3433
        %v3466 = vmul.f32 %v3333, %v3433
        %v3467 = vmul.f32 %v3336, %v3433
        %v3468 = vmul.f32 %v3339, %v3433
        %v3469 = vmul.f32 %v3342, %v3433
        %v3470 = vmul.f32 %v3345, %v3433
        %v3471 = vmul.f32 %v3348, %v3433
        %v3472 = vmul.f32 %v3351, %v3433
        %v3473 = vmul.f32 %v3354, %v3433
        %v3474 = vmul.f32 %v3357, %v3433
        %v3475 = vmul.f32 %v3360, %v3433
        %v3476 = vmul.f32 %v3363, %v3433
        %v3477 = vmul.f32 %v3366, %v3433
        %v3478 = vmul.f32 %v3369, %v3433
        %v3479 = vmul.f32 %v3372, %v3433
        %v3480 = vmul.f32 %v3375, %v3433
        %v3481 = vmul.f32 %v3378, %v3433
        %v3482 = vmul.f32 %v3381, %v3433
        %v3483 = vmul.f32 %v3384, %v3433
        %v3484 = vmul.f32 %v3387, %v3433
        %v3485 = vmul.f32 %v3390, %v3433
        %v3486 = vmul.f32 %v3393, %v3433
        %v3487 = vmul.f32 %v3396, %v3433
        %v3488 = vmul.f32 %v3399, %v3433
        %v3489 = vmul.f32 %v3402, %v3433
        %v3490 = vmul.f32 %v3405, %v3433
        %v3491 = vmul.f32 %v3408, %v3433
        %v3492 = vmul.f32 %v3411, %v3433
        %v3493 = vmul.f32 %v3414, %v3433
        %v3494 = vmul.f32 %v3417, %v3433
        %v3495 = vmul.f32 %v3420, %v3433
        %v3496 = vmul.f32 %v3423, %v3433
        %v3497 = vmul.f32 %v3426, %v3433
        %v3498 = vadd.f32 %v3434, 1e-06
        %v3499 = vadd.f32 %v3435, 1e-06
        %v3500 = vadd.f32 %v3436, 1e-06
        %v3501 = vadd.f32 %v3437, 1e-06
        %v3502 = vadd.f32 %v3438, 1e-06
        %v3503 = vadd.f32 %v3439, 1e-06
        %v3504 = vadd.f32 %v3440, 1e-06
        %v3505 = vadd.f32 %v3441, 1e-06
        %v3506 = vadd.f32 %v3442, 1e-06
        %v3507 = vadd.f32 %v3443, 1e-06
        %v3508 = vadd.f32 %v3444, 1e-06
        %v3509 = vadd.f32 %v3445, 1e-06
        %v3510 = vadd.f32 %v3446, 1e-06
        %v3511 = vadd.f32 %v3447, 1e-06
        %v3512 = vadd.f32 %v3448, 1e-06
        %v3513 = vadd.f32 %v3449, 1e-06
        %v3514 = vadd.f32 %v3450, 1e-06
        %v3515 = vadd.f32 %v3451, 1e-06
        %v3516 = vadd.f32 %v3452, 1e-06
        %v3517 = vadd.f32 %v3453, 1e-06
        %v3518 = vadd.f32 %v3454, 1e-06
        %v3519 = vadd.f32 %v3455, 1e-06
        %v3520 = vadd.f32 %v3456, 1e-06
        %v3521 = vadd.f32 %v3457, 1e-06
        %v3522 = vadd.f32 %v3458, 1e-06
        %v3523 = vadd.f32 %v3459, 1e-06
        %v3524 = vadd.f32 %v3460, 1e-06
        %v3525 = vadd.f32 %v3461, 1e-06
        %v3526 = vadd.f32 %v3462, 1e-06
        %v3527 = vadd.f32 %v3463, 1e-06
        %v3528 = vadd.f32 %v3464, 1e-06
        %v3529 = vadd.f32 %v3465, 1e-06
        %v3530 = vadd.f32 %v3466, 1e-06
        %v3531 = vadd.f32 %v3467, 1e-06
        %v3532 = vadd.f32 %v3468, 1e-06
        %v3533 = vadd.f32 %v3469, 1e-06
        %v3534 = vadd.f32 %v3470, 1e-06
        %v3535 = vadd.f32 %v3471, 1e-06
        %v3536 = vadd.f32 %v3472, 1e-06
        %v3537 = vadd.f32 %v3473, 1e-06
        %v3538 = vadd.f32 %v3474, 1e-06
        %v3539 = vadd.f32 %v3475, 1e-06
        %v3540 = vadd.f32 %v3476, 1e-06
        %v3541 = vadd.f32 %v3477, 1e-06
        %v3542 = vadd.f32 %v3478, 1e-06
        %v3543 = vadd.f32 %v3479, 1e-06
        %v3544 = vadd.f32 %v3480, 1e-06
        %v3545 = vadd.f32 %v3481, 1e-06
        %v3546 = vadd.f32 %v3482, 1e-06
        %v3547 = vadd.f32 %v3483, 1e-06
        %v3548 = vadd.f32 %v3484, 1e-06
        %v3549 = vadd.f32 %v3485, 1e-06
        %v3550 = vadd.f32 %v3486, 1e-06
        %v3551 = vadd.f32 %v3487, 1e-06
        %v3552 = vadd.f32 %v3488, 1e-06
        %v3553 = vadd.f32 %v3489, 1e-06
        %v3554 = vadd.f32 %v3490, 1e-06
        %v3555 = vadd.f32 %v3491, 1e-06
        %v3556 = vadd.f32 %v3492, 1e-06
        %v3557 = vadd.f32 %v3493, 1e-06
        %v3558 = vadd.f32 %v3494, 1e-06
        %v3559 = vadd.f32 %v3495, 1e-06
        %v3560 = vadd.f32 %v3496, 1e-06
        %v3561 = vadd.f32 %v3497, 1e-06
        %v3562 = vrsqrt.pop %v3498
        %v3563 = vmul.f32 %v3562, %v3498
        %v3564 = vmul.f32 %v3563, %v3562
        %v3565 = vmul.f32 0.5, %v3564
        %v3566 = vsub.f32 1.5, %v3565
        %v3567 = vmul.f32 %v3562, %v3566
        %vm3568 = vweird.f32 %v3498
        %vm3569 = vweird.f32 %v3562
        %vm3570 = vmor %vm3568, %vm3569
        %v3571 = vsel %vm3570, %v3562, %v3567
        %v3572 = vrsqrt.pop %v3499
        %v3573 = vmul.f32 %v3572, %v3499
        %v3574 = vmul.f32 %v3573, %v3572
        %v3575 = vmul.f32 0.5, %v3574
        %v3576 = vsub.f32 1.5, %v3575
        %v3577 = vmul.f32 %v3572, %v3576
        %vm3578 = vweird.f32 %v3499
        %vm3579 = vweird.f32 %v3572
        %vm3580 = vmor %vm3578, %vm3579
        %v3581 = vsel %vm3580, %v3572, %v3577
        %v3582 = vrsqrt.pop %v3500
        %v3583 = vmul.f32 %v3582, %v3500
        %v3584 = vmul.f32 %v3583, %v3582
        %v3585 = vmul.f32 0.5, %v3584
        %v3586 = vsub.f32 1.5, %v3585
        %v3587 = vmul.f32 %v3582, %v3586
        %vm3588 = vweird.f32 %v3500
        %vm3589 = vweird.f32 %v3582
        %vm3590 = vmor %vm3588, %vm3589
        %v3591 = vsel %vm3590, %v3582, %v3587
        %v3592 = vrsqrt.pop %v3501
        %v3593 = vmul.f32 %v3592, %v3501
        %v3594 = vmul.f32 %v3593, %v3592
        %v3595 = vmul.f32 0.5, %v3594
        %v3596 = vsub.f32 1.5, %v3595
        %v3597 = vmul.f32 %v3592, %v3596
        %vm3598 = vweird.f32 %v3501
        %vm3599 = vweird.f32 %v3592
        %vm3600 = vmor %vm3598, %vm3599
        %v3601 = vsel %vm3600, %v3592, %v3597
        %v3602 = vrsqrt.pop %v3502
        %v3603 = vmul.f32 %v3602, %v3502
        %v3604 = vmul.f32 %v3603, %v3602
        %v3605 = vmul.f32 0.5, %v3604
        %v3606 = vsub.f32 1.5, %v3605
        %v3607 = vmul.f32 %v3602, %v3606
        %vm3608 = vweird.f32 %v3502
        %vm3609 = vweird.f32 %v3602
        %vm3610 = vmor %vm3608, %vm3609
        %v3611 = vsel %vm3610, %v3602, %v3607
        %v3612 = vrsqrt.pop %v3503
        %v3613 = vmul.f32 %v3612, %v3503
        %v3614 = vmul.f32 %v3613, %v3612
        %v3615 = vmul.f32 0.5, %v3614
        %v3616 = vsub.f32 1.5, %v3615
        %v3617 = vmul.f32 %v3612, %v3616
        %vm3618 = vweird.f32 %v3503
        %vm3619 = vweird.f32 %v3612
        %vm3620 = vmor %vm3618, %vm3619
        %v3621 = vsel %vm3620, %v3612, %v3617
        %v3622 = vrsqrt.pop %v3504
        %v3623 = vmul.f32 %v3622, %v3504
        %v3624 = vmul.f32 %v3623, %v3622
        %v3625 = vmul.f32 0.5, %v3624
        %v3626 = vsub.f32 1.5, %v3625
        %v3627 = vmul.f32 %v3622, %v3626
        %vm3628 = vweird.f32 %v3504
        %vm3629 = vweird.f32 %v3622
        %vm3630 = vmor %vm3628, %vm3629
        %v3631 = vsel %vm3630, %v3622, %v3627
        %v3632 = vrsqrt.pop %v3505
        %v3633 = vmul.f32 %v3632, %v3505
        %v3634 = vmul.f32 %v3633, %v3632
        %v3635 = vmul.f32 0.5, %v3634
        %v3636 = vsub.f32 1.5, %v3635
        %v3637 = vmul.f32 %v3632, %v3636
        %vm3638 = vweird.f32 %v3505
        %vm3639 = vweird.f32 %v3632
        %vm3640 = vmor %vm3638, %vm3639
        %v3641 = vsel %vm3640, %v3632, %v3637
        %v3642 = vrsqrt.pop %v3506
        %v3643 = vmul.f32 %v3642, %v3506
        %v3644 = vmul.f32 %v3643, %v3642
        %v3645 = vmul.f32 0.5, %v3644
        %v3646 = vsub.f32 1.5, %v3645
        %v3647 = vmul.f32 %v3642, %v3646
        %vm3648 = vweird.f32 %v3506
        %vm3649 = vweird.f32 %v3642
        %vm3650 = vmor %vm3648, %vm3649
        %v3651 = vsel %vm3650, %v3642, %v3647
        %v3652 = vrsqrt.pop %v3507
        %v3653 = vmul.f32 %v3652, %v3507
        %v3654 = vmul.f32 %v3653, %v3652
        %v3655 = vmul.f32 0.5, %v3654
        %v3656 = vsub.f32 1.5, %v3655
        %v3657 = vmul.f32 %v3652, %v3656
        %vm3658 = vweird.f32 %v3507
        %vm3659 = vweird.f32 %v3652
        %vm3660 = vmor %vm3658, %vm3659
        %v3661 = vsel %vm3660, %v3652, %v3657
        %v3662 = vrsqrt.pop %v3508
        %v3663 = vmul.f32 %v3662, %v3508
        %v3664 = vmul.f32 %v3663, %v3662
        %v3665 = vmul.f32 0.5, %v3664
        %v3666 = vsub.f32 1.5, %v3665
        %v3667 = vmul.f32 %v3662, %v3666
        %vm3668 = vweird.f32 %v3508
        %vm3669 = vweird.f32 %v3662
        %vm3670 = vmor %vm3668, %vm3669
        %v3671 = vsel %vm3670, %v3662, %v3667
        %v3672 = vrsqrt.pop %v3509
        %v3673 = vmul.f32 %v3672, %v3509
        %v3674 = vmul.f32 %v3673, %v3672
        %v3675 = vmul.f32 0.5, %v3674
        %v3676 = vsub.f32 1.5, %v3675
        %v3677 = vmul.f32 %v3672, %v3676
        %vm3678 = vweird.f32 %v3509
        %vm3679 = vweird.f32 %v3672
        %vm3680 = vmor %vm3678, %vm3679
        %v3681 = vsel %vm3680, %v3672, %v3677
        %v3682 = vrsqrt.pop %v3510
        %v3683 = vmul.f32 %v3682, %v3510
        %v3684 = vmul.f32 %v3683, %v3682
        %v3685 = vmul.f32 0.5, %v3684
        %v3686 = vsub.f32 1.5, %v3685
        %v3687 = vmul.f32 %v3682, %v3686
        %vm3688 = vweird.f32 %v3510
        %vm3689 = vweird.f32 %v3682
        %vm3690 = vmor %vm3688, %vm3689
        %v3691 = vsel %vm3690, %v3682, %v3687
        %v3692 = vrsqrt.pop %v3511
        %v3693 = vmul.f32 %v3692, %v3511
        %v3694 = vmul.f32 %v3693, %v3692
        %v3695 = vmul.f32 0.5, %v3694
        %v3696 = vsub.f32 1.5, %v3695
        %v3697 = vmul.f32 %v3692, %v3696
        %vm3698 = vweird.f32 %v3511
        %vm3699 = vweird.f32 %v3692
        %vm3700 = vmor %vm3698, %vm3699
        %v3701 = vsel %vm3700, %v3692, %v3697
        %v3702 = vrsqrt.pop %v3512
        %v3703 = vmul.f32 %v3702, %v3512
        %v3704 = vmul.f32 %v3703, %v3702
        %v3705 = vmul.f32 0.5, %v3704
        %v3706 = vsub.f32 1.5, %v3705
        %v3707 = vmul.f32 %v3702, %v3706
        %vm3708 = vweird.f32 %v3512
        %vm3709 = vweird.f32 %v3702
        %vm3710 = vmor %vm3708, %vm3709
        %v3711 = vsel %vm3710, %v3702, %v3707
        %v3712 = vrsqrt.pop %v3513
        %v3713 = vmul.f32 %v3712, %v3513
        %v3714 = vmul.f32 %v3713, %v3712
        %v3715 = vmul.f32 0.5, %v3714
        %v3716 = vsub.f32 1.5, %v3715
        %v3717 = vmul.f32 %v3712, %v3716
        %vm3718 = vweird.f32 %v3513
        %vm3719 = vweird.f32 %v3712
        %vm3720 = vmor %vm3718, %vm3719
        %v3721 = vsel %vm3720, %v3712, %v3717
        %v3722 = vrsqrt.pop %v3514
        %v3723 = vmul.f32 %v3722, %v3514
        %v3724 = vmul.f32 %v3723, %v3722
        %v3725 = vmul.f32 0.5, %v3724
        %v3726 = vsub.f32 1.5, %v3725
        %v3727 = vmul.f32 %v3722, %v3726
        %vm3728 = vweird.f32 %v3514
        %vm3729 = vweird.f32 %v3722
        %vm3730 = vmor %vm3728, %vm3729
        %v3731 = vsel %vm3730, %v3722, %v3727
        %v3732 = vrsqrt.pop %v3515
        %v3733 = vmul.f32 %v3732, %v3515
        %v3734 = vmul.f32 %v3733, %v3732
        %v3735 = vmul.f32 0.5, %v3734
        %v3736 = vsub.f32 1.5, %v3735
        %v3737 = vmul.f32 %v3732, %v3736
        %vm3738 = vweird.f32 %v3515
        %vm3739 = vweird.f32 %v3732
        %vm3740 = vmor %vm3738, %vm3739
        %v3741 = vsel %vm3740, %v3732, %v3737
        %v3742 = vrsqrt.pop %v3516
        %v3743 = vmul.f32 %v3742, %v3516
        %v3744 = vmul.f32 %v3743, %v3742
        %v3745 = vmul.f32 0.5, %v3744
        %v3746 = vsub.f32 1.5, %v3745
        %v3747 = vmul.f32 %v3742, %v3746
        %vm3748 = vweird.f32 %v3516
        %vm3749 = vweird.f32 %v3742
        %vm3750 = vmor %vm3748, %vm3749
        %v3751 = vsel %vm3750, %v3742, %v3747
        %v3752 = vrsqrt.pop %v3517
        %v3753 = vmul.f32 %v3752, %v3517
        %v3754 = vmul.f32 %v3753, %v3752
        %v3755 = vmul.f32 0.5, %v3754
        %v3756 = vsub.f32 1.5, %v3755
        %v3757 = vmul.f32 %v3752, %v3756
        %vm3758 = vweird.f32 %v3517
        %vm3759 = vweird.f32 %v3752
        %vm3760 = vmor %vm3758, %vm3759
        %v3761 = vsel %vm3760, %v3752, %v3757
        %v3762 = vrsqrt.pop %v3518
        %v3763 = vmul.f32 %v3762, %v3518
        %v3764 = vmul.f32 %v3763, %v3762
        %v3765 = vmul.f32 0.5, %v3764
        %v3766 = vsub.f32 1.5, %v3765
        %v3767 = vmul.f32 %v3762, %v3766
        %vm3768 = vweird.f32 %v3518
        %vm3769 = vweird.f32 %v3762
        %vm3770 = vmor %vm3768, %vm3769
        %v3771 = vsel %vm3770, %v3762, %v3767
        %v3772 = vrsqrt.pop %v3519
        %v3773 = vmul.f32 %v3772, %v3519
        %v3774 = vmul.f32 %v3773, %v3772
        %v3775 = vmul.f32 0.5, %v3774
        %v3776 = vsub.f32 1.5, %v3775
        %v3777 = vmul.f32 %v3772, %v3776
        %vm3778 = vweird.f32 %v3519
        %vm3779 = vweird.f32 %v3772
        %vm3780 = vmor %vm3778, %vm3779
        %v3781 = vsel %vm3780, %v3772, %v3777
        %v3782 = vrsqrt.pop %v3520
        %v3783 = vmul.f32 %v3782, %v3520
        %v3784 = vmul.f32 %v3783, %v3782
        %v3785 = vmul.f32 0.5, %v3784
        %v3786 = vsub.f32 1.5, %v3785
        %v3787 = vmul.f32 %v3782, %v3786
        %vm3788 = vweird.f32 %v3520
        %vm3789 = vweird.f32 %v3782
        %vm3790 = vmor %vm3788, %vm3789
        %v3791 = vsel %vm3790, %v3782, %v3787
        %v3792 = vrsqrt.pop %v3521
        %v3793 = vmul.f32 %v3792, %v3521
        %v3794 = vmul.f32 %v3793, %v3792
        %v3795 = vmul.f32 0.5, %v3794
        %v3796 = vsub.f32 1.5, %v3795
        %v3797 = vmul.f32 %v3792, %v3796
        %vm3798 = vweird.f32 %v3521
        %vm3799 = vweird.f32 %v3792
        %vm3800 = vmor %vm3798, %vm3799
        %v3801 = vsel %vm3800, %v3792, %v3797
        %v3802 = vrsqrt.pop %v3522
        %v3803 = vmul.f32 %v3802, %v3522
        %v3804 = vmul.f32 %v3803, %v3802
        %v3805 = vmul.f32 0.5, %v3804
        %v3806 = vsub.f32 1.5, %v3805
        %v3807 = vmul.f32 %v3802, %v3806
        %vm3808 = vweird.f32 %v3522
        %vm3809 = vweird.f32 %v3802
        %vm3810 = vmor %vm3808, %vm3809
        %v3811 = vsel %vm3810, %v3802, %v3807
        %v3812 = vrsqrt.pop %v3523
        %v3813 = vmul.f32 %v3812, %v3523
        %v3814 = vmul.f32 %v3813, %v3812
        %v3815 = vmul.f32 0.5, %v3814
        %v3816 = vsub.f32 1.5, %v3815
        %v3817 = vmul.f32 %v3812, %v3816
        %vm3818 = vweird.f32 %v3523
        %vm3819 = vweird.f32 %v3812
        %vm3820 = vmor %vm3818, %vm3819
        %v3821 = vsel %vm3820, %v3812, %v3817
        %v3822 = vrsqrt.pop %v3524
        %v3823 = vmul.f32 %v3822, %v3524
        %v3824 = vmul.f32 %v3823, %v3822
        %v3825 = vmul.f32 0.5, %v3824
        %v3826 = vsub.f32 1.5, %v3825
        %v3827 = vmul.f32 %v3822, %v3826
        %vm3828 = vweird.f32 %v3524
        %vm3829 = vweird.f32 %v3822
        %vm3830 = vmor %vm3828, %vm3829
        %v3831 = vsel %vm3830, %v3822, %v3827
        %v3832 = vrsqrt.pop %v3525
        %v3833 = vmul.f32 %v3832, %v3525
        %v3834 = vmul.f32 %v3833, %v3832
        %v3835 = vmul.f32 0.5, %v3834
        %v3836 = vsub.f32 1.5, %v3835
        %v3837 = vmul.f32 %v3832, %v3836
        %vm3838 = vweird.f32 %v3525
        %vm3839 = vweird.f32 %v3832
        %vm3840 = vmor %vm3838, %vm3839
        %v3841 = vsel %vm3840, %v3832, %v3837
        %v3842 = vrsqrt.pop %v3526
        %v3843 = vmul.f32 %v3842, %v3526
        %v3844 = vmul.f32 %v3843, %v3842
        %v3845 = vmul.f32 0.5, %v3844
        %v3846 = vsub.f32 1.5, %v3845
        %v3847 = vmul.f32 %v3842, %v3846
        %vm3848 = vweird.f32 %v3526
        %vm3849 = vweird.f32 %v3842
        %vm3850 = vmor %vm3848, %vm3849
        %v3851 = vsel %vm3850, %v3842, %v3847
        %v3852 = vrsqrt.pop %v3527
        %v3853 = vmul.f32 %v3852, %v3527
        %v3854 = vmul.f32 %v3853, %v3852
        %v3855 = vmul.f32 0.5, %v3854
        %v3856 = vsub.f32 1.5, %v3855
        %v3857 = vmul.f32 %v3852, %v3856
        %vm3858 = vweird.f32 %v3527
        %vm3859 = vweird.f32 %v3852
        %vm3860 = vmor %vm3858, %vm3859
        %v3861 = vsel %vm3860, %v3852, %v3857
        %v3862 = vrsqrt.pop %v3528
        %v3863 = vmul.f32 %v3862, %v3528
        %v3864 = vmul.f32 %v3863, %v3862
        %v3865 = vmul.f32 0.5, %v3864
        %v3866 = vsub.f32 1.5, %v3865
        %v3867 = vmul.f32 %v3862, %v3866
        %vm3868 = vweird.f32 %v3528
        %vm3869 = vweird.f32 %v3862
        %vm3870 = vmor %vm3868, %vm3869
        %v3871 = vsel %vm3870, %v3862, %v3867
        %v3872 = vrsqrt.pop %v3529
        %v3873 = vmul.f32 %v3872, %v3529
        %v3874 = vmul.f32 %v3873, %v3872
        %v3875 = vmul.f32 0.5, %v3874
        %v3876 = vsub.f32 1.5, %v3875
        %v3877 = vmul.f32 %v3872, %v3876
        %vm3878 = vweird.f32 %v3529
        %vm3879 = vweird.f32 %v3872
        %vm3880 = vmor %vm3878, %vm3879
        %v3881 = vsel %vm3880, %v3872, %v3877
        %v3882 = vrsqrt.pop %v3530
        %v3883 = vmul.f32 %v3882, %v3530
        %v3884 = vmul.f32 %v3883, %v3882
        %v3885 = vmul.f32 0.5, %v3884
        %v3886 = vsub.f32 1.5, %v3885
        %v3887 = vmul.f32 %v3882, %v3886
        %vm3888 = vweird.f32 %v3530
        %vm3889 = vweird.f32 %v3882
        %vm3890 = vmor %vm3888, %vm3889
        %v3891 = vsel %vm3890, %v3882, %v3887
        %v3892 = vrsqrt.pop %v3531
        %v3893 = vmul.f32 %v3892, %v3531
        %v3894 = vmul.f32 %v3893, %v3892
        %v3895 = vmul.f32 0.5, %v3894
        %v3896 = vsub.f32 1.5, %v3895
        %v3897 = vmul.f32 %v3892, %v3896
        %vm3898 = vweird.f32 %v3531
        %vm3899 = vweird.f32 %v3892
        %vm3900 = vmor %vm3898, %vm3899
        %v3901 = vsel %vm3900, %v3892, %v3897
        %v3902 = vrsqrt.pop %v3532
        %v3903 = vmul.f32 %v3902, %v3532
        %v3904 = vmul.f32 %v3903, %v3902
        %v3905 = vmul.f32 0.5, %v3904
        %v3906 = vsub.f32 1.5, %v3905
        %v3907 = vmul.f32 %v3902, %v3906
        %vm3908 = vweird.f32 %v3532
        %vm3909 = vweird.f32 %v3902
        %vm3910 = vmor %vm3908, %vm3909
        %v3911 = vsel %vm3910, %v3902, %v3907
        %v3912 = vrsqrt.pop %v3533
        %v3913 = vmul.f32 %v3912, %v3533
        %v3914 = vmul.f32 %v3913, %v3912
        %v3915 = vmul.f32 0.5, %v3914
        %v3916 = vsub.f32 1.5, %v3915
        %v3917 = vmul.f32 %v3912, %v3916
        %vm3918 = vweird.f32 %v3533
        %vm3919 = vweird.f32 %v3912
        %vm3920 = vmor %vm3918, %vm3919
        %v3921 = vsel %vm3920, %v3912, %v3917
        %v3922 = vrsqrt.pop %v3534
        %v3923 = vmul.f32 %v3922, %v3534
        %v3924 = vmul.f32 %v3923, %v3922
        %v3925 = vmul.f32 0.5, %v3924
        %v3926 = vsub.f32 1.5, %v3925
        %v3927 = vmul.f32 %v3922, %v3926
        %vm3928 = vweird.f32 %v3534
        %vm3929 = vweird.f32 %v3922
        %vm3930 = vmor %vm3928, %vm3929
        %v3931 = vsel %vm3930, %v3922, %v3927
        %v3932 = vrsqrt.pop %v3535
        %v3933 = vmul.f32 %v3932, %v3535
        %v3934 = vmul.f32 %v3933, %v3932
        %v3935 = vmul.f32 0.5, %v3934
        %v3936 = vsub.f32 1.5, %v3935
        %v3937 = vmul.f32 %v3932, %v3936
        %vm3938 = vweird.f32 %v3535
        %vm3939 = vweird.f32 %v3932
        %vm3940 = vmor %vm3938, %vm3939
        %v3941 = vsel %vm3940, %v3932, %v3937
        %v3942 = vrsqrt.pop %v3536
        %v3943 = vmul.f32 %v3942, %v3536
        %v3944 = vmul.f32 %v3943, %v3942
        %v3945 = vmul.f32 0.5, %v3944
        %v3946 = vsub.f32 1.5, %v3945
        %v3947 = vmul.f32 %v3942, %v3946
        %vm3948 = vweird.f32 %v3536
        %vm3949 = vweird.f32 %v3942
        %vm3950 = vmor %vm3948, %vm3949
        %v3951 = vsel %vm3950, %v3942, %v3947
        %v3952 = vrsqrt.pop %v3537
        %v3953 = vmul.f32 %v3952, %v3537
        %v3954 = vmul.f32 %v3953, %v3952
        %v3955 = vmul.f32 0.5, %v3954
        %v3956 = vsub.f32 1.5, %v3955
        %v3957 = vmul.f32 %v3952, %v3956
        %vm3958 = vweird.f32 %v3537
        %vm3959 = vweird.f32 %v3952
        %vm3960 = vmor %vm3958, %vm3959
        %v3961 = vsel %vm3960, %v3952, %v3957
        %v3962 = vrsqrt.pop %v3538
        %v3963 = vmul.f32 %v3962, %v3538
        %v3964 = vmul.f32 %v3963, %v3962
        %v3965 = vmul.f32 0.5, %v3964
        %v3966 = vsub.f32 1.5, %v3965
        %v3967 = vmul.f32 %v3962, %v3966
        %vm3968 = vweird.f32 %v3538
        %vm3969 = vweird.f32 %v3962
        %vm3970 = vmor %vm3968, %vm3969
        %v3971 = vsel %vm3970, %v3962, %v3967
        %v3972 = vrsqrt.pop %v3539
        %v3973 = vmul.f32 %v3972, %v3539
        %v3974 = vmul.f32 %v3973, %v3972
        %v3975 = vmul.f32 0.5, %v3974
        %v3976 = vsub.f32 1.5, %v3975
        %v3977 = vmul.f32 %v3972, %v3976
        %vm3978 = vweird.f32 %v3539
        %vm3979 = vweird.f32 %v3972
        %vm3980 = vmor %vm3978, %vm3979
        %v3981 = vsel %vm3980, %v3972, %v3977
        %v3982 = vrsqrt.pop %v3540
        %v3983 = vmul.f32 %v3982, %v3540
        %v3984 = vmul.f32 %v3983, %v3982
        %v3985 = vmul.f32 0.5, %v3984
        %v3986 = vsub.f32 1.5, %v3985
        %v3987 = vmul.f32 %v3982, %v3986
        %vm3988 = vweird.f32 %v3540
        %vm3989 = vweird.f32 %v3982
        %vm3990 = vmor %vm3988, %vm3989
        %v3991 = vsel %vm3990, %v3982, %v3987
        %v3992 = vrsqrt.pop %v3541
        %v3993 = vmul.f32 %v3992, %v3541
        %v3994 = vmul.f32 %v3993, %v3992
        %v3995 = vmul.f32 0.5, %v3994
        %v3996 = vsub.f32 1.5, %v3995
        %v3997 = vmul.f32 %v3992, %v3996
        %vm3998 = vweird.f32 %v3541
        %vm3999 = vweird.f32 %v3992
        %vm4000 = vmor %vm3998, %vm3999
        %v4001 = vsel %vm4000, %v3992, %v3997
        %v4002 = vrsqrt.pop %v3542
        %v4003 = vmul.f32 %v4002, %v3542
        %v4004 = vmul.f32 %v4003, %v4002
        %v4005 = vmul.f32 0.5, %v4004
        %v4006 = vsub.f32 1.5, %v4005
        %v4007 = vmul.f32 %v4002, %v4006
        %vm4008 = vweird.f32 %v3542
        %vm4009 = vweird.f32 %v4002
        %vm4010 = vmor %vm4008, %vm4009
        %v4011 = vsel %vm4010, %v4002, %v4007
        %v4012 = vrsqrt.pop %v3543
        %v4013 = vmul.f32 %v4012, %v3543
        %v4014 = vmul.f32 %v4013, %v4012
        %v4015 = vmul.f32 0.5, %v4014
        %v4016 = vsub.f32 1.5, %v4015
        %v4017 = vmul.f32 %v4012, %v4016
        %vm4018 = vweird.f32 %v3543
        %vm4019 = vweird.f32 %v4012
        %vm4020 = vmor %vm4018, %vm4019
        %v4021 = vsel %vm4020, %v4012, %v4017
        %v4022 = vrsqrt.pop %v3544
        %v4023 = vmul.f32 %v4022, %v3544
        %v4024 = vmul.f32 %v4023, %v4022
        %v4025 = vmul.f32 0.5, %v4024
        %v4026 = vsub.f32 1.5, %v4025
        %v4027 = vmul.f32 %v4022, %v4026
        %vm4028 = vweird.f32 %v3544
        %vm4029 = vweird.f32 %v4022
        %vm4030 = vmor %vm4028, %vm4029
        %v4031 = vsel %vm4030, %v4022, %v4027
        %v4032 = vrsqrt.pop %v3545
        %v4033 = vmul.f32 %v4032, %v3545
        %v4034 = vmul.f32 %v4033, %v4032
        %v4035 = vmul.f32 0.5, %v4034
        %v4036 = vsub.f32 1.5, %v4035
        %v4037 = vmul.f32 %v4032, %v4036
        %vm4038 = vweird.f32 %v3545
        %vm4039 = vweird.f32 %v4032
        %vm4040 = vmor %vm4038, %vm4039
        %v4041 = vsel %vm4040, %v4032, %v4037
        %v4042 = vrsqrt.pop %v3546
        %v4043 = vmul.f32 %v4042, %v3546
        %v4044 = vmul.f32 %v4043, %v4042
        %v4045 = vmul.f32 0.5, %v4044
        %v4046 = vsub.f32 1.5, %v4045
        %v4047 = vmul.f32 %v4042, %v4046
        %vm4048 = vweird.f32 %v3546
        %vm4049 = vweird.f32 %v4042
        %vm4050 = vmor %vm4048, %vm4049
        %v4051 = vsel %vm4050, %v4042, %v4047
        %v4052 = vrsqrt.pop %v3547
        %v4053 = vmul.f32 %v4052, %v3547
        %v4054 = vmul.f32 %v4053, %v4052
        %v4055 = vmul.f32 0.5, %v4054
        %v4056 = vsub.f32 1.5, %v4055
        %v4057 = vmul.f32 %v4052, %v4056
        %vm4058 = vweird.f32 %v3547
        %vm4059 = vweird.f32 %v4052
        %vm4060 = vmor %vm4058, %vm4059
        %v4061 = vsel %vm4060, %v4052, %v4057
        %v4062 = vrsqrt.pop %v3548
        %v4063 = vmul.f32 %v4062, %v3548
        %v4064 = vmul.f32 %v4063, %v4062
        %v4065 = vmul.f32 0.5, %v4064
        %v4066 = vsub.f32 1.5, %v4065
        %v4067 = vmul.f32 %v4062, %v4066
        %vm4068 = vweird.f32 %v3548
        %vm4069 = vweird.f32 %v4062
        %vm4070 = vmor %vm4068, %vm4069
        %v4071 = vsel %vm4070, %v4062, %v4067
        %v4072 = vrsqrt.pop %v3549
        %v4073 = vmul.f32 %v4072, %v3549
        %v4074 = vmul.f32 %v4073, %v4072
        %v4075 = vmul.f32 0.5, %v4074
        %v4076 = vsub.f32 1.5, %v4075
        %v4077 = vmul.f32 %v4072, %v4076
        %vm4078 = vweird.f32 %v3549
        %vm4079 = vweird.f32 %v4072
        %vm4080 = vmor %vm4078, %vm4079
        %v4081 = vsel %vm4080, %v4072, %v4077
        %v4082 = vrsqrt.pop %v3550
        %v4083 = vmul.f32 %v4082, %v3550
        %v4084 = vmul.f32 %v4083, %v4082
        %v4085 = vmul.f32 0.5, %v4084
        %v4086 = vsub.f32 1.5, %v4085
        %v4087 = vmul.f32 %v4082, %v4086
        %vm4088 = vweird.f32 %v3550
        %vm4089 = vweird.f32 %v4082
        %vm4090 = vmor %vm4088, %vm4089
        %v4091 = vsel %vm4090, %v4082, %v4087
        %v4092 = vrsqrt.pop %v3551
        %v4093 = vmul.f32 %v4092, %v3551
        %v4094 = vmul.f32 %v4093, %v4092
        %v4095 = vmul.f32 0.5, %v4094
        %v4096 = vsub.f32 1.5, %v4095
        %v4097 = vmul.f32 %v4092, %v4096
        %vm4098 = vweird.f32 %v3551
        %vm4099 = vweird.f32 %v4092
        %vm4100 = vmor %vm4098, %vm4099
        %v4101 = vsel %vm4100, %v4092, %v4097
        %v4102 = vrsqrt.pop %v3552
        %v4103 = vmul.f32 %v4102, %v3552
        %v4104 = vmul.f32 %v4103, %v4102
        %v4105 = vmul.f32 0.5, %v4104
        %v4106 = vsub.f32 1.5, %v4105
        %v4107 = vmul.f32 %v4102, %v4106
        %vm4108 = vweird.f32 %v3552
        %vm4109 = vweird.f32 %v4102
        %vm4110 = vmor %vm4108, %vm4109
        %v4111 = vsel %vm4110, %v4102, %v4107
        %v4112 = vrsqrt.pop %v3553
        %v4113 = vmul.f32 %v4112, %v3553
        %v4114 = vmul.f32 %v4113, %v4112
        %v4115 = vmul.f32 0.5, %v4114
        %v4116 = vsub.f32 1.5, %v4115
        %v4117 = vmul.f32 %v4112, %v4116
        %vm4118 = vweird.f32 %v3553
        %vm4119 = vweird.f32 %v4112
        %vm4120 = vmor %vm4118, %vm4119
        %v4121 = vsel %vm4120, %v4112, %v4117
        %v4122 = vrsqrt.pop %v3554
        %v4123 = vmul.f32 %v4122, %v3554
        %v4124 = vmul.f32 %v4123, %v4122
        %v4125 = vmul.f32 0.5, %v4124
        %v4126 = vsub.f32 1.5, %v4125
        %v4127 = vmul.f32 %v4122, %v4126
        %vm4128 = vweird.f32 %v3554
        %vm4129 = vweird.f32 %v4122
        %vm4130 = vmor %vm4128, %vm4129
        %v4131 = vsel %vm4130, %v4122, %v4127
        %v4132 = vrsqrt.pop %v3555
        %v4133 = vmul.f32 %v4132, %v3555
        %v4134 = vmul.f32 %v4133, %v4132
        %v4135 = vmul.f32 0.5, %v4134
        %v4136 = vsub.f32 1.5, %v4135
        %v4137 = vmul.f32 %v4132, %v4136
        %vm4138 = vweird.f32 %v3555
        %vm4139 = vweird.f32 %v4132
        %vm4140 = vmor %vm4138, %vm4139
        %v4141 = vsel %vm4140, %v4132, %v4137
        %v4142 = vrsqrt.pop %v3556
        %v4143 = vmul.f32 %v4142, %v3556
        %v4144 = vmul.f32 %v4143, %v4142
        %v4145 = vmul.f32 0.5, %v4144
        %v4146 = vsub.f32 1.5, %v4145
        %v4147 = vmul.f32 %v4142, %v4146
        %vm4148 = vweird.f32 %v3556
        %vm4149 = vweird.f32 %v4142
        %vm4150 = vmor %vm4148, %vm4149
        %v4151 = vsel %vm4150, %v4142, %v4147
        %v4152 = vrsqrt.pop %v3557
        %v4153 = vmul.f32 %v4152, %v3557
        %v4154 = vmul.f32 %v4153, %v4152
        %v4155 = vmul.f32 0.5, %v4154
        %v4156 = vsub.f32 1.5, %v4155
        %v4157 = vmul.f32 %v4152, %v4156
        %vm4158 = vweird.f32 %v3557
        %vm4159 = vweird.f32 %v4152
        %vm4160 = vmor %vm4158, %vm4159
        %v4161 = vsel %vm4160, %v4152, %v4157
        %v4162 = vrsqrt.pop %v3558
        %v4163 = vmul.f32 %v4162, %v3558
        %v4164 = vmul.f32 %v4163, %v4162
        %v4165 = vmul.f32 0.5, %v4164
        %v4166 = vsub.f32 1.5, %v4165
        %v4167 = vmul.f32 %v4162, %v4166
        %vm4168 = vweird.f32 %v3558
        %vm4169 = vweird.f32 %v4162
        %vm4170 = vmor %vm4168, %vm4169
        %v4171 = vsel %vm4170, %v4162, %v4167
        %v4172 = vrsqrt.pop %v3559
        %v4173 = vmul.f32 %v4172, %v3559
        %v4174 = vmul.f32 %v4173, %v4172
        %v4175 = vmul.f32 0.5, %v4174
        %v4176 = vsub.f32 1.5, %v4175
        %v4177 = vmul.f32 %v4172, %v4176
        %vm4178 = vweird.f32 %v3559
        %vm4179 = vweird.f32 %v4172
        %vm4180 = vmor %vm4178, %vm4179
        %v4181 = vsel %vm4180, %v4172, %v4177
        %v4182 = vrsqrt.pop %v3560
        %v4183 = vmul.f32 %v4182, %v3560
        %v4184 = vmul.f32 %v4183, %v4182
        %v4185 = vmul.f32 0.5, %v4184
        %v4186 = vsub.f32 1.5, %v4185
        %v4187 = vmul.f32 %v4182, %v4186
        %vm4188 = vweird.f32 %v3560
        %vm4189 = vweird.f32 %v4182
        %vm4190 = vmor %vm4188, %vm4189
        %v4191 = vsel %vm4190, %v4182, %v4187
        %v4192 = vrsqrt.pop %v3561
        %v4193 = vmul.f32 %v4192, %v3561
        %v4194 = vmul.f32 %v4193, %v4192
        %v4195 = vmul.f32 0.5, %v4194
        %v4196 = vsub.f32 1.5, %v4195
        %v4197 = vmul.f32 %v4192, %v4196
        %vm4198 = vweird.f32 %v3561
        %vm4199 = vweird.f32 %v4192
        %vm4200 = vmor %vm4198, %vm4199
        %v4201 = vsel %vm4200, %v4192, %v4197
        %v4202 = vmul.f32 %v2417, %v3571
        %v4203 = vmul.f32 %v2419, %v3581
        %v4204 = vmul.f32 %v2422, %v3591
        %v4205 = vmul.f32 %v2424, %v3601
        %v4206 = vmul.f32 %v2427, %v3611
        %v4207 = vmul.f32 %v2429, %v3621
        %v4208 = vmul.f32 %v2432, %v3631
        %v4209 = vmul.f32 %v2434, %v3641
        %v4210 = vmul.f32 %v2437, %v3651
        %v4211 = vmul.f32 %v2439, %v3661
        %v4212 = vmul.f32 %v2442, %v3671
        %v4213 = vmul.f32 %v2444, %v3681
        %v4214 = vmul.f32 %v2447, %v3691
        %v4215 = vmul.f32 %v2449, %v3701
        %v4216 = vmul.f32 %v2452, %v3711
        %v4217 = vmul.f32 %v2454, %v3721
        %v4218 = vmul.f32 %v2707, %v3731
        %v4219 = vmul.f32 %v2709, %v3741
        %v4220 = vmul.f32 %v2711, %v3751
        %v4221 = vmul.f32 %v2713, %v3761
        %v4222 = vmul.f32 %v2715, %v3771
        %v4223 = vmul.f32 %v2717, %v3781
        %v4224 = vmul.f32 %v2719, %v3791
        %v4225 = vmul.f32 %v2721, %v3801
        %v4226 = vmul.f32 %v2723, %v3811
        %v4227 = vmul.f32 %v2725, %v3821
        %v4228 = vmul.f32 %v2727, %v3831
        %v4229 = vmul.f32 %v2729, %v3841
        %v4230 = vmul.f32 %v2731, %v3851
        %v4231 = vmul.f32 %v2733, %v3861
        %v4232 = vmul.f32 %v2735, %v3871
        %v4233 = vmul.f32 %v2737, %v3881
        %v4234 = vmul.f32 %v2755, %v3891
        %v4235 = vmul.f32 %v2757, %v3901
        %v4236 = vmul.f32 %v2759, %v3911
        %v4237 = vmul.f32 %v2761, %v3921
        %v4238 = vmul.f32 %v2763, %v3931
        %v4239 = vmul.f32 %v2765, %v3941
        %v4240 = vmul.f32 %v2767, %v3951
        %v4241 = vmul.f32 %v2769, %v3961
        %v4242 = vmul.f32 %v2771, %v3971
        %v4243 = vmul.f32 %v2773, %v3981
        %v4244 = vmul.f32 %v2775, %v3991
        %v4245 = vmul.f32 %v2777, %v4001
        %v4246 = vmul.f32 %v2779, %v4011
        %v4247 = vmul.f32 %v2781, %v4021
        %v4248 = vmul.f32 %v2783, %v4031
        %v4249 = vmul.f32 %v2785, %v4041
        %v4250 = vmul.f32 %v2803, %v4051
        %v4251 = vmul.f32 %v2805, %v4061
        %v4252 = vmul.f32 %v2807, %v4071
        %v4253 = vmul.f32 %v2809, %v4081
        %v4254 = vmul.f32 %v2811, %v4091
        %v4255 = vmul.f32 %v2813, %v4101
        %v4256 = vmul.f32 %v2815, %v4111
        %v4257 = vmul.f32 %v2817, %v4121
        %v4258 = vmul.f32 %v2819, %v4131
        %v4259 = vmul.f32 %v2821, %v4141
        %v4260 = vmul.f32 %v2823, %v4151
        %v4261 = vmul.f32 %v2825, %v4161
        %v4262 = vmul.f32 %v2827, %v4171
        %v4263 = vmul.f32 %v2829, %v4181
        %v4264 = vmul.f32 %v2831, %v4191
        %v4265 = vmul.f32 %v2833, %v4201
        %v4266 = vld [vmem:[%s14] sm:$0x1]
        %v4268 = vperm.slane %v4266, 0
        %v4270 = vmul.f32 %v4202, %v4268
        %v4271 = vmul.f32 %v4203, %v4268
        %v4272 = vmul.f32 %v4204, %v4268
        %v4273 = vmul.f32 %v4205, %v4268
        %v4274 = vmul.f32 %v4206, %v4268
        %v4275 = vmul.f32 %v4207, %v4268
        %v4276 = vmul.f32 %v4208, %v4268
        %v4277 = vmul.f32 %v4209, %v4268
        %v4278 = vmul.f32 %v4210, %v4268
        %v4279 = vmul.f32 %v4211, %v4268
        %v4280 = vmul.f32 %v4212, %v4268
        %v4281 = vmul.f32 %v4213, %v4268
        %v4282 = vmul.f32 %v4214, %v4268
        %v4283 = vmul.f32 %v4215, %v4268
        %v4284 = vmul.f32 %v4216, %v4268
        %v4285 = vmul.f32 %v4217, %v4268
        %v4286 = vmul.f32 %v4218, %v4268
        %v4287 = vmul.f32 %v4219, %v4268
        %v4288 = vmul.f32 %v4220, %v4268
        %v4289 = vmul.f32 %v4221, %v4268
        %v4290 = vmul.f32 %v4222, %v4268
        %v4291 = vmul.f32 %v4223, %v4268
        %v4292 = vmul.f32 %v4224, %v4268
        %v4293 = vmul.f32 %v4225, %v4268
        %v4294 = vmul.f32 %v4226, %v4268
        %v4295 = vmul.f32 %v4227, %v4268
        %v4296 = vmul.f32 %v4228, %v4268
        %v4297 = vmul.f32 %v4229, %v4268
        %v4298 = vmul.f32 %v4230, %v4268
        %v4299 = vmul.f32 %v4231, %v4268
        %v4300 = vmul.f32 %v4232, %v4268
        %v4301 = vmul.f32 %v4233, %v4268
        %v4302 = vmul.f32 %v4234, %v4268
        %v4303 = vmul.f32 %v4235, %v4268
        %v4304 = vmul.f32 %v4236, %v4268
        %v4305 = vmul.f32 %v4237, %v4268
        %v4306 = vmul.f32 %v4238, %v4268
        %v4307 = vmul.f32 %v4239, %v4268
        %v4308 = vmul.f32 %v4240, %v4268
        %v4309 = vmul.f32 %v4241, %v4268
        %v4310 = vmul.f32 %v4242, %v4268
        %v4311 = vmul.f32 %v4243, %v4268
        %v4312 = vmul.f32 %v4244, %v4268
        %v4313 = vmul.f32 %v4245, %v4268
        %v4314 = vmul.f32 %v4246, %v4268
        %v4315 = vmul.f32 %v4247, %v4268
        %v4316 = vmul.f32 %v4248, %v4268
        %v4317 = vmul.f32 %v4249, %v4268
        %v4318 = vmul.f32 %v4250, %v4268
        %v4319 = vmul.f32 %v4251, %v4268
        %v4320 = vmul.f32 %v4252, %v4268
        %v4321 = vmul.f32 %v4253, %v4268
        %v4322 = vmul.f32 %v4254, %v4268
        %v4323 = vmul.f32 %v4255, %v4268
        %v4324 = vmul.f32 %v4256, %v4268
        %v4325 = vmul.f32 %v4257, %v4268
        %v4326 = vmul.f32 %v4258, %v4268
        %v4327 = vmul.f32 %v4259, %v4268
        %v4328 = vmul.f32 %v4260, %v4268
        %v4329 = vmul.f32 %v4261, %v4268
        %v4330 = vmul.f32 %v4262, %v4268
        %v4331 = vmul.f32 %v4263, %v4268
        %v4332 = vmul.f32 %v4264, %v4268
        %v4333 = vmul.f32 %v4265, %v4268
        %v4334 = vmul.f32 %v2534, %v2534
        %v4335 = vmul.f32 %v2536, %v2536
        %v4336 = vmul.f32 %v2539, %v2539
        %v4337 = vmul.f32 %v2541, %v2541
        %v4338 = vmul.f32 %v2544, %v2544
        %v4339 = vmul.f32 %v2546, %v2546
        %v4340 = vmul.f32 %v2549, %v2549
        %v4341 = vmul.f32 %v2551, %v2551
        %v4342 = vmul.f32 %v2554, %v2554
        %v4343 = vmul.f32 %v2556, %v2556
        %v4344 = vmul.f32 %v2559, %v2559
        %v4345 = vmul.f32 %v2561, %v2561
        %v4346 = vmul.f32 %v2564, %v2564
        %v4347 = vmul.f32 %v2566, %v2566
        %v4348 = vmul.f32 %v2569, %v2569
        %v4349 = vmul.f32 %v2571, %v2571
        %v4350 = vmul.f32 %v2867, %v2867
        %v4351 = vmul.f32 %v2869, %v2869
        %v4352 = vmul.f32 %v2871, %v2871
        %v4353 = vmul.f32 %v2873, %v2873
        %v4354 = vmul.f32 %v2875, %v2875
        %v4355 = vmul.f32 %v2877, %v2877
        %v4356 = vmul.f32 %v2879, %v2879
        %v4357 = vmul.f32 %v2881, %v2881
        %v4358 = vmul.f32 %v2883, %v2883
        %v4359 = vmul.f32 %v2885, %v2885
        %v4360 = vmul.f32 %v2887, %v2887
        %v4361 = vmul.f32 %v2889, %v2889
        %v4362 = vmul.f32 %v2891, %v2891
        %v4363 = vmul.f32 %v2893, %v2893
        %v4364 = vmul.f32 %v2895, %v2895
        %v4365 = vmul.f32 %v2897, %v2897
        %v4366 = vmul.f32 %v2915, %v2915
        %v4367 = vmul.f32 %v2917, %v2917
        %v4368 = vmul.f32 %v2919, %v2919
        %v4369 = vmul.f32 %v2921, %v2921
        %v4370 = vmul.f32 %v2923, %v2923
        %v4371 = vmul.f32 %v2925, %v2925
        %v4372 = vmul.f32 %v2927, %v2927
        %v4373 = vmul.f32 %v2929, %v2929
        %v4374 = vmul.f32 %v2931, %v2931
        %v4375 = vmul.f32 %v2933, %v2933
        %v4376 = vmul.f32 %v2935, %v2935
        %v4377 = vmul.f32 %v2937, %v2937
        %v4378 = vmul.f32 %v2939, %v2939
        %v4379 = vmul.f32 %v2941, %v2941
        %v4380 = vmul.f32 %v2943, %v2943
        %v4381 = vmul.f32 %v2945, %v2945
        %v4382 = vmul.f32 %v2963, %v2963
        %v4383 = vmul.f32 %v2965, %v2965
        %v4384 = vmul.f32 %v2967, %v2967
        %v4385 = vmul.f32 %v2969, %v2969
        %v4386 = vmul.f32 %v2971, %v2971
        %v4387 = vmul.f32 %v2973, %v2973
        %v4388 = vmul.f32 %v2975, %v2975
        %v4389 = vmul.f32 %v2977, %v2977
        %v4390 = vmul.f32 %v2979, %v2979
        %v4391 = vmul.f32 %v2981, %v2981
        %v4392 = vmul.f32 %v2983, %v2983
        %v4393 = vmul.f32 %v2985, %v2985
        %v4394 = vmul.f32 %v2987, %v2987
        %v4395 = vmul.f32 %v2989, %v2989
        %v4396 = vmul.f32 %v2991, %v2991
        %v4397 = vmul.f32 %v2993, %v2993
        %v4398 = vsel %vm3234, %v4334, 0.0
        %4399 = vadd.xlane.f32.xlu0 %v4398
        %v4400 = vpop.xlane.xlu0 %4399
        %v4401 = vsel %vm3234, %v4335, 0.0
        %4402 = vadd.xlane.f32.xlu0 %v4401
        %v4403 = vpop.xlane.xlu0 %4402
        %v4404 = vsel %vm3234, %v4336, 0.0
        %4405 = vadd.xlane.f32.xlu0 %v4404
        %v4406 = vpop.xlane.xlu0 %4405
        %v4407 = vsel %vm3234, %v4337, 0.0
        %4408 = vadd.xlane.f32.xlu0 %v4407
        %v4409 = vpop.xlane.xlu0 %4408
        %v4410 = vsel %vm3234, %v4338, 0.0
        %4411 = vadd.xlane.f32.xlu0 %v4410
        %v4412 = vpop.xlane.xlu0 %4411
        %v4413 = vsel %vm3234, %v4339, 0.0
        %4414 = vadd.xlane.f32.xlu0 %v4413
        %v4415 = vpop.xlane.xlu0 %4414
        %v4416 = vsel %vm3234, %v4340, 0.0
        %4417 = vadd.xlane.f32.xlu0 %v4416
        %v4418 = vpop.xlane.xlu0 %4417
        %v4419 = vsel %vm3234, %v4341, 0.0
        %4420 = vadd.xlane.f32.xlu0 %v4419
        %v4421 = vpop.xlane.xlu0 %4420
        %v4422 = vsel %vm3234, %v4342, 0.0
        %4423 = vadd.xlane.f32.xlu0 %v4422
        %v4424 = vpop.xlane.xlu0 %4423
        %v4425 = vsel %vm3234, %v4343, 0.0
        %4426 = vadd.xlane.f32.xlu0 %v4425
        %v4427 = vpop.xlane.xlu0 %4426
        %v4428 = vsel %vm3234, %v4344, 0.0
        %4429 = vadd.xlane.f32.xlu0 %v4428
        %v4430 = vpop.xlane.xlu0 %4429
        %v4431 = vsel %vm3234, %v4345, 0.0
        %4432 = vadd.xlane.f32.xlu0 %v4431
        %v4433 = vpop.xlane.xlu0 %4432
        %v4434 = vsel %vm3234, %v4346, 0.0
        %4435 = vadd.xlane.f32.xlu0 %v4434
        %v4436 = vpop.xlane.xlu0 %4435
        %v4437 = vsel %vm3234, %v4347, 0.0
        %4438 = vadd.xlane.f32.xlu0 %v4437
        %v4439 = vpop.xlane.xlu0 %4438
        %v4440 = vsel %vm3234, %v4348, 0.0
        %4441 = vadd.xlane.f32.xlu0 %v4440
        %v4442 = vpop.xlane.xlu0 %4441
        %v4443 = vsel %vm3234, %v4349, 0.0
        %4444 = vadd.xlane.f32.xlu0 %v4443
        %v4445 = vpop.xlane.xlu0 %4444
        %v4446 = vsel %vm3234, %v4350, 0.0
        %4447 = vadd.xlane.f32.xlu0 %v4446
        %v4448 = vpop.xlane.xlu0 %4447
        %v4449 = vsel %vm3234, %v4351, 0.0
        %4450 = vadd.xlane.f32.xlu0 %v4449
        %v4451 = vpop.xlane.xlu0 %4450
        %v4452 = vsel %vm3234, %v4352, 0.0
        %4453 = vadd.xlane.f32.xlu0 %v4452
        %v4454 = vpop.xlane.xlu0 %4453
        %v4455 = vsel %vm3234, %v4353, 0.0
        %4456 = vadd.xlane.f32.xlu0 %v4455
        %v4457 = vpop.xlane.xlu0 %4456
        %v4458 = vsel %vm3234, %v4354, 0.0
        %4459 = vadd.xlane.f32.xlu0 %v4458
        %v4460 = vpop.xlane.xlu0 %4459
        %v4461 = vsel %vm3234, %v4355, 0.0
        %4462 = vadd.xlane.f32.xlu0 %v4461
        %v4463 = vpop.xlane.xlu0 %4462
        %v4464 = vsel %vm3234, %v4356, 0.0
        %4465 = vadd.xlane.f32.xlu0 %v4464
        %v4466 = vpop.xlane.xlu0 %4465
        %v4467 = vsel %vm3234, %v4357, 0.0
        %4468 = vadd.xlane.f32.xlu0 %v4467
        %v4469 = vpop.xlane.xlu0 %4468
        %v4470 = vsel %vm3234, %v4358, 0.0
        %4471 = vadd.xlane.f32.xlu0 %v4470
        %v4472 = vpop.xlane.xlu0 %4471
        %v4473 = vsel %vm3234, %v4359, 0.0
        %4474 = vadd.xlane.f32.xlu0 %v4473
        %v4475 = vpop.xlane.xlu0 %4474
        %v4476 = vsel %vm3234, %v4360, 0.0
        %4477 = vadd.xlane.f32.xlu0 %v4476
        %v4478 = vpop.xlane.xlu0 %4477
        %v4479 = vsel %vm3234, %v4361, 0.0
        %4480 = vadd.xlane.f32.xlu0 %v4479
        %v4481 = vpop.xlane.xlu0 %4480
        %v4482 = vsel %vm3234, %v4362, 0.0
        %4483 = vadd.xlane.f32.xlu0 %v4482
        %v4484 = vpop.xlane.xlu0 %4483
        %v4485 = vsel %vm3234, %v4363, 0.0
        %4486 = vadd.xlane.f32.xlu0 %v4485
        %v4487 = vpop.xlane.xlu0 %4486
        %v4488 = vsel %vm3234, %v4364, 0.0
        %4489 = vadd.xlane.f32.xlu0 %v4488
        %v4490 = vpop.xlane.xlu0 %4489
        %v4491 = vsel %vm3234, %v4365, 0.0
        %4492 = vadd.xlane.f32.xlu0 %v4491
        %v4493 = vpop.xlane.xlu0 %4492
        %v4494 = vsel %vm3234, %v4366, 0.0
        %4495 = vadd.xlane.f32.xlu0 %v4494
        %v4496 = vpop.xlane.xlu0 %4495
        %v4497 = vsel %vm3234, %v4367, 0.0
        %4498 = vadd.xlane.f32.xlu0 %v4497
        %v4499 = vpop.xlane.xlu0 %4498
        %v4500 = vsel %vm3234, %v4368, 0.0
        %4501 = vadd.xlane.f32.xlu0 %v4500
        %v4502 = vpop.xlane.xlu0 %4501
        %v4503 = vsel %vm3234, %v4369, 0.0
        %4504 = vadd.xlane.f32.xlu0 %v4503
        %v4505 = vpop.xlane.xlu0 %4504
        %v4506 = vsel %vm3234, %v4370, 0.0
        %4507 = vadd.xlane.f32.xlu0 %v4506
        %v4508 = vpop.xlane.xlu0 %4507
        %v4509 = vsel %vm3234, %v4371, 0.0
        %4510 = vadd.xlane.f32.xlu0 %v4509
        %v4511 = vpop.xlane.xlu0 %4510
        %v4512 = vsel %vm3234, %v4372, 0.0
        %4513 = vadd.xlane.f32.xlu0 %v4512
        %v4514 = vpop.xlane.xlu0 %4513
        %v4515 = vsel %vm3234, %v4373, 0.0
        %4516 = vadd.xlane.f32.xlu0 %v4515
        %v4517 = vpop.xlane.xlu0 %4516
        %v4518 = vsel %vm3234, %v4374, 0.0
        %4519 = vadd.xlane.f32.xlu0 %v4518
        %v4520 = vpop.xlane.xlu0 %4519
        %v4521 = vsel %vm3234, %v4375, 0.0
        %4522 = vadd.xlane.f32.xlu0 %v4521
        %v4523 = vpop.xlane.xlu0 %4522
        %v4524 = vsel %vm3234, %v4376, 0.0
        %4525 = vadd.xlane.f32.xlu0 %v4524
        %v4526 = vpop.xlane.xlu0 %4525
        %v4527 = vsel %vm3234, %v4377, 0.0
        %4528 = vadd.xlane.f32.xlu0 %v4527
        %v4529 = vpop.xlane.xlu0 %4528
        %v4530 = vsel %vm3234, %v4378, 0.0
        %4531 = vadd.xlane.f32.xlu0 %v4530
        %v4532 = vpop.xlane.xlu0 %4531
        %v4533 = vsel %vm3234, %v4379, 0.0
        %4534 = vadd.xlane.f32.xlu0 %v4533
        %v4535 = vpop.xlane.xlu0 %4534
        %v4536 = vsel %vm3234, %v4380, 0.0
        %4537 = vadd.xlane.f32.xlu0 %v4536
        %v4538 = vpop.xlane.xlu0 %4537
        %v4539 = vsel %vm3234, %v4381, 0.0
        %4540 = vadd.xlane.f32.xlu0 %v4539
        %v4541 = vpop.xlane.xlu0 %4540
        %v4542 = vsel %vm3234, %v4382, 0.0
        %4543 = vadd.xlane.f32.xlu0 %v4542
        %v4544 = vpop.xlane.xlu0 %4543
        %v4545 = vsel %vm3234, %v4383, 0.0
        %4546 = vadd.xlane.f32.xlu0 %v4545
        %v4547 = vpop.xlane.xlu0 %4546
        %v4548 = vsel %vm3234, %v4384, 0.0
        %4549 = vadd.xlane.f32.xlu0 %v4548
        %v4550 = vpop.xlane.xlu0 %4549
        %v4551 = vsel %vm3234, %v4385, 0.0
        %4552 = vadd.xlane.f32.xlu0 %v4551
        %v4553 = vpop.xlane.xlu0 %4552
        %v4554 = vsel %vm3234, %v4386, 0.0
        %4555 = vadd.xlane.f32.xlu0 %v4554
        %v4556 = vpop.xlane.xlu0 %4555
        %v4557 = vsel %vm3234, %v4387, 0.0
        %4558 = vadd.xlane.f32.xlu0 %v4557
        %v4559 = vpop.xlane.xlu0 %4558
        %v4560 = vsel %vm3234, %v4388, 0.0
        %4561 = vadd.xlane.f32.xlu0 %v4560
        %v4562 = vpop.xlane.xlu0 %4561
        %v4563 = vsel %vm3234, %v4389, 0.0
        %4564 = vadd.xlane.f32.xlu0 %v4563
        %v4565 = vpop.xlane.xlu0 %4564
        %v4566 = vsel %vm3234, %v4390, 0.0
        %4567 = vadd.xlane.f32.xlu0 %v4566
        %v4568 = vpop.xlane.xlu0 %4567
        %v4569 = vsel %vm3234, %v4391, 0.0
        %4570 = vadd.xlane.f32.xlu0 %v4569
        %v4571 = vpop.xlane.xlu0 %4570
        %v4572 = vsel %vm3234, %v4392, 0.0
        %4573 = vadd.xlane.f32.xlu0 %v4572
        %v4574 = vpop.xlane.xlu0 %4573
        %v4575 = vsel %vm3234, %v4393, 0.0
        %4576 = vadd.xlane.f32.xlu0 %v4575
        %v4577 = vpop.xlane.xlu0 %4576
        %v4578 = vsel %vm3234, %v4394, 0.0
        %4579 = vadd.xlane.f32.xlu0 %v4578
        %v4580 = vpop.xlane.xlu0 %4579
        %v4581 = vsel %vm3234, %v4395, 0.0
        %4582 = vadd.xlane.f32.xlu0 %v4581
        %v4583 = vpop.xlane.xlu0 %4582
        %v4584 = vsel %vm3234, %v4396, 0.0
        %4585 = vadd.xlane.f32.xlu0 %v4584
        %v4586 = vpop.xlane.xlu0 %4585
        %v4587 = vsel %vm3234, %v4397, 0.0
        %4588 = vadd.xlane.f32.xlu0 %v4587
        %v4589 = vpop.xlane.xlu0 %4588
        %v4590 = vmul.f32 %v4400, %v3433
        %v4591 = vmul.f32 %v4403, %v3433
        %v4592 = vmul.f32 %v4406, %v3433
        %v4593 = vmul.f32 %v4409, %v3433
        %v4594 = vmul.f32 %v4412, %v3433
        %v4595 = vmul.f32 %v4415, %v3433
        %v4596 = vmul.f32 %v4418, %v3433
        %v4597 = vmul.f32 %v4421, %v3433
        %v4598 = vmul.f32 %v4424, %v3433
        %v4599 = vmul.f32 %v4427, %v3433
        %v4600 = vmul.f32 %v4430, %v3433
        %v4601 = vmul.f32 %v4433, %v3433
        %v4602 = vmul.f32 %v4436, %v3433
        %v4603 = vmul.f32 %v4439, %v3433
        %v4604 = vmul.f32 %v4442, %v3433
        %v4605 = vmul.f32 %v4445, %v3433
        %v4606 = vmul.f32 %v4448, %v3433
        %v4607 = vmul.f32 %v4451, %v3433
        %v4608 = vmul.f32 %v4454, %v3433
        %v4609 = vmul.f32 %v4457, %v3433
        %v4610 = vmul.f32 %v4460, %v3433
        %v4611 = vmul.f32 %v4463, %v3433
        %v4612 = vmul.f32 %v4466, %v3433
        %v4613 = vmul.f32 %v4469, %v3433
        %v4614 = vmul.f32 %v4472, %v3433
        %v4615 = vmul.f32 %v4475, %v3433
        %v4616 = vmul.f32 %v4478, %v3433
        %v4617 = vmul.f32 %v4481, %v3433
        %v4618 = vmul.f32 %v4484, %v3433
        %v4619 = vmul.f32 %v4487, %v3433
        %v4620 = vmul.f32 %v4490, %v3433
        %v4621 = vmul.f32 %v4493, %v3433
        %v4622 = vmul.f32 %v4496, %v3433
        %v4623 = vmul.f32 %v4499, %v3433
        %v4624 = vmul.f32 %v4502, %v3433
        %v4625 = vmul.f32 %v4505, %v3433
        %v4626 = vmul.f32 %v4508, %v3433
        %v4627 = vmul.f32 %v4511, %v3433
        %v4628 = vmul.f32 %v4514, %v3433
        %v4629 = vmul.f32 %v4517, %v3433
        %v4630 = vmul.f32 %v4520, %v3433
        %v4631 = vmul.f32 %v4523, %v3433
        %v4632 = vmul.f32 %v4526, %v3433
        %v4633 = vmul.f32 %v4529, %v3433
        %v4634 = vmul.f32 %v4532, %v3433
        %v4635 = vmul.f32 %v4535, %v3433
        %v4636 = vmul.f32 %v4538, %v3433
        %v4637 = vmul.f32 %v4541, %v3433
        %v4638 = vmul.f32 %v4544, %v3433
        %v4639 = vmul.f32 %v4547, %v3433
        %v4640 = vmul.f32 %v4550, %v3433
        %v4641 = vmul.f32 %v4553, %v3433
        %v4642 = vmul.f32 %v4556, %v3433
        %v4643 = vmul.f32 %v4559, %v3433
        %v4644 = vmul.f32 %v4562, %v3433
        %v4645 = vmul.f32 %v4565, %v3433
        %v4646 = vmul.f32 %v4568, %v3433
        %v4647 = vmul.f32 %v4571, %v3433
        %v4648 = vmul.f32 %v4574, %v3433
        %v4649 = vmul.f32 %v4577, %v3433
        %v4650 = vmul.f32 %v4580, %v3433
        %v4651 = vmul.f32 %v4583, %v3433
        %v4652 = vmul.f32 %v4586, %v3433
        %v4653 = vmul.f32 %v4589, %v3433
        %v4654 = vadd.f32 %v4590, 1e-06
        %v4655 = vadd.f32 %v4591, 1e-06
        %v4656 = vadd.f32 %v4592, 1e-06
        %v4657 = vadd.f32 %v4593, 1e-06
        %v4658 = vadd.f32 %v4594, 1e-06
        %v4659 = vadd.f32 %v4595, 1e-06
        %v4660 = vadd.f32 %v4596, 1e-06
        %v4661 = vadd.f32 %v4597, 1e-06
        %v4662 = vadd.f32 %v4598, 1e-06
        %v4663 = vadd.f32 %v4599, 1e-06
        %v4664 = vadd.f32 %v4600, 1e-06
        %v4665 = vadd.f32 %v4601, 1e-06
        %v4666 = vadd.f32 %v4602, 1e-06
        %v4667 = vadd.f32 %v4603, 1e-06
        %v4668 = vadd.f32 %v4604, 1e-06
        %v4669 = vadd.f32 %v4605, 1e-06
        %v4670 = vadd.f32 %v4606, 1e-06
        %v4671 = vadd.f32 %v4607, 1e-06
        %v4672 = vadd.f32 %v4608, 1e-06
        %v4673 = vadd.f32 %v4609, 1e-06
        %v4674 = vadd.f32 %v4610, 1e-06
        %v4675 = vadd.f32 %v4611, 1e-06
        %v4676 = vadd.f32 %v4612, 1e-06
        %v4677 = vadd.f32 %v4613, 1e-06
        %v4678 = vadd.f32 %v4614, 1e-06
        %v4679 = vadd.f32 %v4615, 1e-06
        %v4680 = vadd.f32 %v4616, 1e-06
        %v4681 = vadd.f32 %v4617, 1e-06
        %v4682 = vadd.f32 %v4618, 1e-06
        %v4683 = vadd.f32 %v4619, 1e-06
        %v4684 = vadd.f32 %v4620, 1e-06
        %v4685 = vadd.f32 %v4621, 1e-06
        %v4686 = vadd.f32 %v4622, 1e-06
        %v4687 = vadd.f32 %v4623, 1e-06
        %v4688 = vadd.f32 %v4624, 1e-06
        %v4689 = vadd.f32 %v4625, 1e-06
        %v4690 = vadd.f32 %v4626, 1e-06
        %v4691 = vadd.f32 %v4627, 1e-06
        %v4692 = vadd.f32 %v4628, 1e-06
        %v4693 = vadd.f32 %v4629, 1e-06
        %v4694 = vadd.f32 %v4630, 1e-06
        %v4695 = vadd.f32 %v4631, 1e-06
        %v4696 = vadd.f32 %v4632, 1e-06
        %v4697 = vadd.f32 %v4633, 1e-06
        %v4698 = vadd.f32 %v4634, 1e-06
        %v4699 = vadd.f32 %v4635, 1e-06
        %v4700 = vadd.f32 %v4636, 1e-06
        %v4701 = vadd.f32 %v4637, 1e-06
        %v4702 = vadd.f32 %v4638, 1e-06
        %v4703 = vadd.f32 %v4639, 1e-06
        %v4704 = vadd.f32 %v4640, 1e-06
        %v4705 = vadd.f32 %v4641, 1e-06
        %v4706 = vadd.f32 %v4642, 1e-06
        %v4707 = vadd.f32 %v4643, 1e-06
        %v4708 = vadd.f32 %v4644, 1e-06
        %v4709 = vadd.f32 %v4645, 1e-06
        %v4710 = vadd.f32 %v4646, 1e-06
        %v4711 = vadd.f32 %v4647, 1e-06
        %v4712 = vadd.f32 %v4648, 1e-06
        %v4713 = vadd.f32 %v4649, 1e-06
        %v4714 = vadd.f32 %v4650, 1e-06
        %v4715 = vadd.f32 %v4651, 1e-06
        %v4716 = vadd.f32 %v4652, 1e-06
        %v4717 = vadd.f32 %v4653, 1e-06
        %v4718 = vrsqrt.pop %v4654
        %v4719 = vmul.f32 %v4718, %v4654
        %v4720 = vmul.f32 %v4719, %v4718
        %v4721 = vmul.f32 0.5, %v4720
        %v4722 = vsub.f32 1.5, %v4721
        %v4723 = vmul.f32 %v4718, %v4722
        %vm4724 = vweird.f32 %v4654
        %vm4725 = vweird.f32 %v4718
        %vm4726 = vmor %vm4724, %vm4725
        %v4727 = vsel %vm4726, %v4718, %v4723
        %v4728 = vrsqrt.pop %v4655
        %v4729 = vmul.f32 %v4728, %v4655
        %v4730 = vmul.f32 %v4729, %v4728
        %v4731 = vmul.f32 0.5, %v4730
        %v4732 = vsub.f32 1.5, %v4731
        %v4733 = vmul.f32 %v4728, %v4732
        %vm4734 = vweird.f32 %v4655
        %vm4735 = vweird.f32 %v4728
        %vm4736 = vmor %vm4734, %vm4735
        %v4737 = vsel %vm4736, %v4728, %v4733
        %v4738 = vrsqrt.pop %v4656
        %v4739 = vmul.f32 %v4738, %v4656
        %v4740 = vmul.f32 %v4739, %v4738
        %v4741 = vmul.f32 0.5, %v4740
        %v4742 = vsub.f32 1.5, %v4741
        %v4743 = vmul.f32 %v4738, %v4742
        %vm4744 = vweird.f32 %v4656
        %vm4745 = vweird.f32 %v4738
        %vm4746 = vmor %vm4744, %vm4745
        %v4747 = vsel %vm4746, %v4738, %v4743
        %v4748 = vrsqrt.pop %v4657
        %v4749 = vmul.f32 %v4748, %v4657
        %v4750 = vmul.f32 %v4749, %v4748
        %v4751 = vmul.f32 0.5, %v4750
        %v4752 = vsub.f32 1.5, %v4751
        %v4753 = vmul.f32 %v4748, %v4752
        %vm4754 = vweird.f32 %v4657
        %vm4755 = vweird.f32 %v4748
        %vm4756 = vmor %vm4754, %vm4755
        %v4757 = vsel %vm4756, %v4748, %v4753
        %v4758 = vrsqrt.pop %v4658
        %v4759 = vmul.f32 %v4758, %v4658
        %v4760 = vmul.f32 %v4759, %v4758
        %v4761 = vmul.f32 0.5, %v4760
        %v4762 = vsub.f32 1.5, %v4761
        %v4763 = vmul.f32 %v4758, %v4762
        %vm4764 = vweird.f32 %v4658
        %vm4765 = vweird.f32 %v4758
        %vm4766 = vmor %vm4764, %vm4765
        %v4767 = vsel %vm4766, %v4758, %v4763
        %v4768 = vrsqrt.pop %v4659
        %v4769 = vmul.f32 %v4768, %v4659
        %v4770 = vmul.f32 %v4769, %v4768
        %v4771 = vmul.f32 0.5, %v4770
        %v4772 = vsub.f32 1.5, %v4771
        %v4773 = vmul.f32 %v4768, %v4772
        %vm4774 = vweird.f32 %v4659
        %vm4775 = vweird.f32 %v4768
        %vm4776 = vmor %vm4774, %vm4775
        %v4777 = vsel %vm4776, %v4768, %v4773
        %v4778 = vrsqrt.pop %v4660
        %v4779 = vmul.f32 %v4778, %v4660
        %v4780 = vmul.f32 %v4779, %v4778
        %v4781 = vmul.f32 0.5, %v4780
        %v4782 = vsub.f32 1.5, %v4781
        %v4783 = vmul.f32 %v4778, %v4782
        %vm4784 = vweird.f32 %v4660
        %vm4785 = vweird.f32 %v4778
        %vm4786 = vmor %vm4784, %vm4785
        %v4787 = vsel %vm4786, %v4778, %v4783
        %v4788 = vrsqrt.pop %v4661
        %v4789 = vmul.f32 %v4788, %v4661
        %v4790 = vmul.f32 %v4789, %v4788
        %v4791 = vmul.f32 0.5, %v4790
        %v4792 = vsub.f32 1.5, %v4791
        %v4793 = vmul.f32 %v4788, %v4792
        %vm4794 = vweird.f32 %v4661
        %vm4795 = vweird.f32 %v4788
        %vm4796 = vmor %vm4794, %vm4795
        %v4797 = vsel %vm4796, %v4788, %v4793
        %v4798 = vrsqrt.pop %v4662
        %v4799 = vmul.f32 %v4798, %v4662
        %v4800 = vmul.f32 %v4799, %v4798
        %v4801 = vmul.f32 0.5, %v4800
        %v4802 = vsub.f32 1.5, %v4801
        %v4803 = vmul.f32 %v4798, %v4802
        %vm4804 = vweird.f32 %v4662
        %vm4805 = vweird.f32 %v4798
        %vm4806 = vmor %vm4804, %vm4805
        %v4807 = vsel %vm4806, %v4798, %v4803
        %v4808 = vrsqrt.pop %v4663
        %v4809 = vmul.f32 %v4808, %v4663
        %v4810 = vmul.f32 %v4809, %v4808
        %v4811 = vmul.f32 0.5, %v4810
        %v4812 = vsub.f32 1.5, %v4811
        %v4813 = vmul.f32 %v4808, %v4812
        %vm4814 = vweird.f32 %v4663
        %vm4815 = vweird.f32 %v4808
        %vm4816 = vmor %vm4814, %vm4815
        %v4817 = vsel %vm4816, %v4808, %v4813
        %v4818 = vrsqrt.pop %v4664
        %v4819 = vmul.f32 %v4818, %v4664
        %v4820 = vmul.f32 %v4819, %v4818
        %v4821 = vmul.f32 0.5, %v4820
        %v4822 = vsub.f32 1.5, %v4821
        %v4823 = vmul.f32 %v4818, %v4822
        %vm4824 = vweird.f32 %v4664
        %vm4825 = vweird.f32 %v4818
        %vm4826 = vmor %vm4824, %vm4825
        %v4827 = vsel %vm4826, %v4818, %v4823
        %v4828 = vrsqrt.pop %v4665
        %v4829 = vmul.f32 %v4828, %v4665
        %v4830 = vmul.f32 %v4829, %v4828
        %v4831 = vmul.f32 0.5, %v4830
        %v4832 = vsub.f32 1.5, %v4831
        %v4833 = vmul.f32 %v4828, %v4832
        %vm4834 = vweird.f32 %v4665
        %vm4835 = vweird.f32 %v4828
        %vm4836 = vmor %vm4834, %vm4835
        %v4837 = vsel %vm4836, %v4828, %v4833
        %v4838 = vrsqrt.pop %v4666
        %v4839 = vmul.f32 %v4838, %v4666
        %v4840 = vmul.f32 %v4839, %v4838
        %v4841 = vmul.f32 0.5, %v4840
        %v4842 = vsub.f32 1.5, %v4841
        %v4843 = vmul.f32 %v4838, %v4842
        %vm4844 = vweird.f32 %v4666
        %vm4845 = vweird.f32 %v4838
        %vm4846 = vmor %vm4844, %vm4845
        %v4847 = vsel %vm4846, %v4838, %v4843
        %v4848 = vrsqrt.pop %v4667
        %v4849 = vmul.f32 %v4848, %v4667
        %v4850 = vmul.f32 %v4849, %v4848
        %v4851 = vmul.f32 0.5, %v4850
        %v4852 = vsub.f32 1.5, %v4851
        %v4853 = vmul.f32 %v4848, %v4852
        %vm4854 = vweird.f32 %v4667
        %vm4855 = vweird.f32 %v4848
        %vm4856 = vmor %vm4854, %vm4855
        %v4857 = vsel %vm4856, %v4848, %v4853
        %v4858 = vrsqrt.pop %v4668
        %v4859 = vmul.f32 %v4858, %v4668
        %v4860 = vmul.f32 %v4859, %v4858
        %v4861 = vmul.f32 0.5, %v4860
        %v4862 = vsub.f32 1.5, %v4861
        %v4863 = vmul.f32 %v4858, %v4862
        %vm4864 = vweird.f32 %v4668
        %vm4865 = vweird.f32 %v4858
        %vm4866 = vmor %vm4864, %vm4865
        %v4867 = vsel %vm4866, %v4858, %v4863
        %v4868 = vrsqrt.pop %v4669
        %v4869 = vmul.f32 %v4868, %v4669
        %v4870 = vmul.f32 %v4869, %v4868
        %v4871 = vmul.f32 0.5, %v4870
        %v4872 = vsub.f32 1.5, %v4871
        %v4873 = vmul.f32 %v4868, %v4872
        %vm4874 = vweird.f32 %v4669
        %vm4875 = vweird.f32 %v4868
        %vm4876 = vmor %vm4874, %vm4875
        %v4877 = vsel %vm4876, %v4868, %v4873
        %v4878 = vrsqrt.pop %v4670
        %v4879 = vmul.f32 %v4878, %v4670
        %v4880 = vmul.f32 %v4879, %v4878
        %v4881 = vmul.f32 0.5, %v4880
        %v4882 = vsub.f32 1.5, %v4881
        %v4883 = vmul.f32 %v4878, %v4882
        %vm4884 = vweird.f32 %v4670
        %vm4885 = vweird.f32 %v4878
        %vm4886 = vmor %vm4884, %vm4885
        %v4887 = vsel %vm4886, %v4878, %v4883
        %v4888 = vrsqrt.pop %v4671
        %v4889 = vmul.f32 %v4888, %v4671
        %v4890 = vmul.f32 %v4889, %v4888
        %v4891 = vmul.f32 0.5, %v4890
        %v4892 = vsub.f32 1.5, %v4891
        %v4893 = vmul.f32 %v4888, %v4892
        %vm4894 = vweird.f32 %v4671
        %vm4895 = vweird.f32 %v4888
        %vm4896 = vmor %vm4894, %vm4895
        %v4897 = vsel %vm4896, %v4888, %v4893
        %v4898 = vrsqrt.pop %v4672
        %v4899 = vmul.f32 %v4898, %v4672
        %v4900 = vmul.f32 %v4899, %v4898
        %v4901 = vmul.f32 0.5, %v4900
        %v4902 = vsub.f32 1.5, %v4901
        %v4903 = vmul.f32 %v4898, %v4902
        %vm4904 = vweird.f32 %v4672
        %vm4905 = vweird.f32 %v4898
        %vm4906 = vmor %vm4904, %vm4905
        %v4907 = vsel %vm4906, %v4898, %v4903
        %v4908 = vrsqrt.pop %v4673
        %v4909 = vmul.f32 %v4908, %v4673
        %v4910 = vmul.f32 %v4909, %v4908
        %v4911 = vmul.f32 0.5, %v4910
        %v4912 = vsub.f32 1.5, %v4911
        %v4913 = vmul.f32 %v4908, %v4912
        %vm4914 = vweird.f32 %v4673
        %vm4915 = vweird.f32 %v4908
        %vm4916 = vmor %vm4914, %vm4915
        %v4917 = vsel %vm4916, %v4908, %v4913
        %v4918 = vrsqrt.pop %v4674
        %v4919 = vmul.f32 %v4918, %v4674
        %v4920 = vmul.f32 %v4919, %v4918
        %v4921 = vmul.f32 0.5, %v4920
        %v4922 = vsub.f32 1.5, %v4921
        %v4923 = vmul.f32 %v4918, %v4922
        %vm4924 = vweird.f32 %v4674
        %vm4925 = vweird.f32 %v4918
        %vm4926 = vmor %vm4924, %vm4925
        %v4927 = vsel %vm4926, %v4918, %v4923
        %v4928 = vrsqrt.pop %v4675
        %v4929 = vmul.f32 %v4928, %v4675
        %v4930 = vmul.f32 %v4929, %v4928
        %v4931 = vmul.f32 0.5, %v4930
        %v4932 = vsub.f32 1.5, %v4931
        %v4933 = vmul.f32 %v4928, %v4932
        %vm4934 = vweird.f32 %v4675
        %vm4935 = vweird.f32 %v4928
        %vm4936 = vmor %vm4934, %vm4935
        %v4937 = vsel %vm4936, %v4928, %v4933
        %v4938 = vrsqrt.pop %v4676
        %v4939 = vmul.f32 %v4938, %v4676
        %v4940 = vmul.f32 %v4939, %v4938
        %v4941 = vmul.f32 0.5, %v4940
        %v4942 = vsub.f32 1.5, %v4941
        %v4943 = vmul.f32 %v4938, %v4942
        %vm4944 = vweird.f32 %v4676
        %vm4945 = vweird.f32 %v4938
        %vm4946 = vmor %vm4944, %vm4945
        %v4947 = vsel %vm4946, %v4938, %v4943
        %v4948 = vrsqrt.pop %v4677
        %v4949 = vmul.f32 %v4948, %v4677
        %v4950 = vmul.f32 %v4949, %v4948
        %v4951 = vmul.f32 0.5, %v4950
        %v4952 = vsub.f32 1.5, %v4951
        %v4953 = vmul.f32 %v4948, %v4952
        %vm4954 = vweird.f32 %v4677
        %vm4955 = vweird.f32 %v4948
        %vm4956 = vmor %vm4954, %vm4955
        %v4957 = vsel %vm4956, %v4948, %v4953
        %v4958 = vrsqrt.pop %v4678
        %v4959 = vmul.f32 %v4958, %v4678
        %v4960 = vmul.f32 %v4959, %v4958
        %v4961 = vmul.f32 0.5, %v4960
        %v4962 = vsub.f32 1.5, %v4961
        %v4963 = vmul.f32 %v4958, %v4962
        %vm4964 = vweird.f32 %v4678
        %vm4965 = vweird.f32 %v4958
        %vm4966 = vmor %vm4964, %vm4965
        %v4967 = vsel %vm4966, %v4958, %v4963
        %v4968 = vrsqrt.pop %v4679
        %v4969 = vmul.f32 %v4968, %v4679
        %v4970 = vmul.f32 %v4969, %v4968
        %v4971 = vmul.f32 0.5, %v4970
        %v4972 = vsub.f32 1.5, %v4971
        %v4973 = vmul.f32 %v4968, %v4972
        %vm4974 = vweird.f32 %v4679
        %vm4975 = vweird.f32 %v4968
        %vm4976 = vmor %vm4974, %vm4975
        %v4977 = vsel %vm4976, %v4968, %v4973
        %v4978 = vrsqrt.pop %v4680
        %v4979 = vmul.f32 %v4978, %v4680
        %v4980 = vmul.f32 %v4979, %v4978
        %v4981 = vmul.f32 0.5, %v4980
        %v4982 = vsub.f32 1.5, %v4981
        %v4983 = vmul.f32 %v4978, %v4982
        %vm4984 = vweird.f32 %v4680
        %vm4985 = vweird.f32 %v4978
        %vm4986 = vmor %vm4984, %vm4985
        %v4987 = vsel %vm4986, %v4978, %v4983
        %v4988 = vrsqrt.pop %v4681
        %v4989 = vmul.f32 %v4988, %v4681
        %v4990 = vmul.f32 %v4989, %v4988
        %v4991 = vmul.f32 0.5, %v4990
        %v4992 = vsub.f32 1.5, %v4991
        %v4993 = vmul.f32 %v4988, %v4992
        %vm4994 = vweird.f32 %v4681
        %vm4995 = vweird.f32 %v4988
        %vm4996 = vmor %vm4994, %vm4995
        %v4997 = vsel %vm4996, %v4988, %v4993
        %v4998 = vrsqrt.pop %v4682
        %v4999 = vmul.f32 %v4998, %v4682
        %v5000 = vmul.f32 %v4999, %v4998
        %v5001 = vmul.f32 0.5, %v5000
        %v5002 = vsub.f32 1.5, %v5001
        %v5003 = vmul.f32 %v4998, %v5002
        %vm5004 = vweird.f32 %v4682
        %vm5005 = vweird.f32 %v4998
        %vm5006 = vmor %vm5004, %vm5005
        %v5007 = vsel %vm5006, %v4998, %v5003
        %v5008 = vrsqrt.pop %v4683
        %v5009 = vmul.f32 %v5008, %v4683
        %v5010 = vmul.f32 %v5009, %v5008
        %v5011 = vmul.f32 0.5, %v5010
        %v5012 = vsub.f32 1.5, %v5011
        %v5013 = vmul.f32 %v5008, %v5012
        %vm5014 = vweird.f32 %v4683
        %vm5015 = vweird.f32 %v5008
        %vm5016 = vmor %vm5014, %vm5015
        %v5017 = vsel %vm5016, %v5008, %v5013
        %v5018 = vrsqrt.pop %v4684
        %v5019 = vmul.f32 %v5018, %v4684
        %v5020 = vmul.f32 %v5019, %v5018
        %v5021 = vmul.f32 0.5, %v5020
        %v5022 = vsub.f32 1.5, %v5021
        %v5023 = vmul.f32 %v5018, %v5022
        %vm5024 = vweird.f32 %v4684
        %vm5025 = vweird.f32 %v5018
        %vm5026 = vmor %vm5024, %vm5025
        %v5027 = vsel %vm5026, %v5018, %v5023
        %v5028 = vrsqrt.pop %v4685
        %v5029 = vmul.f32 %v5028, %v4685
        %v5030 = vmul.f32 %v5029, %v5028
        %v5031 = vmul.f32 0.5, %v5030
        %v5032 = vsub.f32 1.5, %v5031
        %v5033 = vmul.f32 %v5028, %v5032
        %vm5034 = vweird.f32 %v4685
        %vm5035 = vweird.f32 %v5028
        %vm5036 = vmor %vm5034, %vm5035
        %v5037 = vsel %vm5036, %v5028, %v5033
        %v5038 = vrsqrt.pop %v4686
        %v5039 = vmul.f32 %v5038, %v4686
        %v5040 = vmul.f32 %v5039, %v5038
        %v5041 = vmul.f32 0.5, %v5040
        %v5042 = vsub.f32 1.5, %v5041
        %v5043 = vmul.f32 %v5038, %v5042
        %vm5044 = vweird.f32 %v4686
        %vm5045 = vweird.f32 %v5038
        %vm5046 = vmor %vm5044, %vm5045
        %v5047 = vsel %vm5046, %v5038, %v5043
        %v5048 = vrsqrt.pop %v4687
        %v5049 = vmul.f32 %v5048, %v4687
        %v5050 = vmul.f32 %v5049, %v5048
        %v5051 = vmul.f32 0.5, %v5050
        %v5052 = vsub.f32 1.5, %v5051
        %v5053 = vmul.f32 %v5048, %v5052
        %vm5054 = vweird.f32 %v4687
        %vm5055 = vweird.f32 %v5048
        %vm5056 = vmor %vm5054, %vm5055
        %v5057 = vsel %vm5056, %v5048, %v5053
        %v5058 = vrsqrt.pop %v4688
        %v5059 = vmul.f32 %v5058, %v4688
        %v5060 = vmul.f32 %v5059, %v5058
        %v5061 = vmul.f32 0.5, %v5060
        %v5062 = vsub.f32 1.5, %v5061
        %v5063 = vmul.f32 %v5058, %v5062
        %vm5064 = vweird.f32 %v4688
        %vm5065 = vweird.f32 %v5058
        %vm5066 = vmor %vm5064, %vm5065
        %v5067 = vsel %vm5066, %v5058, %v5063
        %v5068 = vrsqrt.pop %v4689
        %v5069 = vmul.f32 %v5068, %v4689
        %v5070 = vmul.f32 %v5069, %v5068
        %v5071 = vmul.f32 0.5, %v5070
        %v5072 = vsub.f32 1.5, %v5071
        %v5073 = vmul.f32 %v5068, %v5072
        %vm5074 = vweird.f32 %v4689
        %vm5075 = vweird.f32 %v5068
        %vm5076 = vmor %vm5074, %vm5075
        %v5077 = vsel %vm5076, %v5068, %v5073
        %v5078 = vrsqrt.pop %v4690
        %v5079 = vmul.f32 %v5078, %v4690
        %v5080 = vmul.f32 %v5079, %v5078
        %v5081 = vmul.f32 0.5, %v5080
        %v5082 = vsub.f32 1.5, %v5081
        %v5083 = vmul.f32 %v5078, %v5082
        %vm5084 = vweird.f32 %v4690
        %vm5085 = vweird.f32 %v5078
        %vm5086 = vmor %vm5084, %vm5085
        %v5087 = vsel %vm5086, %v5078, %v5083
        %v5088 = vrsqrt.pop %v4691
        %v5089 = vmul.f32 %v5088, %v4691
        %v5090 = vmul.f32 %v5089, %v5088
        %v5091 = vmul.f32 0.5, %v5090
        %v5092 = vsub.f32 1.5, %v5091
        %v5093 = vmul.f32 %v5088, %v5092
        %vm5094 = vweird.f32 %v4691
        %vm5095 = vweird.f32 %v5088
        %vm5096 = vmor %vm5094, %vm5095
        %v5097 = vsel %vm5096, %v5088, %v5093
        %v5098 = vrsqrt.pop %v4692
        %v5099 = vmul.f32 %v5098, %v4692
        %v5100 = vmul.f32 %v5099, %v5098
        %v5101 = vmul.f32 0.5, %v5100
        %v5102 = vsub.f32 1.5, %v5101
        %v5103 = vmul.f32 %v5098, %v5102
        %vm5104 = vweird.f32 %v4692
        %vm5105 = vweird.f32 %v5098
        %vm5106 = vmor %vm5104, %vm5105
        %v5107 = vsel %vm5106, %v5098, %v5103
        %v5108 = vrsqrt.pop %v4693
        %v5109 = vmul.f32 %v5108, %v4693
        %v5110 = vmul.f32 %v5109, %v5108
        %v5111 = vmul.f32 0.5, %v5110
        %v5112 = vsub.f32 1.5, %v5111
        %v5113 = vmul.f32 %v5108, %v5112
        %vm5114 = vweird.f32 %v4693
        %vm5115 = vweird.f32 %v5108
        %vm5116 = vmor %vm5114, %vm5115
        %v5117 = vsel %vm5116, %v5108, %v5113
        %v5118 = vrsqrt.pop %v4694
        %v5119 = vmul.f32 %v5118, %v4694
        %v5120 = vmul.f32 %v5119, %v5118
        %v5121 = vmul.f32 0.5, %v5120
        %v5122 = vsub.f32 1.5, %v5121
        %v5123 = vmul.f32 %v5118, %v5122
        %vm5124 = vweird.f32 %v4694
        %vm5125 = vweird.f32 %v5118
        %vm5126 = vmor %vm5124, %vm5125
        %v5127 = vsel %vm5126, %v5118, %v5123
        %v5128 = vrsqrt.pop %v4695
        %v5129 = vmul.f32 %v5128, %v4695
        %v5130 = vmul.f32 %v5129, %v5128
        %v5131 = vmul.f32 0.5, %v5130
        %v5132 = vsub.f32 1.5, %v5131
        %v5133 = vmul.f32 %v5128, %v5132
        %vm5134 = vweird.f32 %v4695
        %vm5135 = vweird.f32 %v5128
        %vm5136 = vmor %vm5134, %vm5135
        %v5137 = vsel %vm5136, %v5128, %v5133
        %v5138 = vrsqrt.pop %v4696
        %v5139 = vmul.f32 %v5138, %v4696
        %v5140 = vmul.f32 %v5139, %v5138
        %v5141 = vmul.f32 0.5, %v5140
        %v5142 = vsub.f32 1.5, %v5141
        %v5143 = vmul.f32 %v5138, %v5142
        %vm5144 = vweird.f32 %v4696
        %vm5145 = vweird.f32 %v5138
        %vm5146 = vmor %vm5144, %vm5145
        %v5147 = vsel %vm5146, %v5138, %v5143
        %v5148 = vrsqrt.pop %v4697
        %v5149 = vmul.f32 %v5148, %v4697
        %v5150 = vmul.f32 %v5149, %v5148
        %v5151 = vmul.f32 0.5, %v5150
        %v5152 = vsub.f32 1.5, %v5151
        %v5153 = vmul.f32 %v5148, %v5152
        %vm5154 = vweird.f32 %v4697
        %vm5155 = vweird.f32 %v5148
        %vm5156 = vmor %vm5154, %vm5155
        %v5157 = vsel %vm5156, %v5148, %v5153
        %v5158 = vrsqrt.pop %v4698
        %v5159 = vmul.f32 %v5158, %v4698
        %v5160 = vmul.f32 %v5159, %v5158
        %v5161 = vmul.f32 0.5, %v5160
        %v5162 = vsub.f32 1.5, %v5161
        %v5163 = vmul.f32 %v5158, %v5162
        %vm5164 = vweird.f32 %v4698
        %vm5165 = vweird.f32 %v5158
        %vm5166 = vmor %vm5164, %vm5165
        %v5167 = vsel %vm5166, %v5158, %v5163
        %v5168 = vrsqrt.pop %v4699
        %v5169 = vmul.f32 %v5168, %v4699
        %v5170 = vmul.f32 %v5169, %v5168
        %v5171 = vmul.f32 0.5, %v5170
        %v5172 = vsub.f32 1.5, %v5171
        %v5173 = vmul.f32 %v5168, %v5172
        %vm5174 = vweird.f32 %v4699
        %vm5175 = vweird.f32 %v5168
        %vm5176 = vmor %vm5174, %vm5175
        %v5177 = vsel %vm5176, %v5168, %v5173
        %v5178 = vrsqrt.pop %v4700
        %v5179 = vmul.f32 %v5178, %v4700
        %v5180 = vmul.f32 %v5179, %v5178
        %v5181 = vmul.f32 0.5, %v5180
        %v5182 = vsub.f32 1.5, %v5181
        %v5183 = vmul.f32 %v5178, %v5182
        %vm5184 = vweird.f32 %v4700
        %vm5185 = vweird.f32 %v5178
        %vm5186 = vmor %vm5184, %vm5185
        %v5187 = vsel %vm5186, %v5178, %v5183
        %v5188 = vrsqrt.pop %v4701
        %v5189 = vmul.f32 %v5188, %v4701
        %v5190 = vmul.f32 %v5189, %v5188
        %v5191 = vmul.f32 0.5, %v5190
        %v5192 = vsub.f32 1.5, %v5191
        %v5193 = vmul.f32 %v5188, %v5192
        %vm5194 = vweird.f32 %v4701
        %vm5195 = vweird.f32 %v5188
        %vm5196 = vmor %vm5194, %vm5195
        %v5197 = vsel %vm5196, %v5188, %v5193
        %v5198 = vrsqrt.pop %v4702
        %v5199 = vmul.f32 %v5198, %v4702
        %v5200 = vmul.f32 %v5199, %v5198
        %v5201 = vmul.f32 0.5, %v5200
        %v5202 = vsub.f32 1.5, %v5201
        %v5203 = vmul.f32 %v5198, %v5202
        %vm5204 = vweird.f32 %v4702
        %vm5205 = vweird.f32 %v5198
        %vm5206 = vmor %vm5204, %vm5205
        %v5207 = vsel %vm5206, %v5198, %v5203
        %v5208 = vrsqrt.pop %v4703
        %v5209 = vmul.f32 %v5208, %v4703
        %v5210 = vmul.f32 %v5209, %v5208
        %v5211 = vmul.f32 0.5, %v5210
        %v5212 = vsub.f32 1.5, %v5211
        %v5213 = vmul.f32 %v5208, %v5212
        %vm5214 = vweird.f32 %v4703
        %vm5215 = vweird.f32 %v5208
        %vm5216 = vmor %vm5214, %vm5215
        %v5217 = vsel %vm5216, %v5208, %v5213
        %v5218 = vrsqrt.pop %v4704
        %v5219 = vmul.f32 %v5218, %v4704
        %v5220 = vmul.f32 %v5219, %v5218
        %v5221 = vmul.f32 0.5, %v5220
        %v5222 = vsub.f32 1.5, %v5221
        %v5223 = vmul.f32 %v5218, %v5222
        %vm5224 = vweird.f32 %v4704
        %vm5225 = vweird.f32 %v5218
        %vm5226 = vmor %vm5224, %vm5225
        %v5227 = vsel %vm5226, %v5218, %v5223
        %v5228 = vrsqrt.pop %v4705
        %v5229 = vmul.f32 %v5228, %v4705
        %v5230 = vmul.f32 %v5229, %v5228
        %v5231 = vmul.f32 0.5, %v5230
        %v5232 = vsub.f32 1.5, %v5231
        %v5233 = vmul.f32 %v5228, %v5232
        %vm5234 = vweird.f32 %v4705
        %vm5235 = vweird.f32 %v5228
        %vm5236 = vmor %vm5234, %vm5235
        %v5237 = vsel %vm5236, %v5228, %v5233
        %v5238 = vrsqrt.pop %v4706
        %v5239 = vmul.f32 %v5238, %v4706
        %v5240 = vmul.f32 %v5239, %v5238
        %v5241 = vmul.f32 0.5, %v5240
        %v5242 = vsub.f32 1.5, %v5241
        %v5243 = vmul.f32 %v5238, %v5242
        %vm5244 = vweird.f32 %v4706
        %vm5245 = vweird.f32 %v5238
        %vm5246 = vmor %vm5244, %vm5245
        %v5247 = vsel %vm5246, %v5238, %v5243
        %v5248 = vrsqrt.pop %v4707
        %v5249 = vmul.f32 %v5248, %v4707
        %v5250 = vmul.f32 %v5249, %v5248
        %v5251 = vmul.f32 0.5, %v5250
        %v5252 = vsub.f32 1.5, %v5251
        %v5253 = vmul.f32 %v5248, %v5252
        %vm5254 = vweird.f32 %v4707
        %vm5255 = vweird.f32 %v5248
        %vm5256 = vmor %vm5254, %vm5255
        %v5257 = vsel %vm5256, %v5248, %v5253
        %v5258 = vrsqrt.pop %v4708
        %v5259 = vmul.f32 %v5258, %v4708
        %v5260 = vmul.f32 %v5259, %v5258
        %v5261 = vmul.f32 0.5, %v5260
        %v5262 = vsub.f32 1.5, %v5261
        %v5263 = vmul.f32 %v5258, %v5262
        %vm5264 = vweird.f32 %v4708
        %vm5265 = vweird.f32 %v5258
        %vm5266 = vmor %vm5264, %vm5265
        %v5267 = vsel %vm5266, %v5258, %v5263
        %v5268 = vrsqrt.pop %v4709
        %v5269 = vmul.f32 %v5268, %v4709
        %v5270 = vmul.f32 %v5269, %v5268
        %v5271 = vmul.f32 0.5, %v5270
        %v5272 = vsub.f32 1.5, %v5271
        %v5273 = vmul.f32 %v5268, %v5272
        %vm5274 = vweird.f32 %v4709
        %vm5275 = vweird.f32 %v5268
        %vm5276 = vmor %vm5274, %vm5275
        %v5277 = vsel %vm5276, %v5268, %v5273
        %v5278 = vrsqrt.pop %v4710
        %v5279 = vmul.f32 %v5278, %v4710
        %v5280 = vmul.f32 %v5279, %v5278
        %v5281 = vmul.f32 0.5, %v5280
        %v5282 = vsub.f32 1.5, %v5281
        %v5283 = vmul.f32 %v5278, %v5282
        %vm5284 = vweird.f32 %v4710
        %vm5285 = vweird.f32 %v5278
        %vm5286 = vmor %vm5284, %vm5285
        %v5287 = vsel %vm5286, %v5278, %v5283
        %v5288 = vrsqrt.pop %v4711
        %v5289 = vmul.f32 %v5288, %v4711
        %v5290 = vmul.f32 %v5289, %v5288
        %v5291 = vmul.f32 0.5, %v5290
        %v5292 = vsub.f32 1.5, %v5291
        %v5293 = vmul.f32 %v5288, %v5292
        %vm5294 = vweird.f32 %v4711
        %vm5295 = vweird.f32 %v5288
        %vm5296 = vmor %vm5294, %vm5295
        %v5297 = vsel %vm5296, %v5288, %v5293
        %v5298 = vrsqrt.pop %v4712
        %v5299 = vmul.f32 %v5298, %v4712
        %v5300 = vmul.f32 %v5299, %v5298
        %v5301 = vmul.f32 0.5, %v5300
        %v5302 = vsub.f32 1.5, %v5301
        %v5303 = vmul.f32 %v5298, %v5302
        %vm5304 = vweird.f32 %v4712
        %vm5305 = vweird.f32 %v5298
        %vm5306 = vmor %vm5304, %vm5305
        %v5307 = vsel %vm5306, %v5298, %v5303
        %v5308 = vrsqrt.pop %v4713
        %v5309 = vmul.f32 %v5308, %v4713
        %v5310 = vmul.f32 %v5309, %v5308
        %v5311 = vmul.f32 0.5, %v5310
        %v5312 = vsub.f32 1.5, %v5311
        %v5313 = vmul.f32 %v5308, %v5312
        %vm5314 = vweird.f32 %v4713
        %vm5315 = vweird.f32 %v5308
        %vm5316 = vmor %vm5314, %vm5315
        %v5317 = vsel %vm5316, %v5308, %v5313
        %v5318 = vrsqrt.pop %v4714
        %v5319 = vmul.f32 %v5318, %v4714
        %v5320 = vmul.f32 %v5319, %v5318
        %v5321 = vmul.f32 0.5, %v5320
        %v5322 = vsub.f32 1.5, %v5321
        %v5323 = vmul.f32 %v5318, %v5322
        %vm5324 = vweird.f32 %v4714
        %vm5325 = vweird.f32 %v5318
        %vm5326 = vmor %vm5324, %vm5325
        %v5327 = vsel %vm5326, %v5318, %v5323
        %v5328 = vrsqrt.pop %v4715
        %v5329 = vmul.f32 %v5328, %v4715
        %v5330 = vmul.f32 %v5329, %v5328
        %v5331 = vmul.f32 0.5, %v5330
        %v5332 = vsub.f32 1.5, %v5331
        %v5333 = vmul.f32 %v5328, %v5332
        %vm5334 = vweird.f32 %v4715
        %vm5335 = vweird.f32 %v5328
        %vm5336 = vmor %vm5334, %vm5335
        %v5337 = vsel %vm5336, %v5328, %v5333
        %v5338 = vrsqrt.pop %v4716
        %v5339 = vmul.f32 %v5338, %v4716
        %v5340 = vmul.f32 %v5339, %v5338
        %v5341 = vmul.f32 0.5, %v5340
        %v5342 = vsub.f32 1.5, %v5341
        %v5343 = vmul.f32 %v5338, %v5342
        %vm5344 = vweird.f32 %v4716
        %vm5345 = vweird.f32 %v5338
        %vm5346 = vmor %vm5344, %vm5345
        %v5347 = vsel %vm5346, %v5338, %v5343
        %v5348 = vrsqrt.pop %v4717
        %v5349 = vmul.f32 %v5348, %v4717
        %v5350 = vmul.f32 %v5349, %v5348
        %v5351 = vmul.f32 0.5, %v5350
        %v5352 = vsub.f32 1.5, %v5351
        %v5353 = vmul.f32 %v5348, %v5352
        %vm5354 = vweird.f32 %v4717
        %vm5355 = vweird.f32 %v5348
        %vm5356 = vmor %vm5354, %vm5355
        %v5357 = vsel %vm5356, %v5348, %v5353
        %v5358 = vmul.f32 %v2534, %v4727
        %v5359 = vmul.f32 %v2536, %v4737
        %v5360 = vmul.f32 %v2539, %v4747
        %v5361 = vmul.f32 %v2541, %v4757
        %v5362 = vmul.f32 %v2544, %v4767
        %v5363 = vmul.f32 %v2546, %v4777
        %v5364 = vmul.f32 %v2549, %v4787
        %v5365 = vmul.f32 %v2551, %v4797
        %v5366 = vmul.f32 %v2554, %v4807
        %v5367 = vmul.f32 %v2556, %v4817
        %v5368 = vmul.f32 %v2559, %v4827
        %v5369 = vmul.f32 %v2561, %v4837
        %v5370 = vmul.f32 %v2564, %v4847
        %v5371 = vmul.f32 %v2566, %v4857
        %v5372 = vmul.f32 %v2569, %v4867
        %v5373 = vmul.f32 %v2571, %v4877
        %v5374 = vmul.f32 %v2867, %v4887
        %v5375 = vmul.f32 %v2869, %v4897
        %v5376 = vmul.f32 %v2871, %v4907
        %v5377 = vmul.f32 %v2873, %v4917
        %v5378 = vmul.f32 %v2875, %v4927
        %v5379 = vmul.f32 %v2877, %v4937
        %v5380 = vmul.f32 %v2879, %v4947
        %v5381 = vmul.f32 %v2881, %v4957
        %v5382 = vmul.f32 %v2883, %v4967
        %v5383 = vmul.f32 %v2885, %v4977
        %v5384 = vmul.f32 %v2887, %v4987
        %v5385 = vmul.f32 %v2889, %v4997
        %v5386 = vmul.f32 %v2891, %v5007
        %v5387 = vmul.f32 %v2893, %v5017
        %v5388 = vmul.f32 %v2895, %v5027
        %v5389 = vmul.f32 %v2897, %v5037
        %v5390 = vmul.f32 %v2915, %v5047
        %v5391 = vmul.f32 %v2917, %v5057
        %v5392 = vmul.f32 %v2919, %v5067
        %v5393 = vmul.f32 %v2921, %v5077
        %v5394 = vmul.f32 %v2923, %v5087
        %v5395 = vmul.f32 %v2925, %v5097
        %v5396 = vmul.f32 %v2927, %v5107
        %v5397 = vmul.f32 %v2929, %v5117
        %v5398 = vmul.f32 %v2931, %v5127
        %v5399 = vmul.f32 %v2933, %v5137
        %v5400 = vmul.f32 %v2935, %v5147
        %v5401 = vmul.f32 %v2937, %v5157
        %v5402 = vmul.f32 %v2939, %v5167
        %v5403 = vmul.f32 %v2941, %v5177
        %v5404 = vmul.f32 %v2943, %v5187
        %v5405 = vmul.f32 %v2945, %v5197
        %v5406 = vmul.f32 %v2963, %v5207
        %v5407 = vmul.f32 %v2965, %v5217
        %v5408 = vmul.f32 %v2967, %v5227
        %v5409 = vmul.f32 %v2969, %v5237
        %v5410 = vmul.f32 %v2971, %v5247
        %v5411 = vmul.f32 %v2973, %v5257
        %v5412 = vmul.f32 %v2975, %v5267
        %v5413 = vmul.f32 %v2977, %v5277
        %v5414 = vmul.f32 %v2979, %v5287
        %v5415 = vmul.f32 %v2981, %v5297
        %v5416 = vmul.f32 %v2983, %v5307
        %v5417 = vmul.f32 %v2985, %v5317
        %v5418 = vmul.f32 %v2987, %v5327
        %v5419 = vmul.f32 %v2989, %v5337
        %v5420 = vmul.f32 %v2991, %v5347
        %v5421 = vmul.f32 %v2993, %v5357
        %v5422 = vld [vmem:[%s15] sm:$0x1]
        %v5424 = vperm.slane %v5422, 0
        %v5426 = vmul.f32 %v5358, %v5424
        %v5427 = vmul.f32 %v5359, %v5424
        %v5428 = vmul.f32 %v5360, %v5424
        %v5429 = vmul.f32 %v5361, %v5424
        %v5430 = vmul.f32 %v5362, %v5424
        %v5431 = vmul.f32 %v5363, %v5424
        %v5432 = vmul.f32 %v5364, %v5424
        %v5433 = vmul.f32 %v5365, %v5424
        %v5434 = vmul.f32 %v5366, %v5424
        %v5435 = vmul.f32 %v5367, %v5424
        %v5436 = vmul.f32 %v5368, %v5424
        %v5437 = vmul.f32 %v5369, %v5424
        %v5438 = vmul.f32 %v5370, %v5424
        %v5439 = vmul.f32 %v5371, %v5424
        %v5440 = vmul.f32 %v5372, %v5424
        %v5441 = vmul.f32 %v5373, %v5424
        %v5442 = vmul.f32 %v5374, %v5424
        %v5443 = vmul.f32 %v5375, %v5424
        %v5444 = vmul.f32 %v5376, %v5424
        %v5445 = vmul.f32 %v5377, %v5424
        %v5446 = vmul.f32 %v5378, %v5424
        %v5447 = vmul.f32 %v5379, %v5424
        %v5448 = vmul.f32 %v5380, %v5424
        %v5449 = vmul.f32 %v5381, %v5424
        %v5450 = vmul.f32 %v5382, %v5424
        %v5451 = vmul.f32 %v5383, %v5424
        %v5452 = vmul.f32 %v5384, %v5424
        %v5453 = vmul.f32 %v5385, %v5424
        %v5454 = vmul.f32 %v5386, %v5424
        %v5455 = vmul.f32 %v5387, %v5424
        %v5456 = vmul.f32 %v5388, %v5424
        %v5457 = vmul.f32 %v5389, %v5424
        %v5458 = vmul.f32 %v5390, %v5424
        %v5459 = vmul.f32 %v5391, %v5424
        %v5460 = vmul.f32 %v5392, %v5424
        %v5461 = vmul.f32 %v5393, %v5424
        %v5462 = vmul.f32 %v5394, %v5424
        %v5463 = vmul.f32 %v5395, %v5424
        %v5464 = vmul.f32 %v5396, %v5424
        %v5465 = vmul.f32 %v5397, %v5424
        %v5466 = vmul.f32 %v5398, %v5424
        %v5467 = vmul.f32 %v5399, %v5424
        %v5468 = vmul.f32 %v5400, %v5424
        %v5469 = vmul.f32 %v5401, %v5424
        %v5470 = vmul.f32 %v5402, %v5424
        %v5471 = vmul.f32 %v5403, %v5424
        %v5472 = vmul.f32 %v5404, %v5424
        %v5473 = vmul.f32 %v5405, %v5424
        %v5474 = vmul.f32 %v5406, %v5424
        %v5475 = vmul.f32 %v5407, %v5424
        %v5476 = vmul.f32 %v5408, %v5424
        %v5477 = vmul.f32 %v5409, %v5424
        %v5478 = vmul.f32 %v5410, %v5424
        %v5479 = vmul.f32 %v5411, %v5424
        %v5480 = vmul.f32 %v5412, %v5424
        %v5481 = vmul.f32 %v5413, %v5424
        %v5482 = vmul.f32 %v5414, %v5424
        %v5483 = vmul.f32 %v5415, %v5424
        %v5484 = vmul.f32 %v5416, %v5424
        %v5485 = vmul.f32 %v5417, %v5424
        %v5486 = vmul.f32 %v5418, %v5424
        %v5487 = vmul.f32 %v5419, %v5424
        %v5488 = vmul.f32 %v5420, %v5424
        %v5489 = vmul.f32 %v5421, %v5424
        %v5490 = vld [vmem:[%s2] sm:$0xff]
        %v5491 = vld [vmem:[%s2 + $0x8] sm:$0xff]
        %v5492 = vld [vmem:[%s2 + $0x10] sm:$0xff]
        %v5493 = vld [vmem:[%s2 + $0x18] sm:$0xff]
        %v5494 = vld [vmem:[%s2 + $0x20] sm:$0xff]
        %v5495 = vld [vmem:[%s2 + $0x28] sm:$0xff]
        %v5496 = vld [vmem:[%s2 + $0x30] sm:$0xff]
        %v5497 = vld [vmem:[%s2 + $0x38] sm:$0xff]
        %v5498 = vld [vmem:[%s2 + $0x40] sm:$0xff]
        %v5499 = vld [vmem:[%s2 + $0x48] sm:$0xff]
        %v5500 = vld [vmem:[%s2 + $0x50] sm:$0xff]
        %v5501 = vld [vmem:[%s2 + $0x58] sm:$0xff]
        %v5502 = vld [vmem:[%s2 + $0x60] sm:$0xff]
        %v5503 = vld [vmem:[%s2 + $0x68] sm:$0xff]
        %v5504 = vld [vmem:[%s2 + $0x70] sm:$0xff]
        %v5505 = vld [vmem:[%s2 + $0x78] sm:$0xff]
        %v5506 = vld [vmem:[%s3] sm:$0xff]
        %v5507 = vld [vmem:[%s3 + $0x8] sm:$0xff]
        %v5508 = vld [vmem:[%s3 + $0x10] sm:$0xff]
        %v5509 = vld [vmem:[%s3 + $0x18] sm:$0xff]
        %v5510 = vld [vmem:[%s3 + $0x20] sm:$0xff]
        %v5511 = vld [vmem:[%s3 + $0x28] sm:$0xff]
        %v5512 = vld [vmem:[%s3 + $0x30] sm:$0xff]
        %v5513 = vld [vmem:[%s3 + $0x38] sm:$0xff]
        %v5514 = vld [vmem:[%s3 + $0x40] sm:$0xff]
        %v5515 = vld [vmem:[%s3 + $0x48] sm:$0xff]
        %v5516 = vld [vmem:[%s3 + $0x50] sm:$0xff]
        %v5517 = vld [vmem:[%s3 + $0x58] sm:$0xff]
        %v5518 = vld [vmem:[%s3 + $0x60] sm:$0xff]
        %v5519 = vld [vmem:[%s3 + $0x68] sm:$0xff]
        %v5520 = vld [vmem:[%s3 + $0x70] sm:$0xff]
        %v5521 = vld [vmem:[%s3 + $0x78] sm:$0xff]
        %v5522 = vsub.f32 0.0, %v4270
        %v5523 = vsub.f32 0.0, %v4271
        %v5524 = vsub.f32 0.0, %v4272
        %v5525 = vsub.f32 0.0, %v4273
        %v5526 = vsub.f32 0.0, %v4274
        %v5527 = vsub.f32 0.0, %v4275
        %v5528 = vsub.f32 0.0, %v4276
        %v5529 = vsub.f32 0.0, %v4277
        %v5530 = vsub.f32 0.0, %v4278
        %v5531 = vsub.f32 0.0, %v4279
        %v5532 = vsub.f32 0.0, %v4280
        %v5533 = vsub.f32 0.0, %v4281
        %v5534 = vsub.f32 0.0, %v4282
        %v5535 = vsub.f32 0.0, %v4283
        %v5536 = vsub.f32 0.0, %v4284
        %v5537 = vsub.f32 0.0, %v4285
        %v5538 = vsub.f32 0.0, %v4286
        %v5539 = vsub.f32 0.0, %v4287
        %v5540 = vsub.f32 0.0, %v4288
        %v5541 = vsub.f32 0.0, %v4289
        %v5542 = vsub.f32 0.0, %v4290
        %v5543 = vsub.f32 0.0, %v4291
        %v5544 = vsub.f32 0.0, %v4292
        %v5545 = vsub.f32 0.0, %v4293
        %v5546 = vsub.f32 0.0, %v4294
        %v5547 = vsub.f32 0.0, %v4295
        %v5548 = vsub.f32 0.0, %v4296
        %v5549 = vsub.f32 0.0, %v4297
        %v5550 = vsub.f32 0.0, %v4298
        %v5551 = vsub.f32 0.0, %v4299
        %v5552 = vsub.f32 0.0, %v4300
        %v5553 = vsub.f32 0.0, %v4301
        %v5554 = vsub.f32 0.0, %v4302
        %v5555 = vsub.f32 0.0, %v4303
        %v5556 = vsub.f32 0.0, %v4304
        %v5557 = vsub.f32 0.0, %v4305
        %v5558 = vsub.f32 0.0, %v4306
        %v5559 = vsub.f32 0.0, %v4307
        %v5560 = vsub.f32 0.0, %v4308
        %v5561 = vsub.f32 0.0, %v4309
        %v5562 = vsub.f32 0.0, %v4310
        %v5563 = vsub.f32 0.0, %v4311
        %v5564 = vsub.f32 0.0, %v4312
        %v5565 = vsub.f32 0.0, %v4313
        %v5566 = vsub.f32 0.0, %v4314
        %v5567 = vsub.f32 0.0, %v4315
        %v5568 = vsub.f32 0.0, %v4316
        %v5569 = vsub.f32 0.0, %v4317
        %v5570 = vsub.f32 0.0, %v4318
        %v5571 = vsub.f32 0.0, %v4319
        %v5572 = vsub.f32 0.0, %v4320
        %v5573 = vsub.f32 0.0, %v4321
        %v5574 = vsub.f32 0.0, %v4322
        %v5575 = vsub.f32 0.0, %v4323
        %v5576 = vsub.f32 0.0, %v4324
        %v5577 = vsub.f32 0.0, %v4325
        %v5578 = vsub.f32 0.0, %v4326
        %v5579 = vsub.f32 0.0, %v4327
        %v5580 = vsub.f32 0.0, %v4328
        %v5581 = vsub.f32 0.0, %v4329
        %v5582 = vsub.f32 0.0, %v4330
        %v5583 = vsub.f32 0.0, %v4331
        %v5584 = vsub.f32 0.0, %v4332
        %v5585 = vsub.f32 0.0, %v4333
        %5650 = vrot.lane.b32.xlu0 %v5522, 112
        %v5651 = vpop.permute.xlu0 %5650
        %5652 = vrot.lane.b32.xlu0 %v5523, 112
        %v5653 = vpop.permute.xlu0 %5652
        %5654 = vrot.lane.b32.xlu0 %v5524, 112
        %v5655 = vpop.permute.xlu0 %5654
        %5656 = vrot.lane.b32.xlu0 %v5525, 112
        %v5657 = vpop.permute.xlu0 %5656
        %5658 = vrot.lane.b32.xlu0 %v5526, 112
        %v5659 = vpop.permute.xlu0 %5658
        %5660 = vrot.lane.b32.xlu0 %v5527, 112
        %v5661 = vpop.permute.xlu0 %5660
        %5662 = vrot.lane.b32.xlu0 %v5528, 112
        %v5663 = vpop.permute.xlu0 %5662
        %5664 = vrot.lane.b32.xlu0 %v5529, 112
        %v5665 = vpop.permute.xlu0 %5664
        %5666 = vrot.lane.b32.xlu0 %v5530, 112
        %v5667 = vpop.permute.xlu0 %5666
        %5668 = vrot.lane.b32.xlu0 %v5531, 112
        %v5669 = vpop.permute.xlu0 %5668
        %5670 = vrot.lane.b32.xlu0 %v5532, 112
        %v5671 = vpop.permute.xlu0 %5670
        %5672 = vrot.lane.b32.xlu0 %v5533, 112
        %v5673 = vpop.permute.xlu0 %5672
        %5674 = vrot.lane.b32.xlu0 %v5534, 112
        %v5675 = vpop.permute.xlu0 %5674
        %5676 = vrot.lane.b32.xlu0 %v5535, 112
        %v5677 = vpop.permute.xlu0 %5676
        %5678 = vrot.lane.b32.xlu0 %v5536, 112
        %v5679 = vpop.permute.xlu0 %5678
        %5680 = vrot.lane.b32.xlu0 %v5537, 112
        %v5681 = vpop.permute.xlu0 %5680
        %5682 = vrot.lane.b32.xlu0 %v5538, 112
        %v5683 = vpop.permute.xlu0 %5682
        %5684 = vrot.lane.b32.xlu0 %v5539, 112
        %v5685 = vpop.permute.xlu0 %5684
        %5686 = vrot.lane.b32.xlu0 %v5540, 112
        %v5687 = vpop.permute.xlu0 %5686
        %5688 = vrot.lane.b32.xlu0 %v5541, 112
        %v5689 = vpop.permute.xlu0 %5688
        %5690 = vrot.lane.b32.xlu0 %v5542, 112
        %v5691 = vpop.permute.xlu0 %5690
        %5692 = vrot.lane.b32.xlu0 %v5543, 112
        %v5693 = vpop.permute.xlu0 %5692
        %5694 = vrot.lane.b32.xlu0 %v5544, 112
        %v5695 = vpop.permute.xlu0 %5694
        %5696 = vrot.lane.b32.xlu0 %v5545, 112
        %v5697 = vpop.permute.xlu0 %5696
        %5698 = vrot.lane.b32.xlu0 %v5546, 112
        %v5699 = vpop.permute.xlu0 %5698
        %5700 = vrot.lane.b32.xlu0 %v5547, 112
        %v5701 = vpop.permute.xlu0 %5700
        %5702 = vrot.lane.b32.xlu0 %v5548, 112
        %v5703 = vpop.permute.xlu0 %5702
        %5704 = vrot.lane.b32.xlu0 %v5549, 112
        %v5705 = vpop.permute.xlu0 %5704
        %5706 = vrot.lane.b32.xlu0 %v5550, 112
        %v5707 = vpop.permute.xlu0 %5706
        %5708 = vrot.lane.b32.xlu0 %v5551, 112
        %v5709 = vpop.permute.xlu0 %5708
        %5710 = vrot.lane.b32.xlu0 %v5552, 112
        %v5711 = vpop.permute.xlu0 %5710
        %5712 = vrot.lane.b32.xlu0 %v5553, 112
        %v5713 = vpop.permute.xlu0 %5712
        %5714 = vrot.lane.b32.xlu0 %v5554, 112
        %v5715 = vpop.permute.xlu0 %5714
        %5716 = vrot.lane.b32.xlu0 %v5555, 112
        %v5717 = vpop.permute.xlu0 %5716
        %5718 = vrot.lane.b32.xlu0 %v5556, 112
        %v5719 = vpop.permute.xlu0 %5718
        %5720 = vrot.lane.b32.xlu0 %v5557, 112
        %v5721 = vpop.permute.xlu0 %5720
        %5722 = vrot.lane.b32.xlu0 %v5558, 112
        %v5723 = vpop.permute.xlu0 %5722
        %5724 = vrot.lane.b32.xlu0 %v5559, 112
        %v5725 = vpop.permute.xlu0 %5724
        %5726 = vrot.lane.b32.xlu0 %v5560, 112
        %v5727 = vpop.permute.xlu0 %5726
        %5728 = vrot.lane.b32.xlu0 %v5561, 112
        %v5729 = vpop.permute.xlu0 %5728
        %5730 = vrot.lane.b32.xlu0 %v5562, 112
        %v5731 = vpop.permute.xlu0 %5730
        %5732 = vrot.lane.b32.xlu0 %v5563, 112
        %v5733 = vpop.permute.xlu0 %5732
        %5734 = vrot.lane.b32.xlu0 %v5564, 112
        %v5735 = vpop.permute.xlu0 %5734
        %5736 = vrot.lane.b32.xlu0 %v5565, 112
        %v5737 = vpop.permute.xlu0 %5736
        %5738 = vrot.lane.b32.xlu0 %v5566, 112
        %v5739 = vpop.permute.xlu0 %5738
        %5740 = vrot.lane.b32.xlu0 %v5567, 112
        %v5741 = vpop.permute.xlu0 %5740
        %5742 = vrot.lane.b32.xlu0 %v5568, 112
        %v5743 = vpop.permute.xlu0 %5742
        %5744 = vrot.lane.b32.xlu0 %v5569, 112
        %v5745 = vpop.permute.xlu0 %5744
        %5746 = vrot.lane.b32.xlu0 %v5570, 112
        %v5747 = vpop.permute.xlu0 %5746
        %5748 = vrot.lane.b32.xlu0 %v5571, 112
        %v5749 = vpop.permute.xlu0 %5748
        %5750 = vrot.lane.b32.xlu0 %v5572, 112
        %v5751 = vpop.permute.xlu0 %5750
        %5752 = vrot.lane.b32.xlu0 %v5573, 112
        %v5753 = vpop.permute.xlu0 %5752
        %5754 = vrot.lane.b32.xlu0 %v5574, 112
        %v5755 = vpop.permute.xlu0 %5754
        %5756 = vrot.lane.b32.xlu0 %v5575, 112
        %v5757 = vpop.permute.xlu0 %5756
        %5758 = vrot.lane.b32.xlu0 %v5576, 112
        %v5759 = vpop.permute.xlu0 %5758
        %5760 = vrot.lane.b32.xlu0 %v5577, 112
        %v5761 = vpop.permute.xlu0 %5760
        %5762 = vrot.lane.b32.xlu0 %v5578, 112
        %v5763 = vpop.permute.xlu0 %5762
        %5764 = vrot.lane.b32.xlu0 %v5579, 112
        %v5765 = vpop.permute.xlu0 %5764
        %5766 = vrot.lane.b32.xlu0 %v5580, 112
        %v5767 = vpop.permute.xlu0 %5766
        %5768 = vrot.lane.b32.xlu0 %v5581, 112
        %v5769 = vpop.permute.xlu0 %5768
        %5770 = vrot.lane.b32.xlu0 %v5582, 112
        %v5771 = vpop.permute.xlu0 %5770
        %5772 = vrot.lane.b32.xlu0 %v5583, 112
        %v5773 = vpop.permute.xlu0 %5772
        %5774 = vrot.lane.b32.xlu0 %v5584, 112
        %v5775 = vpop.permute.xlu0 %5774
        %5776 = vrot.lane.b32.xlu0 %v5585, 112
        %v5777 = vpop.permute.xlu0 %5776
        %5906 = vrot.lane.b32.xlu0 %v4270, 16
        %v5907 = vpop.permute.xlu0 %5906
        %5908 = vrot.lane.b32.xlu0 %v4271, 16
        %v5909 = vpop.permute.xlu0 %5908
        %5910 = vrot.lane.b32.xlu0 %v4272, 16
        %v5911 = vpop.permute.xlu0 %5910
        %5912 = vrot.lane.b32.xlu0 %v4273, 16
        %v5913 = vpop.permute.xlu0 %5912
        %5914 = vrot.lane.b32.xlu0 %v4274, 16
        %v5915 = vpop.permute.xlu0 %5914
        %5916 = vrot.lane.b32.xlu0 %v4275, 16
        %v5917 = vpop.permute.xlu0 %5916
        %5918 = vrot.lane.b32.xlu0 %v4276, 16
        %v5919 = vpop.permute.xlu0 %5918
        %5920 = vrot.lane.b32.xlu0 %v4277, 16
        %v5921 = vpop.permute.xlu0 %5920
        %5922 = vrot.lane.b32.xlu0 %v4278, 16
        %v5923 = vpop.permute.xlu0 %5922
        %5924 = vrot.lane.b32.xlu0 %v4279, 16
        %v5925 = vpop.permute.xlu0 %5924
        %5926 = vrot.lane.b32.xlu0 %v4280, 16
        %v5927 = vpop.permute.xlu0 %5926
        %5928 = vrot.lane.b32.xlu0 %v4281, 16
        %v5929 = vpop.permute.xlu0 %5928
        %5930 = vrot.lane.b32.xlu0 %v4282, 16
        %v5931 = vpop.permute.xlu0 %5930
        %5932 = vrot.lane.b32.xlu0 %v4283, 16
        %v5933 = vpop.permute.xlu0 %5932
        %5934 = vrot.lane.b32.xlu0 %v4284, 16
        %v5935 = vpop.permute.xlu0 %5934
        %5936 = vrot.lane.b32.xlu0 %v4285, 16
        %v5937 = vpop.permute.xlu0 %5936
        %5938 = vrot.lane.b32.xlu0 %v4286, 16
        %v5939 = vpop.permute.xlu0 %5938
        %5940 = vrot.lane.b32.xlu0 %v4287, 16
        %v5941 = vpop.permute.xlu0 %5940
        %5942 = vrot.lane.b32.xlu0 %v4288, 16
        %v5943 = vpop.permute.xlu0 %5942
        %5944 = vrot.lane.b32.xlu0 %v4289, 16
        %v5945 = vpop.permute.xlu0 %5944
        %5946 = vrot.lane.b32.xlu0 %v4290, 16
        %v5947 = vpop.permute.xlu0 %5946
        %5948 = vrot.lane.b32.xlu0 %v4291, 16
        %v5949 = vpop.permute.xlu0 %5948
        %5950 = vrot.lane.b32.xlu0 %v4292, 16
        %v5951 = vpop.permute.xlu0 %5950
        %5952 = vrot.lane.b32.xlu0 %v4293, 16
        %v5953 = vpop.permute.xlu0 %5952
        %5954 = vrot.lane.b32.xlu0 %v4294, 16
        %v5955 = vpop.permute.xlu0 %5954
        %5956 = vrot.lane.b32.xlu0 %v4295, 16
        %v5957 = vpop.permute.xlu0 %5956
        %5958 = vrot.lane.b32.xlu0 %v4296, 16
        %v5959 = vpop.permute.xlu0 %5958
        %5960 = vrot.lane.b32.xlu0 %v4297, 16
        %v5961 = vpop.permute.xlu0 %5960
        %5962 = vrot.lane.b32.xlu0 %v4298, 16
        %v5963 = vpop.permute.xlu0 %5962
        %5964 = vrot.lane.b32.xlu0 %v4299, 16
        %v5965 = vpop.permute.xlu0 %5964
        %5966 = vrot.lane.b32.xlu0 %v4300, 16
        %v5967 = vpop.permute.xlu0 %5966
        %5968 = vrot.lane.b32.xlu0 %v4301, 16
        %v5969 = vpop.permute.xlu0 %5968
        %5970 = vrot.lane.b32.xlu0 %v4302, 16
        %v5971 = vpop.permute.xlu0 %5970
        %5972 = vrot.lane.b32.xlu0 %v4303, 16
        %v5973 = vpop.permute.xlu0 %5972
        %5974 = vrot.lane.b32.xlu0 %v4304, 16
        %v5975 = vpop.permute.xlu0 %5974
        %5976 = vrot.lane.b32.xlu0 %v4305, 16
        %v5977 = vpop.permute.xlu0 %5976
        %5978 = vrot.lane.b32.xlu0 %v4306, 16
        %v5979 = vpop.permute.xlu0 %5978
        %5980 = vrot.lane.b32.xlu0 %v4307, 16
        %v5981 = vpop.permute.xlu0 %5980
        %5982 = vrot.lane.b32.xlu0 %v4308, 16
        %v5983 = vpop.permute.xlu0 %5982
        %5984 = vrot.lane.b32.xlu0 %v4309, 16
        %v5985 = vpop.permute.xlu0 %5984
        %5986 = vrot.lane.b32.xlu0 %v4310, 16
        %v5987 = vpop.permute.xlu0 %5986
        %5988 = vrot.lane.b32.xlu0 %v4311, 16
        %v5989 = vpop.permute.xlu0 %5988
        %5990 = vrot.lane.b32.xlu0 %v4312, 16
        %v5991 = vpop.permute.xlu0 %5990
        %5992 = vrot.lane.b32.xlu0 %v4313, 16
        %v5993 = vpop.permute.xlu0 %5992
        %5994 = vrot.lane.b32.xlu0 %v4314, 16
        %v5995 = vpop.permute.xlu0 %5994
        %5996 = vrot.lane.b32.xlu0 %v4315, 16
        %v5997 = vpop.permute.xlu0 %5996
        %5998 = vrot.lane.b32.xlu0 %v4316, 16
        %v5999 = vpop.permute.xlu0 %5998
        %6000 = vrot.lane.b32.xlu0 %v4317, 16
        %v6001 = vpop.permute.xlu0 %6000
        %6002 = vrot.lane.b32.xlu0 %v4318, 16
        %v6003 = vpop.permute.xlu0 %6002
        %6004 = vrot.lane.b32.xlu0 %v4319, 16
        %v6005 = vpop.permute.xlu0 %6004
        %6006 = vrot.lane.b32.xlu0 %v4320, 16
        %v6007 = vpop.permute.xlu0 %6006
        %6008 = vrot.lane.b32.xlu0 %v4321, 16
        %v6009 = vpop.permute.xlu0 %6008
        %6010 = vrot.lane.b32.xlu0 %v4322, 16
        %v6011 = vpop.permute.xlu0 %6010
        %6012 = vrot.lane.b32.xlu0 %v4323, 16
        %v6013 = vpop.permute.xlu0 %6012
        %6014 = vrot.lane.b32.xlu0 %v4324, 16
        %v6015 = vpop.permute.xlu0 %6014
        %6016 = vrot.lane.b32.xlu0 %v4325, 16
        %v6017 = vpop.permute.xlu0 %6016
        %6018 = vrot.lane.b32.xlu0 %v4326, 16
        %v6019 = vpop.permute.xlu0 %6018
        %6020 = vrot.lane.b32.xlu0 %v4327, 16
        %v6021 = vpop.permute.xlu0 %6020
        %6022 = vrot.lane.b32.xlu0 %v4328, 16
        %v6023 = vpop.permute.xlu0 %6022
        %6024 = vrot.lane.b32.xlu0 %v4329, 16
        %v6025 = vpop.permute.xlu0 %6024
        %6026 = vrot.lane.b32.xlu0 %v4330, 16
        %v6027 = vpop.permute.xlu0 %6026
        %6028 = vrot.lane.b32.xlu0 %v4331, 16
        %v6029 = vpop.permute.xlu0 %6028
        %6030 = vrot.lane.b32.xlu0 %v4332, 16
        %v6031 = vpop.permute.xlu0 %6030
        %6032 = vrot.lane.b32.xlu0 %v4333, 16
        %v6033 = vpop.permute.xlu0 %6032
        %vm6098 = vcmask 130048
        %v6099 = vsel %vm6098, %v5651, %v5907
        %v6100 = vsel %vm6098, %v5653, %v5909
        %v6101 = vsel %vm6098, %v5655, %v5911
        %v6102 = vsel %vm6098, %v5657, %v5913
        %v6103 = vsel %vm6098, %v5659, %v5915
        %v6104 = vsel %vm6098, %v5661, %v5917
        %v6105 = vsel %vm6098, %v5663, %v5919
        %v6106 = vsel %vm6098, %v5665, %v5921
        %v6107 = vsel %vm6098, %v5667, %v5923
        %v6108 = vsel %vm6098, %v5669, %v5925
        %v6109 = vsel %vm6098, %v5671, %v5927
        %v6110 = vsel %vm6098, %v5673, %v5929
        %v6111 = vsel %vm6098, %v5675, %v5931
        %v6112 = vsel %vm6098, %v5677, %v5933
        %v6113 = vsel %vm6098, %v5679, %v5935
        %v6114 = vsel %vm6098, %v5681, %v5937
        %v6115 = vsel %vm6098, %v5683, %v5939
        %v6116 = vsel %vm6098, %v5685, %v5941
        %v6117 = vsel %vm6098, %v5687, %v5943
        %v6118 = vsel %vm6098, %v5689, %v5945
        %v6119 = vsel %vm6098, %v5691, %v5947
        %v6120 = vsel %vm6098, %v5693, %v5949
        %v6121 = vsel %vm6098, %v5695, %v5951
        %v6122 = vsel %vm6098, %v5697, %v5953
        %v6123 = vsel %vm6098, %v5699, %v5955
        %v6124 = vsel %vm6098, %v5701, %v5957
        %v6125 = vsel %vm6098, %v5703, %v5959
        %v6126 = vsel %vm6098, %v5705, %v5961
        %v6127 = vsel %vm6098, %v5707, %v5963
        %v6128 = vsel %vm6098, %v5709, %v5965
        %v6129 = vsel %vm6098, %v5711, %v5967
        %v6130 = vsel %vm6098, %v5713, %v5969
        %v6131 = vsel %vm6098, %v5715, %v5971
        %v6132 = vsel %vm6098, %v5717, %v5973
        %v6133 = vsel %vm6098, %v5719, %v5975
        %v6134 = vsel %vm6098, %v5721, %v5977
        %v6135 = vsel %vm6098, %v5723, %v5979
        %v6136 = vsel %vm6098, %v5725, %v5981
        %v6137 = vsel %vm6098, %v5727, %v5983
        %v6138 = vsel %vm6098, %v5729, %v5985
        %v6139 = vsel %vm6098, %v5731, %v5987
        %v6140 = vsel %vm6098, %v5733, %v5989
        %v6141 = vsel %vm6098, %v5735, %v5991
        %v6142 = vsel %vm6098, %v5737, %v5993
        %v6143 = vsel %vm6098, %v5739, %v5995
        %v6144 = vsel %vm6098, %v5741, %v5997
        %v6145 = vsel %vm6098, %v5743, %v5999
        %v6146 = vsel %vm6098, %v5745, %v6001
        %v6147 = vsel %vm6098, %v5747, %v6003
        %v6148 = vsel %vm6098, %v5749, %v6005
        %v6149 = vsel %vm6098, %v5751, %v6007
        %v6150 = vsel %vm6098, %v5753, %v6009
        %v6151 = vsel %vm6098, %v5755, %v6011
        %v6152 = vsel %vm6098, %v5757, %v6013
        %v6153 = vsel %vm6098, %v5759, %v6015
        %v6154 = vsel %vm6098, %v5761, %v6017
        %v6155 = vsel %vm6098, %v5763, %v6019
        %v6156 = vsel %vm6098, %v5765, %v6021
        %v6157 = vsel %vm6098, %v5767, %v6023
        %v6158 = vsel %vm6098, %v5769, %v6025
        %v6159 = vsel %vm6098, %v5771, %v6027
        %v6160 = vsel %vm6098, %v5773, %v6029
        %v6161 = vsel %vm6098, %v5775, %v6031
        %v6162 = vsel %vm6098, %v5777, %v6033
        %v6163 = vmul.f32 %v4270, %v5490
        %v6164 = vmul.f32 %v4271, %v5491
        %v6165 = vmul.f32 %v4272, %v5492
        %v6166 = vmul.f32 %v4273, %v5493
        %v6167 = vmul.f32 %v4274, %v5494
        %v6168 = vmul.f32 %v4275, %v5495
        %v6169 = vmul.f32 %v4276, %v5496
        %v6170 = vmul.f32 %v4277, %v5497
        %v6171 = vmul.f32 %v4278, %v5498
        %v6172 = vmul.f32 %v4279, %v5499
        %v6173 = vmul.f32 %v4280, %v5500
        %v6174 = vmul.f32 %v4281, %v5501
        %v6175 = vmul.f32 %v4282, %v5502
        %v6176 = vmul.f32 %v4283, %v5503
        %v6177 = vmul.f32 %v4284, %v5504
        %v6178 = vmul.f32 %v4285, %v5505
        %v6179 = vmul.f32 %v4286, %v5490
        %v6180 = vmul.f32 %v4287, %v5491
        %v6181 = vmul.f32 %v4288, %v5492
        %v6182 = vmul.f32 %v4289, %v5493
        %v6183 = vmul.f32 %v4290, %v5494
        %v6184 = vmul.f32 %v4291, %v5495
        %v6185 = vmul.f32 %v4292, %v5496
        %v6186 = vmul.f32 %v4293, %v5497
        %v6187 = vmul.f32 %v4294, %v5498
        %v6188 = vmul.f32 %v4295, %v5499
        %v6189 = vmul.f32 %v4296, %v5500
        %v6190 = vmul.f32 %v4297, %v5501
        %v6191 = vmul.f32 %v4298, %v5502
        %v6192 = vmul.f32 %v4299, %v5503
        %v6193 = vmul.f32 %v4300, %v5504
        %v6194 = vmul.f32 %v4301, %v5505
        %v6195 = vmul.f32 %v4302, %v5490
        %v6196 = vmul.f32 %v4303, %v5491
        %v6197 = vmul.f32 %v4304, %v5492
        %v6198 = vmul.f32 %v4305, %v5493
        %v6199 = vmul.f32 %v4306, %v5494
        %v6200 = vmul.f32 %v4307, %v5495
        %v6201 = vmul.f32 %v4308, %v5496
        %v6202 = vmul.f32 %v4309, %v5497
        %v6203 = vmul.f32 %v4310, %v5498
        %v6204 = vmul.f32 %v4311, %v5499
        %v6205 = vmul.f32 %v4312, %v5500
        %v6206 = vmul.f32 %v4313, %v5501
        %v6207 = vmul.f32 %v4314, %v5502
        %v6208 = vmul.f32 %v4315, %v5503
        %v6209 = vmul.f32 %v4316, %v5504
        %v6210 = vmul.f32 %v4317, %v5505
        %v6211 = vmul.f32 %v4318, %v5490
        %v6212 = vmul.f32 %v4319, %v5491
        %v6213 = vmul.f32 %v4320, %v5492
        %v6214 = vmul.f32 %v4321, %v5493
        %v6215 = vmul.f32 %v4322, %v5494
        %v6216 = vmul.f32 %v4323, %v5495
        %v6217 = vmul.f32 %v4324, %v5496
        %v6218 = vmul.f32 %v4325, %v5497
        %v6219 = vmul.f32 %v4326, %v5498
        %v6220 = vmul.f32 %v4327, %v5499
        %v6221 = vmul.f32 %v4328, %v5500
        %v6222 = vmul.f32 %v4329, %v5501
        %v6223 = vmul.f32 %v4330, %v5502
        %v6224 = vmul.f32 %v4331, %v5503
        %v6225 = vmul.f32 %v4332, %v5504
        %v6226 = vmul.f32 %v4333, %v5505
        %v6227 = vmul.f32 %v6099, %v5506
        %v6228 = vmul.f32 %v6100, %v5507
        %v6229 = vmul.f32 %v6101, %v5508
        %v6230 = vmul.f32 %v6102, %v5509
        %v6231 = vmul.f32 %v6103, %v5510
        %v6232 = vmul.f32 %v6104, %v5511
        %v6233 = vmul.f32 %v6105, %v5512
        %v6234 = vmul.f32 %v6106, %v5513
        %v6235 = vmul.f32 %v6107, %v5514
        %v6236 = vmul.f32 %v6108, %v5515
        %v6237 = vmul.f32 %v6109, %v5516
        %v6238 = vmul.f32 %v6110, %v5517
        %v6239 = vmul.f32 %v6111, %v5518
        %v6240 = vmul.f32 %v6112, %v5519
        %v6241 = vmul.f32 %v6113, %v5520
        %v6242 = vmul.f32 %v6114, %v5521
        %v6243 = vmul.f32 %v6115, %v5506
        %v6244 = vmul.f32 %v6116, %v5507
        %v6245 = vmul.f32 %v6117, %v5508
        %v6246 = vmul.f32 %v6118, %v5509
        %v6247 = vmul.f32 %v6119, %v5510
        %v6248 = vmul.f32 %v6120, %v5511
        %v6249 = vmul.f32 %v6121, %v5512
        %v6250 = vmul.f32 %v6122, %v5513
        %v6251 = vmul.f32 %v6123, %v5514
        %v6252 = vmul.f32 %v6124, %v5515
        %v6253 = vmul.f32 %v6125, %v5516
        %v6254 = vmul.f32 %v6126, %v5517
        %v6255 = vmul.f32 %v6127, %v5518
        %v6256 = vmul.f32 %v6128, %v5519
        %v6257 = vmul.f32 %v6129, %v5520
        %v6258 = vmul.f32 %v6130, %v5521
        %v6259 = vmul.f32 %v6131, %v5506
        %v6260 = vmul.f32 %v6132, %v5507
        %v6261 = vmul.f32 %v6133, %v5508
        %v6262 = vmul.f32 %v6134, %v5509
        %v6263 = vmul.f32 %v6135, %v5510
        %v6264 = vmul.f32 %v6136, %v5511
        %v6265 = vmul.f32 %v6137, %v5512
        %v6266 = vmul.f32 %v6138, %v5513
        %v6267 = vmul.f32 %v6139, %v5514
        %v6268 = vmul.f32 %v6140, %v5515
        %v6269 = vmul.f32 %v6141, %v5516
        %v6270 = vmul.f32 %v6142, %v5517
        %v6271 = vmul.f32 %v6143, %v5518
        %v6272 = vmul.f32 %v6144, %v5519
        %v6273 = vmul.f32 %v6145, %v5520
        %v6274 = vmul.f32 %v6146, %v5521
        %v6275 = vmul.f32 %v6147, %v5506
        %v6276 = vmul.f32 %v6148, %v5507
        %v6277 = vmul.f32 %v6149, %v5508
        %v6278 = vmul.f32 %v6150, %v5509
        %v6279 = vmul.f32 %v6151, %v5510
        %v6280 = vmul.f32 %v6152, %v5511
        %v6281 = vmul.f32 %v6153, %v5512
        %v6282 = vmul.f32 %v6154, %v5513
        %v6283 = vmul.f32 %v6155, %v5514
        %v6284 = vmul.f32 %v6156, %v5515
        %v6285 = vmul.f32 %v6157, %v5516
        %v6286 = vmul.f32 %v6158, %v5517
        %v6287 = vmul.f32 %v6159, %v5518
        %v6288 = vmul.f32 %v6160, %v5519
        %v6289 = vmul.f32 %v6161, %v5520
        %v6290 = vmul.f32 %v6162, %v5521
        %v6291 = vadd.f32 %v6163, %v6227
        %v6292 = vadd.f32 %v6164, %v6228
        %v6293 = vadd.f32 %v6165, %v6229
        %v6294 = vadd.f32 %v6166, %v6230
        %v6295 = vadd.f32 %v6167, %v6231
        %v6296 = vadd.f32 %v6168, %v6232
        %v6297 = vadd.f32 %v6169, %v6233
        %v6298 = vadd.f32 %v6170, %v6234
        %v6299 = vadd.f32 %v6171, %v6235
        %v6300 = vadd.f32 %v6172, %v6236
        %v6301 = vadd.f32 %v6173, %v6237
        %v6302 = vadd.f32 %v6174, %v6238
        %v6303 = vadd.f32 %v6175, %v6239
        %v6304 = vadd.f32 %v6176, %v6240
        %v6305 = vadd.f32 %v6177, %v6241
        %v6306 = vadd.f32 %v6178, %v6242
        %v6307 = vadd.f32 %v6179, %v6243
        %v6308 = vadd.f32 %v6180, %v6244
        %v6309 = vadd.f32 %v6181, %v6245
        %v6310 = vadd.f32 %v6182, %v6246
        %v6311 = vadd.f32 %v6183, %v6247
        %v6312 = vadd.f32 %v6184, %v6248
        %v6313 = vadd.f32 %v6185, %v6249
        %v6314 = vadd.f32 %v6186, %v6250
        %v6315 = vadd.f32 %v6187, %v6251
        %v6316 = vadd.f32 %v6188, %v6252
        %v6317 = vadd.f32 %v6189, %v6253
        %v6318 = vadd.f32 %v6190, %v6254
        %v6319 = vadd.f32 %v6191, %v6255
        %v6320 = vadd.f32 %v6192, %v6256
        %v6321 = vadd.f32 %v6193, %v6257
        %v6322 = vadd.f32 %v6194, %v6258
        %v6323 = vadd.f32 %v6195, %v6259
        %v6324 = vadd.f32 %v6196, %v6260
        %v6325 = vadd.f32 %v6197, %v6261
        %v6326 = vadd.f32 %v6198, %v6262
        %v6327 = vadd.f32 %v6199, %v6263
        %v6328 = vadd.f32 %v6200, %v6264
        %v6329 = vadd.f32 %v6201, %v6265
        %v6330 = vadd.f32 %v6202, %v6266
        %v6331 = vadd.f32 %v6203, %v6267
        %v6332 = vadd.f32 %v6204, %v6268
        %v6333 = vadd.f32 %v6205, %v6269
        %v6334 = vadd.f32 %v6206, %v6270
        %v6335 = vadd.f32 %v6207, %v6271
        %v6336 = vadd.f32 %v6208, %v6272
        %v6337 = vadd.f32 %v6209, %v6273
        %v6338 = vadd.f32 %v6210, %v6274
        %v6339 = vadd.f32 %v6211, %v6275
        %v6340 = vadd.f32 %v6212, %v6276
        %v6341 = vadd.f32 %v6213, %v6277
        %v6342 = vadd.f32 %v6214, %v6278
        %v6343 = vadd.f32 %v6215, %v6279
        %v6344 = vadd.f32 %v6216, %v6280
        %v6345 = vadd.f32 %v6217, %v6281
        %v6346 = vadd.f32 %v6218, %v6282
        %v6347 = vadd.f32 %v6219, %v6283
        %v6348 = vadd.f32 %v6220, %v6284
        %v6349 = vadd.f32 %v6221, %v6285
        %v6350 = vadd.f32 %v6222, %v6286
        %v6351 = vadd.f32 %v6223, %v6287
        %v6352 = vadd.f32 %v6224, %v6288
        %v6353 = vadd.f32 %v6225, %v6289
        %v6354 = vadd.f32 %v6226, %v6290
        %v6355 = vsub.f32 0.0, %v5426
        %v6356 = vsub.f32 0.0, %v5427
        %v6357 = vsub.f32 0.0, %v5428
        %v6358 = vsub.f32 0.0, %v5429
        %v6359 = vsub.f32 0.0, %v5430
        %v6360 = vsub.f32 0.0, %v5431
        %v6361 = vsub.f32 0.0, %v5432
        %v6362 = vsub.f32 0.0, %v5433
        %v6363 = vsub.f32 0.0, %v5434
        %v6364 = vsub.f32 0.0, %v5435
        %v6365 = vsub.f32 0.0, %v5436
        %v6366 = vsub.f32 0.0, %v5437
        %v6367 = vsub.f32 0.0, %v5438
        %v6368 = vsub.f32 0.0, %v5439
        %v6369 = vsub.f32 0.0, %v5440
        %v6370 = vsub.f32 0.0, %v5441
        %v6371 = vsub.f32 0.0, %v5442
        %v6372 = vsub.f32 0.0, %v5443
        %v6373 = vsub.f32 0.0, %v5444
        %v6374 = vsub.f32 0.0, %v5445
        %v6375 = vsub.f32 0.0, %v5446
        %v6376 = vsub.f32 0.0, %v5447
        %v6377 = vsub.f32 0.0, %v5448
        %v6378 = vsub.f32 0.0, %v5449
        %v6379 = vsub.f32 0.0, %v5450
        %v6380 = vsub.f32 0.0, %v5451
        %v6381 = vsub.f32 0.0, %v5452
        %v6382 = vsub.f32 0.0, %v5453
        %v6383 = vsub.f32 0.0, %v5454
        %v6384 = vsub.f32 0.0, %v5455
        %v6385 = vsub.f32 0.0, %v5456
        %v6386 = vsub.f32 0.0, %v5457
        %v6387 = vsub.f32 0.0, %v5458
        %v6388 = vsub.f32 0.0, %v5459
        %v6389 = vsub.f32 0.0, %v5460
        %v6390 = vsub.f32 0.0, %v5461
        %v6391 = vsub.f32 0.0, %v5462
        %v6392 = vsub.f32 0.0, %v5463
        %v6393 = vsub.f32 0.0, %v5464
        %v6394 = vsub.f32 0.0, %v5465
        %v6395 = vsub.f32 0.0, %v5466
        %v6396 = vsub.f32 0.0, %v5467
        %v6397 = vsub.f32 0.0, %v5468
        %v6398 = vsub.f32 0.0, %v5469
        %v6399 = vsub.f32 0.0, %v5470
        %v6400 = vsub.f32 0.0, %v5471
        %v6401 = vsub.f32 0.0, %v5472
        %v6402 = vsub.f32 0.0, %v5473
        %v6403 = vsub.f32 0.0, %v5474
        %v6404 = vsub.f32 0.0, %v5475
        %v6405 = vsub.f32 0.0, %v5476
        %v6406 = vsub.f32 0.0, %v5477
        %v6407 = vsub.f32 0.0, %v5478
        %v6408 = vsub.f32 0.0, %v5479
        %v6409 = vsub.f32 0.0, %v5480
        %v6410 = vsub.f32 0.0, %v5481
        %v6411 = vsub.f32 0.0, %v5482
        %v6412 = vsub.f32 0.0, %v5483
        %v6413 = vsub.f32 0.0, %v5484
        %v6414 = vsub.f32 0.0, %v5485
        %v6415 = vsub.f32 0.0, %v5486
        %v6416 = vsub.f32 0.0, %v5487
        %v6417 = vsub.f32 0.0, %v5488
        %v6418 = vsub.f32 0.0, %v5489
        %6483 = vrot.lane.b32.xlu0 %v6355, 112
        %v6484 = vpop.permute.xlu0 %6483
        %6485 = vrot.lane.b32.xlu0 %v6356, 112
        %v6486 = vpop.permute.xlu0 %6485
        %6487 = vrot.lane.b32.xlu0 %v6357, 112
        %v6488 = vpop.permute.xlu0 %6487
        %6489 = vrot.lane.b32.xlu0 %v6358, 112
        %v6490 = vpop.permute.xlu0 %6489
        %6491 = vrot.lane.b32.xlu0 %v6359, 112
        %v6492 = vpop.permute.xlu0 %6491
        %6493 = vrot.lane.b32.xlu0 %v6360, 112
        %v6494 = vpop.permute.xlu0 %6493
        %6495 = vrot.lane.b32.xlu0 %v6361, 112
        %v6496 = vpop.permute.xlu0 %6495
        %6497 = vrot.lane.b32.xlu0 %v6362, 112
        %v6498 = vpop.permute.xlu0 %6497
        %6499 = vrot.lane.b32.xlu0 %v6363, 112
        %v6500 = vpop.permute.xlu0 %6499
        %6501 = vrot.lane.b32.xlu0 %v6364, 112
        %v6502 = vpop.permute.xlu0 %6501
        %6503 = vrot.lane.b32.xlu0 %v6365, 112
        %v6504 = vpop.permute.xlu0 %6503
        %6505 = vrot.lane.b32.xlu0 %v6366, 112
        %v6506 = vpop.permute.xlu0 %6505
        %6507 = vrot.lane.b32.xlu0 %v6367, 112
        %v6508 = vpop.permute.xlu0 %6507
        %6509 = vrot.lane.b32.xlu0 %v6368, 112
        %v6510 = vpop.permute.xlu0 %6509
        %6511 = vrot.lane.b32.xlu0 %v6369, 112
        %v6512 = vpop.permute.xlu0 %6511
        %6513 = vrot.lane.b32.xlu0 %v6370, 112
        %v6514 = vpop.permute.xlu0 %6513
        %6515 = vrot.lane.b32.xlu0 %v6371, 112
        %v6516 = vpop.permute.xlu0 %6515
        %6517 = vrot.lane.b32.xlu0 %v6372, 112
        %v6518 = vpop.permute.xlu0 %6517
        %6519 = vrot.lane.b32.xlu0 %v6373, 112
        %v6520 = vpop.permute.xlu0 %6519
        %6521 = vrot.lane.b32.xlu0 %v6374, 112
        %v6522 = vpop.permute.xlu0 %6521
        %6523 = vrot.lane.b32.xlu0 %v6375, 112
        %v6524 = vpop.permute.xlu0 %6523
        %6525 = vrot.lane.b32.xlu0 %v6376, 112
        %v6526 = vpop.permute.xlu0 %6525
        %6527 = vrot.lane.b32.xlu0 %v6377, 112
        %v6528 = vpop.permute.xlu0 %6527
        %6529 = vrot.lane.b32.xlu0 %v6378, 112
        %v6530 = vpop.permute.xlu0 %6529
        %6531 = vrot.lane.b32.xlu0 %v6379, 112
        %v6532 = vpop.permute.xlu0 %6531
        %6533 = vrot.lane.b32.xlu0 %v6380, 112
        %v6534 = vpop.permute.xlu0 %6533
        %6535 = vrot.lane.b32.xlu0 %v6381, 112
        %v6536 = vpop.permute.xlu0 %6535
        %6537 = vrot.lane.b32.xlu0 %v6382, 112
        %v6538 = vpop.permute.xlu0 %6537
        %6539 = vrot.lane.b32.xlu0 %v6383, 112
        %v6540 = vpop.permute.xlu0 %6539
        %6541 = vrot.lane.b32.xlu0 %v6384, 112
        %v6542 = vpop.permute.xlu0 %6541
        %6543 = vrot.lane.b32.xlu0 %v6385, 112
        %v6544 = vpop.permute.xlu0 %6543
        %6545 = vrot.lane.b32.xlu0 %v6386, 112
        %v6546 = vpop.permute.xlu0 %6545
        %6547 = vrot.lane.b32.xlu0 %v6387, 112
        %v6548 = vpop.permute.xlu0 %6547
        %6549 = vrot.lane.b32.xlu0 %v6388, 112
        %v6550 = vpop.permute.xlu0 %6549
        %6551 = vrot.lane.b32.xlu0 %v6389, 112
        %v6552 = vpop.permute.xlu0 %6551
        %6553 = vrot.lane.b32.xlu0 %v6390, 112
        %v6554 = vpop.permute.xlu0 %6553
        %6555 = vrot.lane.b32.xlu0 %v6391, 112
        %v6556 = vpop.permute.xlu0 %6555
        %6557 = vrot.lane.b32.xlu0 %v6392, 112
        %v6558 = vpop.permute.xlu0 %6557
        %6559 = vrot.lane.b32.xlu0 %v6393, 112
        %v6560 = vpop.permute.xlu0 %6559
        %6561 = vrot.lane.b32.xlu0 %v6394, 112
        %v6562 = vpop.permute.xlu0 %6561
        %6563 = vrot.lane.b32.xlu0 %v6395, 112
        %v6564 = vpop.permute.xlu0 %6563
        %6565 = vrot.lane.b32.xlu0 %v6396, 112
        %v6566 = vpop.permute.xlu0 %6565
        %6567 = vrot.lane.b32.xlu0 %v6397, 112
        %v6568 = vpop.permute.xlu0 %6567
        %6569 = vrot.lane.b32.xlu0 %v6398, 112
        %v6570 = vpop.permute.xlu0 %6569
        %6571 = vrot.lane.b32.xlu0 %v6399, 112
        %v6572 = vpop.permute.xlu0 %6571
        %6573 = vrot.lane.b32.xlu0 %v6400, 112
        %v6574 = vpop.permute.xlu0 %6573
        %6575 = vrot.lane.b32.xlu0 %v6401, 112
        %v6576 = vpop.permute.xlu0 %6575
        %6577 = vrot.lane.b32.xlu0 %v6402, 112
        %v6578 = vpop.permute.xlu0 %6577
        %6579 = vrot.lane.b32.xlu0 %v6403, 112
        %v6580 = vpop.permute.xlu0 %6579
        %6581 = vrot.lane.b32.xlu0 %v6404, 112
        %v6582 = vpop.permute.xlu0 %6581
        %6583 = vrot.lane.b32.xlu0 %v6405, 112
        %v6584 = vpop.permute.xlu0 %6583
        %6585 = vrot.lane.b32.xlu0 %v6406, 112
        %v6586 = vpop.permute.xlu0 %6585
        %6587 = vrot.lane.b32.xlu0 %v6407, 112
        %v6588 = vpop.permute.xlu0 %6587
        %6589 = vrot.lane.b32.xlu0 %v6408, 112
        %v6590 = vpop.permute.xlu0 %6589
        %6591 = vrot.lane.b32.xlu0 %v6409, 112
        %v6592 = vpop.permute.xlu0 %6591
        %6593 = vrot.lane.b32.xlu0 %v6410, 112
        %v6594 = vpop.permute.xlu0 %6593
        %6595 = vrot.lane.b32.xlu0 %v6411, 112
        %v6596 = vpop.permute.xlu0 %6595
        %6597 = vrot.lane.b32.xlu0 %v6412, 112
        %v6598 = vpop.permute.xlu0 %6597
        %6599 = vrot.lane.b32.xlu0 %v6413, 112
        %v6600 = vpop.permute.xlu0 %6599
        %6601 = vrot.lane.b32.xlu0 %v6414, 112
        %v6602 = vpop.permute.xlu0 %6601
        %6603 = vrot.lane.b32.xlu0 %v6415, 112
        %v6604 = vpop.permute.xlu0 %6603
        %6605 = vrot.lane.b32.xlu0 %v6416, 112
        %v6606 = vpop.permute.xlu0 %6605
        %6607 = vrot.lane.b32.xlu0 %v6417, 112
        %v6608 = vpop.permute.xlu0 %6607
        %6609 = vrot.lane.b32.xlu0 %v6418, 112
        %v6610 = vpop.permute.xlu0 %6609
        %6739 = vrot.lane.b32.xlu0 %v5426, 16
        %v6740 = vpop.permute.xlu0 %6739
        %6741 = vrot.lane.b32.xlu0 %v5427, 16
        %v6742 = vpop.permute.xlu0 %6741
        %6743 = vrot.lane.b32.xlu0 %v5428, 16
        %v6744 = vpop.permute.xlu0 %6743
        %6745 = vrot.lane.b32.xlu0 %v5429, 16
        %v6746 = vpop.permute.xlu0 %6745
        %6747 = vrot.lane.b32.xlu0 %v5430, 16
        %v6748 = vpop.permute.xlu0 %6747
        %6749 = vrot.lane.b32.xlu0 %v5431, 16
        %v6750 = vpop.permute.xlu0 %6749
        %6751 = vrot.lane.b32.xlu0 %v5432, 16
        %v6752 = vpop.permute.xlu0 %6751
        %6753 = vrot.lane.b32.xlu0 %v5433, 16
        %v6754 = vpop.permute.xlu0 %6753
        %6755 = vrot.lane.b32.xlu0 %v5434, 16
        %v6756 = vpop.permute.xlu0 %6755
        %6757 = vrot.lane.b32.xlu0 %v5435, 16
        %v6758 = vpop.permute.xlu0 %6757
        %6759 = vrot.lane.b32.xlu0 %v5436, 16
        %v6760 = vpop.permute.xlu0 %6759
        %6761 = vrot.lane.b32.xlu0 %v5437, 16
        %v6762 = vpop.permute.xlu0 %6761
        %6763 = vrot.lane.b32.xlu0 %v5438, 16
        %v6764 = vpop.permute.xlu0 %6763
        %6765 = vrot.lane.b32.xlu0 %v5439, 16
        %v6766 = vpop.permute.xlu0 %6765
        %6767 = vrot.lane.b32.xlu0 %v5440, 16
        %v6768 = vpop.permute.xlu0 %6767
        %6769 = vrot.lane.b32.xlu0 %v5441, 16
        %v6770 = vpop.permute.xlu0 %6769
        %6771 = vrot.lane.b32.xlu0 %v5442, 16
        %v6772 = vpop.permute.xlu0 %6771
        %6773 = vrot.lane.b32.xlu0 %v5443, 16
        %v6774 = vpop.permute.xlu0 %6773
        %6775 = vrot.lane.b32.xlu0 %v5444, 16
        %v6776 = vpop.permute.xlu0 %6775
        %6777 = vrot.lane.b32.xlu0 %v5445, 16
        %v6778 = vpop.permute.xlu0 %6777
        %6779 = vrot.lane.b32.xlu0 %v5446, 16
        %v6780 = vpop.permute.xlu0 %6779
        %6781 = vrot.lane.b32.xlu0 %v5447, 16
        %v6782 = vpop.permute.xlu0 %6781
        %6783 = vrot.lane.b32.xlu0 %v5448, 16
        %v6784 = vpop.permute.xlu0 %6783
        %6785 = vrot.lane.b32.xlu0 %v5449, 16
        %v6786 = vpop.permute.xlu0 %6785
        %6787 = vrot.lane.b32.xlu0 %v5450, 16
        %v6788 = vpop.permute.xlu0 %6787
        %6789 = vrot.lane.b32.xlu0 %v5451, 16
        %v6790 = vpop.permute.xlu0 %6789
        %6791 = vrot.lane.b32.xlu0 %v5452, 16
        %v6792 = vpop.permute.xlu0 %6791
        %6793 = vrot.lane.b32.xlu0 %v5453, 16
        %v6794 = vpop.permute.xlu0 %6793
        %6795 = vrot.lane.b32.xlu0 %v5454, 16
        %v6796 = vpop.permute.xlu0 %6795
        %6797 = vrot.lane.b32.xlu0 %v5455, 16
        %v6798 = vpop.permute.xlu0 %6797
        %6799 = vrot.lane.b32.xlu0 %v5456, 16
        %v6800 = vpop.permute.xlu0 %6799
        %6801 = vrot.lane.b32.xlu0 %v5457, 16
        %v6802 = vpop.permute.xlu0 %6801
        %6803 = vrot.lane.b32.xlu0 %v5458, 16
        %v6804 = vpop.permute.xlu0 %6803
        %6805 = vrot.lane.b32.xlu0 %v5459, 16
        %v6806 = vpop.permute.xlu0 %6805
        %6807 = vrot.lane.b32.xlu0 %v5460, 16
        %v6808 = vpop.permute.xlu0 %6807
        %6809 = vrot.lane.b32.xlu0 %v5461, 16
        %v6810 = vpop.permute.xlu0 %6809
        %6811 = vrot.lane.b32.xlu0 %v5462, 16
        %v6812 = vpop.permute.xlu0 %6811
        %6813 = vrot.lane.b32.xlu0 %v5463, 16
        %v6814 = vpop.permute.xlu0 %6813
        %6815 = vrot.lane.b32.xlu0 %v5464, 16
        %v6816 = vpop.permute.xlu0 %6815
        %6817 = vrot.lane.b32.xlu0 %v5465, 16
        %v6818 = vpop.permute.xlu0 %6817
        %6819 = vrot.lane.b32.xlu0 %v5466, 16
        %v6820 = vpop.permute.xlu0 %6819
        %6821 = vrot.lane.b32.xlu0 %v5467, 16
        %v6822 = vpop.permute.xlu0 %6821
        %6823 = vrot.lane.b32.xlu0 %v5468, 16
        %v6824 = vpop.permute.xlu0 %6823
        %6825 = vrot.lane.b32.xlu0 %v5469, 16
        %v6826 = vpop.permute.xlu0 %6825
        %6827 = vrot.lane.b32.xlu0 %v5470, 16
        %v6828 = vpop.permute.xlu0 %6827
        %6829 = vrot.lane.b32.xlu0 %v5471, 16
        %v6830 = vpop.permute.xlu0 %6829
        %6831 = vrot.lane.b32.xlu0 %v5472, 16
        %v6832 = vpop.permute.xlu0 %6831
        %6833 = vrot.lane.b32.xlu0 %v5473, 16
        %v6834 = vpop.permute.xlu0 %6833
        %6835 = vrot.lane.b32.xlu0 %v5474, 16
        %v6836 = vpop.permute.xlu0 %6835
        %6837 = vrot.lane.b32.xlu0 %v5475, 16
        %v6838 = vpop.permute.xlu0 %6837
        %6839 = vrot.lane.b32.xlu0 %v5476, 16
        %v6840 = vpop.permute.xlu0 %6839
        %6841 = vrot.lane.b32.xlu0 %v5477, 16
        %v6842 = vpop.permute.xlu0 %6841
        %6843 = vrot.lane.b32.xlu0 %v5478, 16
        %v6844 = vpop.permute.xlu0 %6843
        %6845 = vrot.lane.b32.xlu0 %v5479, 16
        %v6846 = vpop.permute.xlu0 %6845
        %6847 = vrot.lane.b32.xlu0 %v5480, 16
        %v6848 = vpop.permute.xlu0 %6847
        %6849 = vrot.lane.b32.xlu0 %v5481, 16
        %v6850 = vpop.permute.xlu0 %6849
        %6851 = vrot.lane.b32.xlu0 %v5482, 16
        %v6852 = vpop.permute.xlu0 %6851
        %6853 = vrot.lane.b32.xlu0 %v5483, 16
        %v6854 = vpop.permute.xlu0 %6853
        %6855 = vrot.lane.b32.xlu0 %v5484, 16
        %v6856 = vpop.permute.xlu0 %6855
        %6857 = vrot.lane.b32.xlu0 %v5485, 16
        %v6858 = vpop.permute.xlu0 %6857
        %6859 = vrot.lane.b32.xlu0 %v5486, 16
        %v6860 = vpop.permute.xlu0 %6859
        %6861 = vrot.lane.b32.xlu0 %v5487, 16
        %v6862 = vpop.permute.xlu0 %6861
        %6863 = vrot.lane.b32.xlu0 %v5488, 16
        %v6864 = vpop.permute.xlu0 %6863
        %6865 = vrot.lane.b32.xlu0 %v5489, 16
        %v6866 = vpop.permute.xlu0 %6865
        %v6931 = vsel %vm6098, %v6484, %v6740
        %v6932 = vsel %vm6098, %v6486, %v6742
        %v6933 = vsel %vm6098, %v6488, %v6744
        %v6934 = vsel %vm6098, %v6490, %v6746
        %v6935 = vsel %vm6098, %v6492, %v6748
        %v6936 = vsel %vm6098, %v6494, %v6750
        %v6937 = vsel %vm6098, %v6496, %v6752
        %v6938 = vsel %vm6098, %v6498, %v6754
        %v6939 = vsel %vm6098, %v6500, %v6756
        %v6940 = vsel %vm6098, %v6502, %v6758
        %v6941 = vsel %vm6098, %v6504, %v6760
        %v6942 = vsel %vm6098, %v6506, %v6762
        %v6943 = vsel %vm6098, %v6508, %v6764
        %v6944 = vsel %vm6098, %v6510, %v6766
        %v6945 = vsel %vm6098, %v6512, %v6768
        %v6946 = vsel %vm6098, %v6514, %v6770
        %v6947 = vsel %vm6098, %v6516, %v6772
        %v6948 = vsel %vm6098, %v6518, %v6774
        %v6949 = vsel %vm6098, %v6520, %v6776
        %v6950 = vsel %vm6098, %v6522, %v6778
        %v6951 = vsel %vm6098, %v6524, %v6780
        %v6952 = vsel %vm6098, %v6526, %v6782
        %v6953 = vsel %vm6098, %v6528, %v6784
        %v6954 = vsel %vm6098, %v6530, %v6786
        %v6955 = vsel %vm6098, %v6532, %v6788
        %v6956 = vsel %vm6098, %v6534, %v6790
        %v6957 = vsel %vm6098, %v6536, %v6792
        %v6958 = vsel %vm6098, %v6538, %v6794
        %v6959 = vsel %vm6098, %v6540, %v6796
        %v6960 = vsel %vm6098, %v6542, %v6798
        %v6961 = vsel %vm6098, %v6544, %v6800
        %v6962 = vsel %vm6098, %v6546, %v6802
        %v6963 = vsel %vm6098, %v6548, %v6804
        %v6964 = vsel %vm6098, %v6550, %v6806
        %v6965 = vsel %vm6098, %v6552, %v6808
        %v6966 = vsel %vm6098, %v6554, %v6810
        %v6967 = vsel %vm6098, %v6556, %v6812
        %v6968 = vsel %vm6098, %v6558, %v6814
        %v6969 = vsel %vm6098, %v6560, %v6816
        %v6970 = vsel %vm6098, %v6562, %v6818
        %v6971 = vsel %vm6098, %v6564, %v6820
        %v6972 = vsel %vm6098, %v6566, %v6822
        %v6973 = vsel %vm6098, %v6568, %v6824
        %v6974 = vsel %vm6098, %v6570, %v6826
        %v6975 = vsel %vm6098, %v6572, %v6828
        %v6976 = vsel %vm6098, %v6574, %v6830
        %v6977 = vsel %vm6098, %v6576, %v6832
        %v6978 = vsel %vm6098, %v6578, %v6834
        %v6979 = vsel %vm6098, %v6580, %v6836
        %v6980 = vsel %vm6098, %v6582, %v6838
        %v6981 = vsel %vm6098, %v6584, %v6840
        %v6982 = vsel %vm6098, %v6586, %v6842
        %v6983 = vsel %vm6098, %v6588, %v6844
        %v6984 = vsel %vm6098, %v6590, %v6846
        %v6985 = vsel %vm6098, %v6592, %v6848
        %v6986 = vsel %vm6098, %v6594, %v6850
        %v6987 = vsel %vm6098, %v6596, %v6852
        %v6988 = vsel %vm6098, %v6598, %v6854
        %v6989 = vsel %vm6098, %v6600, %v6856
        %v6990 = vsel %vm6098, %v6602, %v6858
        %v6991 = vsel %vm6098, %v6604, %v6860
        %v6992 = vsel %vm6098, %v6606, %v6862
        %v6993 = vsel %vm6098, %v6608, %v6864
        %v6994 = vsel %vm6098, %v6610, %v6866
        %v6995 = vmul.f32 %v5426, %v5490
        %v6996 = vmul.f32 %v5427, %v5491
        %v6997 = vmul.f32 %v5428, %v5492
        %v6998 = vmul.f32 %v5429, %v5493
        %v6999 = vmul.f32 %v5430, %v5494
        %v7000 = vmul.f32 %v5431, %v5495
        %v7001 = vmul.f32 %v5432, %v5496
        %v7002 = vmul.f32 %v5433, %v5497
        %v7003 = vmul.f32 %v5434, %v5498
        %v7004 = vmul.f32 %v5435, %v5499
        %v7005 = vmul.f32 %v5436, %v5500
        %v7006 = vmul.f32 %v5437, %v5501
        %v7007 = vmul.f32 %v5438, %v5502
        %v7008 = vmul.f32 %v5439, %v5503
        %v7009 = vmul.f32 %v5440, %v5504
        %v7010 = vmul.f32 %v5441, %v5505
        %v7011 = vmul.f32 %v5442, %v5490
        %v7012 = vmul.f32 %v5443, %v5491
        %v7013 = vmul.f32 %v5444, %v5492
        %v7014 = vmul.f32 %v5445, %v5493
        %v7015 = vmul.f32 %v5446, %v5494
        %v7016 = vmul.f32 %v5447, %v5495
        %v7017 = vmul.f32 %v5448, %v5496
        %v7018 = vmul.f32 %v5449, %v5497
        %v7019 = vmul.f32 %v5450, %v5498
        %v7020 = vmul.f32 %v5451, %v5499
        %v7021 = vmul.f32 %v5452, %v5500
        %v7022 = vmul.f32 %v5453, %v5501
        %v7023 = vmul.f32 %v5454, %v5502
        %v7024 = vmul.f32 %v5455, %v5503
        %v7025 = vmul.f32 %v5456, %v5504
        %v7026 = vmul.f32 %v5457, %v5505
        %v7027 = vmul.f32 %v5458, %v5490
        %v7028 = vmul.f32 %v5459, %v5491
        %v7029 = vmul.f32 %v5460, %v5492
        %v7030 = vmul.f32 %v5461, %v5493
        %v7031 = vmul.f32 %v5462, %v5494
        %v7032 = vmul.f32 %v5463, %v5495
        %v7033 = vmul.f32 %v5464, %v5496
        %v7034 = vmul.f32 %v5465, %v5497
        %v7035 = vmul.f32 %v5466, %v5498
        %v7036 = vmul.f32 %v5467, %v5499
        %v7037 = vmul.f32 %v5468, %v5500
        %v7038 = vmul.f32 %v5469, %v5501
        %v7039 = vmul.f32 %v5470, %v5502
        %v7040 = vmul.f32 %v5471, %v5503
        %v7041 = vmul.f32 %v5472, %v5504
        %v7042 = vmul.f32 %v5473, %v5505
        %v7043 = vmul.f32 %v5474, %v5490
        %v7044 = vmul.f32 %v5475, %v5491
        %v7045 = vmul.f32 %v5476, %v5492
        %v7046 = vmul.f32 %v5477, %v5493
        %v7047 = vmul.f32 %v5478, %v5494
        %v7048 = vmul.f32 %v5479, %v5495
        %v7049 = vmul.f32 %v5480, %v5496
        %v7050 = vmul.f32 %v5481, %v5497
        %v7051 = vmul.f32 %v5482, %v5498
        %v7052 = vmul.f32 %v5483, %v5499
        %v7053 = vmul.f32 %v5484, %v5500
        %v7054 = vmul.f32 %v5485, %v5501
        %v7055 = vmul.f32 %v5486, %v5502
        %v7056 = vmul.f32 %v5487, %v5503
        %v7057 = vmul.f32 %v5488, %v5504
        %v7058 = vmul.f32 %v5489, %v5505
        %v7059 = vmul.f32 %v6931, %v5506
        %v7060 = vmul.f32 %v6932, %v5507
        %v7061 = vmul.f32 %v6933, %v5508
        %v7062 = vmul.f32 %v6934, %v5509
        %v7063 = vmul.f32 %v6935, %v5510
        %v7064 = vmul.f32 %v6936, %v5511
        %v7065 = vmul.f32 %v6937, %v5512
        %v7066 = vmul.f32 %v6938, %v5513
        %v7067 = vmul.f32 %v6939, %v5514
        %v7068 = vmul.f32 %v6940, %v5515
        %v7069 = vmul.f32 %v6941, %v5516
        %v7070 = vmul.f32 %v6942, %v5517
        %v7071 = vmul.f32 %v6943, %v5518
        %v7072 = vmul.f32 %v6944, %v5519
        %v7073 = vmul.f32 %v6945, %v5520
        %v7074 = vmul.f32 %v6946, %v5521
        %v7075 = vmul.f32 %v6947, %v5506
        %v7076 = vmul.f32 %v6948, %v5507
        %v7077 = vmul.f32 %v6949, %v5508
        %v7078 = vmul.f32 %v6950, %v5509
        %v7079 = vmul.f32 %v6951, %v5510
        %v7080 = vmul.f32 %v6952, %v5511
        %v7081 = vmul.f32 %v6953, %v5512
        %v7082 = vmul.f32 %v6954, %v5513
        %v7083 = vmul.f32 %v6955, %v5514
        %v7084 = vmul.f32 %v6956, %v5515
        %v7085 = vmul.f32 %v6957, %v5516
        %v7086 = vmul.f32 %v6958, %v5517
        %v7087 = vmul.f32 %v6959, %v5518
        %v7088 = vmul.f32 %v6960, %v5519
        %v7089 = vmul.f32 %v6961, %v5520
        %v7090 = vmul.f32 %v6962, %v5521
        %v7091 = vmul.f32 %v6963, %v5506
        %v7092 = vmul.f32 %v6964, %v5507
        %v7093 = vmul.f32 %v6965, %v5508
        %v7094 = vmul.f32 %v6966, %v5509
        %v7095 = vmul.f32 %v6967, %v5510
        %v7096 = vmul.f32 %v6968, %v5511
        %v7097 = vmul.f32 %v6969, %v5512
        %v7098 = vmul.f32 %v6970, %v5513
        %v7099 = vmul.f32 %v6971, %v5514
        %v7100 = vmul.f32 %v6972, %v5515
        %v7101 = vmul.f32 %v6973, %v5516
        %v7102 = vmul.f32 %v6974, %v5517
        %v7103 = vmul.f32 %v6975, %v5518
        %v7104 = vmul.f32 %v6976, %v5519
        %v7105 = vmul.f32 %v6977, %v5520
        %v7106 = vmul.f32 %v6978, %v5521
        %v7107 = vmul.f32 %v6979, %v5506
        %v7108 = vmul.f32 %v6980, %v5507
        %v7109 = vmul.f32 %v6981, %v5508
        %v7110 = vmul.f32 %v6982, %v5509
        %v7111 = vmul.f32 %v6983, %v5510
        %v7112 = vmul.f32 %v6984, %v5511
        %v7113 = vmul.f32 %v6985, %v5512
        %v7114 = vmul.f32 %v6986, %v5513
        %v7115 = vmul.f32 %v6987, %v5514
        %v7116 = vmul.f32 %v6988, %v5515
        %v7117 = vmul.f32 %v6989, %v5516
        %v7118 = vmul.f32 %v6990, %v5517
        %v7119 = vmul.f32 %v6991, %v5518
        %v7120 = vmul.f32 %v6992, %v5519
        %v7121 = vmul.f32 %v6993, %v5520
        %v7122 = vmul.f32 %v6994, %v5521
        %v7123 = vadd.f32 %v6995, %v7059
        %v7124 = vadd.f32 %v6996, %v7060
        %v7125 = vadd.f32 %v6997, %v7061
        %v7126 = vadd.f32 %v6998, %v7062
        %v7127 = vadd.f32 %v6999, %v7063
        %v7128 = vadd.f32 %v7000, %v7064
        %v7129 = vadd.f32 %v7001, %v7065
        %v7130 = vadd.f32 %v7002, %v7066
        %v7131 = vadd.f32 %v7003, %v7067
        %v7132 = vadd.f32 %v7004, %v7068
        %v7133 = vadd.f32 %v7005, %v7069
        %v7134 = vadd.f32 %v7006, %v7070
        %v7135 = vadd.f32 %v7007, %v7071
        %v7136 = vadd.f32 %v7008, %v7072
        %v7137 = vadd.f32 %v7009, %v7073
        %v7138 = vadd.f32 %v7010, %v7074
        %v7139 = vadd.f32 %v7011, %v7075
        %v7140 = vadd.f32 %v7012, %v7076
        %v7141 = vadd.f32 %v7013, %v7077
        %v7142 = vadd.f32 %v7014, %v7078
        %v7143 = vadd.f32 %v7015, %v7079
        %v7144 = vadd.f32 %v7016, %v7080
        %v7145 = vadd.f32 %v7017, %v7081
        %v7146 = vadd.f32 %v7018, %v7082
        %v7147 = vadd.f32 %v7019, %v7083
        %v7148 = vadd.f32 %v7020, %v7084
        %v7149 = vadd.f32 %v7021, %v7085
        %v7150 = vadd.f32 %v7022, %v7086
        %v7151 = vadd.f32 %v7023, %v7087
        %v7152 = vadd.f32 %v7024, %v7088
        %v7153 = vadd.f32 %v7025, %v7089
        %v7154 = vadd.f32 %v7026, %v7090
        %v7155 = vadd.f32 %v7027, %v7091
        %v7156 = vadd.f32 %v7028, %v7092
        %v7157 = vadd.f32 %v7029, %v7093
        %v7158 = vadd.f32 %v7030, %v7094
        %v7159 = vadd.f32 %v7031, %v7095
        %v7160 = vadd.f32 %v7032, %v7096
        %v7161 = vadd.f32 %v7033, %v7097
        %v7162 = vadd.f32 %v7034, %v7098
        %v7163 = vadd.f32 %v7035, %v7099
        %v7164 = vadd.f32 %v7036, %v7100
        %v7165 = vadd.f32 %v7037, %v7101
        %v7166 = vadd.f32 %v7038, %v7102
        %v7167 = vadd.f32 %v7039, %v7103
        %v7168 = vadd.f32 %v7040, %v7104
        %v7169 = vadd.f32 %v7041, %v7105
        %v7170 = vadd.f32 %v7042, %v7106
        %v7171 = vadd.f32 %v7043, %v7107
        %v7172 = vadd.f32 %v7044, %v7108
        %v7173 = vadd.f32 %v7045, %v7109
        %v7174 = vadd.f32 %v7046, %v7110
        %v7175 = vadd.f32 %v7047, %v7111
        %v7176 = vadd.f32 %v7048, %v7112
        %v7177 = vadd.f32 %v7049, %v7113
        %v7178 = vadd.f32 %v7050, %v7114
        %v7179 = vadd.f32 %v7051, %v7115
        %v7180 = vadd.f32 %v7052, %v7116
        %v7181 = vadd.f32 %v7053, %v7117
        %v7182 = vadd.f32 %v7054, %v7118
        %v7183 = vadd.f32 %v7055, %v7119
        %v7184 = vadd.f32 %v7056, %v7120
        %v7185 = vadd.f32 %v7057, %v7121
        %v7186 = vadd.f32 %v7058, %v7122
        %v7187 = vpack.c.bf16 %v6291, %v6291
        %v7188 = vpack.c.bf16 %v6292, %v6292
        %v7189 = vpack.c.bf16 %v6293, %v6293
        %v7190 = vpack.c.bf16 %v6294, %v6294
        %v7191 = vpack.c.bf16 %v6295, %v6295
        %v7192 = vpack.c.bf16 %v6296, %v6296
        %v7193 = vpack.c.bf16 %v6297, %v6297
        %v7194 = vpack.c.bf16 %v6298, %v6298
        %v7195 = vpack.c.bf16 %v6299, %v6299
        %v7196 = vpack.c.bf16 %v6300, %v6300
        %v7197 = vpack.c.bf16 %v6301, %v6301
        %v7198 = vpack.c.bf16 %v6302, %v6302
        %v7199 = vpack.c.bf16 %v6303, %v6303
        %v7200 = vpack.c.bf16 %v6304, %v6304
        %v7201 = vpack.c.bf16 %v6305, %v6305
        %v7202 = vpack.c.bf16 %v6306, %v6306
        %v7203 = vpack.c.bf16 %v6307, %v6307
        %v7204 = vpack.c.bf16 %v6308, %v6308
        %v7205 = vpack.c.bf16 %v6309, %v6309
        %v7206 = vpack.c.bf16 %v6310, %v6310
        %v7207 = vpack.c.bf16 %v6311, %v6311
        %v7208 = vpack.c.bf16 %v6312, %v6312
        %v7209 = vpack.c.bf16 %v6313, %v6313
        %v7210 = vpack.c.bf16 %v6314, %v6314
        %v7211 = vpack.c.bf16 %v6315, %v6315
        %v7212 = vpack.c.bf16 %v6316, %v6316
        %v7213 = vpack.c.bf16 %v6317, %v6317
        %v7214 = vpack.c.bf16 %v6318, %v6318
        %v7215 = vpack.c.bf16 %v6319, %v6319
        %v7216 = vpack.c.bf16 %v6320, %v6320
        %v7217 = vpack.c.bf16 %v6321, %v6321
        %v7218 = vpack.c.bf16 %v6322, %v6322
        %v7219 = vpack.c.bf16 %v6323, %v6323
        %v7220 = vpack.c.bf16 %v6324, %v6324
        %v7221 = vpack.c.bf16 %v6325, %v6325
        %v7222 = vpack.c.bf16 %v6326, %v6326
        %v7223 = vpack.c.bf16 %v6327, %v6327
        %v7224 = vpack.c.bf16 %v6328, %v6328
        %v7225 = vpack.c.bf16 %v6329, %v6329
        %v7226 = vpack.c.bf16 %v6330, %v6330
        %v7227 = vpack.c.bf16 %v6331, %v6331
        %v7228 = vpack.c.bf16 %v6332, %v6332
        %v7229 = vpack.c.bf16 %v6333, %v6333
        %v7230 = vpack.c.bf16 %v6334, %v6334
        %v7231 = vpack.c.bf16 %v6335, %v6335
        %v7232 = vpack.c.bf16 %v6336, %v6336
        %v7233 = vpack.c.bf16 %v6337, %v6337
        %v7234 = vpack.c.bf16 %v6338, %v6338
        %v7235 = vpack.c.bf16 %v6339, %v6339
        %v7236 = vpack.c.bf16 %v6340, %v6340
        %v7237 = vpack.c.bf16 %v6341, %v6341
        %v7238 = vpack.c.bf16 %v6342, %v6342
        %v7239 = vpack.c.bf16 %v6343, %v6343
        %v7240 = vpack.c.bf16 %v6344, %v6344
        %v7241 = vpack.c.bf16 %v6345, %v6345
        %v7242 = vpack.c.bf16 %v6346, %v6346
        %v7243 = vpack.c.bf16 %v6347, %v6347
        %v7244 = vpack.c.bf16 %v6348, %v6348
        %v7245 = vpack.c.bf16 %v6349, %v6349
        %v7246 = vpack.c.bf16 %v6350, %v6350
        %v7247 = vpack.c.bf16 %v6351, %v6351
        %v7248 = vpack.c.bf16 %v6352, %v6352
        %v7249 = vpack.c.bf16 %v6353, %v6353
        %v7250 = vpack.c.bf16 %v6354, %v6354
        %v7251 = vpack.c.bf16 %v7123, %v7123
        %v7252 = vpack.c.bf16 %v7124, %v7124
        %v7253 = vpack.c.bf16 %v7125, %v7125
        %v7254 = vpack.c.bf16 %v7126, %v7126
        %v7255 = vpack.c.bf16 %v7127, %v7127
        %v7256 = vpack.c.bf16 %v7128, %v7128
        %v7257 = vpack.c.bf16 %v7129, %v7129
        %v7258 = vpack.c.bf16 %v7130, %v7130
        %v7259 = vpack.c.bf16 %v7131, %v7131
        %v7260 = vpack.c.bf16 %v7132, %v7132
        %v7261 = vpack.c.bf16 %v7133, %v7133
        %v7262 = vpack.c.bf16 %v7134, %v7134
        %v7263 = vpack.c.bf16 %v7135, %v7135
        %v7264 = vpack.c.bf16 %v7136, %v7136
        %v7265 = vpack.c.bf16 %v7137, %v7137
        %v7266 = vpack.c.bf16 %v7138, %v7138
        %v7267 = vpack.c.bf16 %v7139, %v7139
        %v7268 = vpack.c.bf16 %v7140, %v7140
        %v7269 = vpack.c.bf16 %v7141, %v7141
        %v7270 = vpack.c.bf16 %v7142, %v7142
        %v7271 = vpack.c.bf16 %v7143, %v7143
        %v7272 = vpack.c.bf16 %v7144, %v7144
        %v7273 = vpack.c.bf16 %v7145, %v7145
        %v7274 = vpack.c.bf16 %v7146, %v7146
        %v7275 = vpack.c.bf16 %v7147, %v7147
        %v7276 = vpack.c.bf16 %v7148, %v7148
        %v7277 = vpack.c.bf16 %v7149, %v7149
        %v7278 = vpack.c.bf16 %v7150, %v7150
        %v7279 = vpack.c.bf16 %v7151, %v7151
        %v7280 = vpack.c.bf16 %v7152, %v7152
        %v7281 = vpack.c.bf16 %v7153, %v7153
        %v7282 = vpack.c.bf16 %v7154, %v7154
        %v7283 = vpack.c.bf16 %v7155, %v7155
        %v7284 = vpack.c.bf16 %v7156, %v7156
        %v7285 = vpack.c.bf16 %v7157, %v7157
        %v7286 = vpack.c.bf16 %v7158, %v7158
        %v7287 = vpack.c.bf16 %v7159, %v7159
        %v7288 = vpack.c.bf16 %v7160, %v7160
        %v7289 = vpack.c.bf16 %v7161, %v7161
        %v7290 = vpack.c.bf16 %v7162, %v7162
        %v7291 = vpack.c.bf16 %v7163, %v7163
        %v7292 = vpack.c.bf16 %v7164, %v7164
        %v7293 = vpack.c.bf16 %v7165, %v7165
        %v7294 = vpack.c.bf16 %v7166, %v7166
        %v7295 = vpack.c.bf16 %v7167, %v7167
        %v7296 = vpack.c.bf16 %v7168, %v7168
        %v7297 = vpack.c.bf16 %v7169, %v7169
        %v7298 = vpack.c.bf16 %v7170, %v7170
        %v7299 = vpack.c.bf16 %v7171, %v7171
        %v7300 = vpack.c.bf16 %v7172, %v7172
        %v7301 = vpack.c.bf16 %v7173, %v7173
        %v7302 = vpack.c.bf16 %v7174, %v7174
        %v7303 = vpack.c.bf16 %v7175, %v7175
        %v7304 = vpack.c.bf16 %v7176, %v7176
        %v7305 = vpack.c.bf16 %v7177, %v7177
        %v7306 = vpack.c.bf16 %v7178, %v7178
        %v7307 = vpack.c.bf16 %v7179, %v7179
        %v7308 = vpack.c.bf16 %v7180, %v7180
        %v7309 = vpack.c.bf16 %v7181, %v7181
        %v7310 = vpack.c.bf16 %v7182, %v7182
        %v7311 = vpack.c.bf16 %v7183, %v7183
        %v7312 = vpack.c.bf16 %v7184, %v7184
        %v7313 = vpack.c.bf16 %v7185, %v7185
        %v7314 = vpack.c.bf16 %v7186, %v7186
        %v7315 = vpack.c.bf16 %v2651, %v2651
        %v7316 = vpack.c.bf16 %v2653, %v2653
        %v7317 = vpack.c.bf16 %v2656, %v2656
        %v7318 = vpack.c.bf16 %v2658, %v2658
        %v7319 = vpack.c.bf16 %v2661, %v2661
        %v7320 = vpack.c.bf16 %v2663, %v2663
        %v7321 = vpack.c.bf16 %v2666, %v2666
        %v7322 = vpack.c.bf16 %v2668, %v2668
        %v7323 = vpack.c.bf16 %v2671, %v2671
        %v7324 = vpack.c.bf16 %v2673, %v2673
        %v7325 = vpack.c.bf16 %v2676, %v2676
        %v7326 = vpack.c.bf16 %v2678, %v2678
        %v7327 = vpack.c.bf16 %v2681, %v2681
        %v7328 = vpack.c.bf16 %v2683, %v2683
        %v7329 = vpack.c.bf16 %v2686, %v2686
        %v7330 = vpack.c.bf16 %v2688, %v2688
        %v7331 = vpack.c.bf16 %v3027, %v3027
        %v7332 = vpack.c.bf16 %v3029, %v3029
        %v7333 = vpack.c.bf16 %v3031, %v3031
        %v7334 = vpack.c.bf16 %v3033, %v3033
        %v7335 = vpack.c.bf16 %v3035, %v3035
        %v7336 = vpack.c.bf16 %v3037, %v3037
        %v7337 = vpack.c.bf16 %v3039, %v3039
        %v7338 = vpack.c.bf16 %v3041, %v3041
        %v7339 = vpack.c.bf16 %v3043, %v3043
        %v7340 = vpack.c.bf16 %v3045, %v3045
        %v7341 = vpack.c.bf16 %v3047, %v3047
        %v7342 = vpack.c.bf16 %v3049, %v3049
        %v7343 = vpack.c.bf16 %v3051, %v3051
        %v7344 = vpack.c.bf16 %v3053, %v3053
        %v7345 = vpack.c.bf16 %v3055, %v3055
        %v7346 = vpack.c.bf16 %v3057, %v3057
        %v7347 = vpack.c.bf16 %v3075, %v3075
        %v7348 = vpack.c.bf16 %v3077, %v3077
        %v7349 = vpack.c.bf16 %v3079, %v3079
        %v7350 = vpack.c.bf16 %v3081, %v3081
        %v7351 = vpack.c.bf16 %v3083, %v3083
        %v7352 = vpack.c.bf16 %v3085, %v3085
        %v7353 = vpack.c.bf16 %v3087, %v3087
        %v7354 = vpack.c.bf16 %v3089, %v3089
        %v7355 = vpack.c.bf16 %v3091, %v3091
        %v7356 = vpack.c.bf16 %v3093, %v3093
        %v7357 = vpack.c.bf16 %v3095, %v3095
        %v7358 = vpack.c.bf16 %v3097, %v3097
        %v7359 = vpack.c.bf16 %v3099, %v3099
        %v7360 = vpack.c.bf16 %v3101, %v3101
        %v7361 = vpack.c.bf16 %v3103, %v3103
        %v7362 = vpack.c.bf16 %v3105, %v3105
        %v7363 = vpack.c.bf16 %v3123, %v3123
        %v7364 = vpack.c.bf16 %v3125, %v3125
        %v7365 = vpack.c.bf16 %v3127, %v3127
        %v7366 = vpack.c.bf16 %v3129, %v3129
        %v7367 = vpack.c.bf16 %v3131, %v3131
        %v7368 = vpack.c.bf16 %v3133, %v3133
        %v7369 = vpack.c.bf16 %v3135, %v3135
        %v7370 = vpack.c.bf16 %v3137, %v3137
        %v7371 = vpack.c.bf16 %v3139, %v3139
        %v7372 = vpack.c.bf16 %v3141, %v3141
        %v7373 = vpack.c.bf16 %v3143, %v3143
        %v7374 = vpack.c.bf16 %v3145, %v3145
        %v7375 = vpack.c.bf16 %v3147, %v3147
        %v7376 = vpack.c.bf16 %v3149, %v3149
        %v7377 = vpack.c.bf16 %v3151, %v3151
        %v7378 = vpack.c.bf16 %v3153, %v3153
        %v7395 = vunpack.c.l.b16 %v7187
        %v7396 = vunpack.c.l.b16 %v7188
        %v7397 = vunpack.c.l.b16 %v7189
        %v7398 = vunpack.c.l.b16 %v7190
        %v7399 = vunpack.c.l.b16 %v7191
        %v7400 = vunpack.c.l.b16 %v7192
        %v7401 = vunpack.c.l.b16 %v7193
        %v7402 = vunpack.c.l.b16 %v7194
        %v7403 = vunpack.c.l.b16 %v7195
        %v7404 = vunpack.c.l.b16 %v7196
        %v7405 = vunpack.c.l.b16 %v7197
        %v7406 = vunpack.c.l.b16 %v7198
        %v7407 = vunpack.c.l.b16 %v7199
        %v7408 = vunpack.c.l.b16 %v7200
        %v7409 = vunpack.c.l.b16 %v7201
        %v7410 = vunpack.c.l.b16 %v7202
        %v7411 = vpack.c.b16 %v7396, %v7395
        %v7412 = vpack.c.b16 %v7398, %v7397
        %v7413 = vpack.c.b16 %v7400, %v7399
        %v7414 = vpack.c.b16 %v7402, %v7401
        %v7415 = vpack.c.b16 %v7404, %v7403
        %v7416 = vpack.c.b16 %v7406, %v7405
        %v7417 = vpack.c.b16 %v7408, %v7407
        %v7418 = vpack.c.b16 %v7410, %v7409
        %v7435 = vunpack.c.l.b16 %v7251
        %v7436 = vunpack.c.l.b16 %v7252
        %v7437 = vunpack.c.l.b16 %v7253
        %v7438 = vunpack.c.l.b16 %v7254
        %v7439 = vunpack.c.l.b16 %v7255
        %v7440 = vunpack.c.l.b16 %v7256
        %v7441 = vunpack.c.l.b16 %v7257
        %v7442 = vunpack.c.l.b16 %v7258
        %v7443 = vunpack.c.l.b16 %v7259
        %v7444 = vunpack.c.l.b16 %v7260
        %v7445 = vunpack.c.l.b16 %v7261
        %v7446 = vunpack.c.l.b16 %v7262
        %v7447 = vunpack.c.l.b16 %v7263
        %v7448 = vunpack.c.l.b16 %v7264
        %v7449 = vunpack.c.l.b16 %v7265
        %v7450 = vunpack.c.l.b16 %v7266
        %v7451 = vpack.c.b16 %v7436, %v7435
        %v7452 = vpack.c.b16 %v7438, %v7437
        %v7453 = vpack.c.b16 %v7440, %v7439
        %v7454 = vpack.c.b16 %v7442, %v7441
        %v7455 = vpack.c.b16 %v7444, %v7443
        %v7456 = vpack.c.b16 %v7446, %v7445
        %v7457 = vpack.c.b16 %v7448, %v7447
        %v7458 = vpack.c.b16 %v7450, %v7449
        %v7460 = vsel %vm3234, %v7411, 0
        %v7463 = vsel %vm3234, %v7412, 0
        %v7466 = vsel %vm3234, %v7413, 0
        %v7469 = vsel %vm3234, %v7414, 0
        %v7472 = vsel %vm3234, %v7415, 0
        %v7475 = vsel %vm3234, %v7416, 0
        %v7478 = vsel %vm3234, %v7417, 0
        %v7481 = vsel %vm3234, %v7418, 0
        %v7484 = vsel %vm3234, %v7451, 0
        %v7487 = vsel %vm3234, %v7452, 0
        %v7490 = vsel %vm3234, %v7453, 0
        %v7493 = vsel %vm3234, %v7454, 0
        %v7496 = vsel %vm3234, %v7455, 0
        %v7499 = vsel %vm3234, %v7456, 0
        %v7502 = vsel %vm3234, %v7457, 0
        %v7505 = vsel %vm3234, %v7458, 0
        %7507 = vmatpush.bf16.xpose.msra.mxu0 %v7505
        %7508 = vmatpush.bf16.xpose.msra.mxu0 %v7502
        %7509 = vmatpush.bf16.xpose.msra.mxu0 %v7499
        %7510 = vmatpush.bf16.xpose.msra.mxu0 %v7496
        %7511 = vmatpush.bf16.xpose.msra.mxu0 %v7493
        %7512 = vmatpush.bf16.xpose.msra.mxu0 %v7490
        %7513 = vmatpush.bf16.xpose.msra.mxu0 %v7487
        %7514 = vmatpush.bf16.xpose.msra.mxu0 %v7484
        %7515 = vmatmul.bf16.gmra.mxu0 %v7460
        %v7516 = vpop.f32.mrf.mxu0
        %v7517 = vadd.f32 0.0, %v7516
        %v7518 = vpop.f32.mrf.mxu0
        %v7519 = vadd.f32 0.0, %v7518
        %7520 = vmatmul.bf16.gmra.mxu0 %v7463
        %v7521 = vpop.f32.mrf.mxu0
        %v7522 = vadd.f32 0.0, %v7521
        %v7523 = vpop.f32.mrf.mxu0
        %v7524 = vadd.f32 0.0, %v7523
        %7525 = vmatmul.bf16.gmra.mxu0 %v7466
        %v7526 = vpop.f32.mrf.mxu0
        %v7527 = vadd.f32 0.0, %v7526
        %v7528 = vpop.f32.mrf.mxu0
        %v7529 = vadd.f32 0.0, %v7528
        %7530 = vmatmul.bf16.gmra.mxu0 %v7469
        %v7531 = vpop.f32.mrf.mxu0
        %v7532 = vadd.f32 0.0, %v7531
        %v7533 = vpop.f32.mrf.mxu0
        %v7534 = vadd.f32 0.0, %v7533
        %7535 = vmatmul.bf16.gmra.mxu0 %v7472
        %v7536 = vpop.f32.mrf.mxu0
        %v7537 = vadd.f32 0.0, %v7536
        %v7538 = vpop.f32.mrf.mxu0
        %v7539 = vadd.f32 0.0, %v7538
        %7540 = vmatmul.bf16.gmra.mxu0 %v7475
        %v7541 = vpop.f32.mrf.mxu0
        %v7542 = vadd.f32 0.0, %v7541
        %v7543 = vpop.f32.mrf.mxu0
        %v7544 = vadd.f32 0.0, %v7543
        %7545 = vmatmul.bf16.gmra.mxu0 %v7478
        %v7546 = vpop.f32.mrf.mxu0
        %v7547 = vadd.f32 0.0, %v7546
        %v7548 = vpop.f32.mrf.mxu0
        %v7549 = vadd.f32 0.0, %v7548
        %7550 = vmatmul.bf16.gmra.mxu0 %v7481
        %v7551 = vpop.f32.mrf.mxu0
        %v7552 = vadd.f32 0.0, %v7551
        %v7553 = vpop.f32.mrf.mxu0
        %v7554 = vadd.f32 0.0, %v7553
        %7555 = vdwg.mxu0
        %v7572 = vunpack.c.l.b16 %v7203
        %v7573 = vunpack.c.l.b16 %v7204
        %v7574 = vunpack.c.l.b16 %v7205
        %v7575 = vunpack.c.l.b16 %v7206
        %v7576 = vunpack.c.l.b16 %v7207
        %v7577 = vunpack.c.l.b16 %v7208
        %v7578 = vunpack.c.l.b16 %v7209
        %v7579 = vunpack.c.l.b16 %v7210
        %v7580 = vunpack.c.l.b16 %v7211
        %v7581 = vunpack.c.l.b16 %v7212
        %v7582 = vunpack.c.l.b16 %v7213
        %v7583 = vunpack.c.l.b16 %v7214
        %v7584 = vunpack.c.l.b16 %v7215
        %v7585 = vunpack.c.l.b16 %v7216
        %v7586 = vunpack.c.l.b16 %v7217
        %v7587 = vunpack.c.l.b16 %v7218
        %v7588 = vpack.c.b16 %v7573, %v7572
        %v7589 = vpack.c.b16 %v7575, %v7574
        %v7590 = vpack.c.b16 %v7577, %v7576
        %v7591 = vpack.c.b16 %v7579, %v7578
        %v7592 = vpack.c.b16 %v7581, %v7580
        %v7593 = vpack.c.b16 %v7583, %v7582
        %v7594 = vpack.c.b16 %v7585, %v7584
        %v7595 = vpack.c.b16 %v7587, %v7586
        %v7612 = vunpack.c.l.b16 %v7267
        %v7613 = vunpack.c.l.b16 %v7268
        %v7614 = vunpack.c.l.b16 %v7269
        %v7615 = vunpack.c.l.b16 %v7270
        %v7616 = vunpack.c.l.b16 %v7271
        %v7617 = vunpack.c.l.b16 %v7272
        %v7618 = vunpack.c.l.b16 %v7273
        %v7619 = vunpack.c.l.b16 %v7274
        %v7620 = vunpack.c.l.b16 %v7275
        %v7621 = vunpack.c.l.b16 %v7276
        %v7622 = vunpack.c.l.b16 %v7277
        %v7623 = vunpack.c.l.b16 %v7278
        %v7624 = vunpack.c.l.b16 %v7279
        %v7625 = vunpack.c.l.b16 %v7280
        %v7626 = vunpack.c.l.b16 %v7281
        %v7627 = vunpack.c.l.b16 %v7282
        %v7628 = vpack.c.b16 %v7613, %v7612
        %v7629 = vpack.c.b16 %v7615, %v7614
        %v7630 = vpack.c.b16 %v7617, %v7616
        %v7631 = vpack.c.b16 %v7619, %v7618
        %v7632 = vpack.c.b16 %v7621, %v7620
        %v7633 = vpack.c.b16 %v7623, %v7622
        %v7634 = vpack.c.b16 %v7625, %v7624
        %v7635 = vpack.c.b16 %v7627, %v7626
        %v7637 = vsel %vm3234, %v7588, 0
        %v7640 = vsel %vm3234, %v7589, 0
        %v7643 = vsel %vm3234, %v7590, 0
        %v7646 = vsel %vm3234, %v7591, 0
        %v7649 = vsel %vm3234, %v7592, 0
        %v7652 = vsel %vm3234, %v7593, 0
        %v7655 = vsel %vm3234, %v7594, 0
        %v7658 = vsel %vm3234, %v7595, 0
        %v7661 = vsel %vm3234, %v7628, 0
        %v7664 = vsel %vm3234, %v7629, 0
        %v7667 = vsel %vm3234, %v7630, 0
        %v7670 = vsel %vm3234, %v7631, 0
        %v7673 = vsel %vm3234, %v7632, 0
        %v7676 = vsel %vm3234, %v7633, 0
        %v7679 = vsel %vm3234, %v7634, 0
        %v7682 = vsel %vm3234, %v7635, 0
        %7684 = vmatpush.bf16.xpose.msra.mxu0 %v7682
        %7685 = vmatpush.bf16.xpose.msra.mxu0 %v7679
        %7686 = vmatpush.bf16.xpose.msra.mxu0 %v7676
        %7687 = vmatpush.bf16.xpose.msra.mxu0 %v7673
        %7688 = vmatpush.bf16.xpose.msra.mxu0 %v7670
        %7689 = vmatpush.bf16.xpose.msra.mxu0 %v7667
        %7690 = vmatpush.bf16.xpose.msra.mxu0 %v7664
        %7691 = vmatpush.bf16.xpose.msra.mxu0 %v7661
        %7692 = vmatmul.bf16.gmra.mxu0 %v7637
        %v7693 = vpop.f32.mrf.mxu0
        %v7694 = vadd.f32 0.0, %v7693
        %v7695 = vpop.f32.mrf.mxu0
        %v7696 = vadd.f32 0.0, %v7695
        %7697 = vmatmul.bf16.gmra.mxu0 %v7640
        %v7698 = vpop.f32.mrf.mxu0
        %v7699 = vadd.f32 0.0, %v7698
        %v7700 = vpop.f32.mrf.mxu0
        %v7701 = vadd.f32 0.0, %v7700
        %7702 = vmatmul.bf16.gmra.mxu0 %v7643
        %v7703 = vpop.f32.mrf.mxu0
        %v7704 = vadd.f32 0.0, %v7703
        %v7705 = vpop.f32.mrf.mxu0
        %v7706 = vadd.f32 0.0, %v7705
        %7707 = vmatmul.bf16.gmra.mxu0 %v7646
        %v7708 = vpop.f32.mrf.mxu0
        %v7709 = vadd.f32 0.0, %v7708
        %v7710 = vpop.f32.mrf.mxu0
        %v7711 = vadd.f32 0.0, %v7710
        %7712 = vmatmul.bf16.gmra.mxu0 %v7649
        %v7713 = vpop.f32.mrf.mxu0
        %v7714 = vadd.f32 0.0, %v7713
        %v7715 = vpop.f32.mrf.mxu0
        %v7716 = vadd.f32 0.0, %v7715
        %7717 = vmatmul.bf16.gmra.mxu0 %v7652
        %v7718 = vpop.f32.mrf.mxu0
        %v7719 = vadd.f32 0.0, %v7718
        %v7720 = vpop.f32.mrf.mxu0
        %v7721 = vadd.f32 0.0, %v7720
        %7722 = vmatmul.bf16.gmra.mxu0 %v7655
        %v7723 = vpop.f32.mrf.mxu0
        %v7724 = vadd.f32 0.0, %v7723
        %v7725 = vpop.f32.mrf.mxu0
        %v7726 = vadd.f32 0.0, %v7725
        %7727 = vmatmul.bf16.gmra.mxu0 %v7658
        %v7728 = vpop.f32.mrf.mxu0
        %v7729 = vadd.f32 0.0, %v7728
        %v7730 = vpop.f32.mrf.mxu0
        %v7731 = vadd.f32 0.0, %v7730
        %7732 = vdwg.mxu0
        %v7749 = vunpack.c.l.b16 %v7219
        %v7750 = vunpack.c.l.b16 %v7220
        %v7751 = vunpack.c.l.b16 %v7221
        %v7752 = vunpack.c.l.b16 %v7222
        %v7753 = vunpack.c.l.b16 %v7223
        %v7754 = vunpack.c.l.b16 %v7224
        %v7755 = vunpack.c.l.b16 %v7225
        %v7756 = vunpack.c.l.b16 %v7226
        %v7757 = vunpack.c.l.b16 %v7227
        %v7758 = vunpack.c.l.b16 %v7228
        %v7759 = vunpack.c.l.b16 %v7229
        %v7760 = vunpack.c.l.b16 %v7230
        %v7761 = vunpack.c.l.b16 %v7231
        %v7762 = vunpack.c.l.b16 %v7232
        %v7763 = vunpack.c.l.b16 %v7233
        %v7764 = vunpack.c.l.b16 %v7234
        %v7765 = vpack.c.b16 %v7750, %v7749
        %v7766 = vpack.c.b16 %v7752, %v7751
        %v7767 = vpack.c.b16 %v7754, %v7753
        %v7768 = vpack.c.b16 %v7756, %v7755
        %v7769 = vpack.c.b16 %v7758, %v7757
        %v7770 = vpack.c.b16 %v7760, %v7759
        %v7771 = vpack.c.b16 %v7762, %v7761
        %v7772 = vpack.c.b16 %v7764, %v7763
        %v7789 = vunpack.c.l.b16 %v7283
        %v7790 = vunpack.c.l.b16 %v7284
        %v7791 = vunpack.c.l.b16 %v7285
        %v7792 = vunpack.c.l.b16 %v7286
        %v7793 = vunpack.c.l.b16 %v7287
        %v7794 = vunpack.c.l.b16 %v7288
        %v7795 = vunpack.c.l.b16 %v7289
        %v7796 = vunpack.c.l.b16 %v7290
        %v7797 = vunpack.c.l.b16 %v7291
        %v7798 = vunpack.c.l.b16 %v7292
        %v7799 = vunpack.c.l.b16 %v7293
        %v7800 = vunpack.c.l.b16 %v7294
        %v7801 = vunpack.c.l.b16 %v7295
        %v7802 = vunpack.c.l.b16 %v7296
        %v7803 = vunpack.c.l.b16 %v7297
        %v7804 = vunpack.c.l.b16 %v7298
        %v7805 = vpack.c.b16 %v7790, %v7789
        %v7806 = vpack.c.b16 %v7792, %v7791
        %v7807 = vpack.c.b16 %v7794, %v7793
        %v7808 = vpack.c.b16 %v7796, %v7795
        %v7809 = vpack.c.b16 %v7798, %v7797
        %v7810 = vpack.c.b16 %v7800, %v7799
        %v7811 = vpack.c.b16 %v7802, %v7801
        %v7812 = vpack.c.b16 %v7804, %v7803
        %v7814 = vsel %vm3234, %v7765, 0
        %v7817 = vsel %vm3234, %v7766, 0
        %v7820 = vsel %vm3234, %v7767, 0
        %v7823 = vsel %vm3234, %v7768, 0
        %v7826 = vsel %vm3234, %v7769, 0
        %v7829 = vsel %vm3234, %v7770, 0
        %v7832 = vsel %vm3234, %v7771, 0
        %v7835 = vsel %vm3234, %v7772, 0
        %v7838 = vsel %vm3234, %v7805, 0
        %v7841 = vsel %vm3234, %v7806, 0
        %v7844 = vsel %vm3234, %v7807, 0
        %v7847 = vsel %vm3234, %v7808, 0
        %v7850 = vsel %vm3234, %v7809, 0
        %v7853 = vsel %vm3234, %v7810, 0
        %v7856 = vsel %vm3234, %v7811, 0
        %v7859 = vsel %vm3234, %v7812, 0
        %7861 = vmatpush.bf16.xpose.msra.mxu0 %v7859
        %7862 = vmatpush.bf16.xpose.msra.mxu0 %v7856
        %7863 = vmatpush.bf16.xpose.msra.mxu0 %v7853
        %7864 = vmatpush.bf16.xpose.msra.mxu0 %v7850
        %7865 = vmatpush.bf16.xpose.msra.mxu0 %v7847
        %7866 = vmatpush.bf16.xpose.msra.mxu0 %v7844
        %7867 = vmatpush.bf16.xpose.msra.mxu0 %v7841
        %7868 = vmatpush.bf16.xpose.msra.mxu0 %v7838
        %7869 = vmatmul.bf16.gmra.mxu0 %v7814
        %v7870 = vpop.f32.mrf.mxu0
        %v7871 = vadd.f32 0.0, %v7870
        %v7872 = vpop.f32.mrf.mxu0
        %v7873 = vadd.f32 0.0, %v7872
        %7874 = vmatmul.bf16.gmra.mxu0 %v7817
        %v7875 = vpop.f32.mrf.mxu0
        %v7876 = vadd.f32 0.0, %v7875
        %v7877 = vpop.f32.mrf.mxu0
        %v7878 = vadd.f32 0.0, %v7877
        %7879 = vmatmul.bf16.gmra.mxu0 %v7820
        %v7880 = vpop.f32.mrf.mxu0
        %v7881 = vadd.f32 0.0, %v7880
        %v7882 = vpop.f32.mrf.mxu0
        %v7883 = vadd.f32 0.0, %v7882
        %7884 = vmatmul.bf16.gmra.mxu0 %v7823
        %v7885 = vpop.f32.mrf.mxu0
        %v7886 = vadd.f32 0.0, %v7885
        %v7887 = vpop.f32.mrf.mxu0
        %v7888 = vadd.f32 0.0, %v7887
        %7889 = vmatmul.bf16.gmra.mxu0 %v7826
        %v7890 = vpop.f32.mrf.mxu0
        %v7891 = vadd.f32 0.0, %v7890
        %v7892 = vpop.f32.mrf.mxu0
        %v7893 = vadd.f32 0.0, %v7892
        %7894 = vmatmul.bf16.gmra.mxu0 %v7829
        %v7895 = vpop.f32.mrf.mxu0
        %v7896 = vadd.f32 0.0, %v7895
        %v7897 = vpop.f32.mrf.mxu0
        %v7898 = vadd.f32 0.0, %v7897
        %7899 = vmatmul.bf16.gmra.mxu0 %v7832
        %v7900 = vpop.f32.mrf.mxu0
        %v7901 = vadd.f32 0.0, %v7900
        %v7902 = vpop.f32.mrf.mxu0
        %v7903 = vadd.f32 0.0, %v7902
        %7904 = vmatmul.bf16.gmra.mxu0 %v7835
        %v7905 = vpop.f32.mrf.mxu0
        %v7906 = vadd.f32 0.0, %v7905
        %v7907 = vpop.f32.mrf.mxu0
        %v7908 = vadd.f32 0.0, %v7907
        %7909 = vdwg.mxu0
        %v7926 = vunpack.c.l.b16 %v7235
        %v7927 = vunpack.c.l.b16 %v7236
        %v7928 = vunpack.c.l.b16 %v7237
        %v7929 = vunpack.c.l.b16 %v7238
        %v7930 = vunpack.c.l.b16 %v7239
        %v7931 = vunpack.c.l.b16 %v7240
        %v7932 = vunpack.c.l.b16 %v7241
        %v7933 = vunpack.c.l.b16 %v7242
        %v7934 = vunpack.c.l.b16 %v7243
        %v7935 = vunpack.c.l.b16 %v7244
        %v7936 = vunpack.c.l.b16 %v7245
        %v7937 = vunpack.c.l.b16 %v7246
        %v7938 = vunpack.c.l.b16 %v7247
        %v7939 = vunpack.c.l.b16 %v7248
        %v7940 = vunpack.c.l.b16 %v7249
        %v7941 = vunpack.c.l.b16 %v7250
        %v7942 = vpack.c.b16 %v7927, %v7926
        %v7943 = vpack.c.b16 %v7929, %v7928
        %v7944 = vpack.c.b16 %v7931, %v7930
        %v7945 = vpack.c.b16 %v7933, %v7932
        %v7946 = vpack.c.b16 %v7935, %v7934
        %v7947 = vpack.c.b16 %v7937, %v7936
        %v7948 = vpack.c.b16 %v7939, %v7938
        %v7949 = vpack.c.b16 %v7941, %v7940
        %v7966 = vunpack.c.l.b16 %v7299
        %v7967 = vunpack.c.l.b16 %v7300
        %v7968 = vunpack.c.l.b16 %v7301
        %v7969 = vunpack.c.l.b16 %v7302
        %v7970 = vunpack.c.l.b16 %v7303
        %v7971 = vunpack.c.l.b16 %v7304
        %v7972 = vunpack.c.l.b16 %v7305
        %v7973 = vunpack.c.l.b16 %v7306
        %v7974 = vunpack.c.l.b16 %v7307
        %v7975 = vunpack.c.l.b16 %v7308
        %v7976 = vunpack.c.l.b16 %v7309
        %v7977 = vunpack.c.l.b16 %v7310
        %v7978 = vunpack.c.l.b16 %v7311
        %v7979 = vunpack.c.l.b16 %v7312
        %v7980 = vunpack.c.l.b16 %v7313
        %v7981 = vunpack.c.l.b16 %v7314
        %v7982 = vpack.c.b16 %v7967, %v7966
        %v7983 = vpack.c.b16 %v7969, %v7968
        %v7984 = vpack.c.b16 %v7971, %v7970
        %v7985 = vpack.c.b16 %v7973, %v7972
        %v7986 = vpack.c.b16 %v7975, %v7974
        %v7987 = vpack.c.b16 %v7977, %v7976
        %v7988 = vpack.c.b16 %v7979, %v7978
        %v7989 = vpack.c.b16 %v7981, %v7980
        %v7991 = vsel %vm3234, %v7942, 0
        %v7994 = vsel %vm3234, %v7943, 0
        %v7997 = vsel %vm3234, %v7944, 0
        %v8000 = vsel %vm3234, %v7945, 0
        %v8003 = vsel %vm3234, %v7946, 0
        %v8006 = vsel %vm3234, %v7947, 0
        %v8009 = vsel %vm3234, %v7948, 0
        %v8012 = vsel %vm3234, %v7949, 0
        %v8015 = vsel %vm3234, %v7982, 0
        %v8018 = vsel %vm3234, %v7983, 0
        %v8021 = vsel %vm3234, %v7984, 0
        %v8024 = vsel %vm3234, %v7985, 0
        %v8027 = vsel %vm3234, %v7986, 0
        %v8030 = vsel %vm3234, %v7987, 0
        %v8033 = vsel %vm3234, %v7988, 0
        %v8036 = vsel %vm3234, %v7989, 0
        %8038 = vmatpush.bf16.xpose.msra.mxu0 %v8036
        %8039 = vmatpush.bf16.xpose.msra.mxu0 %v8033
        %8040 = vmatpush.bf16.xpose.msra.mxu0 %v8030
        %8041 = vmatpush.bf16.xpose.msra.mxu0 %v8027
        %8042 = vmatpush.bf16.xpose.msra.mxu0 %v8024
        %8043 = vmatpush.bf16.xpose.msra.mxu0 %v8021
        %8044 = vmatpush.bf16.xpose.msra.mxu0 %v8018
        %8045 = vmatpush.bf16.xpose.msra.mxu0 %v8015
        %8046 = vmatmul.bf16.gmra.mxu0 %v7991
        %v8047 = vpop.f32.mrf.mxu0
        %v8048 = vadd.f32 0.0, %v8047
        %v8049 = vpop.f32.mrf.mxu0
        %v8050 = vadd.f32 0.0, %v8049
        %8051 = vmatmul.bf16.gmra.mxu0 %v7994
        %v8052 = vpop.f32.mrf.mxu0
        %v8053 = vadd.f32 0.0, %v8052
        %v8054 = vpop.f32.mrf.mxu0
        %v8055 = vadd.f32 0.0, %v8054
        %8056 = vmatmul.bf16.gmra.mxu0 %v7997
        %v8057 = vpop.f32.mrf.mxu0
        %v8058 = vadd.f32 0.0, %v8057
        %v8059 = vpop.f32.mrf.mxu0
        %v8060 = vadd.f32 0.0, %v8059
        %8061 = vmatmul.bf16.gmra.mxu0 %v8000
        %v8062 = vpop.f32.mrf.mxu0
        %v8063 = vadd.f32 0.0, %v8062
        %v8064 = vpop.f32.mrf.mxu0
        %v8065 = vadd.f32 0.0, %v8064
        %8066 = vmatmul.bf16.gmra.mxu0 %v8003
        %v8067 = vpop.f32.mrf.mxu0
        %v8068 = vadd.f32 0.0, %v8067
        %v8069 = vpop.f32.mrf.mxu0
        %v8070 = vadd.f32 0.0, %v8069
        %8071 = vmatmul.bf16.gmra.mxu0 %v8006
        %v8072 = vpop.f32.mrf.mxu0
        %v8073 = vadd.f32 0.0, %v8072
        %v8074 = vpop.f32.mrf.mxu0
        %v8075 = vadd.f32 0.0, %v8074
        %8076 = vmatmul.bf16.gmra.mxu0 %v8009
        %v8077 = vpop.f32.mrf.mxu0
        %v8078 = vadd.f32 0.0, %v8077
        %v8079 = vpop.f32.mrf.mxu0
        %v8080 = vadd.f32 0.0, %v8079
        %8081 = vmatmul.bf16.gmra.mxu0 %v8012
        %v8082 = vpop.f32.mrf.mxu0
        %v8083 = vadd.f32 0.0, %v8082
        %v8084 = vpop.f32.mrf.mxu0
        %v8085 = vadd.f32 0.0, %v8084
        %8086 = vdwg.mxu0
        %v8087 = vmul.f32 %v7517, 0.17677669
        %v8088 = vmul.f32 %v7519, 0.17677669
        %v8089 = vmul.f32 %v7522, 0.17677669
        %v8090 = vmul.f32 %v7524, 0.17677669
        %v8091 = vmul.f32 %v7527, 0.17677669
        %v8092 = vmul.f32 %v7529, 0.17677669
        %v8093 = vmul.f32 %v7532, 0.17677669
        %v8094 = vmul.f32 %v7534, 0.17677669
        %v8095 = vmul.f32 %v7537, 0.17677669
        %v8096 = vmul.f32 %v7539, 0.17677669
        %v8097 = vmul.f32 %v7542, 0.17677669
        %v8098 = vmul.f32 %v7544, 0.17677669
        %v8099 = vmul.f32 %v7547, 0.17677669
        %v8100 = vmul.f32 %v7549, 0.17677669
        %v8101 = vmul.f32 %v7552, 0.17677669
        %v8102 = vmul.f32 %v7554, 0.17677669
        %v8103 = vmul.f32 %v7694, 0.17677669
        %v8104 = vmul.f32 %v7696, 0.17677669
        %v8105 = vmul.f32 %v7699, 0.17677669
        %v8106 = vmul.f32 %v7701, 0.17677669
        %v8107 = vmul.f32 %v7704, 0.17677669
        %v8108 = vmul.f32 %v7706, 0.17677669
        %v8109 = vmul.f32 %v7709, 0.17677669
        %v8110 = vmul.f32 %v7711, 0.17677669
        %v8111 = vmul.f32 %v7714, 0.17677669
        %v8112 = vmul.f32 %v7716, 0.17677669
        %v8113 = vmul.f32 %v7719, 0.17677669
        %v8114 = vmul.f32 %v7721, 0.17677669
        %v8115 = vmul.f32 %v7724, 0.17677669
        %v8116 = vmul.f32 %v7726, 0.17677669
        %v8117 = vmul.f32 %v7729, 0.17677669
        %v8118 = vmul.f32 %v7731, 0.17677669
        %v8119 = vmul.f32 %v7871, 0.17677669
        %v8120 = vmul.f32 %v7873, 0.17677669
        %v8121 = vmul.f32 %v7876, 0.17677669
        %v8122 = vmul.f32 %v7878, 0.17677669
        %v8123 = vmul.f32 %v7881, 0.17677669
        %v8124 = vmul.f32 %v7883, 0.17677669
        %v8125 = vmul.f32 %v7886, 0.17677669
        %v8126 = vmul.f32 %v7888, 0.17677669
        %v8127 = vmul.f32 %v7891, 0.17677669
        %v8128 = vmul.f32 %v7893, 0.17677669
        %v8129 = vmul.f32 %v7896, 0.17677669
        %v8130 = vmul.f32 %v7898, 0.17677669
        %v8131 = vmul.f32 %v7901, 0.17677669
        %v8132 = vmul.f32 %v7903, 0.17677669
        %v8133 = vmul.f32 %v7906, 0.17677669
        %v8134 = vmul.f32 %v7908, 0.17677669
        %v8135 = vmul.f32 %v8048, 0.17677669
        %v8136 = vmul.f32 %v8050, 0.17677669
        %v8137 = vmul.f32 %v8053, 0.17677669
        %v8138 = vmul.f32 %v8055, 0.17677669
        %v8139 = vmul.f32 %v8058, 0.17677669
        %v8140 = vmul.f32 %v8060, 0.17677669
        %v8141 = vmul.f32 %v8063, 0.17677669
        %v8142 = vmul.f32 %v8065, 0.17677669
        %v8143 = vmul.f32 %v8068, 0.17677669
        %v8144 = vmul.f32 %v8070, 0.17677669
        %v8145 = vmul.f32 %v8073, 0.17677669
        %v8146 = vmul.f32 %v8075, 0.17677669
        %v8147 = vmul.f32 %v8078, 0.17677669
        %v8148 = vmul.f32 %v8080, 0.17677669
        %v8149 = vmul.f32 %v8083, 0.17677669
        %v8150 = vmul.f32 %v8085, 0.17677669
        %8151 = vmax.xlane.f32.xlu0 %v8087
        %v8152 = vpop.xlane.xlu0 %8151
        %8153 = vmax.xlane.f32.xlu0 %v8088
        %v8154 = vpop.xlane.xlu0 %8153
        %8155 = vmax.xlane.f32.xlu0 %v8089
        %v8156 = vpop.xlane.xlu0 %8155
        %8157 = vmax.xlane.f32.xlu0 %v8090
        %v8158 = vpop.xlane.xlu0 %8157
        %8159 = vmax.xlane.f32.xlu0 %v8091
        %v8160 = vpop.xlane.xlu0 %8159
        %8161 = vmax.xlane.f32.xlu0 %v8092
        %v8162 = vpop.xlane.xlu0 %8161
        %8163 = vmax.xlane.f32.xlu0 %v8093
        %v8164 = vpop.xlane.xlu0 %8163
        %8165 = vmax.xlane.f32.xlu0 %v8094
        %v8166 = vpop.xlane.xlu0 %8165
        %8167 = vmax.xlane.f32.xlu0 %v8095
        %v8168 = vpop.xlane.xlu0 %8167
        %8169 = vmax.xlane.f32.xlu0 %v8096
        %v8170 = vpop.xlane.xlu0 %8169
        %8171 = vmax.xlane.f32.xlu0 %v8097
        %v8172 = vpop.xlane.xlu0 %8171
        %8173 = vmax.xlane.f32.xlu0 %v8098
        %v8174 = vpop.xlane.xlu0 %8173
        %8175 = vmax.xlane.f32.xlu0 %v8099
        %v8176 = vpop.xlane.xlu0 %8175
        %8177 = vmax.xlane.f32.xlu0 %v8100
        %v8178 = vpop.xlane.xlu0 %8177
        %8179 = vmax.xlane.f32.xlu0 %v8101
        %v8180 = vpop.xlane.xlu0 %8179
        %8181 = vmax.xlane.f32.xlu0 %v8102
        %v8182 = vpop.xlane.xlu0 %8181
        %8183 = vmax.xlane.f32.xlu0 %v8103
        %v8184 = vpop.xlane.xlu0 %8183
        %8185 = vmax.xlane.f32.xlu0 %v8104
        %v8186 = vpop.xlane.xlu0 %8185
        %8187 = vmax.xlane.f32.xlu0 %v8105
        %v8188 = vpop.xlane.xlu0 %8187
        %8189 = vmax.xlane.f32.xlu0 %v8106
        %v8190 = vpop.xlane.xlu0 %8189
        %8191 = vmax.xlane.f32.xlu0 %v8107
        %v8192 = vpop.xlane.xlu0 %8191
        %8193 = vmax.xlane.f32.xlu0 %v8108
        %v8194 = vpop.xlane.xlu0 %8193
        %8195 = vmax.xlane.f32.xlu0 %v8109
        %v8196 = vpop.xlane.xlu0 %8195
        %8197 = vmax.xlane.f32.xlu0 %v8110
        %v8198 = vpop.xlane.xlu0 %8197
        %8199 = vmax.xlane.f32.xlu0 %v8111
        %v8200 = vpop.xlane.xlu0 %8199
        %8201 = vmax.xlane.f32.xlu0 %v8112
        %v8202 = vpop.xlane.xlu0 %8201
        %8203 = vmax.xlane.f32.xlu0 %v8113
        %v8204 = vpop.xlane.xlu0 %8203
        %8205 = vmax.xlane.f32.xlu0 %v8114
        %v8206 = vpop.xlane.xlu0 %8205
        %8207 = vmax.xlane.f32.xlu0 %v8115
        %v8208 = vpop.xlane.xlu0 %8207
        %8209 = vmax.xlane.f32.xlu0 %v8116
        %v8210 = vpop.xlane.xlu0 %8209
        %8211 = vmax.xlane.f32.xlu0 %v8117
        %v8212 = vpop.xlane.xlu0 %8211
        %8213 = vmax.xlane.f32.xlu0 %v8118
        %v8214 = vpop.xlane.xlu0 %8213
        %8215 = vmax.xlane.f32.xlu0 %v8119
        %v8216 = vpop.xlane.xlu0 %8215
        %8217 = vmax.xlane.f32.xlu0 %v8120
        %v8218 = vpop.xlane.xlu0 %8217
        %8219 = vmax.xlane.f32.xlu0 %v8121
        %v8220 = vpop.xlane.xlu0 %8219
        %8221 = vmax.xlane.f32.xlu0 %v8122
        %v8222 = vpop.xlane.xlu0 %8221
        %8223 = vmax.xlane.f32.xlu0 %v8123
        %v8224 = vpop.xlane.xlu0 %8223
        %8225 = vmax.xlane.f32.xlu0 %v8124
        %v8226 = vpop.xlane.xlu0 %8225
        %8227 = vmax.xlane.f32.xlu0 %v8125
        %v8228 = vpop.xlane.xlu0 %8227
        %8229 = vmax.xlane.f32.xlu0 %v8126
        %v8230 = vpop.xlane.xlu0 %8229
        %8231 = vmax.xlane.f32.xlu0 %v8127
        %v8232 = vpop.xlane.xlu0 %8231
        %8233 = vmax.xlane.f32.xlu0 %v8128
        %v8234 = vpop.xlane.xlu0 %8233
        %8235 = vmax.xlane.f32.xlu0 %v8129
        %v8236 = vpop.xlane.xlu0 %8235
        %8237 = vmax.xlane.f32.xlu0 %v8130
        %v8238 = vpop.xlane.xlu0 %8237
        %8239 = vmax.xlane.f32.xlu0 %v8131
        %v8240 = vpop.xlane.xlu0 %8239
        %8241 = vmax.xlane.f32.xlu0 %v8132
        %v8242 = vpop.xlane.xlu0 %8241
        %8243 = vmax.xlane.f32.xlu0 %v8133
        %v8244 = vpop.xlane.xlu0 %8243
        %8245 = vmax.xlane.f32.xlu0 %v8134
        %v8246 = vpop.xlane.xlu0 %8245
        %8247 = vmax.xlane.f32.xlu0 %v8135
        %v8248 = vpop.xlane.xlu0 %8247
        %8249 = vmax.xlane.f32.xlu0 %v8136
        %v8250 = vpop.xlane.xlu0 %8249
        %8251 = vmax.xlane.f32.xlu0 %v8137
        %v8252 = vpop.xlane.xlu0 %8251
        %8253 = vmax.xlane.f32.xlu0 %v8138
        %v8254 = vpop.xlane.xlu0 %8253
        %8255 = vmax.xlane.f32.xlu0 %v8139
        %v8256 = vpop.xlane.xlu0 %8255
        %8257 = vmax.xlane.f32.xlu0 %v8140
        %v8258 = vpop.xlane.xlu0 %8257
        %8259 = vmax.xlane.f32.xlu0 %v8141
        %v8260 = vpop.xlane.xlu0 %8259
        %8261 = vmax.xlane.f32.xlu0 %v8142
        %v8262 = vpop.xlane.xlu0 %8261
        %8263 = vmax.xlane.f32.xlu0 %v8143
        %v8264 = vpop.xlane.xlu0 %8263
        %8265 = vmax.xlane.f32.xlu0 %v8144
        %v8266 = vpop.xlane.xlu0 %8265
        %8267 = vmax.xlane.f32.xlu0 %v8145
        %v8268 = vpop.xlane.xlu0 %8267
        %8269 = vmax.xlane.f32.xlu0 %v8146
        %v8270 = vpop.xlane.xlu0 %8269
        %8271 = vmax.xlane.f32.xlu0 %v8147
        %v8272 = vpop.xlane.xlu0 %8271
        %8273 = vmax.xlane.f32.xlu0 %v8148
        %v8274 = vpop.xlane.xlu0 %8273
        %8275 = vmax.xlane.f32.xlu0 %v8149
        %v8276 = vpop.xlane.xlu0 %8275
        %8277 = vmax.xlane.f32.xlu0 %v8150
        %v8278 = vpop.xlane.xlu0 %8277
        %v8279 = vsub.f32 %v8087, %v8152
        %v8280 = vsub.f32 %v8088, %v8154
        %v8281 = vsub.f32 %v8089, %v8156
        %v8282 = vsub.f32 %v8090, %v8158
        %v8283 = vsub.f32 %v8091, %v8160
        %v8284 = vsub.f32 %v8092, %v8162
        %v8285 = vsub.f32 %v8093, %v8164
        %v8286 = vsub.f32 %v8094, %v8166
        %v8287 = vsub.f32 %v8095, %v8168
        %v8288 = vsub.f32 %v8096, %v8170
        %v8289 = vsub.f32 %v8097, %v8172
        %v8290 = vsub.f32 %v8098, %v8174
        %v8291 = vsub.f32 %v8099, %v8176
        %v8292 = vsub.f32 %v8100, %v8178
        %v8293 = vsub.f32 %v8101, %v8180
        %v8294 = vsub.f32 %v8102, %v8182
        %v8295 = vsub.f32 %v8103, %v8184
        %v8296 = vsub.f32 %v8104, %v8186
        %v8297 = vsub.f32 %v8105, %v8188
        %v8298 = vsub.f32 %v8106, %v8190
        %v8299 = vsub.f32 %v8107, %v8192
        %v8300 = vsub.f32 %v8108, %v8194
        %v8301 = vsub.f32 %v8109, %v8196
        %v8302 = vsub.f32 %v8110, %v8198
        %v8303 = vsub.f32 %v8111, %v8200
        %v8304 = vsub.f32 %v8112, %v8202
        %v8305 = vsub.f32 %v8113, %v8204
        %v8306 = vsub.f32 %v8114, %v8206
        %v8307 = vsub.f32 %v8115, %v8208
        %v8308 = vsub.f32 %v8116, %v8210
        %v8309 = vsub.f32 %v8117, %v8212
        %v8310 = vsub.f32 %v8118, %v8214
        %v8311 = vsub.f32 %v8119, %v8216
        %v8312 = vsub.f32 %v8120, %v8218
        %v8313 = vsub.f32 %v8121, %v8220
        %v8314 = vsub.f32 %v8122, %v8222
        %v8315 = vsub.f32 %v8123, %v8224
        %v8316 = vsub.f32 %v8124, %v8226
        %v8317 = vsub.f32 %v8125, %v8228
        %v8318 = vsub.f32 %v8126, %v8230
        %v8319 = vsub.f32 %v8127, %v8232
        %v8320 = vsub.f32 %v8128, %v8234
        %v8321 = vsub.f32 %v8129, %v8236
        %v8322 = vsub.f32 %v8130, %v8238
        %v8323 = vsub.f32 %v8131, %v8240
        %v8324 = vsub.f32 %v8132, %v8242
        %v8325 = vsub.f32 %v8133, %v8244
        %v8326 = vsub.f32 %v8134, %v8246
        %v8327 = vsub.f32 %v8135, %v8248
        %v8328 = vsub.f32 %v8136, %v8250
        %v8329 = vsub.f32 %v8137, %v8252
        %v8330 = vsub.f32 %v8138, %v8254
        %v8331 = vsub.f32 %v8139, %v8256
        %v8332 = vsub.f32 %v8140, %v8258
        %v8333 = vsub.f32 %v8141, %v8260
        %v8334 = vsub.f32 %v8142, %v8262
        %v8335 = vsub.f32 %v8143, %v8264
        %v8336 = vsub.f32 %v8144, %v8266
        %v8337 = vsub.f32 %v8145, %v8268
        %v8338 = vsub.f32 %v8146, %v8270
        %v8339 = vsub.f32 %v8147, %v8272
        %v8340 = vsub.f32 %v8148, %v8274
        %v8341 = vsub.f32 %v8149, %v8276
        %v8342 = vsub.f32 %v8150, %v8278
        %v8343 = vmul.f32 %v8279, 1.442695
        %v8344 = vpow.pop %v8343
        %v8345 = vmul.f32 %v8280, 1.442695
        %v8346 = vpow.pop %v8345
        %v8347 = vmul.f32 %v8281, 1.442695
        %v8348 = vpow.pop %v8347
        %v8349 = vmul.f32 %v8282, 1.442695
        %v8350 = vpow.pop %v8349
        %v8351 = vmul.f32 %v8283, 1.442695
        %v8352 = vpow.pop %v8351
        %v8353 = vmul.f32 %v8284, 1.442695
        %v8354 = vpow.pop %v8353
        %v8355 = vmul.f32 %v8285, 1.442695
        %v8356 = vpow.pop %v8355
        %v8357 = vmul.f32 %v8286, 1.442695
        %v8358 = vpow.pop %v8357
        %v8359 = vmul.f32 %v8287, 1.442695
        %v8360 = vpow.pop %v8359
        %v8361 = vmul.f32 %v8288, 1.442695
        %v8362 = vpow.pop %v8361
        %v8363 = vmul.f32 %v8289, 1.442695
        %v8364 = vpow.pop %v8363
        %v8365 = vmul.f32 %v8290, 1.442695
        %v8366 = vpow.pop %v8365
        %v8367 = vmul.f32 %v8291, 1.442695
        %v8368 = vpow.pop %v8367
        %v8369 = vmul.f32 %v8292, 1.442695
        %v8370 = vpow.pop %v8369
        %v8371 = vmul.f32 %v8293, 1.442695
        %v8372 = vpow.pop %v8371
        %v8373 = vmul.f32 %v8294, 1.442695
        %v8374 = vpow.pop %v8373
        %v8375 = vmul.f32 %v8295, 1.442695
        %v8376 = vpow.pop %v8375
        %v8377 = vmul.f32 %v8296, 1.442695
        %v8378 = vpow.pop %v8377
        %v8379 = vmul.f32 %v8297, 1.442695
        %v8380 = vpow.pop %v8379
        %v8381 = vmul.f32 %v8298, 1.442695
        %v8382 = vpow.pop %v8381
        %v8383 = vmul.f32 %v8299, 1.442695
        %v8384 = vpow.pop %v8383
        %v8385 = vmul.f32 %v8300, 1.442695
        %v8386 = vpow.pop %v8385
        %v8387 = vmul.f32 %v8301, 1.442695
        %v8388 = vpow.pop %v8387
        %v8389 = vmul.f32 %v8302, 1.442695
        %v8390 = vpow.pop %v8389
        %v8391 = vmul.f32 %v8303, 1.442695
        %v8392 = vpow.pop %v8391
        %v8393 = vmul.f32 %v8304, 1.442695
        %v8394 = vpow.pop %v8393
        %v8395 = vmul.f32 %v8305, 1.442695
        %v8396 = vpow.pop %v8395
        %v8397 = vmul.f32 %v8306, 1.442695
        %v8398 = vpow.pop %v8397
        %v8399 = vmul.f32 %v8307, 1.442695
        %v8400 = vpow.pop %v8399
        %v8401 = vmul.f32 %v8308, 1.442695
        %v8402 = vpow.pop %v8401
        %v8403 = vmul.f32 %v8309, 1.442695
        %v8404 = vpow.pop %v8403
        %v8405 = vmul.f32 %v8310, 1.442695
        %v8406 = vpow.pop %v8405
        %v8407 = vmul.f32 %v8311, 1.442695
        %v8408 = vpow.pop %v8407
        %v8409 = vmul.f32 %v8312, 1.442695
        %v8410 = vpow.pop %v8409
        %v8411 = vmul.f32 %v8313, 1.442695
        %v8412 = vpow.pop %v8411
        %v8413 = vmul.f32 %v8314, 1.442695
        %v8414 = vpow.pop %v8413
        %v8415 = vmul.f32 %v8315, 1.442695
        %v8416 = vpow.pop %v8415
        %v8417 = vmul.f32 %v8316, 1.442695
        %v8418 = vpow.pop %v8417
        %v8419 = vmul.f32 %v8317, 1.442695
        %v8420 = vpow.pop %v8419
        %v8421 = vmul.f32 %v8318, 1.442695
        %v8422 = vpow.pop %v8421
        %v8423 = vmul.f32 %v8319, 1.442695
        %v8424 = vpow.pop %v8423
        %v8425 = vmul.f32 %v8320, 1.442695
        %v8426 = vpow.pop %v8425
        %v8427 = vmul.f32 %v8321, 1.442695
        %v8428 = vpow.pop %v8427
        %v8429 = vmul.f32 %v8322, 1.442695
        %v8430 = vpow.pop %v8429
        %v8431 = vmul.f32 %v8323, 1.442695
        %v8432 = vpow.pop %v8431
        %v8433 = vmul.f32 %v8324, 1.442695
        %v8434 = vpow.pop %v8433
        %v8435 = vmul.f32 %v8325, 1.442695
        %v8436 = vpow.pop %v8435
        %v8437 = vmul.f32 %v8326, 1.442695
        %v8438 = vpow.pop %v8437
        %v8439 = vmul.f32 %v8327, 1.442695
        %v8440 = vpow.pop %v8439
        %v8441 = vmul.f32 %v8328, 1.442695
        %v8442 = vpow.pop %v8441
        %v8443 = vmul.f32 %v8329, 1.442695
        %v8444 = vpow.pop %v8443
        %v8445 = vmul.f32 %v8330, 1.442695
        %v8446 = vpow.pop %v8445
        %v8447 = vmul.f32 %v8331, 1.442695
        %v8448 = vpow.pop %v8447
        %v8449 = vmul.f32 %v8332, 1.442695
        %v8450 = vpow.pop %v8449
        %v8451 = vmul.f32 %v8333, 1.442695
        %v8452 = vpow.pop %v8451
        %v8453 = vmul.f32 %v8334, 1.442695
        %v8454 = vpow.pop %v8453
        %v8455 = vmul.f32 %v8335, 1.442695
        %v8456 = vpow.pop %v8455
        %v8457 = vmul.f32 %v8336, 1.442695
        %v8458 = vpow.pop %v8457
        %v8459 = vmul.f32 %v8337, 1.442695
        %v8460 = vpow.pop %v8459
        %v8461 = vmul.f32 %v8338, 1.442695
        %v8462 = vpow.pop %v8461
        %v8463 = vmul.f32 %v8339, 1.442695
        %v8464 = vpow.pop %v8463
        %v8465 = vmul.f32 %v8340, 1.442695
        %v8466 = vpow.pop %v8465
        %v8467 = vmul.f32 %v8341, 1.442695
        %v8468 = vpow.pop %v8467
        %v8469 = vmul.f32 %v8342, 1.442695
        %v8470 = vpow.pop %v8469
        %8471 = vadd.xlane.f32.xlu0 %v8344
        %v8472 = vpop.xlane.xlu0 %8471
        %8473 = vadd.xlane.f32.xlu0 %v8346
        %v8474 = vpop.xlane.xlu0 %8473
        %8475 = vadd.xlane.f32.xlu0 %v8348
        %v8476 = vpop.xlane.xlu0 %8475
        %8477 = vadd.xlane.f32.xlu0 %v8350
        %v8478 = vpop.xlane.xlu0 %8477
        %8479 = vadd.xlane.f32.xlu0 %v8352
        %v8480 = vpop.xlane.xlu0 %8479
        %8481 = vadd.xlane.f32.xlu0 %v8354
        %v8482 = vpop.xlane.xlu0 %8481
        %8483 = vadd.xlane.f32.xlu0 %v8356
        %v8484 = vpop.xlane.xlu0 %8483
        %8485 = vadd.xlane.f32.xlu0 %v8358
        %v8486 = vpop.xlane.xlu0 %8485
        %8487 = vadd.xlane.f32.xlu0 %v8360
        %v8488 = vpop.xlane.xlu0 %8487
        %8489 = vadd.xlane.f32.xlu0 %v8362
        %v8490 = vpop.xlane.xlu0 %8489
        %8491 = vadd.xlane.f32.xlu0 %v8364
        %v8492 = vpop.xlane.xlu0 %8491
        %8493 = vadd.xlane.f32.xlu0 %v8366
        %v8494 = vpop.xlane.xlu0 %8493
        %8495 = vadd.xlane.f32.xlu0 %v8368
        %v8496 = vpop.xlane.xlu0 %8495
        %8497 = vadd.xlane.f32.xlu0 %v8370
        %v8498 = vpop.xlane.xlu0 %8497
        %8499 = vadd.xlane.f32.xlu0 %v8372
        %v8500 = vpop.xlane.xlu0 %8499
        %8501 = vadd.xlane.f32.xlu0 %v8374
        %v8502 = vpop.xlane.xlu0 %8501
        %8503 = vadd.xlane.f32.xlu0 %v8376
        %v8504 = vpop.xlane.xlu0 %8503
        %8505 = vadd.xlane.f32.xlu0 %v8378
        %v8506 = vpop.xlane.xlu0 %8505
        %8507 = vadd.xlane.f32.xlu0 %v8380
        %v8508 = vpop.xlane.xlu0 %8507
        %8509 = vadd.xlane.f32.xlu0 %v8382
        %v8510 = vpop.xlane.xlu0 %8509
        %8511 = vadd.xlane.f32.xlu0 %v8384
        %v8512 = vpop.xlane.xlu0 %8511
        %8513 = vadd.xlane.f32.xlu0 %v8386
        %v8514 = vpop.xlane.xlu0 %8513
        %8515 = vadd.xlane.f32.xlu0 %v8388
        %v8516 = vpop.xlane.xlu0 %8515
        %8517 = vadd.xlane.f32.xlu0 %v8390
        %v8518 = vpop.xlane.xlu0 %8517
        %8519 = vadd.xlane.f32.xlu0 %v8392
        %v8520 = vpop.xlane.xlu0 %8519
        %8521 = vadd.xlane.f32.xlu0 %v8394
        %v8522 = vpop.xlane.xlu0 %8521
        %8523 = vadd.xlane.f32.xlu0 %v8396
        %v8524 = vpop.xlane.xlu0 %8523
        %8525 = vadd.xlane.f32.xlu0 %v8398
        %v8526 = vpop.xlane.xlu0 %8525
        %8527 = vadd.xlane.f32.xlu0 %v8400
        %v8528 = vpop.xlane.xlu0 %8527
        %8529 = vadd.xlane.f32.xlu0 %v8402
        %v8530 = vpop.xlane.xlu0 %8529
        %8531 = vadd.xlane.f32.xlu0 %v8404
        %v8532 = vpop.xlane.xlu0 %8531
        %8533 = vadd.xlane.f32.xlu0 %v8406
        %v8534 = vpop.xlane.xlu0 %8533
        %8535 = vadd.xlane.f32.xlu0 %v8408
        %v8536 = vpop.xlane.xlu0 %8535
        %8537 = vadd.xlane.f32.xlu0 %v8410
        %v8538 = vpop.xlane.xlu0 %8537
        %8539 = vadd.xlane.f32.xlu0 %v8412
        %v8540 = vpop.xlane.xlu0 %8539
        %8541 = vadd.xlane.f32.xlu0 %v8414
        %v8542 = vpop.xlane.xlu0 %8541
        %8543 = vadd.xlane.f32.xlu0 %v8416
        %v8544 = vpop.xlane.xlu0 %8543
        %8545 = vadd.xlane.f32.xlu0 %v8418
        %v8546 = vpop.xlane.xlu0 %8545
        %8547 = vadd.xlane.f32.xlu0 %v8420
        %v8548 = vpop.xlane.xlu0 %8547
        %8549 = vadd.xlane.f32.xlu0 %v8422
        %v8550 = vpop.xlane.xlu0 %8549
        %8551 = vadd.xlane.f32.xlu0 %v8424
        %v8552 = vpop.xlane.xlu0 %8551
        %8553 = vadd.xlane.f32.xlu0 %v8426
        %v8554 = vpop.xlane.xlu0 %8553
        %8555 = vadd.xlane.f32.xlu0 %v8428
        %v8556 = vpop.xlane.xlu0 %8555
        %8557 = vadd.xlane.f32.xlu0 %v8430
        %v8558 = vpop.xlane.xlu0 %8557
        %8559 = vadd.xlane.f32.xlu0 %v8432
        %v8560 = vpop.xlane.xlu0 %8559
        %8561 = vadd.xlane.f32.xlu0 %v8434
        %v8562 = vpop.xlane.xlu0 %8561
        %8563 = vadd.xlane.f32.xlu0 %v8436
        %v8564 = vpop.xlane.xlu0 %8563
        %8565 = vadd.xlane.f32.xlu0 %v8438
        %v8566 = vpop.xlane.xlu0 %8565
        %8567 = vadd.xlane.f32.xlu0 %v8440
        %v8568 = vpop.xlane.xlu0 %8567
        %8569 = vadd.xlane.f32.xlu0 %v8442
        %v8570 = vpop.xlane.xlu0 %8569
        %8571 = vadd.xlane.f32.xlu0 %v8444
        %v8572 = vpop.xlane.xlu0 %8571
        %8573 = vadd.xlane.f32.xlu0 %v8446
        %v8574 = vpop.xlane.xlu0 %8573
        %8575 = vadd.xlane.f32.xlu0 %v8448
        %v8576 = vpop.xlane.xlu0 %8575
        %8577 = vadd.xlane.f32.xlu0 %v8450
        %v8578 = vpop.xlane.xlu0 %8577
        %8579 = vadd.xlane.f32.xlu0 %v8452
        %v8580 = vpop.xlane.xlu0 %8579
        %8581 = vadd.xlane.f32.xlu0 %v8454
        %v8582 = vpop.xlane.xlu0 %8581
        %8583 = vadd.xlane.f32.xlu0 %v8456
        %v8584 = vpop.xlane.xlu0 %8583
        %8585 = vadd.xlane.f32.xlu0 %v8458
        %v8586 = vpop.xlane.xlu0 %8585
        %8587 = vadd.xlane.f32.xlu0 %v8460
        %v8588 = vpop.xlane.xlu0 %8587
        %8589 = vadd.xlane.f32.xlu0 %v8462
        %v8590 = vpop.xlane.xlu0 %8589
        %8591 = vadd.xlane.f32.xlu0 %v8464
        %v8592 = vpop.xlane.xlu0 %8591
        %8593 = vadd.xlane.f32.xlu0 %v8466
        %v8594 = vpop.xlane.xlu0 %8593
        %8595 = vadd.xlane.f32.xlu0 %v8468
        %v8596 = vpop.xlane.xlu0 %8595
        %8597 = vadd.xlane.f32.xlu0 %v8470
        %v8598 = vpop.xlane.xlu0 %8597
        %v8599 = vrcp.pop %v8472
        %v8600 = vrcp.pop %v8474
        %v8601 = vrcp.pop %v8476
        %v8602 = vrcp.pop %v8478
        %v8603 = vrcp.pop %v8480
        %v8604 = vrcp.pop %v8482
        %v8605 = vrcp.pop %v8484
        %v8606 = vrcp.pop %v8486
        %v8607 = vrcp.pop %v8488
        %v8608 = vrcp.pop %v8490
        %v8609 = vrcp.pop %v8492
        %v8610 = vrcp.pop %v8494
        %v8611 = vrcp.pop %v8496
        %v8612 = vrcp.pop %v8498
        %v8613 = vrcp.pop %v8500
        %v8614 = vrcp.pop %v8502
        %v8615 = vrcp.pop %v8504
        %v8616 = vrcp.pop %v8506
        %v8617 = vrcp.pop %v8508
        %v8618 = vrcp.pop %v8510
        %v8619 = vrcp.pop %v8512
        %v8620 = vrcp.pop %v8514
        %v8621 = vrcp.pop %v8516
        %v8622 = vrcp.pop %v8518
        %v8623 = vrcp.pop %v8520
        %v8624 = vrcp.pop %v8522
        %v8625 = vrcp.pop %v8524
        %v8626 = vrcp.pop %v8526
        %v8627 = vrcp.pop %v8528
        %v8628 = vrcp.pop %v8530
        %v8629 = vrcp.pop %v8532
        %v8630 = vrcp.pop %v8534
        %v8631 = vrcp.pop %v8536
        %v8632 = vrcp.pop %v8538
        %v8633 = vrcp.pop %v8540
        %v8634 = vrcp.pop %v8542
        %v8635 = vrcp.pop %v8544
        %v8636 = vrcp.pop %v8546
        %v8637 = vrcp.pop %v8548
        %v8638 = vrcp.pop %v8550
        %v8639 = vrcp.pop %v8552
        %v8640 = vrcp.pop %v8554
        %v8641 = vrcp.pop %v8556
        %v8642 = vrcp.pop %v8558
        %v8643 = vrcp.pop %v8560
        %v8644 = vrcp.pop %v8562
        %v8645 = vrcp.pop %v8564
        %v8646 = vrcp.pop %v8566
        %v8647 = vrcp.pop %v8568
        %v8648 = vrcp.pop %v8570
        %v8649 = vrcp.pop %v8572
        %v8650 = vrcp.pop %v8574
        %v8651 = vrcp.pop %v8576
        %v8652 = vrcp.pop %v8578
        %v8653 = vrcp.pop %v8580
        %v8654 = vrcp.pop %v8582
        %v8655 = vrcp.pop %v8584
        %v8656 = vrcp.pop %v8586
        %v8657 = vrcp.pop %v8588
        %v8658 = vrcp.pop %v8590
        %v8659 = vrcp.pop %v8592
        %v8660 = vrcp.pop %v8594
        %v8661 = vrcp.pop %v8596
        %v8662 = vrcp.pop %v8598
        %v8663 = vmul.f32 %v8344, %v8599
        %v8664 = vmul.f32 %v8346, %v8600
        %v8665 = vmul.f32 %v8348, %v8601
        %v8666 = vmul.f32 %v8350, %v8602
        %v8667 = vmul.f32 %v8352, %v8603
        %v8668 = vmul.f32 %v8354, %v8604
        %v8669 = vmul.f32 %v8356, %v8605
        %v8670 = vmul.f32 %v8358, %v8606
        %v8671 = vmul.f32 %v8360, %v8607
        %v8672 = vmul.f32 %v8362, %v8608
        %v8673 = vmul.f32 %v8364, %v8609
        %v8674 = vmul.f32 %v8366, %v8610
        %v8675 = vmul.f32 %v8368, %v8611
        %v8676 = vmul.f32 %v8370, %v8612
        %v8677 = vmul.f32 %v8372, %v8613
        %v8678 = vmul.f32 %v8374, %v8614
        %v8679 = vmul.f32 %v8376, %v8615
        %v8680 = vmul.f32 %v8378, %v8616
        %v8681 = vmul.f32 %v8380, %v8617
        %v8682 = vmul.f32 %v8382, %v8618
        %v8683 = vmul.f32 %v8384, %v8619
        %v8684 = vmul.f32 %v8386, %v8620
        %v8685 = vmul.f32 %v8388, %v8621
        %v8686 = vmul.f32 %v8390, %v8622
        %v8687 = vmul.f32 %v8392, %v8623
        %v8688 = vmul.f32 %v8394, %v8624
        %v8689 = vmul.f32 %v8396, %v8625
        %v8690 = vmul.f32 %v8398, %v8626
        %v8691 = vmul.f32 %v8400, %v8627
        %v8692 = vmul.f32 %v8402, %v8628
        %v8693 = vmul.f32 %v8404, %v8629
        %v8694 = vmul.f32 %v8406, %v8630
        %v8695 = vmul.f32 %v8408, %v8631
        %v8696 = vmul.f32 %v8410, %v8632
        %v8697 = vmul.f32 %v8412, %v8633
        %v8698 = vmul.f32 %v8414, %v8634
        %v8699 = vmul.f32 %v8416, %v8635
        %v8700 = vmul.f32 %v8418, %v8636
        %v8701 = vmul.f32 %v8420, %v8637
        %v8702 = vmul.f32 %v8422, %v8638
        %v8703 = vmul.f32 %v8424, %v8639
        %v8704 = vmul.f32 %v8426, %v8640
        %v8705 = vmul.f32 %v8428, %v8641
        %v8706 = vmul.f32 %v8430, %v8642
        %v8707 = vmul.f32 %v8432, %v8643
        %v8708 = vmul.f32 %v8434, %v8644
        %v8709 = vmul.f32 %v8436, %v8645
        %v8710 = vmul.f32 %v8438, %v8646
        %v8711 = vmul.f32 %v8440, %v8647
        %v8712 = vmul.f32 %v8442, %v8648
        %v8713 = vmul.f32 %v8444, %v8649
        %v8714 = vmul.f32 %v8446, %v8650
        %v8715 = vmul.f32 %v8448, %v8651
        %v8716 = vmul.f32 %v8450, %v8652
        %v8717 = vmul.f32 %v8452, %v8653
        %v8718 = vmul.f32 %v8454, %v8654
        %v8719 = vmul.f32 %v8456, %v8655
        %v8720 = vmul.f32 %v8458, %v8656
        %v8721 = vmul.f32 %v8460, %v8657
        %v8722 = vmul.f32 %v8462, %v8658
        %v8723 = vmul.f32 %v8464, %v8659
        %v8724 = vmul.f32 %v8466, %v8660
        %v8725 = vmul.f32 %v8468, %v8661
        %v8726 = vmul.f32 %v8470, %v8662
        %v8727 = vpack.c.bf16 %v8663, %v8663
        %v8728 = vpack.c.bf16 %v8664, %v8664
        %v8729 = vpack.c.bf16 %v8665, %v8665
        %v8730 = vpack.c.bf16 %v8666, %v8666
        %v8731 = vpack.c.bf16 %v8667, %v8667
        %v8732 = vpack.c.bf16 %v8668, %v8668
        %v8733 = vpack.c.bf16 %v8669, %v8669
        %v8734 = vpack.c.bf16 %v8670, %v8670
        %v8735 = vpack.c.bf16 %v8671, %v8671
        %v8736 = vpack.c.bf16 %v8672, %v8672
        %v8737 = vpack.c.bf16 %v8673, %v8673
        %v8738 = vpack.c.bf16 %v8674, %v8674
        %v8739 = vpack.c.bf16 %v8675, %v8675
        %v8740 = vpack.c.bf16 %v8676, %v8676
        %v8741 = vpack.c.bf16 %v8677, %v8677
        %v8742 = vpack.c.bf16 %v8678, %v8678
        %v8743 = vpack.c.bf16 %v8679, %v8679
        %v8744 = vpack.c.bf16 %v8680, %v8680
        %v8745 = vpack.c.bf16 %v8681, %v8681
        %v8746 = vpack.c.bf16 %v8682, %v8682
        %v8747 = vpack.c.bf16 %v8683, %v8683
        %v8748 = vpack.c.bf16 %v8684, %v8684
        %v8749 = vpack.c.bf16 %v8685, %v8685
        %v8750 = vpack.c.bf16 %v8686, %v8686
        %v8751 = vpack.c.bf16 %v8687, %v8687
        %v8752 = vpack.c.bf16 %v8688, %v8688
        %v8753 = vpack.c.bf16 %v8689, %v8689
        %v8754 = vpack.c.bf16 %v8690, %v8690
        %v8755 = vpack.c.bf16 %v8691, %v8691
        %v8756 = vpack.c.bf16 %v8692, %v8692
        %v8757 = vpack.c.bf16 %v8693, %v8693
        %v8758 = vpack.c.bf16 %v8694, %v8694
        %v8759 = vpack.c.bf16 %v8695, %v8695
        %v8760 = vpack.c.bf16 %v8696, %v8696
        %v8761 = vpack.c.bf16 %v8697, %v8697
        %v8762 = vpack.c.bf16 %v8698, %v8698
        %v8763 = vpack.c.bf16 %v8699, %v8699
        %v8764 = vpack.c.bf16 %v8700, %v8700
        %v8765 = vpack.c.bf16 %v8701, %v8701
        %v8766 = vpack.c.bf16 %v8702, %v8702
        %v8767 = vpack.c.bf16 %v8703, %v8703
        %v8768 = vpack.c.bf16 %v8704, %v8704
        %v8769 = vpack.c.bf16 %v8705, %v8705
        %v8770 = vpack.c.bf16 %v8706, %v8706
        %v8771 = vpack.c.bf16 %v8707, %v8707
        %v8772 = vpack.c.bf16 %v8708, %v8708
        %v8773 = vpack.c.bf16 %v8709, %v8709
        %v8774 = vpack.c.bf16 %v8710, %v8710
        %v8775 = vpack.c.bf16 %v8711, %v8711
        %v8776 = vpack.c.bf16 %v8712, %v8712
        %v8777 = vpack.c.bf16 %v8713, %v8713
        %v8778 = vpack.c.bf16 %v8714, %v8714
        %v8779 = vpack.c.bf16 %v8715, %v8715
        %v8780 = vpack.c.bf16 %v8716, %v8716
        %v8781 = vpack.c.bf16 %v8717, %v8717
        %v8782 = vpack.c.bf16 %v8718, %v8718
        %v8783 = vpack.c.bf16 %v8719, %v8719
        %v8784 = vpack.c.bf16 %v8720, %v8720
        %v8785 = vpack.c.bf16 %v8721, %v8721
        %v8786 = vpack.c.bf16 %v8722, %v8722
        %v8787 = vpack.c.bf16 %v8723, %v8723
        %v8788 = vpack.c.bf16 %v8724, %v8724
        %v8789 = vpack.c.bf16 %v8725, %v8725
        %v8790 = vpack.c.bf16 %v8726, %v8726
        %v8807 = vunpack.c.l.b16 %v8727
        %v8808 = vunpack.c.l.b16 %v8728
        %v8809 = vunpack.c.l.b16 %v8729
        %v8810 = vunpack.c.l.b16 %v8730
        %v8811 = vunpack.c.l.b16 %v8731
        %v8812 = vunpack.c.l.b16 %v8732
        %v8813 = vunpack.c.l.b16 %v8733
        %v8814 = vunpack.c.l.b16 %v8734
        %v8815 = vunpack.c.l.b16 %v8735
        %v8816 = vunpack.c.l.b16 %v8736
        %v8817 = vunpack.c.l.b16 %v8737
        %v8818 = vunpack.c.l.b16 %v8738
        %v8819 = vunpack.c.l.b16 %v8739
        %v8820 = vunpack.c.l.b16 %v8740
        %v8821 = vunpack.c.l.b16 %v8741
        %v8822 = vunpack.c.l.b16 %v8742
        %v8823 = vpack.c.b16 %v8808, %v8807
        %v8824 = vpack.c.b16 %v8810, %v8809
        %v8825 = vpack.c.b16 %v8812, %v8811
        %v8826 = vpack.c.b16 %v8814, %v8813
        %v8827 = vpack.c.b16 %v8816, %v8815
        %v8828 = vpack.c.b16 %v8818, %v8817
        %v8829 = vpack.c.b16 %v8820, %v8819
        %v8830 = vpack.c.b16 %v8822, %v8821
        %v8855 = vunpack.c.l.b16 %v7315
        %v8856 = vunpack.c.l.b16 %v7316
        %v8857 = vunpack.c.l.b16 %v7317
        %v8858 = vunpack.c.l.b16 %v7318
        %v8859 = vunpack.c.l.b16 %v7319
        %v8860 = vunpack.c.l.b16 %v7320
        %v8861 = vunpack.c.l.b16 %v7321
        %v8862 = vunpack.c.l.b16 %v7322
        %v8863 = vunpack.c.l.b16 %v7323
        %v8864 = vunpack.c.l.b16 %v7324
        %v8865 = vunpack.c.l.b16 %v7325
        %v8866 = vunpack.c.l.b16 %v7326
        %v8867 = vunpack.c.l.b16 %v7327
        %v8868 = vunpack.c.l.b16 %v7328
        %v8869 = vunpack.c.l.b16 %v7329
        %v8870 = vunpack.c.l.b16 %v7330
        %v8871 = vpack.c.b16 %v8856, %v8855
        %v8872 = vpack.c.b16 %v8858, %v8857
        %v8873 = vpack.c.b16 %v8860, %v8859
        %v8874 = vpack.c.b16 %v8862, %v8861
        %v8875 = vpack.c.b16 %v8864, %v8863
        %v8876 = vpack.c.b16 %v8866, %v8865
        %v8877 = vpack.c.b16 %v8868, %v8867
        %v8878 = vpack.c.b16 %v8870, %v8869
        %8887 = vmatpush.bf16.msra.mxu0 %v8878
        %8888 = vmatpush.bf16.msra.mxu0 %v8877
        %8889 = vmatpush.bf16.msra.mxu0 %v8876
        %8890 = vmatpush.bf16.msra.mxu0 %v8875
        %8891 = vmatpush.bf16.msra.mxu0 %v8874
        %8892 = vmatpush.bf16.msra.mxu0 %v8873
        %8893 = vmatpush.bf16.msra.mxu0 %v8872
        %8894 = vmatpush.bf16.msra.mxu0 %v8871
        %8895 = vmatmul.bf16.gmra.mxu0 %v8823
        %v8896 = vpop.f32.mrf.mxu0
        %v8897 = vadd.f32 0.0, %v8896
        %v8898 = vpop.f32.mrf.mxu0
        %v8899 = vadd.f32 0.0, %v8898
        %8900 = vmatmul.bf16.gmra.mxu0 %v8824
        %v8901 = vpop.f32.mrf.mxu0
        %v8902 = vadd.f32 0.0, %v8901
        %v8903 = vpop.f32.mrf.mxu0
        %v8904 = vadd.f32 0.0, %v8903
        %8905 = vmatmul.bf16.gmra.mxu0 %v8825
        %v8906 = vpop.f32.mrf.mxu0
        %v8907 = vadd.f32 0.0, %v8906
        %v8908 = vpop.f32.mrf.mxu0
        %v8909 = vadd.f32 0.0, %v8908
        %8910 = vmatmul.bf16.gmra.mxu0 %v8826
        %v8911 = vpop.f32.mrf.mxu0
        %v8912 = vadd.f32 0.0, %v8911
        %v8913 = vpop.f32.mrf.mxu0
        %v8914 = vadd.f32 0.0, %v8913
        %8915 = vmatmul.bf16.gmra.mxu0 %v8827
        %v8916 = vpop.f32.mrf.mxu0
        %v8917 = vadd.f32 0.0, %v8916
        %v8918 = vpop.f32.mrf.mxu0
        %v8919 = vadd.f32 0.0, %v8918
        %8920 = vmatmul.bf16.gmra.mxu0 %v8828
        %v8921 = vpop.f32.mrf.mxu0
        %v8922 = vadd.f32 0.0, %v8921
        %v8923 = vpop.f32.mrf.mxu0
        %v8924 = vadd.f32 0.0, %v8923
        %8925 = vmatmul.bf16.gmra.mxu0 %v8829
        %v8926 = vpop.f32.mrf.mxu0
        %v8927 = vadd.f32 0.0, %v8926
        %v8928 = vpop.f32.mrf.mxu0
        %v8929 = vadd.f32 0.0, %v8928
        %8930 = vmatmul.bf16.gmra.mxu0 %v8830
        %v8931 = vpop.f32.mrf.mxu0
        %v8932 = vadd.f32 0.0, %v8931
        %v8933 = vpop.f32.mrf.mxu0
        %v8934 = vadd.f32 0.0, %v8933
        %8935 = vdwg.mxu0
        %v8952 = vunpack.c.l.b16 %v8743
        %v8953 = vunpack.c.l.b16 %v8744
        %v8954 = vunpack.c.l.b16 %v8745
        %v8955 = vunpack.c.l.b16 %v8746
        %v8956 = vunpack.c.l.b16 %v8747
        %v8957 = vunpack.c.l.b16 %v8748
        %v8958 = vunpack.c.l.b16 %v8749
        %v8959 = vunpack.c.l.b16 %v8750
        %v8960 = vunpack.c.l.b16 %v8751
        %v8961 = vunpack.c.l.b16 %v8752
        %v8962 = vunpack.c.l.b16 %v8753
        %v8963 = vunpack.c.l.b16 %v8754
        %v8964 = vunpack.c.l.b16 %v8755
        %v8965 = vunpack.c.l.b16 %v8756
        %v8966 = vunpack.c.l.b16 %v8757
        %v8967 = vunpack.c.l.b16 %v8758
        %v8968 = vpack.c.b16 %v8953, %v8952
        %v8969 = vpack.c.b16 %v8955, %v8954
        %v8970 = vpack.c.b16 %v8957, %v8956
        %v8971 = vpack.c.b16 %v8959, %v8958
        %v8972 = vpack.c.b16 %v8961, %v8960
        %v8973 = vpack.c.b16 %v8963, %v8962
        %v8974 = vpack.c.b16 %v8965, %v8964
        %v8975 = vpack.c.b16 %v8967, %v8966
        %v9000 = vunpack.c.l.b16 %v7331
        %v9001 = vunpack.c.l.b16 %v7332
        %v9002 = vunpack.c.l.b16 %v7333
        %v9003 = vunpack.c.l.b16 %v7334
        %v9004 = vunpack.c.l.b16 %v7335
        %v9005 = vunpack.c.l.b16 %v7336
        %v9006 = vunpack.c.l.b16 %v7337
        %v9007 = vunpack.c.l.b16 %v7338
        %v9008 = vunpack.c.l.b16 %v7339
        %v9009 = vunpack.c.l.b16 %v7340
        %v9010 = vunpack.c.l.b16 %v7341
        %v9011 = vunpack.c.l.b16 %v7342
        %v9012 = vunpack.c.l.b16 %v7343
        %v9013 = vunpack.c.l.b16 %v7344
        %v9014 = vunpack.c.l.b16 %v7345
        %v9015 = vunpack.c.l.b16 %v7346
        %v9016 = vpack.c.b16 %v9001, %v9000
        %v9017 = vpack.c.b16 %v9003, %v9002
        %v9018 = vpack.c.b16 %v9005, %v9004
        %v9019 = vpack.c.b16 %v9007, %v9006
        %v9020 = vpack.c.b16 %v9009, %v9008
        %v9021 = vpack.c.b16 %v9011, %v9010
        %v9022 = vpack.c.b16 %v9013, %v9012
        %v9023 = vpack.c.b16 %v9015, %v9014
        %9032 = vmatpush.bf16.msra.mxu0 %v9023
        %9033 = vmatpush.bf16.msra.mxu0 %v9022
        %9034 = vmatpush.bf16.msra.mxu0 %v9021
        %9035 = vmatpush.bf16.msra.mxu0 %v9020
        %9036 = vmatpush.bf16.msra.mxu0 %v9019
        %9037 = vmatpush.bf16.msra.mxu0 %v9018
        %9038 = vmatpush.bf16.msra.mxu0 %v9017
        %9039 = vmatpush.bf16.msra.mxu0 %v9016
        %9040 = vmatmul.bf16.gmra.mxu0 %v8968
        %v9041 = vpop.f32.mrf.mxu0
        %v9042 = vadd.f32 0.0, %v9041
        %v9043 = vpop.f32.mrf.mxu0
        %v9044 = vadd.f32 0.0, %v9043
        %9045 = vmatmul.bf16.gmra.mxu0 %v8969
        %v9046 = vpop.f32.mrf.mxu0
        %v9047 = vadd.f32 0.0, %v9046
        %v9048 = vpop.f32.mrf.mxu0
        %v9049 = vadd.f32 0.0, %v9048
        %9050 = vmatmul.bf16.gmra.mxu0 %v8970
        %v9051 = vpop.f32.mrf.mxu0
        %v9052 = vadd.f32 0.0, %v9051
        %v9053 = vpop.f32.mrf.mxu0
        %v9054 = vadd.f32 0.0, %v9053
        %9055 = vmatmul.bf16.gmra.mxu0 %v8971
        %v9056 = vpop.f32.mrf.mxu0
        %v9057 = vadd.f32 0.0, %v9056
        %v9058 = vpop.f32.mrf.mxu0
        %v9059 = vadd.f32 0.0, %v9058
        %9060 = vmatmul.bf16.gmra.mxu0 %v8972
        %v9061 = vpop.f32.mrf.mxu0
        %v9062 = vadd.f32 0.0, %v9061
        %v9063 = vpop.f32.mrf.mxu0
        %v9064 = vadd.f32 0.0, %v9063
        %9065 = vmatmul.bf16.gmra.mxu0 %v8973
        %v9066 = vpop.f32.mrf.mxu0
        %v9067 = vadd.f32 0.0, %v9066
        %v9068 = vpop.f32.mrf.mxu0
        %v9069 = vadd.f32 0.0, %v9068
        %9070 = vmatmul.bf16.gmra.mxu0 %v8974
        %v9071 = vpop.f32.mrf.mxu0
        %v9072 = vadd.f32 0.0, %v9071
        %v9073 = vpop.f32.mrf.mxu0
        %v9074 = vadd.f32 0.0, %v9073
        %9075 = vmatmul.bf16.gmra.mxu0 %v8975
        %v9076 = vpop.f32.mrf.mxu0
        %v9077 = vadd.f32 0.0, %v9076
        %v9078 = vpop.f32.mrf.mxu0
        %v9079 = vadd.f32 0.0, %v9078
        %9080 = vdwg.mxu0
        %v9097 = vunpack.c.l.b16 %v8759
        %v9098 = vunpack.c.l.b16 %v8760
        %v9099 = vunpack.c.l.b16 %v8761
        %v9100 = vunpack.c.l.b16 %v8762
        %v9101 = vunpack.c.l.b16 %v8763
        %v9102 = vunpack.c.l.b16 %v8764
        %v9103 = vunpack.c.l.b16 %v8765
        %v9104 = vunpack.c.l.b16 %v8766
        %v9105 = vunpack.c.l.b16 %v8767
        %v9106 = vunpack.c.l.b16 %v8768
        %v9107 = vunpack.c.l.b16 %v8769
        %v9108 = vunpack.c.l.b16 %v8770
        %v9109 = vunpack.c.l.b16 %v8771
        %v9110 = vunpack.c.l.b16 %v8772
        %v9111 = vunpack.c.l.b16 %v8773
        %v9112 = vunpack.c.l.b16 %v8774
        %v9113 = vpack.c.b16 %v9098, %v9097
        %v9114 = vpack.c.b16 %v9100, %v9099
        %v9115 = vpack.c.b16 %v9102, %v9101
        %v9116 = vpack.c.b16 %v9104, %v9103
        %v9117 = vpack.c.b16 %v9106, %v9105
        %v9118 = vpack.c.b16 %v9108, %v9107
        %v9119 = vpack.c.b16 %v9110, %v9109
        %v9120 = vpack.c.b16 %v9112, %v9111
        %v9145 = vunpack.c.l.b16 %v7347
        %v9146 = vunpack.c.l.b16 %v7348
        %v9147 = vunpack.c.l.b16 %v7349
        %v9148 = vunpack.c.l.b16 %v7350
        %v9149 = vunpack.c.l.b16 %v7351
        %v9150 = vunpack.c.l.b16 %v7352
        %v9151 = vunpack.c.l.b16 %v7353
        %v9152 = vunpack.c.l.b16 %v7354
        %v9153 = vunpack.c.l.b16 %v7355
        %v9154 = vunpack.c.l.b16 %v7356
        %v9155 = vunpack.c.l.b16 %v7357
        %v9156 = vunpack.c.l.b16 %v7358
        %v9157 = vunpack.c.l.b16 %v7359
        %v9158 = vunpack.c.l.b16 %v7360
        %v9159 = vunpack.c.l.b16 %v7361
        %v9160 = vunpack.c.l.b16 %v7362
        %v9161 = vpack.c.b16 %v9146, %v9145
        %v9162 = vpack.c.b16 %v9148, %v9147
        %v9163 = vpack.c.b16 %v9150, %v9149
        %v9164 = vpack.c.b16 %v9152, %v9151
        %v9165 = vpack.c.b16 %v9154, %v9153
        %v9166 = vpack.c.b16 %v9156, %v9155
        %v9167 = vpack.c.b16 %v9158, %v9157
        %v9168 = vpack.c.b16 %v9160, %v9159
        %9177 = vmatpush.bf16.msra.mxu0 %v9168
        %9178 = vmatpush.bf16.msra.mxu0 %v9167
        %9179 = vmatpush.bf16.msra.mxu0 %v9166
        %9180 = vmatpush.bf16.msra.mxu0 %v9165
        %9181 = vmatpush.bf16.msra.mxu0 %v9164
        %9182 = vmatpush.bf16.msra.mxu0 %v9163
        %9183 = vmatpush.bf16.msra.mxu0 %v9162
        %9184 = vmatpush.bf16.msra.mxu0 %v9161
        %9185 = vmatmul.bf16.gmra.mxu0 %v9113
        %v9186 = vpop.f32.mrf.mxu0
        %v9187 = vadd.f32 0.0, %v9186
        %v9188 = vpop.f32.mrf.mxu0
        %v9189 = vadd.f32 0.0, %v9188
        %9190 = vmatmul.bf16.gmra.mxu0 %v9114
        %v9191 = vpop.f32.mrf.mxu0
        %v9192 = vadd.f32 0.0, %v9191
        %v9193 = vpop.f32.mrf.mxu0
        %v9194 = vadd.f32 0.0, %v9193
        %9195 = vmatmul.bf16.gmra.mxu0 %v9115
        %v9196 = vpop.f32.mrf.mxu0
        %v9197 = vadd.f32 0.0, %v9196
        %v9198 = vpop.f32.mrf.mxu0
        %v9199 = vadd.f32 0.0, %v9198
        %9200 = vmatmul.bf16.gmra.mxu0 %v9116
        %v9201 = vpop.f32.mrf.mxu0
        %v9202 = vadd.f32 0.0, %v9201
        %v9203 = vpop.f32.mrf.mxu0
        %v9204 = vadd.f32 0.0, %v9203
        %9205 = vmatmul.bf16.gmra.mxu0 %v9117
        %v9206 = vpop.f32.mrf.mxu0
        %v9207 = vadd.f32 0.0, %v9206
        %v9208 = vpop.f32.mrf.mxu0
        %v9209 = vadd.f32 0.0, %v9208
        %9210 = vmatmul.bf16.gmra.mxu0 %v9118
        %v9211 = vpop.f32.mrf.mxu0
        %v9212 = vadd.f32 0.0, %v9211
        %v9213 = vpop.f32.mrf.mxu0
        %v9214 = vadd.f32 0.0, %v9213
        %9215 = vmatmul.bf16.gmra.mxu0 %v9119
        %v9216 = vpop.f32.mrf.mxu0
        %v9217 = vadd.f32 0.0, %v9216
        %v9218 = vpop.f32.mrf.mxu0
        %v9219 = vadd.f32 0.0, %v9218
        %9220 = vmatmul.bf16.gmra.mxu0 %v9120
        %v9221 = vpop.f32.mrf.mxu0
        %v9222 = vadd.f32 0.0, %v9221
        %v9223 = vpop.f32.mrf.mxu0
        %v9224 = vadd.f32 0.0, %v9223
        %9225 = vdwg.mxu0
        %v9242 = vunpack.c.l.b16 %v8775
        %v9243 = vunpack.c.l.b16 %v8776
        %v9244 = vunpack.c.l.b16 %v8777
        %v9245 = vunpack.c.l.b16 %v8778
        %v9246 = vunpack.c.l.b16 %v8779
        %v9247 = vunpack.c.l.b16 %v8780
        %v9248 = vunpack.c.l.b16 %v8781
        %v9249 = vunpack.c.l.b16 %v8782
        %v9250 = vunpack.c.l.b16 %v8783
        %v9251 = vunpack.c.l.b16 %v8784
        %v9252 = vunpack.c.l.b16 %v8785
        %v9253 = vunpack.c.l.b16 %v8786
        %v9254 = vunpack.c.l.b16 %v8787
        %v9255 = vunpack.c.l.b16 %v8788
        %v9256 = vunpack.c.l.b16 %v8789
        %v9257 = vunpack.c.l.b16 %v8790
        %v9258 = vpack.c.b16 %v9243, %v9242
        %v9259 = vpack.c.b16 %v9245, %v9244
        %v9260 = vpack.c.b16 %v9247, %v9246
        %v9261 = vpack.c.b16 %v9249, %v9248
        %v9262 = vpack.c.b16 %v9251, %v9250
        %v9263 = vpack.c.b16 %v9253, %v9252
        %v9264 = vpack.c.b16 %v9255, %v9254
        %v9265 = vpack.c.b16 %v9257, %v9256
        %v9290 = vunpack.c.l.b16 %v7363
        %v9291 = vunpack.c.l.b16 %v7364
        %v9292 = vunpack.c.l.b16 %v7365
        %v9293 = vunpack.c.l.b16 %v7366
        %v9294 = vunpack.c.l.b16 %v7367
        %v9295 = vunpack.c.l.b16 %v7368
        %v9296 = vunpack.c.l.b16 %v7369
        %v9297 = vunpack.c.l.b16 %v7370
        %v9298 = vunpack.c.l.b16 %v7371
        %v9299 = vunpack.c.l.b16 %v7372
        %v9300 = vunpack.c.l.b16 %v7373
        %v9301 = vunpack.c.l.b16 %v7374
        %v9302 = vunpack.c.l.b16 %v7375
        %v9303 = vunpack.c.l.b16 %v7376
        %v9304 = vunpack.c.l.b16 %v7377
        %v9305 = vunpack.c.l.b16 %v7378
        %v9306 = vpack.c.b16 %v9291, %v9290
        %v9307 = vpack.c.b16 %v9293, %v9292
        %v9308 = vpack.c.b16 %v9295, %v9294
        %v9309 = vpack.c.b16 %v9297, %v9296
        %v9310 = vpack.c.b16 %v9299, %v9298
        %v9311 = vpack.c.b16 %v9301, %v9300
        %v9312 = vpack.c.b16 %v9303, %v9302
        %v9313 = vpack.c.b16 %v9305, %v9304
        %9322 = vmatpush.bf16.msra.mxu0 %v9313
        %9323 = vmatpush.bf16.msra.mxu0 %v9312
        %9324 = vmatpush.bf16.msra.mxu0 %v9311
        %9325 = vmatpush.bf16.msra.mxu0 %v9310
        %9326 = vmatpush.bf16.msra.mxu0 %v9309
        %9327 = vmatpush.bf16.msra.mxu0 %v9308
        %9328 = vmatpush.bf16.msra.mxu0 %v9307
        %9329 = vmatpush.bf16.msra.mxu0 %v9306
        %9330 = vmatmul.bf16.gmra.mxu0 %v9258
        %v9331 = vpop.f32.mrf.mxu0
        %v9332 = vadd.f32 0.0, %v9331
        %v9333 = vpop.f32.mrf.mxu0
        %v9334 = vadd.f32 0.0, %v9333
        %9335 = vmatmul.bf16.gmra.mxu0 %v9259
        %v9336 = vpop.f32.mrf.mxu0
        %v9337 = vadd.f32 0.0, %v9336
        %v9338 = vpop.f32.mrf.mxu0
        %v9339 = vadd.f32 0.0, %v9338
        %9340 = vmatmul.bf16.gmra.mxu0 %v9260
        %v9341 = vpop.f32.mrf.mxu0
        %v9342 = vadd.f32 0.0, %v9341
        %v9343 = vpop.f32.mrf.mxu0
        %v9344 = vadd.f32 0.0, %v9343
        %9345 = vmatmul.bf16.gmra.mxu0 %v9261
        %v9346 = vpop.f32.mrf.mxu0
        %v9347 = vadd.f32 0.0, %v9346
        %v9348 = vpop.f32.mrf.mxu0
        %v9349 = vadd.f32 0.0, %v9348
        %9350 = vmatmul.bf16.gmra.mxu0 %v9262
        %v9351 = vpop.f32.mrf.mxu0
        %v9352 = vadd.f32 0.0, %v9351
        %v9353 = vpop.f32.mrf.mxu0
        %v9354 = vadd.f32 0.0, %v9353
        %9355 = vmatmul.bf16.gmra.mxu0 %v9263
        %v9356 = vpop.f32.mrf.mxu0
        %v9357 = vadd.f32 0.0, %v9356
        %v9358 = vpop.f32.mrf.mxu0
        %v9359 = vadd.f32 0.0, %v9358
        %9360 = vmatmul.bf16.gmra.mxu0 %v9264
        %v9361 = vpop.f32.mrf.mxu0
        %v9362 = vadd.f32 0.0, %v9361
        %v9363 = vpop.f32.mrf.mxu0
        %v9364 = vadd.f32 0.0, %v9363
        %9365 = vmatmul.bf16.gmra.mxu0 %v9265
        %v9366 = vpop.f32.mrf.mxu0
        %v9367 = vadd.f32 0.0, %v9366
        %v9368 = vpop.f32.mrf.mxu0
        %v9369 = vadd.f32 0.0, %v9368
        %9370 = vdwg.mxu0
        %9387 = vrot.lane.b32.xlu0 %v9042, 32
        %v9388 = vpop.permute.xlu0 %9387
        %9389 = vrot.lane.b32.xlu0 %v9044, 32
        %v9390 = vpop.permute.xlu0 %9389
        %9391 = vrot.lane.b32.xlu0 %v9047, 32
        %v9392 = vpop.permute.xlu0 %9391
        %9393 = vrot.lane.b32.xlu0 %v9049, 32
        %v9394 = vpop.permute.xlu0 %9393
        %9395 = vrot.lane.b32.xlu0 %v9052, 32
        %v9396 = vpop.permute.xlu0 %9395
        %9397 = vrot.lane.b32.xlu0 %v9054, 32
        %v9398 = vpop.permute.xlu0 %9397
        %9399 = vrot.lane.b32.xlu0 %v9057, 32
        %v9400 = vpop.permute.xlu0 %9399
        %9401 = vrot.lane.b32.xlu0 %v9059, 32
        %v9402 = vpop.permute.xlu0 %9401
        %9403 = vrot.lane.b32.xlu0 %v9062, 32
        %v9404 = vpop.permute.xlu0 %9403
        %9405 = vrot.lane.b32.xlu0 %v9064, 32
        %v9406 = vpop.permute.xlu0 %9405
        %9407 = vrot.lane.b32.xlu0 %v9067, 32
        %v9408 = vpop.permute.xlu0 %9407
        %9409 = vrot.lane.b32.xlu0 %v9069, 32
        %v9410 = vpop.permute.xlu0 %9409
        %9411 = vrot.lane.b32.xlu0 %v9072, 32
        %v9412 = vpop.permute.xlu0 %9411
        %9413 = vrot.lane.b32.xlu0 %v9074, 32
        %v9414 = vpop.permute.xlu0 %9413
        %9415 = vrot.lane.b32.xlu0 %v9077, 32
        %v9416 = vpop.permute.xlu0 %9415
        %9417 = vrot.lane.b32.xlu0 %v9079, 32
        %v9418 = vpop.permute.xlu0 %9417
        %9451 = vrot.lane.b32.xlu0 %v9187, 64
        %v9452 = vpop.permute.xlu0 %9451
        %9453 = vrot.lane.b32.xlu0 %v9189, 64
        %v9454 = vpop.permute.xlu0 %9453
        %9455 = vrot.lane.b32.xlu0 %v9192, 64
        %v9456 = vpop.permute.xlu0 %9455
        %9457 = vrot.lane.b32.xlu0 %v9194, 64
        %v9458 = vpop.permute.xlu0 %9457
        %9459 = vrot.lane.b32.xlu0 %v9197, 64
        %v9460 = vpop.permute.xlu0 %9459
        %9461 = vrot.lane.b32.xlu0 %v9199, 64
        %v9462 = vpop.permute.xlu0 %9461
        %9463 = vrot.lane.b32.xlu0 %v9202, 64
        %v9464 = vpop.permute.xlu0 %9463
        %9465 = vrot.lane.b32.xlu0 %v9204, 64
        %v9466 = vpop.permute.xlu0 %9465
        %9467 = vrot.lane.b32.xlu0 %v9207, 64
        %v9468 = vpop.permute.xlu0 %9467
        %9469 = vrot.lane.b32.xlu0 %v9209, 64
        %v9470 = vpop.permute.xlu0 %9469
        %9471 = vrot.lane.b32.xlu0 %v9212, 64
        %v9472 = vpop.permute.xlu0 %9471
        %9473 = vrot.lane.b32.xlu0 %v9214, 64
        %v9474 = vpop.permute.xlu0 %9473
        %9475 = vrot.lane.b32.xlu0 %v9217, 64
        %v9476 = vpop.permute.xlu0 %9475
        %9477 = vrot.lane.b32.xlu0 %v9219, 64
        %v9478 = vpop.permute.xlu0 %9477
        %9479 = vrot.lane.b32.xlu0 %v9222, 64
        %v9480 = vpop.permute.xlu0 %9479
        %9481 = vrot.lane.b32.xlu0 %v9224, 64
        %v9482 = vpop.permute.xlu0 %9481
        %9515 = vrot.lane.b32.xlu0 %v9332, 96
        %v9516 = vpop.permute.xlu0 %9515
        %9517 = vrot.lane.b32.xlu0 %v9334, 96
        %v9518 = vpop.permute.xlu0 %9517
        %9519 = vrot.lane.b32.xlu0 %v9337, 96
        %v9520 = vpop.permute.xlu0 %9519
        %9521 = vrot.lane.b32.xlu0 %v9339, 96
        %v9522 = vpop.permute.xlu0 %9521
        %9523 = vrot.lane.b32.xlu0 %v9342, 96
        %v9524 = vpop.permute.xlu0 %9523
        %9525 = vrot.lane.b32.xlu0 %v9344, 96
        %v9526 = vpop.permute.xlu0 %9525
        %9527 = vrot.lane.b32.xlu0 %v9347, 96
        %v9528 = vpop.permute.xlu0 %9527
        %9529 = vrot.lane.b32.xlu0 %v9349, 96
        %v9530 = vpop.permute.xlu0 %9529
        %9531 = vrot.lane.b32.xlu0 %v9352, 96
        %v9532 = vpop.permute.xlu0 %9531
        %9533 = vrot.lane.b32.xlu0 %v9354, 96
        %v9534 = vpop.permute.xlu0 %9533
        %9535 = vrot.lane.b32.xlu0 %v9357, 96
        %v9536 = vpop.permute.xlu0 %9535
        %9537 = vrot.lane.b32.xlu0 %v9359, 96
        %v9538 = vpop.permute.xlu0 %9537
        %9539 = vrot.lane.b32.xlu0 %v9362, 96
        %v9540 = vpop.permute.xlu0 %9539
        %9541 = vrot.lane.b32.xlu0 %v9364, 96
        %v9542 = vpop.permute.xlu0 %9541
        %9543 = vrot.lane.b32.xlu0 %v9367, 96
        %v9544 = vpop.permute.xlu0 %9543
        %9545 = vrot.lane.b32.xlu0 %v9369, 96
        %v9546 = vpop.permute.xlu0 %9545
        %v9563 = vsel %vm3234, %v8897, %v9388
        %v9564 = vsel %vm3234, %v8899, %v9390
        %v9565 = vsel %vm3234, %v8902, %v9392
        %v9566 = vsel %vm3234, %v8904, %v9394
        %v9567 = vsel %vm3234, %v8907, %v9396
        %v9568 = vsel %vm3234, %v8909, %v9398
        %v9569 = vsel %vm3234, %v8912, %v9400
        %v9570 = vsel %vm3234, %v8914, %v9402
        %v9571 = vsel %vm3234, %v8917, %v9404
        %v9572 = vsel %vm3234, %v8919, %v9406
        %v9573 = vsel %vm3234, %v8922, %v9408
        %v9574 = vsel %vm3234, %v8924, %v9410
        %v9575 = vsel %vm3234, %v8927, %v9412
        %v9576 = vsel %vm3234, %v8929, %v9414
        %v9577 = vsel %vm3234, %v8932, %v9416
        %v9578 = vsel %vm3234, %v8934, %v9418
        %vm9579 = vcmask 523264
        %v9580 = vsel %vm9579, %v9563, %v9452
        %v9581 = vsel %vm9579, %v9564, %v9454
        %v9582 = vsel %vm9579, %v9565, %v9456
        %v9583 = vsel %vm9579, %v9566, %v9458
        %v9584 = vsel %vm9579, %v9567, %v9460
        %v9585 = vsel %vm9579, %v9568, %v9462
        %v9586 = vsel %vm9579, %v9569, %v9464
        %v9587 = vsel %vm9579, %v9570, %v9466
        %v9588 = vsel %vm9579, %v9571, %v9468
        %v9589 = vsel %vm9579, %v9572, %v9470
        %v9590 = vsel %vm9579, %v9573, %v9472
        %v9591 = vsel %vm9579, %v9574, %v9474
        %v9592 = vsel %vm9579, %v9575, %v9476
        %v9593 = vsel %vm9579, %v9576, %v9478
        %v9594 = vsel %vm9579, %v9577, %v9480
        %v9595 = vsel %vm9579, %v9578, %v9482
        %vm9596 = vcmask 785408
        %v9597 = vsel %vm9596, %v9580, %v9516
        %v9598 = vsel %vm9596, %v9581, %v9518
        %v9599 = vsel %vm9596, %v9582, %v9520
        %v9600 = vsel %vm9596, %v9583, %v9522
        %v9601 = vsel %vm9596, %v9584, %v9524
        %v9602 = vsel %vm9596, %v9585, %v9526
        %v9603 = vsel %vm9596, %v9586, %v9528
        %v9604 = vsel %vm9596, %v9587, %v9530
        %v9605 = vsel %vm9596, %v9588, %v9532
        %v9606 = vsel %vm9596, %v9589, %v9534
        %v9607 = vsel %vm9596, %v9590, %v9536
        %v9608 = vsel %vm9596, %v9591, %v9538
        %v9609 = vsel %vm9596, %v9592, %v9540
        %v9610 = vsel %vm9596, %v9593, %v9542
        %v9611 = vsel %vm9596, %v9594, %v9544
        %v9612 = vsel %vm9596, %v9595, %v9546
        %v9613 = vpack.c.bf16 %v9598, %v9597
        %v9614 = vpack.c.bf16 %v9600, %v9599
        %v9615 = vpack.c.bf16 %v9602, %v9601
        %v9616 = vpack.c.bf16 %v9604, %v9603
        %v9617 = vpack.c.bf16 %v9606, %v9605
        %v9618 = vpack.c.bf16 %v9608, %v9607
        %v9619 = vpack.c.bf16 %v9610, %v9609
        %v9620 = vpack.c.bf16 %v9612, %v9611
        %v9621 = vld [vmem:[#allocation13] sm:$0xf]
        %v9622 = vld [vmem:[#allocation13 + $0x4] sm:$0xf]
        %v9623 = vld [vmem:[#allocation13 + $0x8] sm:$0xf]
        %v9624 = vld [vmem:[#allocation13 + $0xc] sm:$0xf]
        %v9625 = vld [vmem:[#allocation13 + $0x10] sm:$0xf]
        %v9626 = vld [vmem:[#allocation13 + $0x14] sm:$0xf]
        %v9627 = vld [vmem:[#allocation13 + $0x18] sm:$0xf]
        %v9628 = vld [vmem:[#allocation13 + $0x1c] sm:$0xf]
        %v9629 = vld [vmem:[#allocation13 + $0x20] sm:$0xf]
        %v9630 = vld [vmem:[#allocation13 + $0x24] sm:$0xf]
        %v9631 = vld [vmem:[#allocation13 + $0x28] sm:$0xf]
        %v9632 = vld [vmem:[#allocation13 + $0x2c] sm:$0xf]
        %v9633 = vld [vmem:[#allocation13 + $0x30] sm:$0xf]
        %v9634 = vld [vmem:[#allocation13 + $0x34] sm:$0xf]
        %v9635 = vld [vmem:[#allocation13 + $0x38] sm:$0xf]
        %v9636 = vld [vmem:[#allocation13 + $0x3c] sm:$0xf]
        %v9637 = vpack.c.bf16 %v2279, %v2275
        %v9638 = vpack.c.bf16 %v2280, %v2276
        %v9639 = vpack.c.bf16 %v2281, %v2277
        %v9640 = vpack.c.bf16 %v2282, %v2278
        %v9641 = vpack.c.bf16 %v2287, %v2283
        %v9642 = vpack.c.bf16 %v2288, %v2284
        %v9643 = vpack.c.bf16 %v2289, %v2285
        %v9644 = vpack.c.bf16 %v2290, %v2286
        %v9645 = vpack.c.bf16 %v2295, %v2291
        %v9646 = vpack.c.bf16 %v2296, %v2292
        %v9647 = vpack.c.bf16 %v2297, %v2293
        %v9648 = vpack.c.bf16 %v2298, %v2294
        %v9649 = vpack.c.bf16 %v2303, %v2299
        %v9650 = vpack.c.bf16 %v2304, %v2300
        %v9651 = vpack.c.bf16 %v2305, %v2301
        %v9652 = vpack.c.bf16 %v2306, %v2302
        %v9653 = vpack.c.bf16 %v2311, %v2307
        %v9654 = vpack.c.bf16 %v2312, %v2308
        %v9655 = vpack.c.bf16 %v2313, %v2309
        %v9656 = vpack.c.bf16 %v2314, %v2310
        %v9657 = vpack.c.bf16 %v2319, %v2315
        %v9658 = vpack.c.bf16 %v2320, %v2316
        %v9659 = vpack.c.bf16 %v2321, %v2317
        %v9660 = vpack.c.bf16 %v2322, %v2318
        %v9661 = vpack.c.bf16 %v2327, %v2323
        %v9662 = vpack.c.bf16 %v2328, %v2324
        %v9663 = vpack.c.bf16 %v2329, %v2325
        %v9664 = vpack.c.bf16 %v2330, %v2326
        %v9665 = vpack.c.bf16 %v2335, %v2331
        %v9666 = vpack.c.bf16 %v2336, %v2332
        %v9667 = vpack.c.bf16 %v2337, %v2333
        %v9668 = vpack.c.bf16 %v2338, %v2334
        %v9669 = vld [vmem:[#allocation14] sm:$0xf]
        %v9670 = vld [vmem:[#allocation14 + $0x4] sm:$0xf]
        %v9671 = vld [vmem:[#allocation14 + $0x8] sm:$0xf]
        %v9672 = vld [vmem:[#allocation14 + $0xc] sm:$0xf]
        %v9673 = vld [vmem:[#allocation14 + $0x10] sm:$0xf]
        %v9674 = vld [vmem:[#allocation14 + $0x14] sm:$0xf]
        %v9675 = vld [vmem:[#allocation14 + $0x18] sm:$0xf]
        %v9676 = vld [vmem:[#allocation14 + $0x1c] sm:$0xf]
        %v9677 = vld [vmem:[#allocation14 + $0x20] sm:$0xf]
        %v9678 = vld [vmem:[#allocation14 + $0x24] sm:$0xf]
        %v9679 = vld [vmem:[#allocation14 + $0x28] sm:$0xf]
        %v9680 = vld [vmem:[#allocation14 + $0x2c] sm:$0xf]
        %v9681 = vld [vmem:[#allocation14 + $0x30] sm:$0xf]
        %v9682 = vld [vmem:[#allocation14 + $0x34] sm:$0xf]
        %v9683 = vld [vmem:[#allocation14 + $0x38] sm:$0xf]
        %v9684 = vld [vmem:[#allocation14 + $0x3c] sm:$0xf]
        %v9685 = vld [vmem:[#allocation14 + $0x40] sm:$0xf]
        %v9686 = vld [vmem:[#allocation14 + $0x44] sm:$0xf]
        %v9687 = vld [vmem:[#allocation14 + $0x48] sm:$0xf]
        %v9688 = vld [vmem:[#allocation14 + $0x4c] sm:$0xf]
        %v9689 = vld [vmem:[#allocation14 + $0x50] sm:$0xf]
        %v9690 = vld [vmem:[#allocation14 + $0x54] sm:$0xf]
        %v9691 = vld [vmem:[#allocation14 + $0x58] sm:$0xf]
        %v9692 = vld [vmem:[#allocation14 + $0x5c] sm:$0xf]
        %v9693 = vld [vmem:[#allocation14 + $0x60] sm:$0xf]
        %v9694 = vld [vmem:[#allocation14 + $0x64] sm:$0xf]
        %v9695 = vld [vmem:[#allocation14 + $0x68] sm:$0xf]
        %v9696 = vld [vmem:[#allocation14 + $0x6c] sm:$0xf]
        %v9697 = vld [vmem:[#allocation14 + $0x70] sm:$0xf]
        %v9698 = vld [vmem:[#allocation14 + $0x74] sm:$0xf]
        %v9699 = vld [vmem:[#allocation14 + $0x78] sm:$0xf]
        %v9700 = vld [vmem:[#allocation14 + $0x7c] sm:$0xf]
        %v9701 = vld [vmem:[#allocation14 + $0x80] sm:$0xf]
        %v9702 = vld [vmem:[#allocation14 + $0x84] sm:$0xf]
        %v9703 = vld [vmem:[#allocation14 + $0x88] sm:$0xf]
        %v9704 = vld [vmem:[#allocation14 + $0x8c] sm:$0xf]
        %v9705 = vld [vmem:[#allocation14 + $0x90] sm:$0xf]
        %v9706 = vld [vmem:[#allocation14 + $0x94] sm:$0xf]
        %v9707 = vld [vmem:[#allocation14 + $0x98] sm:$0xf]
        %v9708 = vld [vmem:[#allocation14 + $0x9c] sm:$0xf]
        %v9709 = vld [vmem:[#allocation14 + $0xa0] sm:$0xf]
        %v9710 = vld [vmem:[#allocation14 + $0xa4] sm:$0xf]
        %v9711 = vld [vmem:[#allocation14 + $0xa8] sm:$0xf]
        %v9712 = vld [vmem:[#allocation14 + $0xac] sm:$0xf]
        %v9713 = vld [vmem:[#allocation14 + $0xb0] sm:$0xf]
        %v9714 = vld [vmem:[#allocation14 + $0xb4] sm:$0xf]
        %v9715 = vld [vmem:[#allocation14 + $0xb8] sm:$0xf]
        %v9716 = vld [vmem:[#allocation14 + $0xbc] sm:$0xf]
        %v9717 = vld [vmem:[#allocation14 + $0xc0] sm:$0xf]
        %v9718 = vld [vmem:[#allocation14 + $0xc4] sm:$0xf]
        %v9719 = vld [vmem:[#allocation14 + $0xc8] sm:$0xf]
        %v9720 = vld [vmem:[#allocation14 + $0xcc] sm:$0xf]
        %v9721 = vld [vmem:[#allocation14 + $0xd0] sm:$0xf]
        %v9722 = vld [vmem:[#allocation14 + $0xd4] sm:$0xf]
        %v9723 = vld [vmem:[#allocation14 + $0xd8] sm:$0xf]
        %v9724 = vld [vmem:[#allocation14 + $0xdc] sm:$0xf]
        %v9725 = vld [vmem:[#allocation14 + $0xe0] sm:$0xf]
        %v9726 = vld [vmem:[#allocation14 + $0xe4] sm:$0xf]
        %v9727 = vld [vmem:[#allocation14 + $0xe8] sm:$0xf]
        %v9728 = vld [vmem:[#allocation14 + $0xec] sm:$0xf]
        %v9729 = vld [vmem:[#allocation14 + $0xf0] sm:$0xf]
        %v9730 = vld [vmem:[#allocation14 + $0xf4] sm:$0xf]
        %v9731 = vld [vmem:[#allocation14 + $0xf8] sm:$0xf]
        %v9732 = vld [vmem:[#allocation14 + $0xfc] sm:$0xf]
        %v9797 = vunpack.c.l.b16 %v9669
        %v9798 = vunpack.c.l.b16 %v9670
        %v9799 = vunpack.c.l.b16 %v9671
        %v9800 = vunpack.c.l.b16 %v9672
        %v9801 = vunpack.c.l.b16 %v9673
        %v9802 = vunpack.c.l.b16 %v9674
        %v9803 = vunpack.c.l.b16 %v9675
        %v9804 = vunpack.c.l.b16 %v9676
        %v9805 = vunpack.c.l.b16 %v9677
        %v9806 = vunpack.c.l.b16 %v9678
        %v9807 = vunpack.c.l.b16 %v9679
        %v9808 = vunpack.c.l.b16 %v9680
        %v9809 = vunpack.c.l.b16 %v9681
        %v9810 = vunpack.c.l.b16 %v9682
        %v9811 = vunpack.c.l.b16 %v9683
        %v9812 = vunpack.c.l.b16 %v9684
        %v9813 = vunpack.c.l.b16 %v9685
        %v9814 = vunpack.c.l.b16 %v9686
        %v9815 = vunpack.c.l.b16 %v9687
        %v9816 = vunpack.c.l.b16 %v9688
        %v9817 = vunpack.c.l.b16 %v9689
        %v9818 = vunpack.c.l.b16 %v9690
        %v9819 = vunpack.c.l.b16 %v9691
        %v9820 = vunpack.c.l.b16 %v9692
        %v9821 = vunpack.c.l.b16 %v9693
        %v9822 = vunpack.c.l.b16 %v9694
        %v9823 = vunpack.c.l.b16 %v9695
        %v9824 = vunpack.c.l.b16 %v9696
        %v9825 = vunpack.c.l.b16 %v9697
        %v9826 = vunpack.c.l.b16 %v9698
        %v9827 = vunpack.c.l.b16 %v9699
        %v9828 = vunpack.c.l.b16 %v9700
        %v9829 = vunpack.c.l.b16 %v9701
        %v9830 = vunpack.c.l.b16 %v9702
        %v9831 = vunpack.c.l.b16 %v9703
        %v9832 = vunpack.c.l.b16 %v9704
        %v9833 = vunpack.c.l.b16 %v9705
        %v9834 = vunpack.c.l.b16 %v9706
        %v9835 = vunpack.c.l.b16 %v9707
        %v9836 = vunpack.c.l.b16 %v9708
        %v9837 = vunpack.c.l.b16 %v9709
        %v9838 = vunpack.c.l.b16 %v9710
        %v9839 = vunpack.c.l.b16 %v9711
        %v9840 = vunpack.c.l.b16 %v9712
        %v9841 = vunpack.c.l.b16 %v9713
        %v9842 = vunpack.c.l.b16 %v9714
        %v9843 = vunpack.c.l.b16 %v9715
        %v9844 = vunpack.c.l.b16 %v9716
        %v9845 = vunpack.c.l.b16 %v9717
        %v9846 = vunpack.c.l.b16 %v9718
        %v9847 = vunpack.c.l.b16 %v9719
        %v9848 = vunpack.c.l.b16 %v9720
        %v9849 = vunpack.c.l.b16 %v9721
        %v9850 = vunpack.c.l.b16 %v9722
        %v9851 = vunpack.c.l.b16 %v9723
        %v9852 = vunpack.c.l.b16 %v9724
        %v9853 = vunpack.c.l.b16 %v9725
        %v9854 = vunpack.c.l.b16 %v9726
        %v9855 = vunpack.c.l.b16 %v9727
        %v9856 = vunpack.c.l.b16 %v9728
        %v9857 = vunpack.c.l.b16 %v9729
        %v9858 = vunpack.c.l.b16 %v9730
        %v9859 = vunpack.c.l.b16 %v9731
        %v9860 = vunpack.c.l.b16 %v9732
        %v9861 = vpack.c.b16 %v9798, %v9797
        %v9862 = vpack.c.b16 %v9800, %v9799
        %v9863 = vpack.c.b16 %v9802, %v9801
        %v9864 = vpack.c.b16 %v9804, %v9803
        %v9865 = vpack.c.b16 %v9806, %v9805
        %v9866 = vpack.c.b16 %v9808, %v9807
        %v9867 = vpack.c.b16 %v9810, %v9809
        %v9868 = vpack.c.b16 %v9812, %v9811
        %v9869 = vpack.c.b16 %v9814, %v9813
        %v9870 = vpack.c.b16 %v9816, %v9815
        %v9871 = vpack.c.b16 %v9818, %v9817
        %v9872 = vpack.c.b16 %v9820, %v9819
        %v9873 = vpack.c.b16 %v9822, %v9821
        %v9874 = vpack.c.b16 %v9824, %v9823
        %v9875 = vpack.c.b16 %v9826, %v9825
        %v9876 = vpack.c.b16 %v9828, %v9827
        %v9877 = vpack.c.b16 %v9830, %v9829
        %v9878 = vpack.c.b16 %v9832, %v9831
        %v9879 = vpack.c.b16 %v9834, %v9833
        %v9880 = vpack.c.b16 %v9836, %v9835
        %v9881 = vpack.c.b16 %v9838, %v9837
        %v9882 = vpack.c.b16 %v9840, %v9839
        %v9883 = vpack.c.b16 %v9842, %v9841
        %v9884 = vpack.c.b16 %v9844, %v9843
        %v9885 = vpack.c.b16 %v9846, %v9845
        %v9886 = vpack.c.b16 %v9848, %v9847
        %v9887 = vpack.c.b16 %v9850, %v9849
        %v9888 = vpack.c.b16 %v9852, %v9851
        %v9889 = vpack.c.b16 %v9854, %v9853
        %v9890 = vpack.c.b16 %v9856, %v9855
        %v9891 = vpack.c.b16 %v9858, %v9857
        %v9892 = vpack.c.b16 %v9860, %v9859
        %9925 = vmatpush.bf16.msra.mxu0 %v9868
        %9926 = vmatpush.bf16.msra.mxu0 %v9867
        %9927 = vmatpush.bf16.msra.mxu0 %v9866
        %9928 = vmatpush.bf16.msra.mxu0 %v9865
        %9929 = vmatpush.bf16.msra.mxu0 %v9864
        %9930 = vmatpush.bf16.msra.mxu0 %v9863
        %9931 = vmatpush.bf16.msra.mxu0 %v9862
        %9932 = vmatpush.bf16.msra.mxu0 %v9861
        %9933 = vmatmul.bf16.gmra.mxu0 %v9637
        %v9934 = vpop.f32.mrf.mxu0
        %v9935 = vadd.f32 0.0, %v9934
        %v9936 = vpop.f32.mrf.mxu0
        %v9937 = vadd.f32 0.0, %v9936
        %9938 = vmatmul.bf16.gmra.mxu0 %v9641
        %v9939 = vpop.f32.mrf.mxu0
        %v9940 = vadd.f32 0.0, %v9939
        %v9941 = vpop.f32.mrf.mxu0
        %v9942 = vadd.f32 0.0, %v9941
        %9943 = vmatmul.bf16.gmra.mxu0 %v9645
        %v9944 = vpop.f32.mrf.mxu0
        %v9945 = vadd.f32 0.0, %v9944
        %v9946 = vpop.f32.mrf.mxu0
        %v9947 = vadd.f32 0.0, %v9946
        %9948 = vmatmul.bf16.gmra.mxu0 %v9649
        %v9949 = vpop.f32.mrf.mxu0
        %v9950 = vadd.f32 0.0, %v9949
        %v9951 = vpop.f32.mrf.mxu0
        %v9952 = vadd.f32 0.0, %v9951
        %9953 = vmatmul.bf16.gmra.mxu0 %v9653
        %v9954 = vpop.f32.mrf.mxu0
        %v9955 = vadd.f32 0.0, %v9954
        %v9956 = vpop.f32.mrf.mxu0
        %v9957 = vadd.f32 0.0, %v9956
        %9958 = vmatmul.bf16.gmra.mxu0 %v9657
        %v9959 = vpop.f32.mrf.mxu0
        %v9960 = vadd.f32 0.0, %v9959
        %v9961 = vpop.f32.mrf.mxu0
        %v9962 = vadd.f32 0.0, %v9961
        %9963 = vmatmul.bf16.gmra.mxu0 %v9661
        %v9964 = vpop.f32.mrf.mxu0
        %v9965 = vadd.f32 0.0, %v9964
        %v9966 = vpop.f32.mrf.mxu0
        %v9967 = vadd.f32 0.0, %v9966
        %9968 = vmatmul.bf16.gmra.mxu0 %v9665
        %v9969 = vpop.f32.mrf.mxu0
        %v9970 = vadd.f32 0.0, %v9969
        %v9971 = vpop.f32.mrf.mxu0
        %v9972 = vadd.f32 0.0, %v9971
        %9973 = vdwg.mxu0
        %9974 = vmatpush.bf16.msra.mxu0 %v9876
        %9975 = vmatpush.bf16.msra.mxu0 %v9875
        %9976 = vmatpush.bf16.msra.mxu0 %v9874
        %9977 = vmatpush.bf16.msra.mxu0 %v9873
        %9978 = vmatpush.bf16.msra.mxu0 %v9872
        %9979 = vmatpush.bf16.msra.mxu0 %v9871
        %9980 = vmatpush.bf16.msra.mxu0 %v9870
        %9981 = vmatpush.bf16.msra.mxu0 %v9869
        %9982 = vmatmul.bf16.gmra.mxu0 %v9638
        %v9983 = vpop.f32.mrf.mxu0
        %v9984 = vadd.f32 %v9935, %v9983
        %v9985 = vpop.f32.mrf.mxu0
        %v9986 = vadd.f32 %v9937, %v9985
        %9987 = vmatmul.bf16.gmra.mxu0 %v9642
        %v9988 = vpop.f32.mrf.mxu0
        %v9989 = vadd.f32 %v9940, %v9988
        %v9990 = vpop.f32.mrf.mxu0
        %v9991 = vadd.f32 %v9942, %v9990
        %9992 = vmatmul.bf16.gmra.mxu0 %v9646
        %v9993 = vpop.f32.mrf.mxu0
        %v9994 = vadd.f32 %v9945, %v9993
        %v9995 = vpop.f32.mrf.mxu0
        %v9996 = vadd.f32 %v9947, %v9995
        %9997 = vmatmul.bf16.gmra.mxu0 %v9650
        %v9998 = vpop.f32.mrf.mxu0
        %v9999 = vadd.f32 %v9950, %v9998
        %v10000 = vpop.f32.mrf.mxu0
        %v10001 = vadd.f32 %v9952, %v10000
        %10002 = vmatmul.bf16.gmra.mxu0 %v9654
        %v10003 = vpop.f32.mrf.mxu0
        %v10004 = vadd.f32 %v9955, %v10003
        %v10005 = vpop.f32.mrf.mxu0
        %v10006 = vadd.f32 %v9957, %v10005
        %10007 = vmatmul.bf16.gmra.mxu0 %v9658
        %v10008 = vpop.f32.mrf.mxu0
        %v10009 = vadd.f32 %v9960, %v10008
        %v10010 = vpop.f32.mrf.mxu0
        %v10011 = vadd.f32 %v9962, %v10010
        %10012 = vmatmul.bf16.gmra.mxu0 %v9662
        %v10013 = vpop.f32.mrf.mxu0
        %v10014 = vadd.f32 %v9965, %v10013
        %v10015 = vpop.f32.mrf.mxu0
        %v10016 = vadd.f32 %v9967, %v10015
        %10017 = vmatmul.bf16.gmra.mxu0 %v9666
        %v10018 = vpop.f32.mrf.mxu0
        %v10019 = vadd.f32 %v9970, %v10018
        %v10020 = vpop.f32.mrf.mxu0
        %v10021 = vadd.f32 %v9972, %v10020
        %10022 = vdwg.mxu0
        %10023 = vmatpush.bf16.msra.mxu0 %v9884
        %10024 = vmatpush.bf16.msra.mxu0 %v9883
        %10025 = vmatpush.bf16.msra.mxu0 %v9882
        %10026 = vmatpush.bf16.msra.mxu0 %v9881
        %10027 = vmatpush.bf16.msra.mxu0 %v9880
        %10028 = vmatpush.bf16.msra.mxu0 %v9879
        %10029 = vmatpush.bf16.msra.mxu0 %v9878
        %10030 = vmatpush.bf16.msra.mxu0 %v9877
        %10031 = vmatmul.bf16.gmra.mxu0 %v9639
        %v10032 = vpop.f32.mrf.mxu0
        %v10033 = vadd.f32 %v9984, %v10032
        %v10034 = vpop.f32.mrf.mxu0
        %v10035 = vadd.f32 %v9986, %v10034
        %10036 = vmatmul.bf16.gmra.mxu0 %v9643
        %v10037 = vpop.f32.mrf.mxu0
        %v10038 = vadd.f32 %v9989, %v10037
        %v10039 = vpop.f32.mrf.mxu0
        %v10040 = vadd.f32 %v9991, %v10039
        %10041 = vmatmul.bf16.gmra.mxu0 %v9647
        %v10042 = vpop.f32.mrf.mxu0
        %v10043 = vadd.f32 %v9994, %v10042
        %v10044 = vpop.f32.mrf.mxu0
        %v10045 = vadd.f32 %v9996, %v10044
        %10046 = vmatmul.bf16.gmra.mxu0 %v9651
        %v10047 = vpop.f32.mrf.mxu0
        %v10048 = vadd.f32 %v9999, %v10047
        %v10049 = vpop.f32.mrf.mxu0
        %v10050 = vadd.f32 %v10001, %v10049
        %10051 = vmatmul.bf16.gmra.mxu0 %v9655
        %v10052 = vpop.f32.mrf.mxu0
        %v10053 = vadd.f32 %v10004, %v10052
        %v10054 = vpop.f32.mrf.mxu0
        %v10055 = vadd.f32 %v10006, %v10054
        %10056 = vmatmul.bf16.gmra.mxu0 %v9659
        %v10057 = vpop.f32.mrf.mxu0
        %v10058 = vadd.f32 %v10009, %v10057
        %v10059 = vpop.f32.mrf.mxu0
        %v10060 = vadd.f32 %v10011, %v10059
        %10061 = vmatmul.bf16.gmra.mxu0 %v9663
        %v10062 = vpop.f32.mrf.mxu0
        %v10063 = vadd.f32 %v10014, %v10062
        %v10064 = vpop.f32.mrf.mxu0
        %v10065 = vadd.f32 %v10016, %v10064
        %10066 = vmatmul.bf16.gmra.mxu0 %v9667
        %v10067 = vpop.f32.mrf.mxu0
        %v10068 = vadd.f32 %v10019, %v10067
        %v10069 = vpop.f32.mrf.mxu0
        %v10070 = vadd.f32 %v10021, %v10069
        %10071 = vdwg.mxu0
        %10072 = vmatpush.bf16.msra.mxu0 %v9892
        %10073 = vmatpush.bf16.msra.mxu0 %v9891
        %10074 = vmatpush.bf16.msra.mxu0 %v9890
        %10075 = vmatpush.bf16.msra.mxu0 %v9889
        %10076 = vmatpush.bf16.msra.mxu0 %v9888
        %10077 = vmatpush.bf16.msra.mxu0 %v9887
        %10078 = vmatpush.bf16.msra.mxu0 %v9886
        %10079 = vmatpush.bf16.msra.mxu0 %v9885
        %10080 = vmatmul.bf16.gmra.mxu0 %v9640
        %v10081 = vpop.f32.mrf.mxu0
        %v10082 = vadd.f32 %v10033, %v10081
        %v10083 = vpop.f32.mrf.mxu0
        %v10084 = vadd.f32 %v10035, %v10083
        %10085 = vmatmul.bf16.gmra.mxu0 %v9644
        %v10086 = vpop.f32.mrf.mxu0
        %v10087 = vadd.f32 %v10038, %v10086
        %v10088 = vpop.f32.mrf.mxu0
        %v10089 = vadd.f32 %v10040, %v10088
        %10090 = vmatmul.bf16.gmra.mxu0 %v9648
        %v10091 = vpop.f32.mrf.mxu0
        %v10092 = vadd.f32 %v10043, %v10091
        %v10093 = vpop.f32.mrf.mxu0
        %v10094 = vadd.f32 %v10045, %v10093
        %10095 = vmatmul.bf16.gmra.mxu0 %v9652
        %v10096 = vpop.f32.mrf.mxu0
        %v10097 = vadd.f32 %v10048, %v10096
        %v10098 = vpop.f32.mrf.mxu0
        %v10099 = vadd.f32 %v10050, %v10098
        %10100 = vmatmul.bf16.gmra.mxu0 %v9656
        %v10101 = vpop.f32.mrf.mxu0
        %v10102 = vadd.f32 %v10053, %v10101
        %v10103 = vpop.f32.mrf.mxu0
        %v10104 = vadd.f32 %v10055, %v10103
        %10105 = vmatmul.bf16.gmra.mxu0 %v9660
        %v10106 = vpop.f32.mrf.mxu0
        %v10107 = vadd.f32 %v10058, %v10106
        %v10108 = vpop.f32.mrf.mxu0
        %v10109 = vadd.f32 %v10060, %v10108
        %10110 = vmatmul.bf16.gmra.mxu0 %v9664
        %v10111 = vpop.f32.mrf.mxu0
        %v10112 = vadd.f32 %v10063, %v10111
        %v10113 = vpop.f32.mrf.mxu0
        %v10114 = vadd.f32 %v10065, %v10113
        %10115 = vmatmul.bf16.gmra.mxu0 %v9668
        %v10116 = vpop.f32.mrf.mxu0
        %v10117 = vadd.f32 %v10068, %v10116
        %v10118 = vpop.f32.mrf.mxu0
        %v10119 = vadd.f32 %v10070, %v10118
        %10120 = vdwg.mxu0
        %v10137 = vunpack.c.l.b16 %v9621
        %v10138 = vunpack.c.l.b16 %v9622
        %v10139 = vunpack.c.l.b16 %v9623
        %v10140 = vunpack.c.l.b16 %v9624
        %v10141 = vunpack.c.l.b16 %v9625
        %v10142 = vunpack.c.l.b16 %v9626
        %v10143 = vunpack.c.l.b16 %v9627
        %v10144 = vunpack.c.l.b16 %v9628
        %v10145 = vunpack.c.l.b16 %v9629
        %v10146 = vunpack.c.l.b16 %v9630
        %v10147 = vunpack.c.l.b16 %v9631
        %v10148 = vunpack.c.l.b16 %v9632
        %v10149 = vunpack.c.l.b16 %v9633
        %v10150 = vunpack.c.l.b16 %v9634
        %v10151 = vunpack.c.l.b16 %v9635
        %v10152 = vunpack.c.l.b16 %v9636
        %v10153 = vpack.c.b16 %v10138, %v10137
        %v10154 = vpack.c.b16 %v10140, %v10139
        %v10155 = vpack.c.b16 %v10142, %v10141
        %v10156 = vpack.c.b16 %v10144, %v10143
        %v10157 = vpack.c.b16 %v10146, %v10145
        %v10158 = vpack.c.b16 %v10148, %v10147
        %v10159 = vpack.c.b16 %v10150, %v10149
        %v10160 = vpack.c.b16 %v10152, %v10151
        %10169 = vmatpush.bf16.msra.mxu0 %v10160
        %10170 = vmatpush.bf16.msra.mxu0 %v10159
        %10171 = vmatpush.bf16.msra.mxu0 %v10158
        %10172 = vmatpush.bf16.msra.mxu0 %v10157
        %10173 = vmatpush.bf16.msra.mxu0 %v10156
        %10174 = vmatpush.bf16.msra.mxu0 %v10155
        %10175 = vmatpush.bf16.msra.mxu0 %v10154
        %10176 = vmatpush.bf16.msra.mxu0 %v10153
        %10177 = vmatmul.bf16.gmra.mxu0 %v9613
        %v10178 = vpop.f32.mrf.mxu0
        %v10179 = vadd.f32 %v10082, %v10178
        %v10180 = vpop.f32.mrf.mxu0
        %v10181 = vadd.f32 %v10084, %v10180
        %10182 = vmatmul.bf16.gmra.mxu0 %v9614
        %v10183 = vpop.f32.mrf.mxu0
        %v10184 = vadd.f32 %v10087, %v10183
        %v10185 = vpop.f32.mrf.mxu0
        %v10186 = vadd.f32 %v10089, %v10185
        %10187 = vmatmul.bf16.gmra.mxu0 %v9615
        %v10188 = vpop.f32.mrf.mxu0
        %v10189 = vadd.f32 %v10092, %v10188
        %v10190 = vpop.f32.mrf.mxu0
        %v10191 = vadd.f32 %v10094, %v10190
        %10192 = vmatmul.bf16.gmra.mxu0 %v9616
        %v10193 = vpop.f32.mrf.mxu0
        %v10194 = vadd.f32 %v10097, %v10193
        %v10195 = vpop.f32.mrf.mxu0
        %v10196 = vadd.f32 %v10099, %v10195
        %10197 = vmatmul.bf16.gmra.mxu0 %v9617
        %v10198 = vpop.f32.mrf.mxu0
        %v10199 = vadd.f32 %v10102, %v10198
        %v10200 = vpop.f32.mrf.mxu0
        %v10201 = vadd.f32 %v10104, %v10200
        %10202 = vmatmul.bf16.gmra.mxu0 %v9618
        %v10203 = vpop.f32.mrf.mxu0
        %v10204 = vadd.f32 %v10107, %v10203
        %v10205 = vpop.f32.mrf.mxu0
        %v10206 = vadd.f32 %v10109, %v10205
        %10207 = vmatmul.bf16.gmra.mxu0 %v9619
        %v10208 = vpop.f32.mrf.mxu0
        %v10209 = vadd.f32 %v10112, %v10208
        %v10210 = vpop.f32.mrf.mxu0
        %v10211 = vadd.f32 %v10114, %v10210
        %10212 = vmatmul.bf16.gmra.mxu0 %v9620
        %v10213 = vpop.f32.mrf.mxu0
        %v10214 = vadd.f32 %v10117, %v10213
        %v10215 = vpop.f32.mrf.mxu0
        %v10216 = vadd.f32 %v10119, %v10215
        %10217 = vdwg.mxu0
        %v10218 = vld [vmem:[%s18] sm:$0x1]
        %v10220 = vperm.slane %v10218, 0
        %v10222 = vadd.f32 %v10179, %v10220
        %v10223 = vadd.f32 %v10181, %v10220
        %v10224 = vadd.f32 %v10184, %v10220
        %v10225 = vadd.f32 %v10186, %v10220
        %v10226 = vadd.f32 %v10189, %v10220
        %v10227 = vadd.f32 %v10191, %v10220
        %v10228 = vadd.f32 %v10194, %v10220
        %v10229 = vadd.f32 %v10196, %v10220
        %v10230 = vadd.f32 %v10199, %v10220
        %v10231 = vadd.f32 %v10201, %v10220
        %v10232 = vadd.f32 %v10204, %v10220
        %v10233 = vadd.f32 %v10206, %v10220
        %v10234 = vadd.f32 %v10209, %v10220
        %v10235 = vadd.f32 %v10211, %v10220
        %v10236 = vadd.f32 %v10214, %v10220
        %v10237 = vadd.f32 %v10216, %v10220
        %v10238 = vperm.slane %v992, 0
        %v10239 = vmul.f32 %v10238, %v10222
        %v10240 = vmul.f32 %v10238, %v10223
        %v10241 = vmul.f32 %v10238, %v10224
        %v10242 = vmul.f32 %v10238, %v10225
        %v10243 = vmul.f32 %v10238, %v10226
        %v10244 = vmul.f32 %v10238, %v10227
        %v10245 = vmul.f32 %v10238, %v10228
        %v10246 = vmul.f32 %v10238, %v10229
        %v10247 = vmul.f32 %v10238, %v10230
        %v10248 = vmul.f32 %v10238, %v10231
        %v10249 = vmul.f32 %v10238, %v10232
        %v10250 = vmul.f32 %v10238, %v10233
        %v10251 = vmul.f32 %v10238, %v10234
        %v10252 = vmul.f32 %v10238, %v10235
        %v10253 = vmul.f32 %v10238, %v10236
        %v10254 = vmul.f32 %v10238, %v10237
        %v10255 = vadd.f32 %v750, %v10239
        %v10256 = vadd.f32 %v751, %v10240
        %v10257 = vadd.f32 %v752, %v10241
        %v10258 = vadd.f32 %v753, %v10242
        %v10259 = vadd.f32 %v754, %v10243
        %v10260 = vadd.f32 %v755, %v10244
        %v10261 = vadd.f32 %v756, %v10245
        %v10262 = vadd.f32 %v757, %v10246
        %v10263 = vadd.f32 %v758, %v10247
        %v10264 = vadd.f32 %v759, %v10248
        %v10265 = vadd.f32 %v760, %v10249
        %v10266 = vadd.f32 %v761, %v10250
        %v10267 = vadd.f32 %v762, %v10251
        %v10268 = vadd.f32 %v763, %v10252
        %v10269 = vadd.f32 %v764, %v10253
        %v10270 = vadd.f32 %v765, %v10254
        %10271 = vst [vmem:[%s744] sm:$0xff] %v10255
        %10272 = vst [vmem:[%s744 + $0x8] sm:$0xff] %v10256
        %10273 = vst [vmem:[%s744 + $0x10] sm:$0xff] %v10257
        %10274 = vst [vmem:[%s744 + $0x18] sm:$0xff] %v10258
        %10275 = vst [vmem:[%s744 + $0x20] sm:$0xff] %v10259
        %10276 = vst [vmem:[%s744 + $0x28] sm:$0xff] %v10260
        %10277 = vst [vmem:[%s744 + $0x30] sm:$0xff] %v10261
        %10278 = vst [vmem:[%s744 + $0x38] sm:$0xff] %v10262
        %10279 = vst [vmem:[%s744 + $0x40] sm:$0xff] %v10263
        %10280 = vst [vmem:[%s744 + $0x48] sm:$0xff] %v10264
        %10281 = vst [vmem:[%s744 + $0x50] sm:$0xff] %v10265
        %10282 = vst [vmem:[%s744 + $0x58] sm:$0xff] %v10266
        %10283 = vst [vmem:[%s744 + $0x60] sm:$0xff] %v10267
        %10284 = vst [vmem:[%s744 + $0x68] sm:$0xff] %v10268
        %10285 = vst [vmem:[%s744 + $0x70] sm:$0xff] %v10269
        %10286 = vst [vmem:[%s744 + $0x78] sm:$0xff] %v10270
        %s10287 = sand.u32 %s457, 1
        %s10288 = scalar_lea.sflag [#allocation4], %s10287
        %s10289 = sand.u32 %s457, 1
        %s10290 = smul.addr %s10289, 128
        %s10291 = scalar_lea.vmem [#allocation16], %s10290
        // Predicated region
        $region129: #{tpu_custom_call.1} parent=95 // pred_check
          %p10292 = pneg %p467
        $region130: #{tpu_custom_call.1} parent=95 // pred_check_branch
          %10294 = sbr.rel (%p10292) target = $region132
        $region131: #{tpu_custom_call.1} parent=95 // pred_region
          %10296 = vsyncadd %s10288, 0
          %s10297 = smul.addr %s40, 16
          %s10298 = smul.addr %s10297, 8
          %s10299 = scalar_lea.hbm %s19, %s10298
          %s10300 = sshll.u32 %s10291, 4
          %s10301 = int_to_ptr.vmem [resolvable:$true] %s10300
          %s10302 = sshll.u32 %s10299, 4
          %s10303 = int_to_ptr.hbm [resolvable:$true] %s10302
          %10308 = dma.vmem_to_hbm [thread:$0]  %s10301, 2048, %s10303, %s10288, 128, 128, 8
        $region132: #{tpu_custom_call.1} parent=95 // pred_fallthru
          _
      $region96: #{tpu_custom_call.1} parent=5 // pred_fallthru
        _
      %p10309 = scmp.le.s32.totalorder 2, %s35
      // Predicated region
      $region133: #{tpu_custom_call.1} parent=5 // pred_check
        %p10310 = pneg %p10309
      $region134: #{tpu_custom_call.1} parent=5 // pred_check_branch
        %10312 = sbr.rel (%p10310) target = $region136
      $region135: #{tpu_custom_call.1} parent=5 // pred_region
        %s10313 = ssub.s32 %s35, 2
        // Predicated region
        $region137: #{tpu_custom_call.1} parent=135 // pred_check
          %p10314 = pneg %p473
        $region138: #{tpu_custom_call.1} parent=135 // pred_check_branch
          %10316 = sbr.rel (%p10314) target = $region140
        $region139: #{tpu_custom_call.1} parent=135 // pred_region
          %s10317 = sand.u32 %s458, 1
          %s10318 = scalar_lea.sflag [#allocation4], %s10317
          %s10319 = sand.u32 %s458, 1
          %s10320 = smul.addr %s10319, 128
          %s10321 = scalar_lea.vmem [#allocation16], %s10320
          %10323 = dma.done %s10318, 2048
        $region140: #{tpu_custom_call.1} parent=135 // pred_fallthru
          _
      $region136: #{tpu_custom_call.1} parent=5 // pred_fallthru
        _
    $region6: #{tpu_custom_call.1} parent=1 // loop_footer
      %s39 = sadd.s32 1, %s35
    $region7: #{tpu_custom_call.1} parent=1 // loop_footer_branch
      %34 = sbr.rel target = $region3
    $region8: #{tpu_custom_call.1} parent=1 // loop_exit
      _
    %10324 = vsyncpa [#allocation3], 1
    %s10325 = scalar_lea.sflag [#allocation3], 1
    %10326 = vsyncpa %s10325, 1
    %10327 = vsyncpa [#allocation6], 1
    %10328 = vsyncpa [#allocation9], 1
    %10329 = vsyncpa [#allocation12], 1
    %10330 = vsyncpa [#allocation15], 1
    %10331 = vsyncpa [#allocation4], 1
    %s10332 = scalar_lea.sflag [#allocation4], 1
    %10333 = vsyncpa %s10332, 1

</llo_original>
